<compile_context>
chip_gen: v7x
topology: tpu7x:2x2x1
jax: 0.10.0
libtpu: 0.0.40
codegen_flags: <defaults>
</compile_context>

<pallas_src>
import functools

import numpy as np

import jax
import jax.numpy as jnp
from jax.experimental import pallas as pl
from jax.experimental.pallas import tpu as pltpu

BN_EPS = 1e-5


def _silu(x):
    # numerically stable SiLU: sigmoid(x) = 0.5 * (tanh(x/2) + 1)  (EUP tanh, no overflow)
    return x * (0.5 * (jnp.tanh(0.5 * x) + 1.0))


# ----------------------------- the single fused kernel -----------------------------

def _encoder_kernel(x_ref, t_ref, y_ref, edge_ref, bmat_ref, sel_ref,
                    bn_g_ref, bn_b_ref, cw_ref, cb_ref,
                    tw1_ref, tb1_ref, tw2_ref, tb2_ref,
                    yw1_ref, yb1_ref, yw2_ref, yb2_ref,
                    dw_ref, db_ref,
                    o_ref, xpad,
                    *, n_layers, nbatch, h, w, lpad):
    HW = h * w
    inv_count = 1.0 / float(nbatch * HW)

    mask_l = edge_ref[0:1, :]          # 0 where col == 0   (left wrap of the flat layout)
    mask_r = edge_ref[1:2, :]          # 0 where col == W-1 (right wrap)
    bmat = bmat_ref[...]               # (N*C, N*C): per-channel sum over images + broadcast

    # zero the halo ONCE; the interior [lpad, lpad+HW) is fully overwritten before every conv
    xpad[...] = jnp.zeros_like(xpad)

    def conv3x3(act, w9):
        """act: (N*Cin, HW); w9: (9, N*Cout, N*Cin) image-block-diagonal tap weights."""
        xpad[:, lpad:lpad + HW] = act                      # 128-lane aligned interior store
        base = lpad - (w + 1)
        acc = jnp.zeros((w9.shape[1], HW), jnp.float32)
        for t in range(9):
            di, dj = divmod(t, 3)
            start = base + di * w + dj
            tap = xpad[:, start:start + HW]                # flat-shifted tap, (N*Cin, HW)
            if dj == 0:
                tap = tap * mask_l
            elif dj == 2:
                tap = tap * mask_r
            # channel contraction on the MXU (all images at once via block-diag weights)
            acc = acc + jnp.dot(w9[t], tap, preferred_element_type=jnp.float32)
        return acc

    def silu_bn(act, gamma, beta):
        """BatchNorm2d(SiLU(act)) with training-mode batch stats, two-pass variance."""
        s = _silu(act)
        mean = jnp.dot(bmat, jnp.sum(s, axis=1, keepdims=True),
                       preferred_element_type=jnp.float32) * inv_count
        d = s - mean
        var = jnp.dot(bmat, jnp.sum(d * d, axis=1, keepdims=True),
                      preferred_element_type=jnp.float32) * inv_count
        return gamma * d * jax.lax.rsqrt(var + BN_EPS) + beta

    x = x_ref[...].astype(jnp.float32)                     # (N*C, HW), resident in VMEM
    t_col = t_ref[...].astype(jnp.float32)                 # (N*Td, 1)
    y_col = y_ref[...].astype(jnp.float32)                 # (N*Yd, 1)

    for l in range(n_layers):
        # adapter MLPs fused in-kernel; block-diag weights land the result as (N*C, 1)
        th = _silu(jnp.dot(tw1_ref[l], t_col, preferred_element_type=jnp.float32) + tb1_ref[l])
        tv = jnp.dot(tw2_ref[l], th, preferred_element_type=jnp.float32) + tb2_ref[l]
        yh = _silu(jnp.dot(yw1_ref[l], y_col, preferred_element_type=jnp.float32) + yb1_ref[l])
        yv = jnp.dot(yw2_ref[l], yh, preferred_element_type=jnp.float32) + yb2_ref[l]

        s0, s1 = 2 * l, 2 * l + 1
        h1 = conv3x3(silu_bn(x, bn_g_ref[s0], bn_b_ref[s0]), cw_ref[s0])
        h1 = h1 + (cb_ref[s0] + tv + yv)                   # bias + (t+y) folded: one broadcast add
        h2 = conv3x3(silu_bn(h1, bn_g_ref[s1], bn_b_ref[s1]), cw_ref[s1])
        x = h2 + cb_ref[s1] + x                            # conv bias + residual

    # 3x3 stride-2 pad-1 downsample: full-res taps, then a 0/1 selection matmul
    acc = conv3x3(x, dw_ref[...])                          # (N*Cout, HW)
    out = jnp.dot(acc, sel_ref[...], preferred_element_type=jnp.float32) + db_ref[...]
    o_ref[...] = out.astype(o_ref.dtype)


# ----------------------------- wrapper / parameter prep -----------------------------

def encoder_forward(x_nchw, t_embed, y_embed, params):
    N, C, H, W = x_nchw.shape
    assert H % 2 == 0 and W % 2 == 0
    HW, Ho, Wo = H * W, H // 2, W // 2
    blocks = params['res_blocks']
    L = len(blocks)
    c_out = params['down_w'].shape[-1]
    t_dim = t_embed.shape[1]
    y_dim = y_embed.shape[1]

    eye_n = jnp.eye(N, dtype=jnp.float32)

    def bd(wm):                        # (r, c) -> image-block-diagonal (N*r, N*c)
        return jnp.kron(eye_n, wm.astype(jnp.float32))

    def bd_taps(w_hwio):               # (3,3,cin,cout) HWIO -> (9, N*cout, N*cin)
        kh, kw, cin, cout = w_hwio.shape
        w9 = jnp.transpose(w_hwio, (0, 1, 3, 2)).reshape(kh * kw, cout, cin)
        return jax.vmap(lambda wt: jnp.kron(eye_n, wt))(w9.astype(jnp.float32))

    def tile_col(v):                   # (c,) -> (N*c, 1): one copy per image, stacked
        return jnp.tile(v.astype(jnp.float32), (N,)).reshape(N * v.shape[0], 1)

    # stacked per-conv-stage params, index = 2*layer + stage
    bn_g = jnp.stack([tile_col(p[k]) for p in blocks for k in ('bn1_gamma', 'bn2_gamma')])
    bn_b = jnp.stack([tile_col(p[k]) for p in blocks for k in ('bn1_beta', 'bn2_beta')])
    cw = jnp.stack([bd_taps(p[k]) for p in blocks for k in ('conv1_w', 'conv2_w')])
    cb = jnp.stack([tile_col(p[k]) for p in blocks for k in ('conv1_b', 'conv2_b')])
    tw1 = jnp.stack([bd(p['t_w1'].T) for p in blocks])
    tb1 = jnp.stack([tile_col(p['t_b1']) for p in blocks])
    tw2 = jnp.stack([bd(p['t_w2'].T) for p in blocks])
    tb2 = jnp.stack([tile_col(p['t_b2']) for p in blocks])
    yw1 = jnp.stack([bd(p['y_w1'].T) for p in blocks])
    yb1 = jnp.stack([tile_col(p['y_b1']) for p in blocks])
    yw2 = jnp.stack([bd(p['y_w2'].T) for p in blocks])
    yb2 = jnp.stack([tile_col(p['y_b2']) for p in blocks])
    dw = bd_taps(params['down_w'])                         # (9, N*c_out, N*C)
    db = tile_col(params['down_b'])                        # (N*c_out, 1)

    # shape-only constants (numpy -> baked-in jit constants)
    col = np.arange(HW) % W
    edge = np.stack([(col != 0), (col != W - 1)]).astype(np.float32)        # (2, HW)
    bmat = np.kron(np.ones((N, N), np.float32), np.eye(C, dtype=np.float32))  # (N*C, N*C)
    sel_rows = (2 * np.arange(Ho)[:, None] * W + 2 * np.arange(Wo)[None, :]).reshape(-1)
    sel = (np.arange(HW)[:, None] == sel_rows[None, :]).astype(np.float32)  # (HW, Ho*Wo)

    lpad = ((W + 1 + 127) // 128) * 128                    # aligned interior offset >= W+1

    kernel = functools.partial(_encoder_kernel, n_layers=L, nbatch=N, h=H, w=W, lpad=lpad)
    out2d = pl.pallas_call(
        kernel,
        out_shape=jax.ShapeDtypeStruct((N * c_out, Ho * Wo), x_nchw.dtype),
        scratch_shapes=[pltpu.VMEM((N * C, lpad + HW + lpad), jnp.float32)],
    )(x_nchw.reshape(N * C, HW),
      t_embed.reshape(N * t_dim, 1), y_embed.reshape(N * y_dim, 1),
      edge, bmat, sel,
      bn_g, bn_b, cw, cb,
      tw1, tb1, tw2, tb2, yw1, yb1, yw2, yb2,
      dw, db)
    return out2d.reshape(N, c_out, Ho, Wo)


# ----------------------------- params / pure-JAX reference -----------------------------

def init_params(c_in, c_out, n_layers, t_dim, y_dim, key):
    keys = iter(jax.random.split(key, 8 + 16 * n_layers))

    def nrm(shape, scale=0.1):
        return (scale * jax.random.normal(next(keys), shape)).astype(jnp.float32)

    res_blocks = []
    for _ in range(n_layers):
        res_blocks.append(dict(
            bn1_gamma=1.0 + nrm((c_in,), 0.05), bn1_beta=nrm((c_in,), 0.05),
            conv1_w=nrm((3, 3, c_in, c_in)), conv1_b=nrm((c_in,)),
            bn2_gamma=1.0 + nrm((c_in,), 0.05), bn2_beta=nrm((c_in,), 0.05),
            conv2_w=nrm((3, 3, c_in, c_in)), conv2_b=nrm((c_in,)),
            t_w1=nrm((t_dim, t_dim)), t_b1=nrm((t_dim,)),
            t_w2=nrm((t_dim, c_in)), t_b2=nrm((c_in,)),
            y_w1=nrm((y_dim, y_dim)), y_b1=nrm((y_dim,)),
            y_w2=nrm((y_dim, c_in)), y_b2=nrm((c_in,)),
        ))
    return dict(res_blocks=res_blocks,
                down_w=nrm((3, 3, c_in, c_out)), down_b=nrm((c_out,)))


def ref_forward(x_nchw, t_embed, y_embed, params):
    """Pure-JAX reference mirroring the PyTorch module (training-mode BN)."""
    def silu(v): return v * jax.nn.sigmoid(v)

    def bn(v, g, b):
        mean = jnp.mean(v, axis=(0, 1, 2), keepdims=True)
        var = jnp.mean((v - mean) ** 2, axis=(0, 1, 2), keepdims=True)
        return g * (v - mean) * jax.lax.rsqrt(var + BN_EPS) + b

    def conv(v, w, b, stride=1):
        out = jax.lax.conv_general_dilated(v, w, (stride, stride), ((1, 1), (1, 1)),
                                           dimension_numbers=('NHWC', 'HWIO', 'NHWC'))
        return out + b

    x = jnp.transpose(x_nchw, (0, 2, 3, 1))
    for p in params['res_blocks']:
        res = x
        h = conv(bn(silu(x), p['bn1_gamma'], p['bn1_beta']), p['conv1_w'], p['conv1_b'])
        tvec = silu(t_embed @ p['t_w1'] + p['t_b1']) @ p['t_w2'] + p['t_b2']
        yvec = silu(y_embed @ p['y_w1'] + p['y_b1']) @ p['y_w2'] + p['y_b2']
        h = h + tvec[:, None, None, :] + yvec[:, None, None, :]
        h = conv(bn(silu(h), p['bn2_gamma'], p['bn2_beta']), p['conv2_w'], p['conv2_b'])
        x = h + res
    y = conv(x, params['down_w'], params['down_b'], stride=2)
    return jnp.transpose(y, (0, 3, 1, 2))


# ----------------------------------- main -----------------------------------

if __name__ == "__main__":
    N, C_in, H, W = 2, 4, 16, 16
    C_out, n_layers, t_dim, y_dim = 8, 2, 32, 32

    key = jax.random.PRNGKey(0)
    k1, k2, k3, k4 = jax.random.split(key, 4)
    x = jax.random.normal(k1, (N, C_in, H, W), jnp.float32)
    t_embed = jax.random.normal(k2, (N, t_dim), jnp.float32)
    y_embed = jax.random.normal(k3, (N, y_dim), jnp.float32)
    params = init_params(C_in, C_out, n_layers, t_dim, y_dim, k4)

    out = jax.block_until_ready(jax.jit(encoder_forward)(x, t_embed, y_embed, params))
    assert out.shape == (N, C_out, H // 2, W // 2), out.shape

    ref = jax.block_until_ready(ref_forward(x, t_embed, y_embed, params))
    max_err = float(jnp.max(jnp.abs(out - ref)))
    assert max_err < 5e-3, f"mismatch vs reference: max abs err = {max_err}"

    print("KERNEL_OK")
</pallas_src>

<mosaic_0001>
module attributes {stable_mosaic.version = 11 : i64} {
  func.func @_encoder_kernel(%arg0: memref<8x256xf32, #tpu.memory_space<vmem>>, %arg1: memref<64x1xf32, #tpu.memory_space<vmem>>, %arg2: memref<64x1xf32, #tpu.memory_space<vmem>>, %arg3: memref<2x256xf32, #tpu.memory_space<vmem>>, %arg4: memref<8x8xf32, #tpu.memory_space<vmem>>, %arg5: memref<256x64xf32, #tpu.memory_space<vmem>>, %arg6: memref<4x8x1xf32, #tpu.memory_space<vmem>>, %arg7: memref<4x8x1xf32, #tpu.memory_space<vmem>>, %arg8: memref<4x9x8x8xf32, #tpu.memory_space<vmem>>, %arg9: memref<4x8x1xf32, #tpu.memory_space<vmem>>, %arg10: memref<2x64x64xf32, #tpu.memory_space<vmem>>, %arg11: memref<2x64x1xf32, #tpu.memory_space<vmem>>, %arg12: memref<2x8x64xf32, #tpu.memory_space<vmem>>, %arg13: memref<2x8x1xf32, #tpu.memory_space<vmem>>, %arg14: memref<2x64x64xf32, #tpu.memory_space<vmem>>, %arg15: memref<2x64x1xf32, #tpu.memory_space<vmem>>, %arg16: memref<2x8x64xf32, #tpu.memory_space<vmem>>, %arg17: memref<2x8x1xf32, #tpu.memory_space<vmem>>, %arg18: memref<9x16x8xf32, #tpu.memory_space<vmem>>, %arg19: memref<16x1xf32, #tpu.memory_space<vmem>>, %arg20: memref<16x64xf32, #tpu.memory_space<vmem>>, %arg21: memref<8x512xf32, #tpu.memory_space<vmem>>) attributes {dimension_semantics = [], scalar_prefetch = 0 : i64, scratch_operands = 1 : i64, tpu.core_type = #tpu.core_type<tc>} {
    %c0 = arith.constant 0 : index
    %c0_0 = arith.constant 0 : index
    %0 = vector.load %arg3[%c0, %c0_0] : memref<2x256xf32, #tpu.memory_space<vmem>>, vector<1x256xf32>
    %c1 = arith.constant 1 : index
    %c0_1 = arith.constant 0 : index
    %1 = vector.load %arg3[%c1, %c0_1] : memref<2x256xf32, #tpu.memory_space<vmem>>, vector<1x256xf32>
    %c0_2 = arith.constant 0 : index
    %c0_3 = arith.constant 0 : index
    %2 = vector.load %arg4[%c0_2, %c0_3] : memref<8x8xf32, #tpu.memory_space<vmem>>, vector<8x8xf32>
    %cst = arith.constant 0.000000e+00 : f32
    %3 = vector.broadcast %cst : f32 to vector<8x512xf32>
    %c0_4 = arith.constant 0 : index
    %c0_5 = arith.constant 0 : index
    %4 = vector.load %arg21[%c0_4, %c0_5] : memref<8x512xf32, #tpu.memory_space<vmem>>, vector<8x512xf32>
    tpu.vector_store %arg21[%c0_4, %c0_5], %3 {strides = array<i32>} : memref<8x512xf32, #tpu.memory_space<vmem>>, vector<8x512xf32>,
    %c0_6 = arith.constant 0 : index
    %c0_7 = arith.constant 0 : index
    %5 = vector.load %arg0[%c0_6, %c0_7] : memref<8x256xf32, #tpu.memory_space<vmem>>, vector<8x256xf32>
    %c0_8 = arith.constant 0 : index
    %c0_9 = arith.constant 0 : index
    %6 = vector.load %arg1[%c0_8, %c0_9] : memref<64x1xf32, #tpu.memory_space<vmem>>, vector<64x1xf32>
    %c0_10 = arith.constant 0 : index
    %c0_11 = arith.constant 0 : index
    %7 = vector.load %arg2[%c0_10, %c0_11] : memref<64x1xf32, #tpu.memory_space<vmem>>, vector<64x1xf32>
    %c0_12 = arith.constant 0 : index
    %c0_13 = arith.constant 0 : index
    %c0_14 = arith.constant 0 : index
    %8 = vector.load %arg10[%c0_12, %c0_13, %c0_14] : memref<2x64x64xf32, #tpu.memory_space<vmem>>, vector<1x64x64xf32>
    %9 = vector.shape_cast %8 : vector<1x64x64xf32> to vector<64x64xf32>
    %cst_15 = arith.constant dense<0.000000e+00> : vector<64x1xf32>
    %10 = tpu.matmul %9, %6, %cst_15 {dimension_numbers = #tpu.dot_dimension_numbers<[1], [0], [0], [1], [0, 0, 1, 1], [], []>} : vector<64x64xf32>, vector<64x1xf32>, vector<64x1xf32> -> vector<64x1xf32>
    %c0_16 = arith.constant 0 : index
    %c0_17 = arith.constant 0 : index
    %c0_18 = arith.constant 0 : index
    %11 = vector.load %arg11[%c0_16, %c0_17, %c0_18] : memref<2x64x1xf32, #tpu.memory_space<vmem>>, vector<1x64x1xf32>
    %12 = vector.shape_cast %11 : vector<1x64x1xf32> to vector<64x1xf32>
    %13 = arith.addf %10, %12 : vector<64x1xf32>
    %cst_19 = arith.constant 5.000000e-01 : f32
    %14 = vector.broadcast %cst_19 : f32 to vector<64x1xf32>
    %15 = arith.mulf %14, %13 : vector<64x1xf32>
    %16 = math.tanh %15 : vector<64x1xf32>
    %cst_20 = arith.constant 1.000000e+00 : f32
    %17 = vector.broadcast %cst_20 : f32 to vector<64x1xf32>
    %18 = arith.addf %16, %17 : vector<64x1xf32>
    %cst_21 = arith.constant 5.000000e-01 : f32
    %19 = vector.broadcast %cst_21 : f32 to vector<64x1xf32>
    %20 = arith.mulf %19, %18 : vector<64x1xf32>
    %21 = arith.mulf %13, %20 : vector<64x1xf32>
    %c0_22 = arith.constant 0 : index
    %c0_23 = arith.constant 0 : index
    %c0_24 = arith.constant 0 : index
    %22 = vector.load %arg12[%c0_22, %c0_23, %c0_24] : memref<2x8x64xf32, #tpu.memory_space<vmem>>, vector<1x8x64xf32>
    %23 = vector.shape_cast %22 : vector<1x8x64xf32> to vector<8x64xf32>
    %cst_25 = arith.constant dense<0.000000e+00> : vector<8x1xf32>
    %24 = tpu.matmul %23, %21, %cst_25 {dimension_numbers = #tpu.dot_dimension_numbers<[1], [0], [0], [1], [0, 0, 1, 1], [], []>} : vector<8x64xf32>, vector<64x1xf32>, vector<8x1xf32> -> vector<8x1xf32>
    %c0_26 = arith.constant 0 : index
    %c0_27 = arith.constant 0 : index
    %c0_28 = arith.constant 0 : index
    %25 = vector.load %arg13[%c0_26, %c0_27, %c0_28] : memref<2x8x1xf32, #tpu.memory_space<vmem>>, vector<1x8x1xf32>
    %26 = vector.shape_cast %25 : vector<1x8x1xf32> to vector<8x1xf32>
    %27 = arith.addf %24, %26 : vector<8x1xf32>
    %c0_29 = arith.constant 0 : index
    %c0_30 = arith.constant 0 : index
    %c0_31 = arith.constant 0 : index
    %28 = vector.load %arg14[%c0_29, %c0_30, %c0_31] : memref<2x64x64xf32, #tpu.memory_space<vmem>>, vector<1x64x64xf32>
    %29 = vector.shape_cast %28 : vector<1x64x64xf32> to vector<64x64xf32>
    %cst_32 = arith.constant dense<0.000000e+00> : vector<64x1xf32>
    %30 = tpu.matmul %29, %7, %cst_32 {dimension_numbers = #tpu.dot_dimension_numbers<[1], [0], [0], [1], [0, 0, 1, 1], [], []>} : vector<64x64xf32>, vector<64x1xf32>, vector<64x1xf32> -> vector<64x1xf32>
    %c0_33 = arith.constant 0 : index
    %c0_34 = arith.constant 0 : index
    %c0_35 = arith.constant 0 : index
    %31 = vector.load %arg15[%c0_33, %c0_34, %c0_35] : memref<2x64x1xf32, #tpu.memory_space<vmem>>, vector<1x64x1xf32>
    %32 = vector.shape_cast %31 : vector<1x64x1xf32> to vector<64x1xf32>
    %33 = arith.addf %30, %32 : vector<64x1xf32>
    %cst_36 = arith.constant 5.000000e-01 : f32
    %34 = vector.broadcast %cst_36 : f32 to vector<64x1xf32>
    %35 = arith.mulf %34, %33 : vector<64x1xf32>
    %36 = math.tanh %35 : vector<64x1xf32>
    %cst_37 = arith.constant 1.000000e+00 : f32
    %37 = vector.broadcast %cst_37 : f32 to vector<64x1xf32>
    %38 = arith.addf %36, %37 : vector<64x1xf32>
    %cst_38 = arith.constant 5.000000e-01 : f32
    %39 = vector.broadcast %cst_38 : f32 to vector<64x1xf32>
    %40 = arith.mulf %39, %38 : vector<64x1xf32>
    %41 = arith.mulf %33, %40 : vector<64x1xf32>
    %c0_39 = arith.constant 0 : index
    %c0_40 = arith.constant 0 : index
    %c0_41 = arith.constant 0 : index
    %42 = vector.load %arg16[%c0_39, %c0_40, %c0_41] : memref<2x8x64xf32, #tpu.memory_space<vmem>>, vector<1x8x64xf32>
    %43 = vector.shape_cast %42 : vector<1x8x64xf32> to vector<8x64xf32>
    %cst_42 = arith.constant dense<0.000000e+00> : vector<8x1xf32>
    %44 = tpu.matmul %43, %41, %cst_42 {dimension_numbers = #tpu.dot_dimension_numbers<[1], [0], [0], [1], [0, 0, 1, 1], [], []>} : vector<8x64xf32>, vector<64x1xf32>, vector<8x1xf32> -> vector<8x1xf32>
    %c0_43 = arith.constant 0 : index
    %c0_44 = arith.constant 0 : index
    %c0_45 = arith.constant 0 : index
    %45 = vector.load %arg17[%c0_43, %c0_44, %c0_45] : memref<2x8x1xf32, #tpu.memory_space<vmem>>, vector<1x8x1xf32>
    %46 = vector.shape_cast %45 : vector<1x8x1xf32> to vector<8x1xf32>
    %47 = arith.addf %44, %46 : vector<8x1xf32>
    %c0_46 = arith.constant 0 : index
    %c0_47 = arith.constant 0 : index
    %c0_48 = arith.constant 0 : index
    %48 = vector.load %arg6[%c0_46, %c0_47, %c0_48] : memref<4x8x1xf32, #tpu.memory_space<vmem>>, vector<1x8x1xf32>
    %49 = vector.shape_cast %48 : vector<1x8x1xf32> to vector<8x1xf32>
    %c0_49 = arith.constant 0 : index
    %c0_50 = arith.constant 0 : index
    %c0_51 = arith.constant 0 : index
    %50 = vector.load %arg7[%c0_49, %c0_50, %c0_51] : memref<4x8x1xf32, #tpu.memory_space<vmem>>, vector<1x8x1xf32>
    %51 = vector.shape_cast %50 : vector<1x8x1xf32> to vector<8x1xf32>
    %cst_52 = arith.constant 5.000000e-01 : f32
    %52 = vector.broadcast %cst_52 : f32 to vector<8x256xf32>
    %53 = arith.mulf %52, %5 : vector<8x256xf32>
    %54 = math.tanh %53 : vector<8x256xf32>
    %cst_53 = arith.constant 1.000000e+00 : f32
    %55 = vector.broadcast %cst_53 : f32 to vector<8x256xf32>
    %56 = arith.addf %54, %55 : vector<8x256xf32>
    %cst_54 = arith.constant 5.000000e-01 : f32
    %57 = vector.broadcast %cst_54 : f32 to vector<8x256xf32>
    %58 = arith.mulf %57, %56 : vector<8x256xf32>
    %59 = arith.mulf %5, %58 : vector<8x256xf32>
    %cst_55 = arith.constant dense<0.000000e+00> : vector<8xf32>
    %60 = vector.multi_reduction <add>, %59, %cst_55 [1] : vector<8x256xf32> to vector<8xf32>
    %61 = vector.shape_cast %60 : vector<8xf32> to vector<8x1xf32>
    %cst_56 = arith.constant dense<0.000000e+00> : vector<8x1xf32>
    %62 = tpu.matmul %2, %61, %cst_56 {dimension_numbers = #tpu.dot_dimension_numbers<[1], [0], [0], [1], [0, 0, 1, 1], [], []>} : vector<8x8xf32>, vector<8x1xf32>, vector<8x1xf32> -> vector<8x1xf32>
    %cst_57 = arith.constant 0.001953125 : f32
    %63 = vector.broadcast %cst_57 : f32 to vector<8x1xf32>
    %64 = arith.mulf %62, %63 : vector<8x1xf32>
    %65 = vector.broadcast %64 : vector<8x1xf32> to vector<8x256xf32>
    %66 = arith.subf %59, %65 : vector<8x256xf32>
    %67 = arith.mulf %66, %66 : vector<8x256xf32>
    %cst_58 = arith.constant dense<0.000000e+00> : vector<8xf32>
    %68 = vector.multi_reduction <add>, %67, %cst_58 [1] : vector<8x256xf32> to vector<8xf32>
    %69 = vector.shape_cast %68 : vector<8xf32> to vector<8x1xf32>
    %cst_59 = arith.constant dense<0.000000e+00> : vector<8x1xf32>
    %70 = tpu.matmul %2, %69, %cst_59 {dimension_numbers = #tpu.dot_dimension_numbers<[1], [0], [0], [1], [0, 0, 1, 1], [], []>} : vector<8x8xf32>, vector<8x1xf32>, vector<8x1xf32> -> vector<8x1xf32>
    %cst_60 = arith.constant 0.001953125 : f32
    %71 = vector.broadcast %cst_60 : f32 to vector<8x1xf32>
    %72 = arith.mulf %70, %71 : vector<8x1xf32>
    %73 = vector.broadcast %49 : vector<8x1xf32> to vector<8x256xf32>
    %74 = arith.mulf %73, %66 : vector<8x256xf32>
    %cst_61 = arith.constant 9.99999974E-6 : f32
    %75 = vector.broadcast %cst_61 : f32 to vector<8x1xf32>
    %76 = arith.addf %72, %75 : vector<8x1xf32>
    %77 = math.rsqrt %76 : vector<8x1xf32>
    %78 = vector.broadcast %77 : vector<8x1xf32> to vector<8x256xf32>
    %79 = arith.mulf %74, %78 : vector<8x256xf32>
    %80 = vector.broadcast %51 : vector<8x1xf32> to vector<8x256xf32>
    %81 = arith.addf %79, %80 : vector<8x256xf32>
    %c0_62 = arith.constant 0 : index
    %c0_63 = arith.constant 0 : index
    %c0_64 = arith.constant 0 : index
    %c0_65 = arith.constant 0 : index
    %82 = vector.load %arg8[%c0_62, %c0_63, %c0_64, %c0_65] : memref<4x9x8x8xf32, #tpu.memory_space<vmem>>, vector<1x9x8x8xf32>
    %83 = vector.shape_cast %82 : vector<1x9x8x8xf32> to vector<9x8x8xf32>
    %c0_66 = arith.constant 0 : index
    %c128 = arith.constant 128 : index
    %84 = vector.load %arg21[%c0_66, %c128] : memref<8x512xf32, #tpu.memory_space<vmem>>, vector<8x256xf32>
    tpu.vector_store %arg21[%c0_66, %c128], %81 {strides = array<i32>} : memref<8x512xf32, #tpu.memory_space<vmem>>, vector<8x256xf32>,
    %cst_67 = arith.constant 0.000000e+00 : f32
    %85 = vector.broadcast %cst_67 : f32 to vector<8x256xf32>
    %c0_68 = arith.constant 0 : index
    %c111 = arith.constant 111 : index
    %86 = vector.load %arg21[%c0_68, %c111] : memref<8x512xf32, #tpu.memory_space<vmem>>, vector<8x256xf32>
    %87 = vector.broadcast %0 : vector<1x256xf32> to vector<8x256xf32>
    %88 = arith.mulf %86, %87 : vector<8x256xf32>
    %89 = vector.extract_strided_slice %83 {offsets = [0, 0, 0], sizes = [1, 8, 8], strides = [1, 1, 1]} : vector<9x8x8xf32> to vector<1x8x8xf32>
    %90 = vector.shape_cast %89 : vector<1x8x8xf32> to vector<8x8xf32>
    %cst_69 = arith.constant dense<0.000000e+00> : vector<8x256xf32>
    %91 = tpu.matmul %90, %88, %cst_69 {dimension_numbers = #tpu.dot_dimension_numbers<[1], [0], [0], [1], [0, 0, 1, 1], [], []>} : vector<8x8xf32>, vector<8x256xf32>, vector<8x256xf32> -> vector<8x256xf32>
    %92 = arith.addf %85, %91 : vector<8x256xf32>
    %c0_70 = arith.constant 0 : index
    %c112 = arith.constant 112 : index
    %93 = vector.load %arg21[%c0_70, %c112] : memref<8x512xf32, #tpu.memory_space<vmem>>, vector<8x256xf32>
    %94 = vector.extract_strided_slice %83 {offsets = [1, 0, 0], sizes = [1, 8, 8], strides = [1, 1, 1]} : vector<9x8x8xf32> to vector<1x8x8xf32>
    %95 = vector.shape_cast %94 : vector<1x8x8xf32> to vector<8x8xf32>
    %cst_71 = arith.constant dense<0.000000e+00> : vector<8x256xf32>
    %96 = tpu.matmul %95, %93, %cst_71 {dimension_numbers = #tpu.dot_dimension_numbers<[1], [0], [0], [1], [0, 0, 1, 1], [], []>} : vector<8x8xf32>, vector<8x256xf32>, vector<8x256xf32> -> vector<8x256xf32>
    %97 = arith.addf %92, %96 : vector<8x256xf32>
    %c0_72 = arith.constant 0 : index
    %c113 = arith.constant 113 : index
    %98 = vector.load %arg21[%c0_72, %c113] : memref<8x512xf32, #tpu.memory_space<vmem>>, vector<8x256xf32>
    %99 = vector.broadcast %1 : vector<1x256xf32> to vector<8x256xf32>
    %100 = arith.mulf %98, %99 : vector<8x256xf32>
    %101 = vector.extract_strided_slice %83 {offsets = [2, 0, 0], sizes = [1, 8, 8], strides = [1, 1, 1]} : vector<9x8x8xf32> to vector<1x8x8xf32>
    %102 = vector.shape_cast %101 : vector<1x8x8xf32> to vector<8x8xf32>
    %cst_73 = arith.constant dense<0.000000e+00> : vector<8x256xf32>
    %103 = tpu.matmul %102, %100, %cst_73 {dimension_numbers = #tpu.dot_dimension_numbers<[1], [0], [0], [1], [0, 0, 1, 1], [], []>} : vector<8x8xf32>, vector<8x256xf32>, vector<8x256xf32> -> vector<8x256xf32>
    %104 = arith.addf %97, %103 : vector<8x256xf32>
    %c0_74 = arith.constant 0 : index
    %c127 = arith.constant 127 : index
    %105 = vector.load %arg21[%c0_74, %c127] : memref<8x512xf32, #tpu.memory_space<vmem>>, vector<8x256xf32>
    %106 = vector.broadcast %0 : vector<1x256xf32> to vector<8x256xf32>
    %107 = arith.mulf %105, %106 : vector<8x256xf32>
    %108 = vector.extract_strided_slice %83 {offsets = [3, 0, 0], sizes = [1, 8, 8], strides = [1, 1, 1]} : vector<9x8x8xf32> to vector<1x8x8xf32>
    %109 = vector.shape_cast %108 : vector<1x8x8xf32> to vector<8x8xf32>
    %cst_75 = arith.constant dense<0.000000e+00> : vector<8x256xf32>
    %110 = tpu.matmul %109, %107, %cst_75 {dimension_numbers = #tpu.dot_dimension_numbers<[1], [0], [0], [1], [0, 0, 1, 1], [], []>} : vector<8x8xf32>, vector<8x256xf32>, vector<8x256xf32> -> vector<8x256xf32>
    %111 = arith.addf %104, %110 : vector<8x256xf32>
    %c0_76 = arith.constant 0 : index
    %c128_77 = arith.constant 128 : index
    %112 = vector.load %arg21[%c0_76, %c128_77] : memref<8x512xf32, #tpu.memory_space<vmem>>, vector<8x256xf32>
    %113 = vector.extract_strided_slice %83 {offsets = [4, 0, 0], sizes = [1, 8, 8], strides = [1, 1, 1]} : vector<9x8x8xf32> to vector<1x8x8xf32>
    %114 = vector.shape_cast %113 : vector<1x8x8xf32> to vector<8x8xf32>
    %cst_78 = arith.constant dense<0.000000e+00> : vector<8x256xf32>
    %115 = tpu.matmul %114, %112, %cst_78 {dimension_numbers = #tpu.dot_dimension_numbers<[1], [0], [0], [1], [0, 0, 1, 1], [], []>} : vector<8x8xf32>, vector<8x256xf32>, vector<8x256xf32> -> vector<8x256xf32>
    %116 = arith.addf %111, %115 : vector<8x256xf32>
    %c0_79 = arith.constant 0 : index
    %c129 = arith.constant 129 : index
    %117 = vector.load %arg21[%c0_79, %c129] : memref<8x512xf32, #tpu.memory_space<vmem>>, vector<8x256xf32>
    %118 = vector.broadcast %1 : vector<1x256xf32> to vector<8x256xf32>
    %119 = arith.mulf %117, %118 : vector<8x256xf32>
    %120 = vector.extract_strided_slice %83 {offsets = [5, 0, 0], sizes = [1, 8, 8], strides = [1, 1, 1]} : vector<9x8x8xf32> to vector<1x8x8xf32>
    %121 = vector.shape_cast %120 : vector<1x8x8xf32> to vector<8x8xf32>
    %cst_80 = arith.constant dense<0.000000e+00> : vector<8x256xf32>
    %122 = tpu.matmul %121, %119, %cst_80 {dimension_numbers = #tpu.dot_dimension_numbers<[1], [0], [0], [1], [0, 0, 1, 1], [], []>} : vector<8x8xf32>, vector<8x256xf32>, vector<8x256xf32> -> vector<8x256xf32>
    %123 = arith.addf %116, %122 : vector<8x256xf32>
    %c0_81 = arith.constant 0 : index
    %c143 = arith.constant 143 : index
    %124 = vector.load %arg21[%c0_81, %c143] : memref<8x512xf32, #tpu.memory_space<vmem>>, vector<8x256xf32>
    %125 = vector.broadcast %0 : vector<1x256xf32> to vector<8x256xf32>
    %126 = arith.mulf %124, %125 : vector<8x256xf32>
    %127 = vector.extract_strided_slice %83 {offsets = [6, 0, 0], sizes = [1, 8, 8], strides = [1, 1, 1]} : vector<9x8x8xf32> to vector<1x8x8xf32>
    %128 = vector.shape_cast %127 : vector<1x8x8xf32> to vector<8x8xf32>
    %cst_82 = arith.constant dense<0.000000e+00> : vector<8x256xf32>
    %129 = tpu.matmul %128, %126, %cst_82 {dimension_numbers = #tpu.dot_dimension_numbers<[1], [0], [0], [1], [0, 0, 1, 1], [], []>} : vector<8x8xf32>, vector<8x256xf32>, vector<8x256xf32> -> vector<8x256xf32>
    %130 = arith.addf %123, %129 : vector<8x256xf32>
    %c0_83 = arith.constant 0 : index
    %c144 = arith.constant 144 : index
    %131 = vector.load %arg21[%c0_83, %c144] : memref<8x512xf32, #tpu.memory_space<vmem>>, vector<8x256xf32>
    %132 = vector.extract_strided_slice %83 {offsets = [7, 0, 0], sizes = [1, 8, 8], strides = [1, 1, 1]} : vector<9x8x8xf32> to vector<1x8x8xf32>
    %133 = vector.shape_cast %132 : vector<1x8x8xf32> to vector<8x8xf32>
    %cst_84 = arith.constant dense<0.000000e+00> : vector<8x256xf32>
    %134 = tpu.matmul %133, %131, %cst_84 {dimension_numbers = #tpu.dot_dimension_numbers<[1], [0], [0], [1], [0, 0, 1, 1], [], []>} : vector<8x8xf32>, vector<8x256xf32>, vector<8x256xf32> -> vector<8x256xf32>
    %135 = arith.addf %130, %134 : vector<8x256xf32>
    %c0_85 = arith.constant 0 : index
    %c145 = arith.constant 145 : index
    %136 = vector.load %arg21[%c0_85, %c145] : memref<8x512xf32, #tpu.memory_space<vmem>>, vector<8x256xf32>
    %137 = vector.broadcast %1 : vector<1x256xf32> to vector<8x256xf32>
    %138 = arith.mulf %136, %137 : vector<8x256xf32>
    %139 = vector.extract_strided_slice %83 {offsets = [8, 0, 0], sizes = [1, 8, 8], strides = [1, 1, 1]} : vector<9x8x8xf32> to vector<1x8x8xf32>
    %140 = vector.shape_cast %139 : vector<1x8x8xf32> to vector<8x8xf32>
    %cst_86 = arith.constant dense<0.000000e+00> : vector<8x256xf32>
    %141 = tpu.matmul %140, %138, %cst_86 {dimension_numbers = #tpu.dot_dimension_numbers<[1], [0], [0], [1], [0, 0, 1, 1], [], []>} : vector<8x8xf32>, vector<8x256xf32>, vector<8x256xf32> -> vector<8x256xf32>
    %142 = arith.addf %135, %141 : vector<8x256xf32>
    %c0_87 = arith.constant 0 : index
    %c0_88 = arith.constant 0 : index
    %c0_89 = arith.constant 0 : index
    %143 = vector.load %arg9[%c0_87, %c0_88, %c0_89] : memref<4x8x1xf32, #tpu.memory_space<vmem>>, vector<1x8x1xf32>
    %144 = vector.shape_cast %143 : vector<1x8x1xf32> to vector<8x1xf32>
    %145 = arith.addf %144, %27 : vector<8x1xf32>
    %146 = arith.addf %145, %47 : vector<8x1xf32>
    %147 = vector.broadcast %146 : vector<8x1xf32> to vector<8x256xf32>
    %148 = arith.addf %142, %147 : vector<8x256xf32>
    %c1_90 = arith.constant 1 : index
    %c0_91 = arith.constant 0 : index
    %c0_92 = arith.constant 0 : index
    %149 = vector.load %arg6[%c1_90, %c0_91, %c0_92] : memref<4x8x1xf32, #tpu.memory_space<vmem>>, vector<1x8x1xf32>
    %150 = vector.shape_cast %149 : vector<1x8x1xf32> to vector<8x1xf32>
    %c1_93 = arith.constant 1 : index
    %c0_94 = arith.constant 0 : index
    %c0_95 = arith.constant 0 : index
    %151 = vector.load %arg7[%c1_93, %c0_94, %c0_95] : memref<4x8x1xf32, #tpu.memory_space<vmem>>, vector<1x8x1xf32>
    %152 = vector.shape_cast %151 : vector<1x8x1xf32> to vector<8x1xf32>
    %cst_96 = arith.constant 5.000000e-01 : f32
    %153 = vector.broadcast %cst_96 : f32 to vector<8x256xf32>
    %154 = arith.mulf %153, %148 : vector<8x256xf32>
    %155 = math.tanh %154 : vector<8x256xf32>
    %cst_97 = arith.constant 1.000000e+00 : f32
    %156 = vector.broadcast %cst_97 : f32 to vector<8x256xf32>
    %157 = arith.addf %155, %156 : vector<8x256xf32>
    %cst_98 = arith.constant 5.000000e-01 : f32
    %158 = vector.broadcast %cst_98 : f32 to vector<8x256xf32>
    %159 = arith.mulf %158, %157 : vector<8x256xf32>
    %160 = arith.mulf %148, %159 : vector<8x256xf32>
    %cst_99 = arith.constant dense<0.000000e+00> : vector<8xf32>
    %161 = vector.multi_reduction <add>, %160, %cst_99 [1] : vector<8x256xf32> to vector<8xf32>
    %162 = vector.shape_cast %161 : vector<8xf32> to vector<8x1xf32>
    %cst_100 = arith.constant dense<0.000000e+00> : vector<8x1xf32>
    %163 = tpu.matmul %2, %162, %cst_100 {dimension_numbers = #tpu.dot_dimension_numbers<[1], [0], [0], [1], [0, 0, 1, 1], [], []>} : vector<8x8xf32>, vector<8x1xf32>, vector<8x1xf32> -> vector<8x1xf32>
    %cst_101 = arith.constant 0.001953125 : f32
    %164 = vector.broadcast %cst_101 : f32 to vector<8x1xf32>
    %165 = arith.mulf %163, %164 : vector<8x1xf32>
    %166 = vector.broadcast %165 : vector<8x1xf32> to vector<8x256xf32>
    %167 = arith.subf %160, %166 : vector<8x256xf32>
    %168 = arith.mulf %167, %167 : vector<8x256xf32>
    %cst_102 = arith.constant dense<0.000000e+00> : vector<8xf32>
    %169 = vector.multi_reduction <add>, %168, %cst_102 [1] : vector<8x256xf32> to vector<8xf32>
    %170 = vector.shape_cast %169 : vector<8xf32> to vector<8x1xf32>
    %cst_103 = arith.constant dense<0.000000e+00> : vector<8x1xf32>
    %171 = tpu.matmul %2, %170, %cst_103 {dimension_numbers = #tpu.dot_dimension_numbers<[1], [0], [0], [1], [0, 0, 1, 1], [], []>} : vector<8x8xf32>, vector<8x1xf32>, vector<8x1xf32> -> vector<8x1xf32>
    %cst_104 = arith.constant 0.001953125 : f32
    %172 = vector.broadcast %cst_104 : f32 to vector<8x1xf32>
    %173 = arith.mulf %171, %172 : vector<8x1xf32>
    %174 = vector.broadcast %150 : vector<8x1xf32> to vector<8x256xf32>
    %175 = arith.mulf %174, %167 : vector<8x256xf32>
    %cst_105 = arith.constant 9.99999974E-6 : f32
    %176 = vector.broadcast %cst_105 : f32 to vector<8x1xf32>
    %177 = arith.addf %173, %176 : vector<8x1xf32>
    %178 = math.rsqrt %177 : vector<8x1xf32>
    %179 = vector.broadcast %178 : vector<8x1xf32> to vector<8x256xf32>
    %180 = arith.mulf %175, %179 : vector<8x256xf32>
    %181 = vector.broadcast %152 : vector<8x1xf32> to vector<8x256xf32>
    %182 = arith.addf %180, %181 : vector<8x256xf32>
    %c1_106 = arith.constant 1 : index
    %c0_107 = arith.constant 0 : index
    %c0_108 = arith.constant 0 : index
    %c0_109 = arith.constant 0 : index
    %183 = vector.load %arg8[%c1_106, %c0_107, %c0_108, %c0_109] : memref<4x9x8x8xf32, #tpu.memory_space<vmem>>, vector<1x9x8x8xf32>
    %184 = vector.shape_cast %183 : vector<1x9x8x8xf32> to vector<9x8x8xf32>
    %c0_110 = arith.constant 0 : index
    %c128_111 = arith.constant 128 : index
    %185 = vector.load %arg21[%c0_110, %c128_111] : memref<8x512xf32, #tpu.memory_space<vmem>>, vector<8x256xf32>
    tpu.vector_store %arg21[%c0_110, %c128_111], %182 {strides = array<i32>} : memref<8x512xf32, #tpu.memory_space<vmem>>, vector<8x256xf32>,
    %cst_112 = arith.constant 0.000000e+00 : f32
    %186 = vector.broadcast %cst_112 : f32 to vector<8x256xf32>
    %c0_113 = arith.constant 0 : index
    %c111_114 = arith.constant 111 : index
    %187 = vector.load %arg21[%c0_113, %c111_114] : memref<8x512xf32, #tpu.memory_space<vmem>>, vector<8x256xf32>
    %188 = vector.broadcast %0 : vector<1x256xf32> to vector<8x256xf32>
    %189 = arith.mulf %187, %188 : vector<8x256xf32>
    %190 = vector.extract_strided_slice %184 {offsets = [0, 0, 0], sizes = [1, 8, 8], strides = [1, 1, 1]} : vector<9x8x8xf32> to vector<1x8x8xf32>
    %191 = vector.shape_cast %190 : vector<1x8x8xf32> to vector<8x8xf32>
    %cst_115 = arith.constant dense<0.000000e+00> : vector<8x256xf32>
    %192 = tpu.matmul %191, %189, %cst_115 {dimension_numbers = #tpu.dot_dimension_numbers<[1], [0], [0], [1], [0, 0, 1, 1], [], []>} : vector<8x8xf32>, vector<8x256xf32>, vector<8x256xf32> -> vector<8x256xf32>
    %193 = arith.addf %186, %192 : vector<8x256xf32>
    %c0_116 = arith.constant 0 : index
    %c112_117 = arith.constant 112 : index
    %194 = vector.load %arg21[%c0_116, %c112_117] : memref<8x512xf32, #tpu.memory_space<vmem>>, vector<8x256xf32>
    %195 = vector.extract_strided_slice %184 {offsets = [1, 0, 0], sizes = [1, 8, 8], strides = [1, 1, 1]} : vector<9x8x8xf32> to vector<1x8x8xf32>
    %196 = vector.shape_cast %195 : vector<1x8x8xf32> to vector<8x8xf32>
    %cst_118 = arith.constant dense<0.000000e+00> : vector<8x256xf32>
    %197 = tpu.matmul %196, %194, %cst_118 {dimension_numbers = #tpu.dot_dimension_numbers<[1], [0], [0], [1], [0, 0, 1, 1], [], []>} : vector<8x8xf32>, vector<8x256xf32>, vector<8x256xf32> -> vector<8x256xf32>
    %198 = arith.addf %193, %197 : vector<8x256xf32>
    %c0_119 = arith.constant 0 : index
    %c113_120 = arith.constant 113 : index
    %199 = vector.load %arg21[%c0_119, %c113_120] : memref<8x512xf32, #tpu.memory_space<vmem>>, vector<8x256xf32>
    %200 = vector.broadcast %1 : vector<1x256xf32> to vector<8x256xf32>
    %201 = arith.mulf %199, %200 : vector<8x256xf32>
    %202 = vector.extract_strided_slice %184 {offsets = [2, 0, 0], sizes = [1, 8, 8], strides = [1, 1, 1]} : vector<9x8x8xf32> to vector<1x8x8xf32>
    %203 = vector.shape_cast %202 : vector<1x8x8xf32> to vector<8x8xf32>
    %cst_121 = arith.constant dense<0.000000e+00> : vector<8x256xf32>
    %204 = tpu.matmul %203, %201, %cst_121 {dimension_numbers = #tpu.dot_dimension_numbers<[1], [0], [0], [1], [0, 0, 1, 1], [], []>} : vector<8x8xf32>, vector<8x256xf32>, vector<8x256xf32> -> vector<8x256xf32>
    %205 = arith.addf %198, %204 : vector<8x256xf32>
    %c0_122 = arith.constant 0 : index
    %c127_123 = arith.constant 127 : index
    %206 = vector.load %arg21[%c0_122, %c127_123] : memref<8x512xf32, #tpu.memory_space<vmem>>, vector<8x256xf32>
    %207 = vector.broadcast %0 : vector<1x256xf32> to vector<8x256xf32>
    %208 = arith.mulf %206, %207 : vector<8x256xf32>
    %209 = vector.extract_strided_slice %184 {offsets = [3, 0, 0], sizes = [1, 8, 8], strides = [1, 1, 1]} : vector<9x8x8xf32> to vector<1x8x8xf32>
    %210 = vector.shape_cast %209 : vector<1x8x8xf32> to vector<8x8xf32>
    %cst_124 = arith.constant dense<0.000000e+00> : vector<8x256xf32>
    %211 = tpu.matmul %210, %208, %cst_124 {dimension_numbers = #tpu.dot_dimension_numbers<[1], [0], [0], [1], [0, 0, 1, 1], [], []>} : vector<8x8xf32>, vector<8x256xf32>, vector<8x256xf32> -> vector<8x256xf32>
    %212 = arith.addf %205, %211 : vector<8x256xf32>
    %c0_125 = arith.constant 0 : index
    %c128_126 = arith.constant 128 : index
    %213 = vector.load %arg21[%c0_125, %c128_126] : memref<8x512xf32, #tpu.memory_space<vmem>>, vector<8x256xf32>
    %214 = vector.extract_strided_slice %184 {offsets = [4, 0, 0], sizes = [1, 8, 8], strides = [1, 1, 1]} : vector<9x8x8xf32> to vector<1x8x8xf32>
    %215 = vector.shape_cast %214 : vector<1x8x8xf32> to vector<8x8xf32>
    %cst_127 = arith.constant dense<0.000000e+00> : vector<8x256xf32>
    %216 = tpu.matmul %215, %213, %cst_127 {dimension_numbers = #tpu.dot_dimension_numbers<[1], [0], [0], [1], [0, 0, 1, 1], [], []>} : vector<8x8xf32>, vector<8x256xf32>, vector<8x256xf32> -> vector<8x256xf32>
    %217 = arith.addf %212, %216 : vector<8x256xf32>
    %c0_128 = arith.constant 0 : index
    %c129_129 = arith.constant 129 : index
    %218 = vector.load %arg21[%c0_128, %c129_129] : memref<8x512xf32, #tpu.memory_space<vmem>>, vector<8x256xf32>
    %219 = vector.broadcast %1 : vector<1x256xf32> to vector<8x256xf32>
    %220 = arith.mulf %218, %219 : vector<8x256xf32>
    %221 = vector.extract_strided_slice %184 {offsets = [5, 0, 0], sizes = [1, 8, 8], strides = [1, 1, 1]} : vector<9x8x8xf32> to vector<1x8x8xf32>
    %222 = vector.shape_cast %221 : vector<1x8x8xf32> to vector<8x8xf32>
    %cst_130 = arith.constant dense<0.000000e+00> : vector<8x256xf32>
    %223 = tpu.matmul %222, %220, %cst_130 {dimension_numbers = #tpu.dot_dimension_numbers<[1], [0], [0], [1], [0, 0, 1, 1], [], []>} : vector<8x8xf32>, vector<8x256xf32>, vector<8x256xf32> -> vector<8x256xf32>
    %224 = arith.addf %217, %223 : vector<8x256xf32>
    %c0_131 = arith.constant 0 : index
    %c143_132 = arith.constant 143 : index
    %225 = vector.load %arg21[%c0_131, %c143_132] : memref<8x512xf32, #tpu.memory_space<vmem>>, vector<8x256xf32>
    %226 = vector.broadcast %0 : vector<1x256xf32> to vector<8x256xf32>
    %227 = arith.mulf %225, %226 : vector<8x256xf32>
    %228 = vector.extract_strided_slice %184 {offsets = [6, 0, 0], sizes = [1, 8, 8], strides = [1, 1, 1]} : vector<9x8x8xf32> to vector<1x8x8xf32>
    %229 = vector.shape_cast %228 : vector<1x8x8xf32> to vector<8x8xf32>
    %cst_133 = arith.constant dense<0.000000e+00> : vector<8x256xf32>
    %230 = tpu.matmul %229, %227, %cst_133 {dimension_numbers = #tpu.dot_dimension_numbers<[1], [0], [0], [1], [0, 0, 1, 1], [], []>} : vector<8x8xf32>, vector<8x256xf32>, vector<8x256xf32> -> vector<8x256xf32>
    %231 = arith.addf %224, %230 : vector<8x256xf32>
    %c0_134 = arith.constant 0 : index
    %c144_135 = arith.constant 144 : index
    %232 = vector.load %arg21[%c0_134, %c144_135] : memref<8x512xf32, #tpu.memory_space<vmem>>, vector<8x256xf32>
    %233 = vector.extract_strided_slice %184 {offsets = [7, 0, 0], sizes = [1, 8, 8], strides = [1, 1, 1]} : vector<9x8x8xf32> to vector<1x8x8xf32>
    %234 = vector.shape_cast %233 : vector<1x8x8xf32> to vector<8x8xf32>
    %cst_136 = arith.constant dense<0.000000e+00> : vector<8x256xf32>
    %235 = tpu.matmul %234, %232, %cst_136 {dimension_numbers = #tpu.dot_dimension_numbers<[1], [0], [0], [1], [0, 0, 1, 1], [], []>} : vector<8x8xf32>, vector<8x256xf32>, vector<8x256xf32> -> vector<8x256xf32>
    %236 = arith.addf %231, %235 : vector<8x256xf32>
    %c0_137 = arith.constant 0 : index
    %c145_138 = arith.constant 145 : index
    %237 = vector.load %arg21[%c0_137, %c145_138] : memref<8x512xf32, #tpu.memory_space<vmem>>, vector<8x256xf32>
    %238 = vector.broadcast %1 : vector<1x256xf32> to vector<8x256xf32>
    %239 = arith.mulf %237, %238 : vector<8x256xf32>
    %240 = vector.extract_strided_slice %184 {offsets = [8, 0, 0], sizes = [1, 8, 8], strides = [1, 1, 1]} : vector<9x8x8xf32> to vector<1x8x8xf32>
    %241 = vector.shape_cast %240 : vector<1x8x8xf32> to vector<8x8xf32>
    %cst_139 = arith.constant dense<0.000000e+00> : vector<8x256xf32>
    %242 = tpu.matmul %241, %239, %cst_139 {dimension_numbers = #tpu.dot_dimension_numbers<[1], [0], [0], [1], [0, 0, 1, 1], [], []>} : vector<8x8xf32>, vector<8x256xf32>, vector<8x256xf32> -> vector<8x256xf32>
    %243 = arith.addf %236, %242 : vector<8x256xf32>
    %c1_140 = arith.constant 1 : index
    %c0_141 = arith.constant 0 : index
    %c0_142 = arith.constant 0 : index
    %244 = vector.load %arg9[%c1_140, %c0_141, %c0_142] : memref<4x8x1xf32, #tpu.memory_space<vmem>>, vector<1x8x1xf32>
    %245 = vector.shape_cast %244 : vector<1x8x1xf32> to vector<8x1xf32>
    %246 = vector.broadcast %245 : vector<8x1xf32> to vector<8x256xf32>
    %247 = arith.addf %243, %246 : vector<8x256xf32>
    %248 = arith.addf %247, %5 : vector<8x256xf32>
    %c1_143 = arith.constant 1 : index
    %c0_144 = arith.constant 0 : index
    %c0_145 = arith.constant 0 : index
    %249 = vector.load %arg10[%c1_143, %c0_144, %c0_145] : memref<2x64x64xf32, #tpu.memory_space<vmem>>, vector<1x64x64xf32>
    %250 = vector.shape_cast %249 : vector<1x64x64xf32> to vector<64x64xf32>
    %cst_146 = arith.constant dense<0.000000e+00> : vector<64x1xf32>
    %251 = tpu.matmul %250, %6, %cst_146 {dimension_numbers = #tpu.dot_dimension_numbers<[1], [0], [0], [1], [0, 0, 1, 1], [], []>} : vector<64x64xf32>, vector<64x1xf32>, vector<64x1xf32> -> vector<64x1xf32>
    %c1_147 = arith.constant 1 : index
    %c0_148 = arith.constant 0 : index
    %c0_149 = arith.constant 0 : index
    %252 = vector.load %arg11[%c1_147, %c0_148, %c0_149] : memref<2x64x1xf32, #tpu.memory_space<vmem>>, vector<1x64x1xf32>
    %253 = vector.shape_cast %252 : vector<1x64x1xf32> to vector<64x1xf32>
    %254 = arith.addf %251, %253 : vector<64x1xf32>
    %cst_150 = arith.constant 5.000000e-01 : f32
    %255 = vector.broadcast %cst_150 : f32 to vector<64x1xf32>
    %256 = arith.mulf %255, %254 : vector<64x1xf32>
    %257 = math.tanh %256 : vector<64x1xf32>
    %cst_151 = arith.constant 1.000000e+00 : f32
    %258 = vector.broadcast %cst_151 : f32 to vector<64x1xf32>
    %259 = arith.addf %257, %258 : vector<64x1xf32>
    %cst_152 = arith.constant 5.000000e-01 : f32
    %260 = vector.broadcast %cst_152 : f32 to vector<64x1xf32>
    %261 = arith.mulf %260, %259 : vector<64x1xf32>
    %262 = arith.mulf %254, %261 : vector<64x1xf32>
    %c1_153 = arith.constant 1 : index
    %c0_154 = arith.constant 0 : index
    %c0_155 = arith.constant 0 : index
    %263 = vector.load %arg12[%c1_153, %c0_154, %c0_155] : memref<2x8x64xf32, #tpu.memory_space<vmem>>, vector<1x8x64xf32>
    %264 = vector.shape_cast %263 : vector<1x8x64xf32> to vector<8x64xf32>
    %cst_156 = arith.constant dense<0.000000e+00> : vector<8x1xf32>
    %265 = tpu.matmul %264, %262, %cst_156 {dimension_numbers = #tpu.dot_dimension_numbers<[1], [0], [0], [1], [0, 0, 1, 1], [], []>} : vector<8x64xf32>, vector<64x1xf32>, vector<8x1xf32> -> vector<8x1xf32>
    %c1_157 = arith.constant 1 : index
    %c0_158 = arith.constant 0 : index
    %c0_159 = arith.constant 0 : index
    %266 = vector.load %arg13[%c1_157, %c0_158, %c0_159] : memref<2x8x1xf32, #tpu.memory_space<vmem>>, vector<1x8x1xf32>
    %267 = vector.shape_cast %266 : vector<1x8x1xf32> to vector<8x1xf32>
    %268 = arith.addf %265, %267 : vector<8x1xf32>
    %c1_160 = arith.constant 1 : index
    %c0_161 = arith.constant 0 : index
    %c0_162 = arith.constant 0 : index
    %269 = vector.load %arg14[%c1_160, %c0_161, %c0_162] : memref<2x64x64xf32, #tpu.memory_space<vmem>>, vector<1x64x64xf32>
    %270 = vector.shape_cast %269 : vector<1x64x64xf32> to vector<64x64xf32>
    %cst_163 = arith.constant dense<0.000000e+00> : vector<64x1xf32>
    %271 = tpu.matmul %270, %7, %cst_163 {dimension_numbers = #tpu.dot_dimension_numbers<[1], [0], [0], [1], [0, 0, 1, 1], [], []>} : vector<64x64xf32>, vector<64x1xf32>, vector<64x1xf32> -> vector<64x1xf32>
    %c1_164 = arith.constant 1 : index
    %c0_165 = arith.constant 0 : index
    %c0_166 = arith.constant 0 : index
    %272 = vector.load %arg15[%c1_164, %c0_165, %c0_166] : memref<2x64x1xf32, #tpu.memory_space<vmem>>, vector<1x64x1xf32>
    %273 = vector.shape_cast %272 : vector<1x64x1xf32> to vector<64x1xf32>
    %274 = arith.addf %271, %273 : vector<64x1xf32>
    %cst_167 = arith.constant 5.000000e-01 : f32
    %275 = vector.broadcast %cst_167 : f32 to vector<64x1xf32>
    %276 = arith.mulf %275, %274 : vector<64x1xf32>
    %277 = math.tanh %276 : vector<64x1xf32>
    %cst_168 = arith.constant 1.000000e+00 : f32
    %278 = vector.broadcast %cst_168 : f32 to vector<64x1xf32>
    %279 = arith.addf %277, %278 : vector<64x1xf32>
    %cst_169 = arith.constant 5.000000e-01 : f32
    %280 = vector.broadcast %cst_169 : f32 to vector<64x1xf32>
    %281 = arith.mulf %280, %279 : vector<64x1xf32>
    %282 = arith.mulf %274, %281 : vector<64x1xf32>
    %c1_170 = arith.constant 1 : index
    %c0_171 = arith.constant 0 : index
    %c0_172 = arith.constant 0 : index
    %283 = vector.load %arg16[%c1_170, %c0_171, %c0_172] : memref<2x8x64xf32, #tpu.memory_space<vmem>>, vector<1x8x64xf32>
    %284 = vector.shape_cast %283 : vector<1x8x64xf32> to vector<8x64xf32>
    %cst_173 = arith.constant dense<0.000000e+00> : vector<8x1xf32>
    %285 = tpu.matmul %284, %282, %cst_173 {dimension_numbers = #tpu.dot_dimension_numbers<[1], [0], [0], [1], [0, 0, 1, 1], [], []>} : vector<8x64xf32>, vector<64x1xf32>, vector<8x1xf32> -> vector<8x1xf32>
    %c1_174 = arith.constant 1 : index
    %c0_175 = arith.constant 0 : index
    %c0_176 = arith.constant 0 : index
    %286 = vector.load %arg17[%c1_174, %c0_175, %c0_176] : memref<2x8x1xf32, #tpu.memory_space<vmem>>, vector<1x8x1xf32>
    %287 = vector.shape_cast %286 : vector<1x8x1xf32> to vector<8x1xf32>
    %288 = arith.addf %285, %287 : vector<8x1xf32>
    %c2 = arith.constant 2 : index
    %c0_177 = arith.constant 0 : index
    %c0_178 = arith.constant 0 : index
    %289 = vector.load %arg6[%c2, %c0_177, %c0_178] : memref<4x8x1xf32, #tpu.memory_space<vmem>>, vector<1x8x1xf32>
    %290 = vector.shape_cast %289 : vector<1x8x1xf32> to vector<8x1xf32>
    %c2_179 = arith.constant 2 : index
    %c0_180 = arith.constant 0 : index
    %c0_181 = arith.constant 0 : index
    %291 = vector.load %arg7[%c2_179, %c0_180, %c0_181] : memref<4x8x1xf32, #tpu.memory_space<vmem>>, vector<1x8x1xf32>
    %292 = vector.shape_cast %291 : vector<1x8x1xf32> to vector<8x1xf32>
    %cst_182 = arith.constant 5.000000e-01 : f32
    %293 = vector.broadcast %cst_182 : f32 to vector<8x256xf32>
    %294 = arith.mulf %293, %248 : vector<8x256xf32>
    %295 = math.tanh %294 : vector<8x256xf32>
    %cst_183 = arith.constant 1.000000e+00 : f32
    %296 = vector.broadcast %cst_183 : f32 to vector<8x256xf32>
    %297 = arith.addf %295, %296 : vector<8x256xf32>
    %cst_184 = arith.constant 5.000000e-01 : f32
    %298 = vector.broadcast %cst_184 : f32 to vector<8x256xf32>
    %299 = arith.mulf %298, %297 : vector<8x256xf32>
    %300 = arith.mulf %248, %299 : vector<8x256xf32>
    %cst_185 = arith.constant dense<0.000000e+00> : vector<8xf32>
    %301 = vector.multi_reduction <add>, %300, %cst_185 [1] : vector<8x256xf32> to vector<8xf32>
    %302 = vector.shape_cast %301 : vector<8xf32> to vector<8x1xf32>
    %cst_186 = arith.constant dense<0.000000e+00> : vector<8x1xf32>
    %303 = tpu.matmul %2, %302, %cst_186 {dimension_numbers = #tpu.dot_dimension_numbers<[1], [0], [0], [1], [0, 0, 1, 1], [], []>} : vector<8x8xf32>, vector<8x1xf32>, vector<8x1xf32> -> vector<8x1xf32>
    %cst_187 = arith.constant 0.001953125 : f32
    %304 = vector.broadcast %cst_187 : f32 to vector<8x1xf32>
    %305 = arith.mulf %303, %304 : vector<8x1xf32>
    %306 = vector.broadcast %305 : vector<8x1xf32> to vector<8x256xf32>
    %307 = arith.subf %300, %306 : vector<8x256xf32>
    %308 = arith.mulf %307, %307 : vector<8x256xf32>
    %cst_188 = arith.constant dense<0.000000e+00> : vector<8xf32>
    %309 = vector.multi_reduction <add>, %308, %cst_188 [1] : vector<8x256xf32> to vector<8xf32>
    %310 = vector.shape_cast %309 : vector<8xf32> to vector<8x1xf32>
    %cst_189 = arith.constant dense<0.000000e+00> : vector<8x1xf32>
    %311 = tpu.matmul %2, %310, %cst_189 {dimension_numbers = #tpu.dot_dimension_numbers<[1], [0], [0], [1], [0, 0, 1, 1], [], []>} : vector<8x8xf32>, vector<8x1xf32>, vector<8x1xf32> -> vector<8x1xf32>
    %cst_190 = arith.constant 0.001953125 : f32
    %312 = vector.broadcast %cst_190 : f32 to vector<8x1xf32>
    %313 = arith.mulf %311, %312 : vector<8x1xf32>
    %314 = vector.broadcast %290 : vector<8x1xf32> to vector<8x256xf32>
    %315 = arith.mulf %314, %307 : vector<8x256xf32>
    %cst_191 = arith.constant 9.99999974E-6 : f32
    %316 = vector.broadcast %cst_191 : f32 to vector<8x1xf32>
    %317 = arith.addf %313, %316 : vector<8x1xf32>
    %318 = math.rsqrt %317 : vector<8x1xf32>
    %319 = vector.broadcast %318 : vector<8x1xf32> to vector<8x256xf32>
    %320 = arith.mulf %315, %319 : vector<8x256xf32>
    %321 = vector.broadcast %292 : vector<8x1xf32> to vector<8x256xf32>
    %322 = arith.addf %320, %321 : vector<8x256xf32>
    %c2_192 = arith.constant 2 : index
    %c0_193 = arith.constant 0 : index
    %c0_194 = arith.constant 0 : index
    %c0_195 = arith.constant 0 : index
    %323 = vector.load %arg8[%c2_192, %c0_193, %c0_194, %c0_195] : memref<4x9x8x8xf32, #tpu.memory_space<vmem>>, vector<1x9x8x8xf32>
    %324 = vector.shape_cast %323 : vector<1x9x8x8xf32> to vector<9x8x8xf32>
    %c0_196 = arith.constant 0 : index
    %c128_197 = arith.constant 128 : index
    %325 = vector.load %arg21[%c0_196, %c128_197] : memref<8x512xf32, #tpu.memory_space<vmem>>, vector<8x256xf32>
    tpu.vector_store %arg21[%c0_196, %c128_197], %322 {strides = array<i32>} : memref<8x512xf32, #tpu.memory_space<vmem>>, vector<8x256xf32>,
    %cst_198 = arith.constant 0.000000e+00 : f32
    %326 = vector.broadcast %cst_198 : f32 to vector<8x256xf32>
    %c0_199 = arith.constant 0 : index
    %c111_200 = arith.constant 111 : index
    %327 = vector.load %arg21[%c0_199, %c111_200] : memref<8x512xf32, #tpu.memory_space<vmem>>, vector<8x256xf32>
    %328 = vector.broadcast %0 : vector<1x256xf32> to vector<8x256xf32>
    %329 = arith.mulf %327, %328 : vector<8x256xf32>
    %330 = vector.extract_strided_slice %324 {offsets = [0, 0, 0], sizes = [1, 8, 8], strides = [1, 1, 1]} : vector<9x8x8xf32> to vector<1x8x8xf32>
    %331 = vector.shape_cast %330 : vector<1x8x8xf32> to vector<8x8xf32>
    %cst_201 = arith.constant dense<0.000000e+00> : vector<8x256xf32>
    %332 = tpu.matmul %331, %329, %cst_201 {dimension_numbers = #tpu.dot_dimension_numbers<[1], [0], [0], [1], [0, 0, 1, 1], [], []>} : vector<8x8xf32>, vector<8x256xf32>, vector<8x256xf32> -> vector<8x256xf32>
    %333 = arith.addf %326, %332 : vector<8x256xf32>
    %c0_202 = arith.constant 0 : index
    %c112_203 = arith.constant 112 : index
    %334 = vector.load %arg21[%c0_202, %c112_203] : memref<8x512xf32, #tpu.memory_space<vmem>>, vector<8x256xf32>
    %335 = vector.extract_strided_slice %324 {offsets = [1, 0, 0], sizes = [1, 8, 8], strides = [1, 1, 1]} : vector<9x8x8xf32> to vector<1x8x8xf32>
    %336 = vector.shape_cast %335 : vector<1x8x8xf32> to vector<8x8xf32>
    %cst_204 = arith.constant dense<0.000000e+00> : vector<8x256xf32>
    %337 = tpu.matmul %336, %334, %cst_204 {dimension_numbers = #tpu.dot_dimension_numbers<[1], [0], [0], [1], [0, 0, 1, 1], [], []>} : vector<8x8xf32>, vector<8x256xf32>, vector<8x256xf32> -> vector<8x256xf32>
    %338 = arith.addf %333, %337 : vector<8x256xf32>
    %c0_205 = arith.constant 0 : index
    %c113_206 = arith.constant 113 : index
    %339 = vector.load %arg21[%c0_205, %c113_206] : memref<8x512xf32, #tpu.memory_space<vmem>>, vector<8x256xf32>
    %340 = vector.broadcast %1 : vector<1x256xf32> to vector<8x256xf32>
    %341 = arith.mulf %339, %340 : vector<8x256xf32>
    %342 = vector.extract_strided_slice %324 {offsets = [2, 0, 0], sizes = [1, 8, 8], strides = [1, 1, 1]} : vector<9x8x8xf32> to vector<1x8x8xf32>
    %343 = vector.shape_cast %342 : vector<1x8x8xf32> to vector<8x8xf32>
    %cst_207 = arith.constant dense<0.000000e+00> : vector<8x256xf32>
    %344 = tpu.matmul %343, %341, %cst_207 {dimension_numbers = #tpu.dot_dimension_numbers<[1], [0], [0], [1], [0, 0, 1, 1], [], []>} : vector<8x8xf32>, vector<8x256xf32>, vector<8x256xf32> -> vector<8x256xf32>
    %345 = arith.addf %338, %344 : vector<8x256xf32>
    %c0_208 = arith.constant 0 : index
    %c127_209 = arith.constant 127 : index
    %346 = vector.load %arg21[%c0_208, %c127_209] : memref<8x512xf32, #tpu.memory_space<vmem>>, vector<8x256xf32>
    %347 = vector.broadcast %0 : vector<1x256xf32> to vector<8x256xf32>
    %348 = arith.mulf %346, %347 : vector<8x256xf32>
    %349 = vector.extract_strided_slice %324 {offsets = [3, 0, 0], sizes = [1, 8, 8], strides = [1, 1, 1]} : vector<9x8x8xf32> to vector<1x8x8xf32>
    %350 = vector.shape_cast %349 : vector<1x8x8xf32> to vector<8x8xf32>
    %cst_210 = arith.constant dense<0.000000e+00> : vector<8x256xf32>
    %351 = tpu.matmul %350, %348, %cst_210 {dimension_numbers = #tpu.dot_dimension_numbers<[1], [0], [0], [1], [0, 0, 1, 1], [], []>} : vector<8x8xf32>, vector<8x256xf32>, vector<8x256xf32> -> vector<8x256xf32>
    %352 = arith.addf %345, %351 : vector<8x256xf32>
    %c0_211 = arith.constant 0 : index
    %c128_212 = arith.constant 128 : index
    %353 = vector.load %arg21[%c0_211, %c128_212] : memref<8x512xf32, #tpu.memory_space<vmem>>, vector<8x256xf32>
    %354 = vector.extract_strided_slice %324 {offsets = [4, 0, 0], sizes = [1, 8, 8], strides = [1, 1, 1]} : vector<9x8x8xf32> to vector<1x8x8xf32>
    %355 = vector.shape_cast %354 : vector<1x8x8xf32> to vector<8x8xf32>
    %cst_213 = arith.constant dense<0.000000e+00> : vector<8x256xf32>
    %356 = tpu.matmul %355, %353, %cst_213 {dimension_numbers = #tpu.dot_dimension_numbers<[1], [0], [0], [1], [0, 0, 1, 1], [], []>} : vector<8x8xf32>, vector<8x256xf32>, vector<8x256xf32> -> vector<8x256xf32>
    %357 = arith.addf %352, %356 : vector<8x256xf32>
    %c0_214 = arith.constant 0 : index
    %c129_215 = arith.constant 129 : index
    %358 = vector.load %arg21[%c0_214, %c129_215] : memref<8x512xf32, #tpu.memory_space<vmem>>, vector<8x256xf32>
    %359 = vector.broadcast %1 : vector<1x256xf32> to vector<8x256xf32>
    %360 = arith.mulf %358, %359 : vector<8x256xf32>
    %361 = vector.extract_strided_slice %324 {offsets = [5, 0, 0], sizes = [1, 8, 8], strides = [1, 1, 1]} : vector<9x8x8xf32> to vector<1x8x8xf32>
    %362 = vector.shape_cast %361 : vector<1x8x8xf32> to vector<8x8xf32>
    %cst_216 = arith.constant dense<0.000000e+00> : vector<8x256xf32>
    %363 = tpu.matmul %362, %360, %cst_216 {dimension_numbers = #tpu.dot_dimension_numbers<[1], [0], [0], [1], [0, 0, 1, 1], [], []>} : vector<8x8xf32>, vector<8x256xf32>, vector<8x256xf32> -> vector<8x256xf32>
    %364 = arith.addf %357, %363 : vector<8x256xf32>
    %c0_217 = arith.constant 0 : index
    %c143_218 = arith.constant 143 : index
    %365 = vector.load %arg21[%c0_217, %c143_218] : memref<8x512xf32, #tpu.memory_space<vmem>>, vector<8x256xf32>
    %366 = vector.broadcast %0 : vector<1x256xf32> to vector<8x256xf32>
    %367 = arith.mulf %365, %366 : vector<8x256xf32>
    %368 = vector.extract_strided_slice %324 {offsets = [6, 0, 0], sizes = [1, 8, 8], strides = [1, 1, 1]} : vector<9x8x8xf32> to vector<1x8x8xf32>
    %369 = vector.shape_cast %368 : vector<1x8x8xf32> to vector<8x8xf32>
    %cst_219 = arith.constant dense<0.000000e+00> : vector<8x256xf32>
    %370 = tpu.matmul %369, %367, %cst_219 {dimension_numbers = #tpu.dot_dimension_numbers<[1], [0], [0], [1], [0, 0, 1, 1], [], []>} : vector<8x8xf32>, vector<8x256xf32>, vector<8x256xf32> -> vector<8x256xf32>
    %371 = arith.addf %364, %370 : vector<8x256xf32>
    %c0_220 = arith.constant 0 : index
    %c144_221 = arith.constant 144 : index
    %372 = vector.load %arg21[%c0_220, %c144_221] : memref<8x512xf32, #tpu.memory_space<vmem>>, vector<8x256xf32>
    %373 = vector.extract_strided_slice %324 {offsets = [7, 0, 0], sizes = [1, 8, 8], strides = [1, 1, 1]} : vector<9x8x8xf32> to vector<1x8x8xf32>
    %374 = vector.shape_cast %373 : vector<1x8x8xf32> to vector<8x8xf32>
    %cst_222 = arith.constant dense<0.000000e+00> : vector<8x256xf32>
    %375 = tpu.matmul %374, %372, %cst_222 {dimension_numbers = #tpu.dot_dimension_numbers<[1], [0], [0], [1], [0, 0, 1, 1], [], []>} : vector<8x8xf32>, vector<8x256xf32>, vector<8x256xf32> -> vector<8x256xf32>
    %376 = arith.addf %371, %375 : vector<8x256xf32>
    %c0_223 = arith.constant 0 : index
    %c145_224 = arith.constant 145 : index
    %377 = vector.load %arg21[%c0_223, %c145_224] : memref<8x512xf32, #tpu.memory_space<vmem>>, vector<8x256xf32>
    %378 = vector.broadcast %1 : vector<1x256xf32> to vector<8x256xf32>
    %379 = arith.mulf %377, %378 : vector<8x256xf32>
    %380 = vector.extract_strided_slice %324 {offsets = [8, 0, 0], sizes = [1, 8, 8], strides = [1, 1, 1]} : vector<9x8x8xf32> to vector<1x8x8xf32>
    %381 = vector.shape_cast %380 : vector<1x8x8xf32> to vector<8x8xf32>
    %cst_225 = arith.constant dense<0.000000e+00> : vector<8x256xf32>
    %382 = tpu.matmul %381, %379, %cst_225 {dimension_numbers = #tpu.dot_dimension_numbers<[1], [0], [0], [1], [0, 0, 1, 1], [], []>} : vector<8x8xf32>, vector<8x256xf32>, vector<8x256xf32> -> vector<8x256xf32>
    %383 = arith.addf %376, %382 : vector<8x256xf32>
    %c2_226 = arith.constant 2 : index
    %c0_227 = arith.constant 0 : index
    %c0_228 = arith.constant 0 : index
    %384 = vector.load %arg9[%c2_226, %c0_227, %c0_228] : memref<4x8x1xf32, #tpu.memory_space<vmem>>, vector<1x8x1xf32>
    %385 = vector.shape_cast %384 : vector<1x8x1xf32> to vector<8x1xf32>
    %386 = arith.addf %385, %268 : vector<8x1xf32>
    %387 = arith.addf %386, %288 : vector<8x1xf32>
    %388 = vector.broadcast %387 : vector<8x1xf32> to vector<8x256xf32>
    %389 = arith.addf %383, %388 : vector<8x256xf32>
    %c3 = arith.constant 3 : index
    %c0_229 = arith.constant 0 : index
    %c0_230 = arith.constant 0 : index
    %390 = vector.load %arg6[%c3, %c0_229, %c0_230] : memref<4x8x1xf32, #tpu.memory_space<vmem>>, vector<1x8x1xf32>
    %391 = vector.shape_cast %390 : vector<1x8x1xf32> to vector<8x1xf32>
    %c3_231 = arith.constant 3 : index
    %c0_232 = arith.constant 0 : index
    %c0_233 = arith.constant 0 : index
    %392 = vector.load %arg7[%c3_231, %c0_232, %c0_233] : memref<4x8x1xf32, #tpu.memory_space<vmem>>, vector<1x8x1xf32>
    %393 = vector.shape_cast %392 : vector<1x8x1xf32> to vector<8x1xf32>
    %cst_234 = arith.constant 5.000000e-01 : f32
    %394 = vector.broadcast %cst_234 : f32 to vector<8x256xf32>
    %395 = arith.mulf %394, %389 : vector<8x256xf32>
    %396 = math.tanh %395 : vector<8x256xf32>
    %cst_235 = arith.constant 1.000000e+00 : f32
    %397 = vector.broadcast %cst_235 : f32 to vector<8x256xf32>
    %398 = arith.addf %396, %397 : vector<8x256xf32>
    %cst_236 = arith.constant 5.000000e-01 : f32
    %399 = vector.broadcast %cst_236 : f32 to vector<8x256xf32>
    %400 = arith.mulf %399, %398 : vector<8x256xf32>
    %401 = arith.mulf %389, %400 : vector<8x256xf32>
    %cst_237 = arith.constant dense<0.000000e+00> : vector<8xf32>
    %402 = vector.multi_reduction <add>, %401, %cst_237 [1] : vector<8x256xf32> to vector<8xf32>
    %403 = vector.shape_cast %402 : vector<8xf32> to vector<8x1xf32>
    %cst_238 = arith.constant dense<0.000000e+00> : vector<8x1xf32>
    %404 = tpu.matmul %2, %403, %cst_238 {dimension_numbers = #tpu.dot_dimension_numbers<[1], [0], [0], [1], [0, 0, 1, 1], [], []>} : vector<8x8xf32>, vector<8x1xf32>, vector<8x1xf32> -> vector<8x1xf32>
    %cst_239 = arith.constant 0.001953125 : f32
    %405 = vector.broadcast %cst_239 : f32 to vector<8x1xf32>
    %406 = arith.mulf %404, %405 : vector<8x1xf32>
    %407 = vector.broadcast %406 : vector<8x1xf32> to vector<8x256xf32>
    %408 = arith.subf %401, %407 : vector<8x256xf32>
    %409 = arith.mulf %408, %408 : vector<8x256xf32>
    %cst_240 = arith.constant dense<0.000000e+00> : vector<8xf32>
    %410 = vector.multi_reduction <add>, %409, %cst_240 [1] : vector<8x256xf32> to vector<8xf32>
    %411 = vector.shape_cast %410 : vector<8xf32> to vector<8x1xf32>
    %cst_241 = arith.constant dense<0.000000e+00> : vector<8x1xf32>
    %412 = tpu.matmul %2, %411, %cst_241 {dimension_numbers = #tpu.dot_dimension_numbers<[1], [0], [0], [1], [0, 0, 1, 1], [], []>} : vector<8x8xf32>, vector<8x1xf32>, vector<8x1xf32> -> vector<8x1xf32>
    %cst_242 = arith.constant 0.001953125 : f32
    %413 = vector.broadcast %cst_242 : f32 to vector<8x1xf32>
    %414 = arith.mulf %412, %413 : vector<8x1xf32>
    %415 = vector.broadcast %391 : vector<8x1xf32> to vector<8x256xf32>
    %416 = arith.mulf %415, %408 : vector<8x256xf32>
    %cst_243 = arith.constant 9.99999974E-6 : f32
    %417 = vector.broadcast %cst_243 : f32 to vector<8x1xf32>
    %418 = arith.addf %414, %417 : vector<8x1xf32>
    %419 = math.rsqrt %418 : vector<8x1xf32>
    %420 = vector.broadcast %419 : vector<8x1xf32> to vector<8x256xf32>
    %421 = arith.mulf %416, %420 : vector<8x256xf32>
    %422 = vector.broadcast %393 : vector<8x1xf32> to vector<8x256xf32>
    %423 = arith.addf %421, %422 : vector<8x256xf32>
    %c3_244 = arith.constant 3 : index
    %c0_245 = arith.constant 0 : index
    %c0_246 = arith.constant 0 : index
    %c0_247 = arith.constant 0 : index
    %424 = vector.load %arg8[%c3_244, %c0_245, %c0_246, %c0_247] : memref<4x9x8x8xf32, #tpu.memory_space<vmem>>, vector<1x9x8x8xf32>
    %425 = vector.shape_cast %424 : vector<1x9x8x8xf32> to vector<9x8x8xf32>
    %c0_248 = arith.constant 0 : index
    %c128_249 = arith.constant 128 : index
    %426 = vector.load %arg21[%c0_248, %c128_249] : memref<8x512xf32, #tpu.memory_space<vmem>>, vector<8x256xf32>
    tpu.vector_store %arg21[%c0_248, %c128_249], %423 {strides = array<i32>} : memref<8x512xf32, #tpu.memory_space<vmem>>, vector<8x256xf32>,
    %cst_250 = arith.constant 0.000000e+00 : f32
    %427 = vector.broadcast %cst_250 : f32 to vector<8x256xf32>
    %c0_251 = arith.constant 0 : index
    %c111_252 = arith.constant 111 : index
    %428 = vector.load %arg21[%c0_251, %c111_252] : memref<8x512xf32, #tpu.memory_space<vmem>>, vector<8x256xf32>
    %429 = vector.broadcast %0 : vector<1x256xf32> to vector<8x256xf32>
    %430 = arith.mulf %428, %429 : vector<8x256xf32>
    %431 = vector.extract_strided_slice %425 {offsets = [0, 0, 0], sizes = [1, 8, 8], strides = [1, 1, 1]} : vector<9x8x8xf32> to vector<1x8x8xf32>
    %432 = vector.shape_cast %431 : vector<1x8x8xf32> to vector<8x8xf32>
    %cst_253 = arith.constant dense<0.000000e+00> : vector<8x256xf32>
    %433 = tpu.matmul %432, %430, %cst_253 {dimension_numbers = #tpu.dot_dimension_numbers<[1], [0], [0], [1], [0, 0, 1, 1], [], []>} : vector<8x8xf32>, vector<8x256xf32>, vector<8x256xf32> -> vector<8x256xf32>
    %434 = arith.addf %427, %433 : vector<8x256xf32>
    %c0_254 = arith.constant 0 : index
    %c112_255 = arith.constant 112 : index
    %435 = vector.load %arg21[%c0_254, %c112_255] : memref<8x512xf32, #tpu.memory_space<vmem>>, vector<8x256xf32>
    %436 = vector.extract_strided_slice %425 {offsets = [1, 0, 0], sizes = [1, 8, 8], strides = [1, 1, 1]} : vector<9x8x8xf32> to vector<1x8x8xf32>
    %437 = vector.shape_cast %436 : vector<1x8x8xf32> to vector<8x8xf32>
    %cst_256 = arith.constant dense<0.000000e+00> : vector<8x256xf32>
    %438 = tpu.matmul %437, %435, %cst_256 {dimension_numbers = #tpu.dot_dimension_numbers<[1], [0], [0], [1], [0, 0, 1, 1], [], []>} : vector<8x8xf32>, vector<8x256xf32>, vector<8x256xf32> -> vector<8x256xf32>
    %439 = arith.addf %434, %438 : vector<8x256xf32>
    %c0_257 = arith.constant 0 : index
    %c113_258 = arith.constant 113 : index
    %440 = vector.load %arg21[%c0_257, %c113_258] : memref<8x512xf32, #tpu.memory_space<vmem>>, vector<8x256xf32>
    %441 = vector.broadcast %1 : vector<1x256xf32> to vector<8x256xf32>
    %442 = arith.mulf %440, %441 : vector<8x256xf32>
    %443 = vector.extract_strided_slice %425 {offsets = [2, 0, 0], sizes = [1, 8, 8], strides = [1, 1, 1]} : vector<9x8x8xf32> to vector<1x8x8xf32>
    %444 = vector.shape_cast %443 : vector<1x8x8xf32> to vector<8x8xf32>
    %cst_259 = arith.constant dense<0.000000e+00> : vector<8x256xf32>
    %445 = tpu.matmul %444, %442, %cst_259 {dimension_numbers = #tpu.dot_dimension_numbers<[1], [0], [0], [1], [0, 0, 1, 1], [], []>} : vector<8x8xf32>, vector<8x256xf32>, vector<8x256xf32> -> vector<8x256xf32>
    %446 = arith.addf %439, %445 : vector<8x256xf32>
    %c0_260 = arith.constant 0 : index
    %c127_261 = arith.constant 127 : index
    %447 = vector.load %arg21[%c0_260, %c127_261] : memref<8x512xf32, #tpu.memory_space<vmem>>, vector<8x256xf32>
    %448 = vector.broadcast %0 : vector<1x256xf32> to vector<8x256xf32>
    %449 = arith.mulf %447, %448 : vector<8x256xf32>
    %450 = vector.extract_strided_slice %425 {offsets = [3, 0, 0], sizes = [1, 8, 8], strides = [1, 1, 1]} : vector<9x8x8xf32> to vector<1x8x8xf32>
    %451 = vector.shape_cast %450 : vector<1x8x8xf32> to vector<8x8xf32>
    %cst_262 = arith.constant dense<0.000000e+00> : vector<8x256xf32>
    %452 = tpu.matmul %451, %449, %cst_262 {dimension_numbers = #tpu.dot_dimension_numbers<[1], [0], [0], [1], [0, 0, 1, 1], [], []>} : vector<8x8xf32>, vector<8x256xf32>, vector<8x256xf32> -> vector<8x256xf32>
    %453 = arith.addf %446, %452 : vector<8x256xf32>
    %c0_263 = arith.constant 0 : index
    %c128_264 = arith.constant 128 : index
    %454 = vector.load %arg21[%c0_263, %c128_264] : memref<8x512xf32, #tpu.memory_space<vmem>>, vector<8x256xf32>
    %455 = vector.extract_strided_slice %425 {offsets = [4, 0, 0], sizes = [1, 8, 8], strides = [1, 1, 1]} : vector<9x8x8xf32> to vector<1x8x8xf32>
    %456 = vector.shape_cast %455 : vector<1x8x8xf32> to vector<8x8xf32>
    %cst_265 = arith.constant dense<0.000000e+00> : vector<8x256xf32>
    %457 = tpu.matmul %456, %454, %cst_265 {dimension_numbers = #tpu.dot_dimension_numbers<[1], [0], [0], [1], [0, 0, 1, 1], [], []>} : vector<8x8xf32>, vector<8x256xf32>, vector<8x256xf32> -> vector<8x256xf32>
    %458 = arith.addf %453, %457 : vector<8x256xf32>
    %c0_266 = arith.constant 0 : index
    %c129_267 = arith.constant 129 : index
    %459 = vector.load %arg21[%c0_266, %c129_267] : memref<8x512xf32, #tpu.memory_space<vmem>>, vector<8x256xf32>
    %460 = vector.broadcast %1 : vector<1x256xf32> to vector<8x256xf32>
    %461 = arith.mulf %459, %460 : vector<8x256xf32>
    %462 = vector.extract_strided_slice %425 {offsets = [5, 0, 0], sizes = [1, 8, 8], strides = [1, 1, 1]} : vector<9x8x8xf32> to vector<1x8x8xf32>
    %463 = vector.shape_cast %462 : vector<1x8x8xf32> to vector<8x8xf32>
    %cst_268 = arith.constant dense<0.000000e+00> : vector<8x256xf32>
    %464 = tpu.matmul %463, %461, %cst_268 {dimension_numbers = #tpu.dot_dimension_numbers<[1], [0], [0], [1], [0, 0, 1, 1], [], []>} : vector<8x8xf32>, vector<8x256xf32>, vector<8x256xf32> -> vector<8x256xf32>
    %465 = arith.addf %458, %464 : vector<8x256xf32>
    %c0_269 = arith.constant 0 : index
    %c143_270 = arith.constant 143 : index
    %466 = vector.load %arg21[%c0_269, %c143_270] : memref<8x512xf32, #tpu.memory_space<vmem>>, vector<8x256xf32>
    %467 = vector.broadcast %0 : vector<1x256xf32> to vector<8x256xf32>
    %468 = arith.mulf %466, %467 : vector<8x256xf32>
    %469 = vector.extract_strided_slice %425 {offsets = [6, 0, 0], sizes = [1, 8, 8], strides = [1, 1, 1]} : vector<9x8x8xf32> to vector<1x8x8xf32>
    %470 = vector.shape_cast %469 : vector<1x8x8xf32> to vector<8x8xf32>
    %cst_271 = arith.constant dense<0.000000e+00> : vector<8x256xf32>
    %471 = tpu.matmul %470, %468, %cst_271 {dimension_numbers = #tpu.dot_dimension_numbers<[1], [0], [0], [1], [0, 0, 1, 1], [], []>} : vector<8x8xf32>, vector<8x256xf32>, vector<8x256xf32> -> vector<8x256xf32>
    %472 = arith.addf %465, %471 : vector<8x256xf32>
    %c0_272 = arith.constant 0 : index
    %c144_273 = arith.constant 144 : index
    %473 = vector.load %arg21[%c0_272, %c144_273] : memref<8x512xf32, #tpu.memory_space<vmem>>, vector<8x256xf32>
    %474 = vector.extract_strided_slice %425 {offsets = [7, 0, 0], sizes = [1, 8, 8], strides = [1, 1, 1]} : vector<9x8x8xf32> to vector<1x8x8xf32>
    %475 = vector.shape_cast %474 : vector<1x8x8xf32> to vector<8x8xf32>
    %cst_274 = arith.constant dense<0.000000e+00> : vector<8x256xf32>
    %476 = tpu.matmul %475, %473, %cst_274 {dimension_numbers = #tpu.dot_dimension_numbers<[1], [0], [0], [1], [0, 0, 1, 1], [], []>} : vector<8x8xf32>, vector<8x256xf32>, vector<8x256xf32> -> vector<8x256xf32>
    %477 = arith.addf %472, %476 : vector<8x256xf32>
    %c0_275 = arith.constant 0 : index
    %c145_276 = arith.constant 145 : index
    %478 = vector.load %arg21[%c0_275, %c145_276] : memref<8x512xf32, #tpu.memory_space<vmem>>, vector<8x256xf32>
    %479 = vector.broadcast %1 : vector<1x256xf32> to vector<8x256xf32>
    %480 = arith.mulf %478, %479 : vector<8x256xf32>
    %481 = vector.extract_strided_slice %425 {offsets = [8, 0, 0], sizes = [1, 8, 8], strides = [1, 1, 1]} : vector<9x8x8xf32> to vector<1x8x8xf32>
    %482 = vector.shape_cast %481 : vector<1x8x8xf32> to vector<8x8xf32>
    %cst_277 = arith.constant dense<0.000000e+00> : vector<8x256xf32>
    %483 = tpu.matmul %482, %480, %cst_277 {dimension_numbers = #tpu.dot_dimension_numbers<[1], [0], [0], [1], [0, 0, 1, 1], [], []>} : vector<8x8xf32>, vector<8x256xf32>, vector<8x256xf32> -> vector<8x256xf32>
    %484 = arith.addf %477, %483 : vector<8x256xf32>
    %c3_278 = arith.constant 3 : index
    %c0_279 = arith.constant 0 : index
    %c0_280 = arith.constant 0 : index
    %485 = vector.load %arg9[%c3_278, %c0_279, %c0_280] : memref<4x8x1xf32, #tpu.memory_space<vmem>>, vector<1x8x1xf32>
    %486 = vector.shape_cast %485 : vector<1x8x1xf32> to vector<8x1xf32>
    %487 = vector.broadcast %486 : vector<8x1xf32> to vector<8x256xf32>
    %488 = arith.addf %484, %487 : vector<8x256xf32>
    %489 = arith.addf %488, %248 : vector<8x256xf32>
    %c0_281 = arith.constant 0 : index
    %c0_282 = arith.constant 0 : index
    %c0_283 = arith.constant 0 : index
    %490 = vector.load %arg18[%c0_281, %c0_282, %c0_283] : memref<9x16x8xf32, #tpu.memory_space<vmem>>, vector<9x16x8xf32>
    %c0_284 = arith.constant 0 : index
    %c128_285 = arith.constant 128 : index
    %491 = vector.load %arg21[%c0_284, %c128_285] : memref<8x512xf32, #tpu.memory_space<vmem>>, vector<8x256xf32>
    tpu.vector_store %arg21[%c0_284, %c128_285], %489 {strides = array<i32>} : memref<8x512xf32, #tpu.memory_space<vmem>>, vector<8x256xf32>,
    %cst_286 = arith.constant 0.000000e+00 : f32
    %492 = vector.broadcast %cst_286 : f32 to vector<16x256xf32>
    %c0_287 = arith.constant 0 : index
    %c111_288 = arith.constant 111 : index
    %493 = vector.load %arg21[%c0_287, %c111_288] : memref<8x512xf32, #tpu.memory_space<vmem>>, vector<8x256xf32>
    %494 = vector.broadcast %0 : vector<1x256xf32> to vector<8x256xf32>
    %495 = arith.mulf %493, %494 : vector<8x256xf32>
    %496 = vector.extract_strided_slice %490 {offsets = [0, 0, 0], sizes = [1, 16, 8], strides = [1, 1, 1]} : vector<9x16x8xf32> to vector<1x16x8xf32>
    %497 = vector.shape_cast %496 : vector<1x16x8xf32> to vector<16x8xf32>
    %cst_289 = arith.constant dense<0.000000e+00> : vector<16x256xf32>
    %498 = tpu.matmul %497, %495, %cst_289 {dimension_numbers = #tpu.dot_dimension_numbers<[1], [0], [0], [1], [0, 0, 1, 1], [], []>} : vector<16x8xf32>, vector<8x256xf32>, vector<16x256xf32> -> vector<16x256xf32>
    %499 = arith.addf %492, %498 : vector<16x256xf32>
    %c0_290 = arith.constant 0 : index
    %c112_291 = arith.constant 112 : index
    %500 = vector.load %arg21[%c0_290, %c112_291] : memref<8x512xf32, #tpu.memory_space<vmem>>, vector<8x256xf32>
    %501 = vector.extract_strided_slice %490 {offsets = [1, 0, 0], sizes = [1, 16, 8], strides = [1, 1, 1]} : vector<9x16x8xf32> to vector<1x16x8xf32>
    %502 = vector.shape_cast %501 : vector<1x16x8xf32> to vector<16x8xf32>
    %cst_292 = arith.constant dense<0.000000e+00> : vector<16x256xf32>
    %503 = tpu.matmul %502, %500, %cst_292 {dimension_numbers = #tpu.dot_dimension_numbers<[1], [0], [0], [1], [0, 0, 1, 1], [], []>} : vector<16x8xf32>, vector<8x256xf32>, vector<16x256xf32> -> vector<16x256xf32>
    %504 = arith.addf %499, %503 : vector<16x256xf32>
    %c0_293 = arith.constant 0 : index
    %c113_294 = arith.constant 113 : index
    %505 = vector.load %arg21[%c0_293, %c113_294] : memref<8x512xf32, #tpu.memory_space<vmem>>, vector<8x256xf32>
    %506 = vector.broadcast %1 : vector<1x256xf32> to vector<8x256xf32>
    %507 = arith.mulf %505, %506 : vector<8x256xf32>
    %508 = vector.extract_strided_slice %490 {offsets = [2, 0, 0], sizes = [1, 16, 8], strides = [1, 1, 1]} : vector<9x16x8xf32> to vector<1x16x8xf32>
    %509 = vector.shape_cast %508 : vector<1x16x8xf32> to vector<16x8xf32>
    %cst_295 = arith.constant dense<0.000000e+00> : vector<16x256xf32>
    %510 = tpu.matmul %509, %507, %cst_295 {dimension_numbers = #tpu.dot_dimension_numbers<[1], [0], [0], [1], [0, 0, 1, 1], [], []>} : vector<16x8xf32>, vector<8x256xf32>, vector<16x256xf32> -> vector<16x256xf32>
    %511 = arith.addf %504, %510 : vector<16x256xf32>
    %c0_296 = arith.constant 0 : index
    %c127_297 = arith.constant 127 : index
    %512 = vector.load %arg21[%c0_296, %c127_297] : memref<8x512xf32, #tpu.memory_space<vmem>>, vector<8x256xf32>
    %513 = vector.broadcast %0 : vector<1x256xf32> to vector<8x256xf32>
    %514 = arith.mulf %512, %513 : vector<8x256xf32>
    %515 = vector.extract_strided_slice %490 {offsets = [3, 0, 0], sizes = [1, 16, 8], strides = [1, 1, 1]} : vector<9x16x8xf32> to vector<1x16x8xf32>
    %516 = vector.shape_cast %515 : vector<1x16x8xf32> to vector<16x8xf32>
    %cst_298 = arith.constant dense<0.000000e+00> : vector<16x256xf32>
    %517 = tpu.matmul %516, %514, %cst_298 {dimension_numbers = #tpu.dot_dimension_numbers<[1], [0], [0], [1], [0, 0, 1, 1], [], []>} : vector<16x8xf32>, vector<8x256xf32>, vector<16x256xf32> -> vector<16x256xf32>
    %518 = arith.addf %511, %517 : vector<16x256xf32>
    %c0_299 = arith.constant 0 : index
    %c128_300 = arith.constant 128 : index
    %519 = vector.load %arg21[%c0_299, %c128_300] : memref<8x512xf32, #tpu.memory_space<vmem>>, vector<8x256xf32>
    %520 = vector.extract_strided_slice %490 {offsets = [4, 0, 0], sizes = [1, 16, 8], strides = [1, 1, 1]} : vector<9x16x8xf32> to vector<1x16x8xf32>
    %521 = vector.shape_cast %520 : vector<1x16x8xf32> to vector<16x8xf32>
    %cst_301 = arith.constant dense<0.000000e+00> : vector<16x256xf32>
    %522 = tpu.matmul %521, %519, %cst_301 {dimension_numbers = #tpu.dot_dimension_numbers<[1], [0], [0], [1], [0, 0, 1, 1], [], []>} : vector<16x8xf32>, vector<8x256xf32>, vector<16x256xf32> -> vector<16x256xf32>
    %523 = arith.addf %518, %522 : vector<16x256xf32>
    %c0_302 = arith.constant 0 : index
    %c129_303 = arith.constant 129 : index
    %524 = vector.load %arg21[%c0_302, %c129_303] : memref<8x512xf32, #tpu.memory_space<vmem>>, vector<8x256xf32>
    %525 = vector.broadcast %1 : vector<1x256xf32> to vector<8x256xf32>
    %526 = arith.mulf %524, %525 : vector<8x256xf32>
    %527 = vector.extract_strided_slice %490 {offsets = [5, 0, 0], sizes = [1, 16, 8], strides = [1, 1, 1]} : vector<9x16x8xf32> to vector<1x16x8xf32>
    %528 = vector.shape_cast %527 : vector<1x16x8xf32> to vector<16x8xf32>
    %cst_304 = arith.constant dense<0.000000e+00> : vector<16x256xf32>
    %529 = tpu.matmul %528, %526, %cst_304 {dimension_numbers = #tpu.dot_dimension_numbers<[1], [0], [0], [1], [0, 0, 1, 1], [], []>} : vector<16x8xf32>, vector<8x256xf32>, vector<16x256xf32> -> vector<16x256xf32>
    %530 = arith.addf %523, %529 : vector<16x256xf32>
    %c0_305 = arith.constant 0 : index
    %c143_306 = arith.constant 143 : index
    %531 = vector.load %arg21[%c0_305, %c143_306] : memref<8x512xf32, #tpu.memory_space<vmem>>, vector<8x256xf32>
    %532 = vector.broadcast %0 : vector<1x256xf32> to vector<8x256xf32>
    %533 = arith.mulf %531, %532 : vector<8x256xf32>
    %534 = vector.extract_strided_slice %490 {offsets = [6, 0, 0], sizes = [1, 16, 8], strides = [1, 1, 1]} : vector<9x16x8xf32> to vector<1x16x8xf32>
    %535 = vector.shape_cast %534 : vector<1x16x8xf32> to vector<16x8xf32>
    %cst_307 = arith.constant dense<0.000000e+00> : vector<16x256xf32>
    %536 = tpu.matmul %535, %533, %cst_307 {dimension_numbers = #tpu.dot_dimension_numbers<[1], [0], [0], [1], [0, 0, 1, 1], [], []>} : vector<16x8xf32>, vector<8x256xf32>, vector<16x256xf32> -> vector<16x256xf32>
    %537 = arith.addf %530, %536 : vector<16x256xf32>
    %c0_308 = arith.constant 0 : index
    %c144_309 = arith.constant 144 : index
    %538 = vector.load %arg21[%c0_308, %c144_309] : memref<8x512xf32, #tpu.memory_space<vmem>>, vector<8x256xf32>
    %539 = vector.extract_strided_slice %490 {offsets = [7, 0, 0], sizes = [1, 16, 8], strides = [1, 1, 1]} : vector<9x16x8xf32> to vector<1x16x8xf32>
    %540 = vector.shape_cast %539 : vector<1x16x8xf32> to vector<16x8xf32>
    %cst_310 = arith.constant dense<0.000000e+00> : vector<16x256xf32>
    %541 = tpu.matmul %540, %538, %cst_310 {dimension_numbers = #tpu.dot_dimension_numbers<[1], [0], [0], [1], [0, 0, 1, 1], [], []>} : vector<16x8xf32>, vector<8x256xf32>, vector<16x256xf32> -> vector<16x256xf32>
    %542 = arith.addf %537, %541 : vector<16x256xf32>
    %c0_311 = arith.constant 0 : index
    %c145_312 = arith.constant 145 : index
    %543 = vector.load %arg21[%c0_311, %c145_312] : memref<8x512xf32, #tpu.memory_space<vmem>>, vector<8x256xf32>
    %544 = vector.broadcast %1 : vector<1x256xf32> to vector<8x256xf32>
    %545 = arith.mulf %543, %544 : vector<8x256xf32>
    %546 = vector.extract_strided_slice %490 {offsets = [8, 0, 0], sizes = [1, 16, 8], strides = [1, 1, 1]} : vector<9x16x8xf32> to vector<1x16x8xf32>
    %547 = vector.shape_cast %546 : vector<1x16x8xf32> to vector<16x8xf32>
    %cst_313 = arith.constant dense<0.000000e+00> : vector<16x256xf32>
    %548 = tpu.matmul %547, %545, %cst_313 {dimension_numbers = #tpu.dot_dimension_numbers<[1], [0], [0], [1], [0, 0, 1, 1], [], []>} : vector<16x8xf32>, vector<8x256xf32>, vector<16x256xf32> -> vector<16x256xf32>
    %549 = arith.addf %542, %548 : vector<16x256xf32>
    %c0_314 = arith.constant 0 : index
    %c0_315 = arith.constant 0 : index
    %550 = vector.load %arg5[%c0_314, %c0_315] : memref<256x64xf32, #tpu.memory_space<vmem>>, vector<256x64xf32>
    %cst_316 = arith.constant dense<0.000000e+00> : vector<16x64xf32>
    %551 = tpu.matmul %549, %550, %cst_316 {dimension_numbers = #tpu.dot_dimension_numbers<[1], [0], [0], [1], [0, 0, 1, 1], [], []>} : vector<16x256xf32>, vector<256x64xf32>, vector<16x64xf32> -> vector<16x64xf32>
    %c0_317 = arith.constant 0 : index
    %c0_318 = arith.constant 0 : index
    %552 = vector.load %arg19[%c0_317, %c0_318] : memref<16x1xf32, #tpu.memory_space<vmem>>, vector<16x1xf32>
    %553 = vector.broadcast %552 : vector<16x1xf32> to vector<16x64xf32>
    %554 = arith.addf %551, %553 : vector<16x64xf32>
    %c0_319 = arith.constant 0 : index
    %c0_320 = arith.constant 0 : index
    %555 = vector.load %arg20[%c0_319, %c0_320] : memref<16x64xf32, #tpu.memory_space<vmem>>, vector<16x64xf32>
    tpu.vector_store %arg20[%c0_319, %c0_320], %554 {strides = array<i32>} : memref<16x64xf32, #tpu.memory_space<vmem>>, vector<16x64xf32>,
    return
  }
}

</mosaic_0001>

<llo_original>
// kernel: tile.168
$region0: #{tile.168}
  #allocation0 [shape = 's32[1]{0}', space=sflag, size = 0x4, scoped, tag = 'scoped memory for tile.168']
  %s0 = inlined_call_operand.vmem [shape: f32[32], index: 0, kind: input, shape index: {}]
  %s1 = inlined_call_operand.vmem [shape: f32[2,32], index: 1, kind: output, shape index: {}]
  // Predicated region
  $region2: #{tile.168} parent=0 // pred_check
    _
  $region3: #{tile.168} parent=0 // pred_check_branch
    %3 = sbr.rel (0) target = $region5
  $region4: #{tile.168} parent=0 // pred_region
    _
  $region5: #{tile.168} parent=0 // pred_fallthru
    _
  %v4 = vld [vmem:[%s0] ss:$0 sm:$0xff]
  %5 = vst [vmem:[%s1] sm:$0x3] %v4

// kernel: tile.108
$region0: #{tile.108}
  #allocation0 [shape = 's32[1]{0}', space=sflag, size = 0x4, scoped, tag = 'scoped memory for tile.108']
  %s0 = inlined_call_operand.vmem [shape: f32[4], index: 0, kind: input, shape index: {}]
  %s1 = inlined_call_operand.vmem [shape: f32[2,4], index: 1, kind: output, shape index: {}]
  // Predicated region
  $region2: #{tile.108} parent=0 // pred_check
    _
  $region3: #{tile.108} parent=0 // pred_check_branch
    %3 = sbr.rel (0) target = $region5
  $region4: #{tile.108} parent=0 // pred_region
    _
  $region5: #{tile.108} parent=0 // pred_fallthru
    _
  %v4 = vld [vmem:[%s0] ss:$0 sm:$0xff]
  %5 = vst [vmem:[%s1] sm:$0x3] %v4

// kernel: tile.12
$region0: #{tile.12}
  %s0 = inlined_call_operand.vmem [shape: f32[2,32], index: 0, kind: input, shape index: {}]
  %s1 = inlined_call_operand.vmem [shape: f32[1,64,1], index: 1, kind: output, shape index: {}]
  $region1: #{tile.12} parent=0
    #allocation0 [shape = 'u8[4096]{0}', space=vmem, size = 0x1000, scoped, tag = 'scoped mem for input reshape']
    %s3 = sshllo.u32 0, 2
    %v4 = vld [vmem:[%s0] sm:%s3]
    %5 = vst [vmem:[#allocation0] sm:%s3] %v4
    %v6 = vld [vmem:[#allocation0] sm:$0x3]
    %vm7 = vcmask 7168
    %8 = vst.msk [vmem:[%s1] sm:$0x1] %vm7, %v6
    %s9 = scalar_lea.vmem %s1, 31
    %10 = vst.msk [vmem:[%s9] sm:$0x2] %vm7, %v6
    %v11 = vld [vmem:[#allocation0] sm:$0x3]
    %12 = vrot.lane.b32.xlu0 %v11, 127
    %v13 = vpop.permute.xlu0 %12
    %vm14 = vcmask 7168
    %s15 = scalar_lea.vmem %s1, 1
    %16 = vst.msk [vmem:[%s15] sm:$0x1] %vm14, %v13
    %s17 = scalar_lea.vmem %s1, 32
    %18 = vst.msk [vmem:[%s17] sm:$0x2] %vm14, %v13
    %v19 = vld [vmem:[#allocation0] sm:$0x3]
    %20 = vrot.lane.b32.xlu0 %v19, 126
    %v21 = vpop.permute.xlu0 %20
    %vm22 = vcmask 7168
    %s23 = scalar_lea.vmem %s1, 2
    %24 = vst.msk [vmem:[%s23] sm:$0x1] %vm22, %v21
    %s25 = scalar_lea.vmem %s1, 33
    %26 = vst.msk [vmem:[%s25] sm:$0x2] %vm22, %v21
    %v27 = vld [vmem:[#allocation0] sm:$0x3]
    %28 = vrot.lane.b32.xlu0 %v27, 125
    %v29 = vpop.permute.xlu0 %28
    %vm30 = vcmask 7168
    %s31 = scalar_lea.vmem %s1, 3
    %32 = vst.msk [vmem:[%s31] sm:$0x1] %vm30, %v29
    %s33 = scalar_lea.vmem %s1, 34
    %34 = vst.msk [vmem:[%s33] sm:$0x2] %vm30, %v29
    %v35 = vld [vmem:[#allocation0] sm:$0x3]
    %36 = vrot.lane.b32.xlu0 %v35, 124
    %v37 = vpop.permute.xlu0 %36
    %vm38 = vcmask 7168
    %s39 = scalar_lea.vmem %s1, 4
    %40 = vst.msk [vmem:[%s39] sm:$0x1] %vm38, %v37
    %s41 = scalar_lea.vmem %s1, 35
    %42 = vst.msk [vmem:[%s41] sm:$0x2] %vm38, %v37
    %v43 = vld [vmem:[#allocation0] sm:$0x3]
    %44 = vrot.lane.b32.xlu0 %v43, 123
    %v45 = vpop.permute.xlu0 %44
    %vm46 = vcmask 7168
    %s47 = scalar_lea.vmem %s1, 5
    %48 = vst.msk [vmem:[%s47] sm:$0x1] %vm46, %v45
    %s49 = scalar_lea.vmem %s1, 36
    %50 = vst.msk [vmem:[%s49] sm:$0x2] %vm46, %v45
    %v51 = vld [vmem:[#allocation0] sm:$0x3]
    %52 = vrot.lane.b32.xlu0 %v51, 122
    %v53 = vpop.permute.xlu0 %52
    %vm54 = vcmask 7168
    %s55 = scalar_lea.vmem %s1, 6
    %56 = vst.msk [vmem:[%s55] sm:$0x1] %vm54, %v53
    %s57 = scalar_lea.vmem %s1, 37
    %58 = vst.msk [vmem:[%s57] sm:$0x2] %vm54, %v53
    %v59 = vld [vmem:[#allocation0] sm:$0x3]
    %60 = vrot.lane.b32.xlu0 %v59, 121
    %v61 = vpop.permute.xlu0 %60
    %vm62 = vcmask 7168
    %s63 = scalar_lea.vmem %s1, 7
    %64 = vst.msk [vmem:[%s63] sm:$0x1] %vm62, %v61
    %s65 = scalar_lea.vmem %s1, 38
    %66 = vst.msk [vmem:[%s65] sm:$0x2] %vm62, %v61
    %v67 = vld [vmem:[#allocation0] sm:$0x3]
    %68 = vrot.lane.b32.xlu0 %v67, 120
    %v69 = vpop.permute.xlu0 %68
    %vm70 = vcmask 7168
    %s71 = scalar_lea.vmem %s1, 8
    %72 = vst.msk [vmem:[%s71] sm:$0x1] %vm70, %v69
    %s73 = scalar_lea.vmem %s1, 39
    %74 = vst.msk [vmem:[%s73] sm:$0x2] %vm70, %v69
    %v75 = vld [vmem:[#allocation0] sm:$0x3]
    %76 = vrot.lane.b32.xlu0 %v75, 119
    %v77 = vpop.permute.xlu0 %76
    %vm78 = vcmask 7168
    %s79 = scalar_lea.vmem %s1, 9
    %80 = vst.msk [vmem:[%s79] sm:$0x1] %vm78, %v77
    %s81 = scalar_lea.vmem %s1, 40
    %82 = vst.msk [vmem:[%s81] sm:$0x2] %vm78, %v77
    %v83 = vld [vmem:[#allocation0] sm:$0x3]
    %84 = vrot.lane.b32.xlu0 %v83, 118
    %v85 = vpop.permute.xlu0 %84
    %vm86 = vcmask 7168
    %s87 = scalar_lea.vmem %s1, 10
    %88 = vst.msk [vmem:[%s87] sm:$0x1] %vm86, %v85
    %s89 = scalar_lea.vmem %s1, 41
    %90 = vst.msk [vmem:[%s89] sm:$0x2] %vm86, %v85
    %v91 = vld [vmem:[#allocation0] sm:$0x3]
    %92 = vrot.lane.b32.xlu0 %v91, 117
    %v93 = vpop.permute.xlu0 %92
    %vm94 = vcmask 7168
    %s95 = scalar_lea.vmem %s1, 11
    %96 = vst.msk [vmem:[%s95] sm:$0x1] %vm94, %v93
    %s97 = scalar_lea.vmem %s1, 42
    %98 = vst.msk [vmem:[%s97] sm:$0x2] %vm94, %v93
    %v99 = vld [vmem:[#allocation0] sm:$0x3]
    %100 = vrot.lane.b32.xlu0 %v99, 116
    %v101 = vpop.permute.xlu0 %100
    %vm102 = vcmask 7168
    %s103 = scalar_lea.vmem %s1, 12
    %104 = vst.msk [vmem:[%s103] sm:$0x1] %vm102, %v101
    %s105 = scalar_lea.vmem %s1, 43
    %106 = vst.msk [vmem:[%s105] sm:$0x2] %vm102, %v101
    %v107 = vld [vmem:[#allocation0] sm:$0x3]
    %108 = vrot.lane.b32.xlu0 %v107, 115
    %v109 = vpop.permute.xlu0 %108
    %vm110 = vcmask 7168
    %s111 = scalar_lea.vmem %s1, 13
    %112 = vst.msk [vmem:[%s111] sm:$0x1] %vm110, %v109
    %s113 = scalar_lea.vmem %s1, 44
    %114 = vst.msk [vmem:[%s113] sm:$0x2] %vm110, %v109
    %v115 = vld [vmem:[#allocation0] sm:$0x3]
    %116 = vrot.lane.b32.xlu0 %v115, 114
    %v117 = vpop.permute.xlu0 %116
    %vm118 = vcmask 7168
    %s119 = scalar_lea.vmem %s1, 14
    %120 = vst.msk [vmem:[%s119] sm:$0x1] %vm118, %v117
    %s121 = scalar_lea.vmem %s1, 45
    %122 = vst.msk [vmem:[%s121] sm:$0x2] %vm118, %v117
    %v123 = vld [vmem:[#allocation0] sm:$0x3]
    %124 = vrot.lane.b32.xlu0 %v123, 113
    %v125 = vpop.permute.xlu0 %124
    %vm126 = vcmask 7168
    %s127 = scalar_lea.vmem %s1, 15
    %128 = vst.msk [vmem:[%s127] sm:$0x1] %vm126, %v125
    %s129 = scalar_lea.vmem %s1, 46
    %130 = vst.msk [vmem:[%s129] sm:$0x2] %vm126, %v125
    %v131 = vld [vmem:[#allocation0] sm:$0x3]
    %132 = vrot.lane.b32.xlu0 %v131, 112
    %v133 = vpop.permute.xlu0 %132
    %vm134 = vcmask 7168
    %s135 = scalar_lea.vmem %s1, 16
    %136 = vst.msk [vmem:[%s135] sm:$0x1] %vm134, %v133
    %s137 = scalar_lea.vmem %s1, 47
    %138 = vst.msk [vmem:[%s137] sm:$0x2] %vm134, %v133
    %v139 = vld [vmem:[#allocation0] sm:$0x3]
    %140 = vrot.lane.b32.xlu0 %v139, 111
    %v141 = vpop.permute.xlu0 %140
    %vm142 = vcmask 7168
    %s143 = scalar_lea.vmem %s1, 17
    %144 = vst.msk [vmem:[%s143] sm:$0x1] %vm142, %v141
    %s145 = scalar_lea.vmem %s1, 48
    %146 = vst.msk [vmem:[%s145] sm:$0x2] %vm142, %v141
    %v147 = vld [vmem:[#allocation0] sm:$0x3]
    %148 = vrot.lane.b32.xlu0 %v147, 110
    %v149 = vpop.permute.xlu0 %148
    %vm150 = vcmask 7168
    %s151 = scalar_lea.vmem %s1, 18
    %152 = vst.msk [vmem:[%s151] sm:$0x1] %vm150, %v149
    %s153 = scalar_lea.vmem %s1, 49
    %154 = vst.msk [vmem:[%s153] sm:$0x2] %vm150, %v149
    %v155 = vld [vmem:[#allocation0] sm:$0x3]
    %156 = vrot.lane.b32.xlu0 %v155, 109
    %v157 = vpop.permute.xlu0 %156
    %vm158 = vcmask 7168
    %s159 = scalar_lea.vmem %s1, 19
    %160 = vst.msk [vmem:[%s159] sm:$0x1] %vm158, %v157
    %s161 = scalar_lea.vmem %s1, 50
    %162 = vst.msk [vmem:[%s161] sm:$0x2] %vm158, %v157
    %v163 = vld [vmem:[#allocation0] sm:$0x3]
    %164 = vrot.lane.b32.xlu0 %v163, 108
    %v165 = vpop.permute.xlu0 %164
    %vm166 = vcmask 7168
    %s167 = scalar_lea.vmem %s1, 20
    %168 = vst.msk [vmem:[%s167] sm:$0x1] %vm166, %v165
    %s169 = scalar_lea.vmem %s1, 51
    %170 = vst.msk [vmem:[%s169] sm:$0x2] %vm166, %v165
    %v171 = vld [vmem:[#allocation0] sm:$0x3]
    %172 = vrot.lane.b32.xlu0 %v171, 107
    %v173 = vpop.permute.xlu0 %172
    %vm174 = vcmask 7168
    %s175 = scalar_lea.vmem %s1, 21
    %176 = vst.msk [vmem:[%s175] sm:$0x1] %vm174, %v173
    %s177 = scalar_lea.vmem %s1, 52
    %178 = vst.msk [vmem:[%s177] sm:$0x2] %vm174, %v173
    %v179 = vld [vmem:[#allocation0] sm:$0x3]
    %180 = vrot.lane.b32.xlu0 %v179, 106
    %v181 = vpop.permute.xlu0 %180
    %vm182 = vcmask 7168
    %s183 = scalar_lea.vmem %s1, 22
    %184 = vst.msk [vmem:[%s183] sm:$0x1] %vm182, %v181
    %s185 = scalar_lea.vmem %s1, 53
    %186 = vst.msk [vmem:[%s185] sm:$0x2] %vm182, %v181
    %v187 = vld [vmem:[#allocation0] sm:$0x3]
    %188 = vrot.lane.b32.xlu0 %v187, 105
    %v189 = vpop.permute.xlu0 %188
    %vm190 = vcmask 7168
    %s191 = scalar_lea.vmem %s1, 23
    %192 = vst.msk [vmem:[%s191] sm:$0x1] %vm190, %v189
    %s193 = scalar_lea.vmem %s1, 54
    %194 = vst.msk [vmem:[%s193] sm:$0x2] %vm190, %v189
    %v195 = vld [vmem:[#allocation0] sm:$0x3]
    %196 = vrot.lane.b32.xlu0 %v195, 104
    %v197 = vpop.permute.xlu0 %196
    %vm198 = vcmask 7168
    %s199 = scalar_lea.vmem %s1, 24
    %200 = vst.msk [vmem:[%s199] sm:$0x1] %vm198, %v197
    %s201 = scalar_lea.vmem %s1, 55
    %202 = vst.msk [vmem:[%s201] sm:$0x2] %vm198, %v197
    %v203 = vld [vmem:[#allocation0] sm:$0x3]
    %204 = vrot.lane.b32.xlu0 %v203, 103
    %v205 = vpop.permute.xlu0 %204
    %vm206 = vcmask 7168
    %s207 = scalar_lea.vmem %s1, 25
    %208 = vst.msk [vmem:[%s207] sm:$0x1] %vm206, %v205
    %s209 = scalar_lea.vmem %s1, 56
    %210 = vst.msk [vmem:[%s209] sm:$0x2] %vm206, %v205
    %v211 = vld [vmem:[#allocation0] sm:$0x3]
    %212 = vrot.lane.b32.xlu0 %v211, 102
    %v213 = vpop.permute.xlu0 %212
    %vm214 = vcmask 7168
    %s215 = scalar_lea.vmem %s1, 26
    %216 = vst.msk [vmem:[%s215] sm:$0x1] %vm214, %v213
    %s217 = scalar_lea.vmem %s1, 57
    %218 = vst.msk [vmem:[%s217] sm:$0x2] %vm214, %v213
    %v219 = vld [vmem:[#allocation0] sm:$0x3]
    %220 = vrot.lane.b32.xlu0 %v219, 101
    %v221 = vpop.permute.xlu0 %220
    %vm222 = vcmask 7168
    %s223 = scalar_lea.vmem %s1, 27
    %224 = vst.msk [vmem:[%s223] sm:$0x1] %vm222, %v221
    %s225 = scalar_lea.vmem %s1, 58
    %226 = vst.msk [vmem:[%s225] sm:$0x2] %vm222, %v221
    %v227 = vld [vmem:[#allocation0] sm:$0x3]
    %228 = vrot.lane.b32.xlu0 %v227, 100
    %v229 = vpop.permute.xlu0 %228
    %vm230 = vcmask 7168
    %s231 = scalar_lea.vmem %s1, 28
    %232 = vst.msk [vmem:[%s231] sm:$0x1] %vm230, %v229
    %s233 = scalar_lea.vmem %s1, 59
    %234 = vst.msk [vmem:[%s233] sm:$0x2] %vm230, %v229
    %v235 = vld [vmem:[#allocation0] sm:$0x3]
    %236 = vrot.lane.b32.xlu0 %v235, 99
    %v237 = vpop.permute.xlu0 %236
    %vm238 = vcmask 7168
    %s239 = scalar_lea.vmem %s1, 29
    %240 = vst.msk [vmem:[%s239] sm:$0x1] %vm238, %v237
    %s241 = scalar_lea.vmem %s1, 60
    %242 = vst.msk [vmem:[%s241] sm:$0x2] %vm238, %v237
    %v243 = vld [vmem:[#allocation0] sm:$0x3]
    %244 = vrot.lane.b32.xlu0 %v243, 98
    %v245 = vpop.permute.xlu0 %244
    %vm246 = vcmask 7168
    %s247 = scalar_lea.vmem %s1, 30
    %248 = vst.msk [vmem:[%s247] sm:$0x1] %vm246, %v245
    %s249 = scalar_lea.vmem %s1, 61
    %250 = vst.msk [vmem:[%s249] sm:$0x2] %vm246, %v245
    %v251 = vld [vmem:[#allocation0] sm:$0x3]
    %252 = vrot.lane.b32.xlu0 %v251, 97
    %v253 = vpop.permute.xlu0 %252
    %vm254 = vcmask 7168
    %s255 = scalar_lea.vmem %s1, 31
    %256 = vst.msk [vmem:[%s255] sm:$0x1] %vm254, %v253
    %s257 = scalar_lea.vmem %s1, 62
    %258 = vst.msk [vmem:[%s257] sm:$0x2] %vm254, %v253

// kernel: tile.0
$region0: #{tile.0}
  %s0 = inlined_call_operand.vmem [shape: f32[2,4], index: 0, kind: input, shape index: {}]
  %s1 = inlined_call_operand.vmem [shape: f32[1,8,1], index: 1, kind: output, shape index: {}]
  $region1: #{tile.0} parent=0
    #allocation0 [shape = 'u8[4096]{0}', space=vmem, size = 0x1000, scoped, tag = 'scoped mem for input reshape']
    %s3 = sshllo.u32 0, 2
    %v4 = vld [vmem:[%s0] sm:%s3]
    %5 = vst [vmem:[#allocation0] sm:%s3] %v4
    %v6 = vld [vmem:[#allocation0] sm:$0x3]
    %vm7 = vcmask 7168
    %8 = vst.msk [vmem:[%s1] ss:$4 sm:$0x3] %vm7, %v6
    %v9 = vld [vmem:[#allocation0] sm:$0x3]
    %10 = vrot.lane.b32.xlu0 %v9, 127
    %v11 = vpop.permute.xlu0 %10
    %vm12 = vcmask 7168
    %s13 = scalar_lea.vmem %s1, 1
    %14 = vst.msk [vmem:[%s13] ss:$4 sm:$0x3] %vm12, %v11
    %v15 = vld [vmem:[#allocation0] sm:$0x3]
    %16 = vrot.lane.b32.xlu0 %v15, 126
    %v17 = vpop.permute.xlu0 %16
    %vm18 = vcmask 7168
    %s19 = scalar_lea.vmem %s1, 2
    %20 = vst.msk [vmem:[%s19] ss:$4 sm:$0x3] %vm18, %v17
    %v21 = vld [vmem:[#allocation0] sm:$0x3]
    %22 = vrot.lane.b32.xlu0 %v21, 125
    %v23 = vpop.permute.xlu0 %22
    %vm24 = vcmask 7168
    %s25 = scalar_lea.vmem %s1, 3
    %26 = vst.msk [vmem:[%s25] ss:$4 sm:$0x3] %vm24, %v23

// kernel: tile.208
$region0: #{tile.208}
  #allocation0 [shape = 's32[1]{0}', space=sflag, size = 0x4, scoped, tag = 'scoped memory for tile.208']
  %s0 = inlined_call_operand.vmem [shape: f32[8], index: 0, kind: input, shape index: {}]
  %s1 = inlined_call_operand.vmem [shape: f32[2,8], index: 1, kind: output, shape index: {}]
  // Predicated region
  $region2: #{tile.208} parent=0 // pred_check
    _
  $region3: #{tile.208} parent=0 // pred_check_branch
    %3 = sbr.rel (0) target = $region5
  $region4: #{tile.208} parent=0 // pred_region
    _
  $region5: #{tile.208} parent=0 // pred_fallthru
    _
  %v4 = vld [vmem:[%s0] ss:$0 sm:$0xff]
  %5 = vst [vmem:[%s1] sm:$0x3] %v4

// kernel: tile.20
$region0: #{tile.20}
  %s0 = inlined_call_operand.vmem [shape: f32[2,8], index: 0, kind: input, shape index: {}]
  %s1 = inlined_call_operand.vmem [shape: f32[16,1], index: 1, kind: output, shape index: {}]
  $region1: #{tile.20} parent=0
    #allocation0 [shape = 'u8[4096]{0}', space=vmem, size = 0x1000, scoped, tag = 'scoped mem for input reshape']
    %s3 = sshllo.u32 0, 2
    %v4 = vld [vmem:[%s0] sm:%s3]
    %5 = vst [vmem:[#allocation0] sm:%s3] %v4
    %v6 = vld [vmem:[#allocation0] sm:$0x3]
    %vm7 = vcmask 7168
    %8 = vst.msk [vmem:[%s1] ss:$8 sm:$0x3] %vm7, %v6
    %v9 = vld [vmem:[#allocation0] sm:$0x3]
    %10 = vrot.lane.b32.xlu0 %v9, 127
    %v11 = vpop.permute.xlu0 %10
    %vm12 = vcmask 7168
    %s13 = scalar_lea.vmem %s1, 1
    %14 = vst.msk [vmem:[%s13] ss:$8 sm:$0x3] %vm12, %v11
    %v15 = vld [vmem:[#allocation0] sm:$0x3]
    %16 = vrot.lane.b32.xlu0 %v15, 126
    %v17 = vpop.permute.xlu0 %16
    %vm18 = vcmask 7168
    %s19 = scalar_lea.vmem %s1, 2
    %20 = vst.msk [vmem:[%s19] ss:$8 sm:$0x3] %vm18, %v17
    %v21 = vld [vmem:[#allocation0] sm:$0x3]
    %22 = vrot.lane.b32.xlu0 %v21, 125
    %v23 = vpop.permute.xlu0 %22
    %vm24 = vcmask 7168
    %s25 = scalar_lea.vmem %s1, 3
    %26 = vst.msk [vmem:[%s25] ss:$8 sm:$0x3] %vm24, %v23
    %v27 = vld [vmem:[#allocation0] sm:$0x3]
    %28 = vrot.lane.b32.xlu0 %v27, 124
    %v29 = vpop.permute.xlu0 %28
    %vm30 = vcmask 7168
    %s31 = scalar_lea.vmem %s1, 4
    %32 = vst.msk [vmem:[%s31] ss:$8 sm:$0x3] %vm30, %v29
    %v33 = vld [vmem:[#allocation0] sm:$0x3]
    %34 = vrot.lane.b32.xlu0 %v33, 123
    %v35 = vpop.permute.xlu0 %34
    %vm36 = vcmask 7168
    %s37 = scalar_lea.vmem %s1, 5
    %38 = vst.msk [vmem:[%s37] ss:$8 sm:$0x3] %vm36, %v35
    %v39 = vld [vmem:[#allocation0] sm:$0x3]
    %40 = vrot.lane.b32.xlu0 %v39, 122
    %v41 = vpop.permute.xlu0 %40
    %vm42 = vcmask 7168
    %s43 = scalar_lea.vmem %s1, 6
    %44 = vst.msk [vmem:[%s43] ss:$8 sm:$0x3] %vm42, %v41
    %v45 = vld [vmem:[#allocation0] sm:$0x3]
    %46 = vrot.lane.b32.xlu0 %v45, 121
    %v47 = vpop.permute.xlu0 %46
    %vm48 = vcmask 7168
    %s49 = scalar_lea.vmem %s1, 7
    %50 = vst.msk [vmem:[%s49] ss:$8 sm:$0x3] %vm48, %v47

// kernel: encoder_forward.1
$region0: #{encoder_forward.1}
  #allocation0 [shape = 'u32[]', space=smem, size = 0x4, offset = 0x4, fixed_abs, tag = 'smem constant byte address 0x4 - core index']
  #allocation1 [shape = 'u32[144,128]{1,0:T(1,128)}', space=vmem, size = 0x12000, scoped, tag = 'internal scratch']
  #allocation2 [shape = 'f32[8,512]{1,0:T(8,128)}', space=vmem, size = 0x4000, scoped, tag = 'scratch operand']
  %s0 = inlined_call_operand.vmem [shape: f32[8,256], index: 0, kind: input, shape index: {}]
  %s1 = inlined_call_operand.vmem [shape: f32[64,1], index: 1, kind: input, shape index: {}]
  %s2 = inlined_call_operand.vmem [shape: f32[64,1], index: 2, kind: input, shape index: {}]
  %s3 = inlined_call_operand.vmem [shape: f32[2,256], index: 3, kind: input, shape index: {}]
  %s4 = inlined_call_operand.vmem [shape: f32[8,8], index: 4, kind: input, shape index: {}]
  %s5 = inlined_call_operand.vmem [shape: f32[256,64], index: 5, kind: input, shape index: {}]
  %s6 = inlined_call_operand.vmem [shape: f32[4,8,1], index: 6, kind: input, shape index: {}]
  %s7 = inlined_call_operand.vmem [shape: f32[4,8,1], index: 7, kind: input, shape index: {}]
  %s8 = inlined_call_operand.vmem [shape: f32[4,9,8,8], index: 8, kind: input, shape index: {}]
  %s9 = inlined_call_operand.vmem [shape: f32[4,8,1], index: 9, kind: input, shape index: {}]
  %s10 = inlined_call_operand.vmem [shape: f32[2,64,64], index: 10, kind: input, shape index: {}]
  %s11 = inlined_call_operand.vmem [shape: f32[2,64,1], index: 11, kind: input, shape index: {}]
  %s12 = inlined_call_operand.vmem [shape: f32[2,8,64], index: 12, kind: input, shape index: {}]
  %s13 = inlined_call_operand.vmem [shape: f32[2,8,1], index: 13, kind: input, shape index: {}]
  %s14 = inlined_call_operand.vmem [shape: f32[2,64,64], index: 14, kind: input, shape index: {}]
  %s15 = inlined_call_operand.vmem [shape: f32[2,64,1], index: 15, kind: input, shape index: {}]
  %s16 = inlined_call_operand.vmem [shape: f32[2,8,64], index: 16, kind: input, shape index: {}]
  %s17 = inlined_call_operand.vmem [shape: f32[2,8,1], index: 17, kind: input, shape index: {}]
  %s18 = inlined_call_operand.vmem [shape: f32[9,16,8], index: 18, kind: input, shape index: {}]
  %s19 = inlined_call_operand.vmem [shape: f32[16,1], index: 19, kind: input, shape index: {}]
  %s20 = inlined_call_operand.vmem [shape: f32[16,64], index: 20, kind: output, shape index: {}]
  %s21 = sld [smem:[#allocation0]]
  $region90: #{encoder_forward.1} parent=0
    _
  %s23 = ssub.s32 1, %s21
  %s24 = scalar_select 0, %s23, %s21
  // Predicated region
  $region2: #{encoder_forward.1} parent=0 // pred_check
    _
  $region3: #{encoder_forward.1} parent=0 // pred_check_branch
    %26 = sbr.rel (0) target = $region5
  $region4: #{encoder_forward.1} parent=0 // pred_region
    _
  $region5: #{encoder_forward.1} parent=0 // pred_fallthru
    _
  // Predicated region
  $region6: #{encoder_forward.1} parent=0 // pred_check
    _
  $region7: #{encoder_forward.1} parent=0 // pred_check_branch
    %28 = sbr.rel (0) target = $region9
  $region8: #{encoder_forward.1} parent=0 // pred_region
    _
  $region9: #{encoder_forward.1} parent=0 // pred_fallthru
    _
  // Predicated region
  $region10: #{encoder_forward.1} parent=0 // pred_check
    _
  $region11: #{encoder_forward.1} parent=0 // pred_check_branch
    %30 = sbr.rel (0) target = $region13
  $region12: #{encoder_forward.1} parent=0 // pred_region
    _
  $region13: #{encoder_forward.1} parent=0 // pred_fallthru
    _
  // Predicated region
  $region14: #{encoder_forward.1} parent=0 // pred_check
    _
  $region15: #{encoder_forward.1} parent=0 // pred_check_branch
    %32 = sbr.rel (0) target = $region17
  $region16: #{encoder_forward.1} parent=0 // pred_region
    _
  $region17: #{encoder_forward.1} parent=0 // pred_fallthru
    _
  // Predicated region
  $region18: #{encoder_forward.1} parent=0 // pred_check
    _
  $region19: #{encoder_forward.1} parent=0 // pred_check_branch
    %34 = sbr.rel (0) target = $region21
  $region20: #{encoder_forward.1} parent=0 // pred_region
    _
  $region21: #{encoder_forward.1} parent=0 // pred_fallthru
    _
  // Predicated region
  $region22: #{encoder_forward.1} parent=0 // pred_check
    _
  $region23: #{encoder_forward.1} parent=0 // pred_check_branch
    %36 = sbr.rel (0) target = $region25
  $region24: #{encoder_forward.1} parent=0 // pred_region
    _
  $region25: #{encoder_forward.1} parent=0 // pred_fallthru
    _
  // Predicated region
  $region26: #{encoder_forward.1} parent=0 // pred_check
    _
  $region27: #{encoder_forward.1} parent=0 // pred_check_branch
    %38 = sbr.rel (0) target = $region29
  $region28: #{encoder_forward.1} parent=0 // pred_region
    _
  $region29: #{encoder_forward.1} parent=0 // pred_fallthru
    _
  // Predicated region
  $region30: #{encoder_forward.1} parent=0 // pred_check
    _
  $region31: #{encoder_forward.1} parent=0 // pred_check_branch
    %40 = sbr.rel (0) target = $region33
  $region32: #{encoder_forward.1} parent=0 // pred_region
    _
  $region33: #{encoder_forward.1} parent=0 // pred_fallthru
    _
  // Predicated region
  $region34: #{encoder_forward.1} parent=0 // pred_check
    _
  $region35: #{encoder_forward.1} parent=0 // pred_check_branch
    %42 = sbr.rel (0) target = $region37
  $region36: #{encoder_forward.1} parent=0 // pred_region
    _
  $region37: #{encoder_forward.1} parent=0 // pred_fallthru
    _
  // Predicated region
  $region38: #{encoder_forward.1} parent=0 // pred_check
    _
  $region39: #{encoder_forward.1} parent=0 // pred_check_branch
    %44 = sbr.rel (0) target = $region41
  $region40: #{encoder_forward.1} parent=0 // pred_region
    _
  $region41: #{encoder_forward.1} parent=0 // pred_fallthru
    _
  // Predicated region
  $region42: #{encoder_forward.1} parent=0 // pred_check
    _
  $region43: #{encoder_forward.1} parent=0 // pred_check_branch
    %46 = sbr.rel (0) target = $region45
  $region44: #{encoder_forward.1} parent=0 // pred_region
    _
  $region45: #{encoder_forward.1} parent=0 // pred_fallthru
    _
  // Predicated region
  $region46: #{encoder_forward.1} parent=0 // pred_check
    _
  $region47: #{encoder_forward.1} parent=0 // pred_check_branch
    %48 = sbr.rel (0) target = $region49
  $region48: #{encoder_forward.1} parent=0 // pred_region
    _
  $region49: #{encoder_forward.1} parent=0 // pred_fallthru
    _
  // Predicated region
  $region50: #{encoder_forward.1} parent=0 // pred_check
    _
  $region51: #{encoder_forward.1} parent=0 // pred_check_branch
    %50 = sbr.rel (0) target = $region53
  $region52: #{encoder_forward.1} parent=0 // pred_region
    _
  $region53: #{encoder_forward.1} parent=0 // pred_fallthru
    _
  // Predicated region
  $region54: #{encoder_forward.1} parent=0 // pred_check
    _
  $region55: #{encoder_forward.1} parent=0 // pred_check_branch
    %52 = sbr.rel (0) target = $region57
  $region56: #{encoder_forward.1} parent=0 // pred_region
    _
  $region57: #{encoder_forward.1} parent=0 // pred_fallthru
    _
  // Predicated region
  $region58: #{encoder_forward.1} parent=0 // pred_check
    _
  $region59: #{encoder_forward.1} parent=0 // pred_check_branch
    %54 = sbr.rel (0) target = $region61
  $region60: #{encoder_forward.1} parent=0 // pred_region
    _
  $region61: #{encoder_forward.1} parent=0 // pred_fallthru
    _
  // Predicated region
  $region62: #{encoder_forward.1} parent=0 // pred_check
    _
  $region63: #{encoder_forward.1} parent=0 // pred_check_branch
    %56 = sbr.rel (0) target = $region65
  $region64: #{encoder_forward.1} parent=0 // pred_region
    _
  $region65: #{encoder_forward.1} parent=0 // pred_fallthru
    _
  // Predicated region
  $region66: #{encoder_forward.1} parent=0 // pred_check
    _
  $region67: #{encoder_forward.1} parent=0 // pred_check_branch
    %58 = sbr.rel (0) target = $region69
  $region68: #{encoder_forward.1} parent=0 // pred_region
    _
  $region69: #{encoder_forward.1} parent=0 // pred_fallthru
    _
  // Predicated region
  $region70: #{encoder_forward.1} parent=0 // pred_check
    _
  $region71: #{encoder_forward.1} parent=0 // pred_check_branch
    %60 = sbr.rel (0) target = $region73
  $region72: #{encoder_forward.1} parent=0 // pred_region
    _
  $region73: #{encoder_forward.1} parent=0 // pred_fallthru
    _
  // Predicated region
  $region74: #{encoder_forward.1} parent=0 // pred_check
    _
  $region75: #{encoder_forward.1} parent=0 // pred_check_branch
    %62 = sbr.rel (0) target = $region77
  $region76: #{encoder_forward.1} parent=0 // pred_region
    _
  $region77: #{encoder_forward.1} parent=0 // pred_fallthru
    _
  // Predicated region
  $region78: #{encoder_forward.1} parent=0 // pred_check
    _
  $region79: #{encoder_forward.1} parent=0 // pred_check_branch
    %64 = sbr.rel (0) target = $region81
  $region80: #{encoder_forward.1} parent=0 // pred_region
    _
  $region81: #{encoder_forward.1} parent=0 // pred_fallthru
    _
  %v65 = vld [vmem:[%s3] ss:$2 sm:$0x3]
  %s66 = scalar_lea.vmem %s3, 1
  %v67 = vld [vmem:[%s66] ss:$2 sm:$0x3]
  %v68 = vld [vmem:[%s4] sm:$0xff]
  %69 = vst [vmem:[#allocation2] sm:$0xff] 0.0
  %70 = vst [vmem:[#allocation2 + $0x8] sm:$0xff] 0.0
  %71 = vst [vmem:[#allocation2 + $0x10] sm:$0xff] 0.0
  %72 = vst [vmem:[#allocation2 + $0x18] sm:$0xff] 0.0
  %v73 = vld [vmem:[%s0] sm:$0xff]
  %v74 = vld [vmem:[%s0 + $0x8] sm:$0xff]
  %v75 = vld [vmem:[%s1] sm:$0xff]
  %v76 = vld [vmem:[%s1 + $0x8] sm:$0xff]
  %v77 = vld [vmem:[%s1 + $0x10] sm:$0xff]
  %v78 = vld [vmem:[%s1 + $0x18] sm:$0xff]
  %v79 = vld [vmem:[%s1 + $0x20] sm:$0xff]
  %v80 = vld [vmem:[%s1 + $0x28] sm:$0xff]
  %v81 = vld [vmem:[%s1 + $0x30] sm:$0xff]
  %v82 = vld [vmem:[%s1 + $0x38] sm:$0xff]
  %v83 = vld [vmem:[%s2] sm:$0xff]
  %v84 = vld [vmem:[%s2 + $0x8] sm:$0xff]
  %v85 = vld [vmem:[%s2 + $0x10] sm:$0xff]
  %v86 = vld [vmem:[%s2 + $0x18] sm:$0xff]
  %v87 = vld [vmem:[%s2 + $0x20] sm:$0xff]
  %v88 = vld [vmem:[%s2 + $0x28] sm:$0xff]
  %v89 = vld [vmem:[%s2 + $0x30] sm:$0xff]
  %v90 = vld [vmem:[%s2 + $0x38] sm:$0xff]
  %v91 = vld [vmem:[%s10] sm:$0xff]
  %v92 = vld [vmem:[%s10 + $0x8] sm:$0xff]
  %v93 = vld [vmem:[%s10 + $0x10] sm:$0xff]
  %v94 = vld [vmem:[%s10 + $0x18] sm:$0xff]
  %v95 = vld [vmem:[%s10 + $0x20] sm:$0xff]
  %v96 = vld [vmem:[%s10 + $0x28] sm:$0xff]
  %v97 = vld [vmem:[%s10 + $0x30] sm:$0xff]
  %v98 = vld [vmem:[%s10 + $0x38] sm:$0xff]
  %v99 = vld [vmem:[%s11] sm:$0xff]
  %v100 = vld [vmem:[%s11 + $0x8] sm:$0xff]
  %v101 = vld [vmem:[%s11 + $0x10] sm:$0xff]
  %v102 = vld [vmem:[%s11 + $0x18] sm:$0xff]
  %v103 = vld [vmem:[%s11 + $0x20] sm:$0xff]
  %v104 = vld [vmem:[%s11 + $0x28] sm:$0xff]
  %v105 = vld [vmem:[%s11 + $0x30] sm:$0xff]
  %v106 = vld [vmem:[%s11 + $0x38] sm:$0xff]
  %vm107 = vcmask 523264
  %v109 = vsel %vm107, %v91, 0
  %v112 = vsel %vm107, %v92, 0
  %v115 = vsel %vm107, %v93, 0
  %v118 = vsel %vm107, %v94, 0
  %v121 = vsel %vm107, %v95, 0
  %v124 = vsel %vm107, %v96, 0
  %v127 = vsel %vm107, %v97, 0
  %v130 = vsel %vm107, %v98, 0
  %132 = vmatprep.subr.mxu0 0.0
  %133 = vmatpush1.msra.mxu0 %v75
  %134 = vmatprep.subr.mxu0 0.0
  %135 = vmatpush1.msra.mxu0 %v76
  %136 = vmatprep.subr.mxu0 0.0
  %137 = vmatpush1.msra.mxu0 %v77
  %138 = vmatprep.subr.mxu0 0.0
  %139 = vmatpush1.msra.mxu0 %v78
  %140 = vmatprep.subr.mxu0 0.0
  %141 = vmatpush1.msra.mxu0 %v79
  %142 = vmatprep.subr.mxu0 0.0
  %143 = vmatpush1.msra.mxu0 %v80
  %144 = vmatprep.subr.mxu0 0.0
  %145 = vmatpush1.msra.mxu0 %v81
  %146 = vmatprep.subr.mxu0 0.0
  %147 = vmatpush1.msra.mxu0 %v82
  %148 = vmatprep.subr.mxu0 0.0
  %149 = vmatpush1.msra.mxu0 0.0
  %150 = vmatprep.subr.mxu0 0.0
  %151 = vmatpush1.msra.mxu0 0.0
  %152 = vmatprep.subr.mxu0 0.0
  %153 = vmatpush1.msra.mxu0 0.0
  %154 = vmatprep.subr.mxu0 0.0
  %155 = vmatpush1.msra.mxu0 0.0
  %156 = vmatprep.subr.mxu0 0.0
  %157 = vmatpush1.msra.mxu0 0.0
  %158 = vmatprep.subr.mxu0 0.0
  %159 = vmatpush1.msra.mxu0 0.0
  %160 = vmatprep.subr.mxu0 0.0
  %161 = vmatpush1.msra.mxu0 0.0
  %162 = vmatprep.subr.mxu0 0.0
  %163 = vmatpush1.msra.mxu0 0.0
  %164 = vmatprep.subr.mxu0 0.0
  %165 = vmatpush1.msra.mxu0 0.0
  %166 = vmatprep.subr.mxu0 0.0
  %167 = vmatpush1.msra.mxu0 0.0
  %168 = vmatprep.subr.mxu0 0.0
  %169 = vmatpush1.msra.mxu0 0.0
  %170 = vmatprep.subr.mxu0 0.0
  %171 = vmatpush1.msra.mxu0 0.0
  %172 = vmatprep.subr.mxu0 0.0
  %173 = vmatpush1.msra.mxu0 0.0
  %174 = vmatprep.subr.mxu0 0.0
  %175 = vmatpush1.msra.mxu0 0.0
  %176 = vmatprep.subr.mxu0 0.0
  %177 = vmatpush1.msra.mxu0 0.0
  %178 = vmatprep.subr.mxu0 0.0
  %179 = vmatpush1.msra.mxu0 0.0
  %180 = vmatprep.subr.mxu0 0.0
  %181 = vmatpush1.msra.mxu0 0.0
  %182 = vmatprep.subr.mxu0 0.0
  %183 = vmatpush1.msra.mxu0 0.0
  %184 = vmatprep.subr.mxu0 0.0
  %185 = vmatpush1.msra.mxu0 0.0
  %186 = vmatprep.subr.mxu0 0.0
  %187 = vmatpush1.msra.mxu0 0.0
  %188 = vmatprep.subr.mxu0 0.0
  %189 = vmatpush1.msra.mxu0 0.0
  %190 = vmatprep.subr.mxu0 0.0
  %191 = vmatpush1.msra.mxu0 0.0
  %192 = vmatprep.subr.mxu0 0.0
  %193 = vmatpush1.msra.mxu0 0.0
  %194 = vmatprep.subr.mxu0 0.0
  %195 = vmatpush1.msra.mxu0 0.0
  %196 = vmatprep.mubr.f32.mxu0 0.0
  %197 = vmatmul.mubr.f32.gmra.mrb[0].mxu0 %v109
  %v198 = vpop.f32.mrb[0].mxu0
  %v199 = vadd.f32 %v99, %v198
  %v200 = vpop.f32.mrb[0].mxu0
  %201 = vmatprep.mubr.f32.mxu0 0.0
  %202 = vmatmul.mubr.f32.gmra.mrb[0].mxu0 %v112
  %v203 = vpop.f32.mrb[0].mxu0
  %v204 = vadd.f32 %v100, %v203
  %v205 = vpop.f32.mrb[0].mxu0
  %206 = vmatprep.mubr.f32.mxu0 0.0
  %207 = vmatmul.mubr.f32.gmra.mrb[0].mxu0 %v115
  %v208 = vpop.f32.mrb[0].mxu0
  %v209 = vadd.f32 %v101, %v208
  %v210 = vpop.f32.mrb[0].mxu0
  %211 = vmatprep.mubr.f32.mxu0 0.0
  %212 = vmatmul.mubr.f32.gmra.mrb[0].mxu0 %v118
  %v213 = vpop.f32.mrb[0].mxu0
  %v214 = vadd.f32 %v102, %v213
  %v215 = vpop.f32.mrb[0].mxu0
  %216 = vmatprep.mubr.f32.mxu0 0.0
  %217 = vmatmul.mubr.f32.gmra.mrb[0].mxu0 %v121
  %v218 = vpop.f32.mrb[0].mxu0
  %v219 = vadd.f32 %v103, %v218
  %v220 = vpop.f32.mrb[0].mxu0
  %221 = vmatprep.mubr.f32.mxu0 0.0
  %222 = vmatmul.mubr.f32.gmra.mrb[0].mxu0 %v124
  %v223 = vpop.f32.mrb[0].mxu0
  %v224 = vadd.f32 %v104, %v223
  %v225 = vpop.f32.mrb[0].mxu0
  %226 = vmatprep.mubr.f32.mxu0 0.0
  %227 = vmatmul.mubr.f32.gmra.mrb[0].mxu0 %v127
  %v228 = vpop.f32.mrb[0].mxu0
  %v229 = vadd.f32 %v105, %v228
  %v230 = vpop.f32.mrb[0].mxu0
  %231 = vmatprep.mubr.f32.mxu0 0.0
  %232 = vmatmul.mubr.f32.gmra.mrb[0].mxu0 %v130
  %v233 = vpop.f32.mrb[0].mxu0
  %v234 = vadd.f32 %v106, %v233
  %v235 = vpop.f32.mrb[0].mxu0
  %236 = vdwg.mxu0
  %v237 = vmul.f32 %v199, 0.5
  %v238 = vmul.f32 %v204, 0.5
  %v239 = vmul.f32 %v209, 0.5
  %v240 = vmul.f32 %v214, 0.5
  %v241 = vmul.f32 %v219, 0.5
  %v242 = vmul.f32 %v224, 0.5
  %v243 = vmul.f32 %v229, 0.5
  %v244 = vmul.f32 %v234, 0.5
  %v245 = vtanh.pop %v237
  %v246 = vtanh.pop %v238
  %v247 = vtanh.pop %v239
  %v248 = vtanh.pop %v240
  %v249 = vtanh.pop %v241
  %v250 = vtanh.pop %v242
  %v251 = vtanh.pop %v243
  %v252 = vtanh.pop %v244
  %v253 = vadd.f32 %v245, 1.0
  %v254 = vadd.f32 %v246, 1.0
  %v255 = vadd.f32 %v247, 1.0
  %v256 = vadd.f32 %v248, 1.0
  %v257 = vadd.f32 %v249, 1.0
  %v258 = vadd.f32 %v250, 1.0
  %v259 = vadd.f32 %v251, 1.0
  %v260 = vadd.f32 %v252, 1.0
  %v261 = vmul.f32 %v253, 0.5
  %v262 = vmul.f32 %v254, 0.5
  %v263 = vmul.f32 %v255, 0.5
  %v264 = vmul.f32 %v256, 0.5
  %v265 = vmul.f32 %v257, 0.5
  %v266 = vmul.f32 %v258, 0.5
  %v267 = vmul.f32 %v259, 0.5
  %v268 = vmul.f32 %v260, 0.5
  %v269 = vmul.f32 %v199, %v261
  %v270 = vmul.f32 %v204, %v262
  %v271 = vmul.f32 %v209, %v263
  %v272 = vmul.f32 %v214, %v264
  %v273 = vmul.f32 %v219, %v265
  %v274 = vmul.f32 %v224, %v266
  %v275 = vmul.f32 %v229, %v267
  %v276 = vmul.f32 %v234, %v268
  %v277 = vld [vmem:[%s12] sm:$0xff]
  %v278 = vld [vmem:[%s13] sm:$0xff]
  %v280 = vsel %vm107, %v277, 0
  %282 = vmatprep.subr.mxu0 0.0
  %283 = vmatpush1.msra.mxu0 %v269
  %284 = vmatprep.subr.mxu0 0.0
  %285 = vmatpush1.msra.mxu0 %v270
  %286 = vmatprep.subr.mxu0 0.0
  %287 = vmatpush1.msra.mxu0 %v271
  %288 = vmatprep.subr.mxu0 0.0
  %289 = vmatpush1.msra.mxu0 %v272
  %290 = vmatprep.subr.mxu0 0.0
  %291 = vmatpush1.msra.mxu0 %v273
  %292 = vmatprep.subr.mxu0 0.0
  %293 = vmatpush1.msra.mxu0 %v274
  %294 = vmatprep.subr.mxu0 0.0
  %295 = vmatpush1.msra.mxu0 %v275
  %296 = vmatprep.subr.mxu0 0.0
  %297 = vmatpush1.msra.mxu0 %v276
  %298 = vmatprep.subr.mxu0 0.0
  %299 = vmatpush1.msra.mxu0 0.0
  %300 = vmatprep.subr.mxu0 0.0
  %301 = vmatpush1.msra.mxu0 0.0
  %302 = vmatprep.subr.mxu0 0.0
  %303 = vmatpush1.msra.mxu0 0.0
  %304 = vmatprep.subr.mxu0 0.0
  %305 = vmatpush1.msra.mxu0 0.0
  %306 = vmatprep.subr.mxu0 0.0
  %307 = vmatpush1.msra.mxu0 0.0
  %308 = vmatprep.subr.mxu0 0.0
  %309 = vmatpush1.msra.mxu0 0.0
  %310 = vmatprep.subr.mxu0 0.0
  %311 = vmatpush1.msra.mxu0 0.0
  %312 = vmatprep.subr.mxu0 0.0
  %313 = vmatpush1.msra.mxu0 0.0
  %314 = vmatprep.subr.mxu0 0.0
  %315 = vmatpush1.msra.mxu0 0.0
  %316 = vmatprep.subr.mxu0 0.0
  %317 = vmatpush1.msra.mxu0 0.0
  %318 = vmatprep.subr.mxu0 0.0
  %319 = vmatpush1.msra.mxu0 0.0
  %320 = vmatprep.subr.mxu0 0.0
  %321 = vmatpush1.msra.mxu0 0.0
  %322 = vmatprep.subr.mxu0 0.0
  %323 = vmatpush1.msra.mxu0 0.0
  %324 = vmatprep.subr.mxu0 0.0
  %325 = vmatpush1.msra.mxu0 0.0
  %326 = vmatprep.subr.mxu0 0.0
  %327 = vmatpush1.msra.mxu0 0.0
  %328 = vmatprep.subr.mxu0 0.0
  %329 = vmatpush1.msra.mxu0 0.0
  %330 = vmatprep.subr.mxu0 0.0
  %331 = vmatpush1.msra.mxu0 0.0
  %332 = vmatprep.subr.mxu0 0.0
  %333 = vmatpush1.msra.mxu0 0.0
  %334 = vmatprep.subr.mxu0 0.0
  %335 = vmatpush1.msra.mxu0 0.0
  %336 = vmatprep.subr.mxu0 0.0
  %337 = vmatpush1.msra.mxu0 0.0
  %338 = vmatprep.subr.mxu0 0.0
  %339 = vmatpush1.msra.mxu0 0.0
  %340 = vmatprep.subr.mxu0 0.0
  %341 = vmatpush1.msra.mxu0 0.0
  %342 = vmatprep.subr.mxu0 0.0
  %343 = vmatpush1.msra.mxu0 0.0
  %344 = vmatprep.subr.mxu0 0.0
  %345 = vmatpush1.msra.mxu0 0.0
  %346 = vmatprep.mubr.f32.mxu0 0.0
  %347 = vmatmul.mubr.f32.gmra.mrb[0].mxu0 %v280
  %v348 = vpop.f32.mrb[0].mxu0
  %v349 = vadd.f32 %v278, %v348
  %v350 = vpop.f32.mrb[0].mxu0
  %351 = vdwg.mxu0
  %v352 = vld [vmem:[%s14] sm:$0xff]
  %v353 = vld [vmem:[%s14 + $0x8] sm:$0xff]
  %v354 = vld [vmem:[%s14 + $0x10] sm:$0xff]
  %v355 = vld [vmem:[%s14 + $0x18] sm:$0xff]
  %v356 = vld [vmem:[%s14 + $0x20] sm:$0xff]
  %v357 = vld [vmem:[%s14 + $0x28] sm:$0xff]
  %v358 = vld [vmem:[%s14 + $0x30] sm:$0xff]
  %v359 = vld [vmem:[%s14 + $0x38] sm:$0xff]
  %v360 = vld [vmem:[%s15] sm:$0xff]
  %v361 = vld [vmem:[%s15 + $0x8] sm:$0xff]
  %v362 = vld [vmem:[%s15 + $0x10] sm:$0xff]
  %v363 = vld [vmem:[%s15 + $0x18] sm:$0xff]
  %v364 = vld [vmem:[%s15 + $0x20] sm:$0xff]
  %v365 = vld [vmem:[%s15 + $0x28] sm:$0xff]
  %v366 = vld [vmem:[%s15 + $0x30] sm:$0xff]
  %v367 = vld [vmem:[%s15 + $0x38] sm:$0xff]
  %v369 = vsel %vm107, %v352, 0
  %v372 = vsel %vm107, %v353, 0
  %v375 = vsel %vm107, %v354, 0
  %v378 = vsel %vm107, %v355, 0
  %v381 = vsel %vm107, %v356, 0
  %v384 = vsel %vm107, %v357, 0
  %v387 = vsel %vm107, %v358, 0
  %v390 = vsel %vm107, %v359, 0
  %392 = vmatprep.subr.mxu0 0.0
  %393 = vmatpush1.msra.mxu0 %v83
  %394 = vmatprep.subr.mxu0 0.0
  %395 = vmatpush1.msra.mxu0 %v84
  %396 = vmatprep.subr.mxu0 0.0
  %397 = vmatpush1.msra.mxu0 %v85
  %398 = vmatprep.subr.mxu0 0.0
  %399 = vmatpush1.msra.mxu0 %v86
  %400 = vmatprep.subr.mxu0 0.0
  %401 = vmatpush1.msra.mxu0 %v87
  %402 = vmatprep.subr.mxu0 0.0
  %403 = vmatpush1.msra.mxu0 %v88
  %404 = vmatprep.subr.mxu0 0.0
  %405 = vmatpush1.msra.mxu0 %v89
  %406 = vmatprep.subr.mxu0 0.0
  %407 = vmatpush1.msra.mxu0 %v90
  %408 = vmatprep.subr.mxu0 0.0
  %409 = vmatpush1.msra.mxu0 0.0
  %410 = vmatprep.subr.mxu0 0.0
  %411 = vmatpush1.msra.mxu0 0.0
  %412 = vmatprep.subr.mxu0 0.0
  %413 = vmatpush1.msra.mxu0 0.0
  %414 = vmatprep.subr.mxu0 0.0
  %415 = vmatpush1.msra.mxu0 0.0
  %416 = vmatprep.subr.mxu0 0.0
  %417 = vmatpush1.msra.mxu0 0.0
  %418 = vmatprep.subr.mxu0 0.0
  %419 = vmatpush1.msra.mxu0 0.0
  %420 = vmatprep.subr.mxu0 0.0
  %421 = vmatpush1.msra.mxu0 0.0
  %422 = vmatprep.subr.mxu0 0.0
  %423 = vmatpush1.msra.mxu0 0.0
  %424 = vmatprep.subr.mxu0 0.0
  %425 = vmatpush1.msra.mxu0 0.0
  %426 = vmatprep.subr.mxu0 0.0
  %427 = vmatpush1.msra.mxu0 0.0
  %428 = vmatprep.subr.mxu0 0.0
  %429 = vmatpush1.msra.mxu0 0.0
  %430 = vmatprep.subr.mxu0 0.0
  %431 = vmatpush1.msra.mxu0 0.0
  %432 = vmatprep.subr.mxu0 0.0
  %433 = vmatpush1.msra.mxu0 0.0
  %434 = vmatprep.subr.mxu0 0.0
  %435 = vmatpush1.msra.mxu0 0.0
  %436 = vmatprep.subr.mxu0 0.0
  %437 = vmatpush1.msra.mxu0 0.0
  %438 = vmatprep.subr.mxu0 0.0
  %439 = vmatpush1.msra.mxu0 0.0
  %440 = vmatprep.subr.mxu0 0.0
  %441 = vmatpush1.msra.mxu0 0.0
  %442 = vmatprep.subr.mxu0 0.0
  %443 = vmatpush1.msra.mxu0 0.0
  %444 = vmatprep.subr.mxu0 0.0
  %445 = vmatpush1.msra.mxu0 0.0
  %446 = vmatprep.subr.mxu0 0.0
  %447 = vmatpush1.msra.mxu0 0.0
  %448 = vmatprep.subr.mxu0 0.0
  %449 = vmatpush1.msra.mxu0 0.0
  %450 = vmatprep.subr.mxu0 0.0
  %451 = vmatpush1.msra.mxu0 0.0
  %452 = vmatprep.subr.mxu0 0.0
  %453 = vmatpush1.msra.mxu0 0.0
  %454 = vmatprep.subr.mxu0 0.0
  %455 = vmatpush1.msra.mxu0 0.0
  %456 = vmatprep.mubr.f32.mxu0 0.0
  %457 = vmatmul.mubr.f32.gmra.mrb[0].mxu0 %v369
  %v458 = vpop.f32.mrb[0].mxu0
  %v459 = vadd.f32 %v360, %v458
  %v460 = vpop.f32.mrb[0].mxu0
  %461 = vmatprep.mubr.f32.mxu0 0.0
  %462 = vmatmul.mubr.f32.gmra.mrb[0].mxu0 %v372
  %v463 = vpop.f32.mrb[0].mxu0
  %v464 = vadd.f32 %v361, %v463
  %v465 = vpop.f32.mrb[0].mxu0
  %466 = vmatprep.mubr.f32.mxu0 0.0
  %467 = vmatmul.mubr.f32.gmra.mrb[0].mxu0 %v375
  %v468 = vpop.f32.mrb[0].mxu0
  %v469 = vadd.f32 %v362, %v468
  %v470 = vpop.f32.mrb[0].mxu0
  %471 = vmatprep.mubr.f32.mxu0 0.0
  %472 = vmatmul.mubr.f32.gmra.mrb[0].mxu0 %v378
  %v473 = vpop.f32.mrb[0].mxu0
  %v474 = vadd.f32 %v363, %v473
  %v475 = vpop.f32.mrb[0].mxu0
  %476 = vmatprep.mubr.f32.mxu0 0.0
  %477 = vmatmul.mubr.f32.gmra.mrb[0].mxu0 %v381
  %v478 = vpop.f32.mrb[0].mxu0
  %v479 = vadd.f32 %v364, %v478
  %v480 = vpop.f32.mrb[0].mxu0
  %481 = vmatprep.mubr.f32.mxu0 0.0
  %482 = vmatmul.mubr.f32.gmra.mrb[0].mxu0 %v384
  %v483 = vpop.f32.mrb[0].mxu0
  %v484 = vadd.f32 %v365, %v483
  %v485 = vpop.f32.mrb[0].mxu0
  %486 = vmatprep.mubr.f32.mxu0 0.0
  %487 = vmatmul.mubr.f32.gmra.mrb[0].mxu0 %v387
  %v488 = vpop.f32.mrb[0].mxu0
  %v489 = vadd.f32 %v366, %v488
  %v490 = vpop.f32.mrb[0].mxu0
  %491 = vmatprep.mubr.f32.mxu0 0.0
  %492 = vmatmul.mubr.f32.gmra.mrb[0].mxu0 %v390
  %v493 = vpop.f32.mrb[0].mxu0
  %v494 = vadd.f32 %v367, %v493
  %v495 = vpop.f32.mrb[0].mxu0
  %496 = vdwg.mxu0
  %v497 = vmul.f32 %v459, 0.5
  %v498 = vmul.f32 %v464, 0.5
  %v499 = vmul.f32 %v469, 0.5
  %v500 = vmul.f32 %v474, 0.5
  %v501 = vmul.f32 %v479, 0.5
  %v502 = vmul.f32 %v484, 0.5
  %v503 = vmul.f32 %v489, 0.5
  %v504 = vmul.f32 %v494, 0.5
  %v505 = vtanh.pop %v497
  %v506 = vtanh.pop %v498
  %v507 = vtanh.pop %v499
  %v508 = vtanh.pop %v500
  %v509 = vtanh.pop %v501
  %v510 = vtanh.pop %v502
  %v511 = vtanh.pop %v503
  %v512 = vtanh.pop %v504
  %v513 = vadd.f32 %v505, 1.0
  %v514 = vadd.f32 %v506, 1.0
  %v515 = vadd.f32 %v507, 1.0
  %v516 = vadd.f32 %v508, 1.0
  %v517 = vadd.f32 %v509, 1.0
  %v518 = vadd.f32 %v510, 1.0
  %v519 = vadd.f32 %v511, 1.0
  %v520 = vadd.f32 %v512, 1.0
  %v521 = vmul.f32 %v513, 0.5
  %v522 = vmul.f32 %v514, 0.5
  %v523 = vmul.f32 %v515, 0.5
  %v524 = vmul.f32 %v516, 0.5
  %v525 = vmul.f32 %v517, 0.5
  %v526 = vmul.f32 %v518, 0.5
  %v527 = vmul.f32 %v519, 0.5
  %v528 = vmul.f32 %v520, 0.5
  %v529 = vmul.f32 %v459, %v521
  %v530 = vmul.f32 %v464, %v522
  %v531 = vmul.f32 %v469, %v523
  %v532 = vmul.f32 %v474, %v524
  %v533 = vmul.f32 %v479, %v525
  %v534 = vmul.f32 %v484, %v526
  %v535 = vmul.f32 %v489, %v527
  %v536 = vmul.f32 %v494, %v528
  %v537 = vld [vmem:[%s16] sm:$0xff]
  %v538 = vld [vmem:[%s17] sm:$0xff]
  %v540 = vsel %vm107, %v537, 0
  %542 = vmatprep.subr.mxu0 0.0
  %543 = vmatpush1.msra.mxu0 %v529
  %544 = vmatprep.subr.mxu0 0.0
  %545 = vmatpush1.msra.mxu0 %v530
  %546 = vmatprep.subr.mxu0 0.0
  %547 = vmatpush1.msra.mxu0 %v531
  %548 = vmatprep.subr.mxu0 0.0
  %549 = vmatpush1.msra.mxu0 %v532
  %550 = vmatprep.subr.mxu0 0.0
  %551 = vmatpush1.msra.mxu0 %v533
  %552 = vmatprep.subr.mxu0 0.0
  %553 = vmatpush1.msra.mxu0 %v534
  %554 = vmatprep.subr.mxu0 0.0
  %555 = vmatpush1.msra.mxu0 %v535
  %556 = vmatprep.subr.mxu0 0.0
  %557 = vmatpush1.msra.mxu0 %v536
  %558 = vmatprep.subr.mxu0 0.0
  %559 = vmatpush1.msra.mxu0 0.0
  %560 = vmatprep.subr.mxu0 0.0
  %561 = vmatpush1.msra.mxu0 0.0
  %562 = vmatprep.subr.mxu0 0.0
  %563 = vmatpush1.msra.mxu0 0.0
  %564 = vmatprep.subr.mxu0 0.0
  %565 = vmatpush1.msra.mxu0 0.0
  %566 = vmatprep.subr.mxu0 0.0
  %567 = vmatpush1.msra.mxu0 0.0
  %568 = vmatprep.subr.mxu0 0.0
  %569 = vmatpush1.msra.mxu0 0.0
  %570 = vmatprep.subr.mxu0 0.0
  %571 = vmatpush1.msra.mxu0 0.0
  %572 = vmatprep.subr.mxu0 0.0
  %573 = vmatpush1.msra.mxu0 0.0
  %574 = vmatprep.subr.mxu0 0.0
  %575 = vmatpush1.msra.mxu0 0.0
  %576 = vmatprep.subr.mxu0 0.0
  %577 = vmatpush1.msra.mxu0 0.0
  %578 = vmatprep.subr.mxu0 0.0
  %579 = vmatpush1.msra.mxu0 0.0
  %580 = vmatprep.subr.mxu0 0.0
  %581 = vmatpush1.msra.mxu0 0.0
  %582 = vmatprep.subr.mxu0 0.0
  %583 = vmatpush1.msra.mxu0 0.0
  %584 = vmatprep.subr.mxu0 0.0
  %585 = vmatpush1.msra.mxu0 0.0
  %586 = vmatprep.subr.mxu0 0.0
  %587 = vmatpush1.msra.mxu0 0.0
  %588 = vmatprep.subr.mxu0 0.0
  %589 = vmatpush1.msra.mxu0 0.0
  %590 = vmatprep.subr.mxu0 0.0
  %591 = vmatpush1.msra.mxu0 0.0
  %592 = vmatprep.subr.mxu0 0.0
  %593 = vmatpush1.msra.mxu0 0.0
  %594 = vmatprep.subr.mxu0 0.0
  %595 = vmatpush1.msra.mxu0 0.0
  %596 = vmatprep.subr.mxu0 0.0
  %597 = vmatpush1.msra.mxu0 0.0
  %598 = vmatprep.subr.mxu0 0.0
  %599 = vmatpush1.msra.mxu0 0.0
  %600 = vmatprep.subr.mxu0 0.0
  %601 = vmatpush1.msra.mxu0 0.0
  %602 = vmatprep.subr.mxu0 0.0
  %603 = vmatpush1.msra.mxu0 0.0
  %604 = vmatprep.subr.mxu0 0.0
  %605 = vmatpush1.msra.mxu0 0.0
  %606 = vmatprep.mubr.f32.mxu0 0.0
  %607 = vmatmul.mubr.f32.gmra.mrb[0].mxu0 %v540
  %v608 = vpop.f32.mrb[0].mxu0
  %v609 = vadd.f32 %v538, %v608
  %v610 = vpop.f32.mrb[0].mxu0
  %611 = vdwg.mxu0
  %v612 = vld [vmem:[%s6] sm:$0xff]
  %v613 = vld [vmem:[%s7] sm:$0xff]
  %v614 = vmul.f32 %v73, 0.5
  %v615 = vmul.f32 %v74, 0.5
  %v616 = vtanh.pop %v614
  %v617 = vtanh.pop %v615
  %v618 = vadd.f32 %v616, 1.0
  %v619 = vadd.f32 %v617, 1.0
  %v620 = vmul.f32 %v618, 0.5
  %v621 = vmul.f32 %v619, 0.5
  %v622 = vmul.f32 %v73, %v620
  %v623 = vmul.f32 %v74, %v621
  %v624 = vadd.f32 %v622, %v623
  %625 = vadd.xlane.f32.xlu0 %v624
  %v626 = vpop.xlane.xlu0 %625
  %vm627 = vcmask 64512
  %v629 = vsel %vm627, %v68, 0
  %631 = vmatprep.subr.mxu0 0.0
  %632 = vmatpush1.msra.mxu0 %v626
  %633 = vmatprep.subr.mxu0 0.0
  %634 = vmatpush1.msra.mxu0 0.0
  %635 = vmatprep.subr.mxu0 0.0
  %636 = vmatpush1.msra.mxu0 0.0
  %637 = vmatprep.subr.mxu0 0.0
  %638 = vmatpush1.msra.mxu0 0.0
  %639 = vmatprep.subr.mxu0 0.0
  %640 = vmatpush1.msra.mxu0 0.0
  %641 = vmatprep.subr.mxu0 0.0
  %642 = vmatpush1.msra.mxu0 0.0
  %643 = vmatprep.subr.mxu0 0.0
  %644 = vmatpush1.msra.mxu0 0.0
  %645 = vmatprep.subr.mxu0 0.0
  %646 = vmatpush1.msra.mxu0 0.0
  %647 = vmatprep.subr.mxu0 0.0
  %648 = vmatpush1.msra.mxu0 0.0
  %649 = vmatprep.subr.mxu0 0.0
  %650 = vmatpush1.msra.mxu0 0.0
  %651 = vmatprep.subr.mxu0 0.0
  %652 = vmatpush1.msra.mxu0 0.0
  %653 = vmatprep.subr.mxu0 0.0
  %654 = vmatpush1.msra.mxu0 0.0
  %655 = vmatprep.subr.mxu0 0.0
  %656 = vmatpush1.msra.mxu0 0.0
  %657 = vmatprep.subr.mxu0 0.0
  %658 = vmatpush1.msra.mxu0 0.0
  %659 = vmatprep.subr.mxu0 0.0
  %660 = vmatpush1.msra.mxu0 0.0
  %661 = vmatprep.subr.mxu0 0.0
  %662 = vmatpush1.msra.mxu0 0.0
  %663 = vmatprep.subr.mxu0 0.0
  %664 = vmatpush1.msra.mxu0 0.0
  %665 = vmatprep.subr.mxu0 0.0
  %666 = vmatpush1.msra.mxu0 0.0
  %667 = vmatprep.subr.mxu0 0.0
  %668 = vmatpush1.msra.mxu0 0.0
  %669 = vmatprep.subr.mxu0 0.0
  %670 = vmatpush1.msra.mxu0 0.0
  %671 = vmatprep.subr.mxu0 0.0
  %672 = vmatpush1.msra.mxu0 0.0
  %673 = vmatprep.subr.mxu0 0.0
  %674 = vmatpush1.msra.mxu0 0.0
  %675 = vmatprep.subr.mxu0 0.0
  %676 = vmatpush1.msra.mxu0 0.0
  %677 = vmatprep.subr.mxu0 0.0
  %678 = vmatpush1.msra.mxu0 0.0
  %679 = vmatprep.subr.mxu0 0.0
  %680 = vmatpush1.msra.mxu0 0.0
  %681 = vmatprep.subr.mxu0 0.0
  %682 = vmatpush1.msra.mxu0 0.0
  %683 = vmatprep.subr.mxu0 0.0
  %684 = vmatpush1.msra.mxu0 0.0
  %685 = vmatprep.subr.mxu0 0.0
  %686 = vmatpush1.msra.mxu0 0.0
  %687 = vmatprep.subr.mxu0 0.0
  %688 = vmatpush1.msra.mxu0 0.0
  %689 = vmatprep.subr.mxu0 0.0
  %690 = vmatpush1.msra.mxu0 0.0
  %691 = vmatprep.subr.mxu0 0.0
  %692 = vmatpush1.msra.mxu0 0.0
  %693 = vmatprep.subr.mxu0 0.0
  %694 = vmatpush1.msra.mxu0 0.0
  %695 = vmatprep.mubr.f32.mxu0 0.0
  %696 = vmatmul.mubr.f32.gmra.mrb[0].mxu0 %v629
  %v697 = vpop.f32.mrb[0].mxu0
  %v698 = vadd.f32 0.0, %v697
  %v699 = vpop.f32.mrb[0].mxu0
  %700 = vdwg.mxu0
  %v701 = vmul.f32 %v698, 0.001953125
  %703 = vset.pattern.permute.xlu0 0
  %704 = vperm.xlu0 %703, %v701
  %v705 = vpop.permute.xlu0 %704
  %v707 = vsub.f32 %v622, %v705
  %v708 = vsub.f32 %v623, %v705
  %v709 = vmul.f32 %v707, %v707
  %v710 = vmul.f32 %v708, %v708
  %v711 = vadd.f32 %v709, %v710
  %712 = vadd.xlane.f32.xlu0 %v711
  %v713 = vpop.xlane.xlu0 %712
  %714 = vmatprep.subr.mxu0 0.0
  %715 = vmatpush1.msra.mxu0 %v713
  %716 = vmatprep.subr.mxu0 0.0
  %717 = vmatpush1.msra.mxu0 0.0
  %718 = vmatprep.subr.mxu0 0.0
  %719 = vmatpush1.msra.mxu0 0.0
  %720 = vmatprep.subr.mxu0 0.0
  %721 = vmatpush1.msra.mxu0 0.0
  %722 = vmatprep.subr.mxu0 0.0
  %723 = vmatpush1.msra.mxu0 0.0
  %724 = vmatprep.subr.mxu0 0.0
  %725 = vmatpush1.msra.mxu0 0.0
  %726 = vmatprep.subr.mxu0 0.0
  %727 = vmatpush1.msra.mxu0 0.0
  %728 = vmatprep.subr.mxu0 0.0
  %729 = vmatpush1.msra.mxu0 0.0
  %730 = vmatprep.subr.mxu0 0.0
  %731 = vmatpush1.msra.mxu0 0.0
  %732 = vmatprep.subr.mxu0 0.0
  %733 = vmatpush1.msra.mxu0 0.0
  %734 = vmatprep.subr.mxu0 0.0
  %735 = vmatpush1.msra.mxu0 0.0
  %736 = vmatprep.subr.mxu0 0.0
  %737 = vmatpush1.msra.mxu0 0.0
  %738 = vmatprep.subr.mxu0 0.0
  %739 = vmatpush1.msra.mxu0 0.0
  %740 = vmatprep.subr.mxu0 0.0
  %741 = vmatpush1.msra.mxu0 0.0
  %742 = vmatprep.subr.mxu0 0.0
  %743 = vmatpush1.msra.mxu0 0.0
  %744 = vmatprep.subr.mxu0 0.0
  %745 = vmatpush1.msra.mxu0 0.0
  %746 = vmatprep.subr.mxu0 0.0
  %747 = vmatpush1.msra.mxu0 0.0
  %748 = vmatprep.subr.mxu0 0.0
  %749 = vmatpush1.msra.mxu0 0.0
  %750 = vmatprep.subr.mxu0 0.0
  %751 = vmatpush1.msra.mxu0 0.0
  %752 = vmatprep.subr.mxu0 0.0
  %753 = vmatpush1.msra.mxu0 0.0
  %754 = vmatprep.subr.mxu0 0.0
  %755 = vmatpush1.msra.mxu0 0.0
  %756 = vmatprep.subr.mxu0 0.0
  %757 = vmatpush1.msra.mxu0 0.0
  %758 = vmatprep.subr.mxu0 0.0
  %759 = vmatpush1.msra.mxu0 0.0
  %760 = vmatprep.subr.mxu0 0.0
  %761 = vmatpush1.msra.mxu0 0.0
  %762 = vmatprep.subr.mxu0 0.0
  %763 = vmatpush1.msra.mxu0 0.0
  %764 = vmatprep.subr.mxu0 0.0
  %765 = vmatpush1.msra.mxu0 0.0
  %766 = vmatprep.subr.mxu0 0.0
  %767 = vmatpush1.msra.mxu0 0.0
  %768 = vmatprep.subr.mxu0 0.0
  %769 = vmatpush1.msra.mxu0 0.0
  %770 = vmatprep.subr.mxu0 0.0
  %771 = vmatpush1.msra.mxu0 0.0
  %772 = vmatprep.subr.mxu0 0.0
  %773 = vmatpush1.msra.mxu0 0.0
  %774 = vmatprep.subr.mxu0 0.0
  %775 = vmatpush1.msra.mxu0 0.0
  %776 = vmatprep.subr.mxu0 0.0
  %777 = vmatpush1.msra.mxu0 0.0
  %778 = vmatprep.mubr.f32.mxu0 0.0
  %779 = vmatmul.mubr.f32.gmra.mrb[0].mxu0 %v629
  %v780 = vpop.f32.mrb[0].mxu0
  %v781 = vadd.f32 0.0, %v780
  %v782 = vpop.f32.mrb[0].mxu0
  %783 = vdwg.mxu0
  %v784 = vmul.f32 %v781, 0.001953125
  %786 = vset.pattern.permute.xlu0 0
  %787 = vperm.xlu0 %786, %v612
  %v788 = vpop.permute.xlu0 %787
  %v790 = vmul.f32 %v788, %v707
  %v791 = vmul.f32 %v788, %v708
  %v792 = vadd.f32 %v784, 1e-05
  %v793 = vrsqrt.pop %v792
  %795 = vset.pattern.permute.xlu0 0
  %796 = vperm.xlu0 %795, %v793
  %v797 = vpop.permute.xlu0 %796
  %v799 = vmul.f32 %v790, %v797
  %v800 = vmul.f32 %v791, %v797
  %802 = vset.pattern.permute.xlu0 0
  %803 = vperm.xlu0 %802, %v613
  %v804 = vpop.permute.xlu0 %803
  %v806 = vadd.f32 %v799, %v804
  %v807 = vadd.f32 %v800, %v804
  %v808 = vld [vmem:[%s8] sm:$0xff]
  %v809 = vld [vmem:[%s8 + $0x8] sm:$0xff]
  %v810 = vld [vmem:[%s8 + $0x10] sm:$0xff]
  %v811 = vld [vmem:[%s8 + $0x18] sm:$0xff]
  %v812 = vld [vmem:[%s8 + $0x20] sm:$0xff]
  %v813 = vld [vmem:[%s8 + $0x28] sm:$0xff]
  %v814 = vld [vmem:[%s8 + $0x30] sm:$0xff]
  %v815 = vld [vmem:[%s8 + $0x38] sm:$0xff]
  %v816 = vld [vmem:[%s8 + $0x40] sm:$0xff]
  %817 = vst [vmem:[#allocation2 + $0x8] sm:$0xff] %v806
  %818 = vst [vmem:[#allocation2 + $0x10] sm:$0xff] %v807
  %v819 = vld [vmem:[#allocation2] sm:$0xff]
  %v820 = vld [vmem:[#allocation2 + $0x8] sm:$0xff]
  %v821 = vld [vmem:[#allocation2 + $0x10] sm:$0xff]
  %v823 = vlaneseq
  %v824 = vshrl.u32 %v823, 7
  %v825 = vsub.s32 0, %v824
  %v826 = vrot.slane %v65, %v825
  %v827 = vlaneseq
  %v828 = vshrl.u32 %v827, 7
  %v829 = vsub.s32 1, %v828
  %v830 = vrot.slane %v65, %v829
  %831 = vrot.lane.b32.xlu0 %v826, 111
  %v832 = vpop.permute.xlu0 %831
  %833 = vrot.lane.b32.xlu0 %v830, 111
  %v834 = vpop.permute.xlu0 %833
  %vm835 = vcmask 908288
  %v836 = vsel %vm835, %v832, %v834
  %v840 = vmul.f32 %v819, %v832
  %v841 = vmul.f32 %v820, %v836
  %v842 = vmul.f32 %v821, %v834
  %846 = vrot.lane.b32.xlu0 %v819, 16
  %v847 = vpop.permute.xlu0 %846
  %848 = vrot.lane.b32.xlu0 %v820, 16
  %v849 = vpop.permute.xlu0 %848
  %850 = vrot.lane.b32.xlu0 %v821, 16
  %v851 = vpop.permute.xlu0 %850
  %vm852 = vcmask 130048
  %v853 = vsel %vm852, %v847, %v849
  %v854 = vsel %vm852, %v849, %v851
  %v858 = vsel %vm627, %v809, 0
  %860 = vmatprep.subr.mxu0 %v854
  %861 = vmatpush1.msra.mxu0 %v853
  %862 = vmatprep.subr.mxu0 0.0
  %863 = vmatpush1.msra.mxu0 0.0
  %864 = vmatprep.subr.mxu0 0.0
  %865 = vmatpush1.msra.mxu0 0.0
  %866 = vmatprep.subr.mxu0 0.0
  %867 = vmatpush1.msra.mxu0 0.0
  %868 = vmatprep.subr.mxu0 0.0
  %869 = vmatpush1.msra.mxu0 0.0
  %870 = vmatprep.subr.mxu0 0.0
  %871 = vmatpush1.msra.mxu0 0.0
  %872 = vmatprep.subr.mxu0 0.0
  %873 = vmatpush1.msra.mxu0 0.0
  %874 = vmatprep.subr.mxu0 0.0
  %875 = vmatpush1.msra.mxu0 0.0
  %876 = vmatprep.subr.mxu0 0.0
  %877 = vmatpush1.msra.mxu0 0.0
  %878 = vmatprep.subr.mxu0 0.0
  %879 = vmatpush1.msra.mxu0 0.0
  %880 = vmatprep.subr.mxu0 0.0
  %881 = vmatpush1.msra.mxu0 0.0
  %882 = vmatprep.subr.mxu0 0.0
  %883 = vmatpush1.msra.mxu0 0.0
  %884 = vmatprep.subr.mxu0 0.0
  %885 = vmatpush1.msra.mxu0 0.0
  %886 = vmatprep.subr.mxu0 0.0
  %887 = vmatpush1.msra.mxu0 0.0
  %888 = vmatprep.subr.mxu0 0.0
  %889 = vmatpush1.msra.mxu0 0.0
  %890 = vmatprep.subr.mxu0 0.0
  %891 = vmatpush1.msra.mxu0 0.0
  %892 = vmatprep.subr.mxu0 0.0
  %893 = vmatpush1.msra.mxu0 0.0
  %894 = vmatprep.subr.mxu0 0.0
  %895 = vmatpush1.msra.mxu0 0.0
  %896 = vmatprep.subr.mxu0 0.0
  %897 = vmatpush1.msra.mxu0 0.0
  %898 = vmatprep.subr.mxu0 0.0
  %899 = vmatpush1.msra.mxu0 0.0
  %900 = vmatprep.subr.mxu0 0.0
  %901 = vmatpush1.msra.mxu0 0.0
  %902 = vmatprep.subr.mxu0 0.0
  %903 = vmatpush1.msra.mxu0 0.0
  %904 = vmatprep.subr.mxu0 0.0
  %905 = vmatpush1.msra.mxu0 0.0
  %906 = vmatprep.subr.mxu0 0.0
  %907 = vmatpush1.msra.mxu0 0.0
  %908 = vmatprep.subr.mxu0 0.0
  %909 = vmatpush1.msra.mxu0 0.0
  %910 = vmatprep.subr.mxu0 0.0
  %911 = vmatpush1.msra.mxu0 0.0
  %912 = vmatprep.subr.mxu0 0.0
  %913 = vmatpush1.msra.mxu0 0.0
  %914 = vmatprep.subr.mxu0 0.0
  %915 = vmatpush1.msra.mxu0 0.0
  %916 = vmatprep.subr.mxu0 0.0
  %917 = vmatpush1.msra.mxu0 0.0
  %918 = vmatprep.subr.mxu0 0.0
  %919 = vmatpush1.msra.mxu0 0.0
  %920 = vmatprep.subr.mxu0 0.0
  %921 = vmatpush1.msra.mxu0 0.0
  %922 = vmatprep.subr.mxu0 0.0
  %923 = vmatpush1.msra.mxu0 0.0
  %924 = vmatprep.mubr.f32.mxu0 0.0
  %925 = vmatmul.mubr.f32.gmra.mrb[0].mxu0 %v858
  %v926 = vpop.f32.mrb[0].mxu0
  %v927 = vadd.f32 0.0, %v926
  %v928 = vpop.f32.mrb[0].mxu0
  %v929 = vadd.f32 0.0, %v928
  %930 = vdwg.mxu0
  %934 = vrot.lane.b32.xlu0 %v840, 17
  %v935 = vpop.permute.xlu0 %934
  %936 = vrot.lane.b32.xlu0 %v841, 17
  %v937 = vpop.permute.xlu0 %936
  %938 = vrot.lane.b32.xlu0 %v842, 17
  %v939 = vpop.permute.xlu0 %938
  %vm940 = vcmask 138240
  %v941 = vsel %vm940, %v935, %v937
  %v942 = vsel %vm940, %v937, %v939
  %v946 = vsel %vm627, %v808, 0
  %948 = vmatprep.subr.mxu0 %v942
  %949 = vmatpush1.msra.mxu0 %v941
  %950 = vmatprep.subr.mxu0 0.0
  %951 = vmatpush1.msra.mxu0 0.0
  %952 = vmatprep.subr.mxu0 0.0
  %953 = vmatpush1.msra.mxu0 0.0
  %954 = vmatprep.subr.mxu0 0.0
  %955 = vmatpush1.msra.mxu0 0.0
  %956 = vmatprep.subr.mxu0 0.0
  %957 = vmatpush1.msra.mxu0 0.0
  %958 = vmatprep.subr.mxu0 0.0
  %959 = vmatpush1.msra.mxu0 0.0
  %960 = vmatprep.subr.mxu0 0.0
  %961 = vmatpush1.msra.mxu0 0.0
  %962 = vmatprep.subr.mxu0 0.0
  %963 = vmatpush1.msra.mxu0 0.0
  %964 = vmatprep.subr.mxu0 0.0
  %965 = vmatpush1.msra.mxu0 0.0
  %966 = vmatprep.subr.mxu0 0.0
  %967 = vmatpush1.msra.mxu0 0.0
  %968 = vmatprep.subr.mxu0 0.0
  %969 = vmatpush1.msra.mxu0 0.0
  %970 = vmatprep.subr.mxu0 0.0
  %971 = vmatpush1.msra.mxu0 0.0
  %972 = vmatprep.subr.mxu0 0.0
  %973 = vmatpush1.msra.mxu0 0.0
  %974 = vmatprep.subr.mxu0 0.0
  %975 = vmatpush1.msra.mxu0 0.0
  %976 = vmatprep.subr.mxu0 0.0
  %977 = vmatpush1.msra.mxu0 0.0
  %978 = vmatprep.subr.mxu0 0.0
  %979 = vmatpush1.msra.mxu0 0.0
  %980 = vmatprep.subr.mxu0 0.0
  %981 = vmatpush1.msra.mxu0 0.0
  %982 = vmatprep.subr.mxu0 0.0
  %983 = vmatpush1.msra.mxu0 0.0
  %984 = vmatprep.subr.mxu0 0.0
  %985 = vmatpush1.msra.mxu0 0.0
  %986 = vmatprep.subr.mxu0 0.0
  %987 = vmatpush1.msra.mxu0 0.0
  %988 = vmatprep.subr.mxu0 0.0
  %989 = vmatpush1.msra.mxu0 0.0
  %990 = vmatprep.subr.mxu0 0.0
  %991 = vmatpush1.msra.mxu0 0.0
  %992 = vmatprep.subr.mxu0 0.0
  %993 = vmatpush1.msra.mxu0 0.0
  %994 = vmatprep.subr.mxu0 0.0
  %995 = vmatpush1.msra.mxu0 0.0
  %996 = vmatprep.subr.mxu0 0.0
  %997 = vmatpush1.msra.mxu0 0.0
  %998 = vmatprep.subr.mxu0 0.0
  %999 = vmatpush1.msra.mxu0 0.0
  %1000 = vmatprep.subr.mxu0 0.0
  %1001 = vmatpush1.msra.mxu0 0.0
  %1002 = vmatprep.subr.mxu0 0.0
  %1003 = vmatpush1.msra.mxu0 0.0
  %1004 = vmatprep.subr.mxu0 0.0
  %1005 = vmatpush1.msra.mxu0 0.0
  %1006 = vmatprep.subr.mxu0 0.0
  %1007 = vmatpush1.msra.mxu0 0.0
  %1008 = vmatprep.subr.mxu0 0.0
  %1009 = vmatpush1.msra.mxu0 0.0
  %1010 = vmatprep.subr.mxu0 0.0
  %1011 = vmatpush1.msra.mxu0 0.0
  %1012 = vmatprep.mubr.f32.mxu0 0.0
  %1013 = vmatmul.mubr.f32.gmra.mrb[0].mxu0 %v946
  %v1014 = vpop.f32.mrb[0].mxu0
  %v1015 = vadd.f32 %v927, %v1014
  %v1016 = vpop.f32.mrb[0].mxu0
  %v1017 = vadd.f32 %v929, %v1016
  %1018 = vdwg.mxu0
  %v1020 = vlaneseq
  %v1021 = vshrl.u32 %v1020, 7
  %v1022 = vsub.s32 0, %v1021
  %v1023 = vrot.slane %v67, %v1022
  %v1024 = vlaneseq
  %v1025 = vshrl.u32 %v1024, 7
  %v1026 = vsub.s32 1, %v1025
  %v1027 = vrot.slane %v67, %v1026
  %1028 = vrot.lane.b32.xlu0 %v1023, 113
  %v1029 = vpop.permute.xlu0 %1028
  %1030 = vrot.lane.b32.xlu0 %v1027, 113
  %v1031 = vpop.permute.xlu0 %1030
  %vm1032 = vcmask 924672
  %v1033 = vsel %vm1032, %v1029, %v1031
  %v1037 = vmul.f32 %v819, %v1029
  %v1038 = vmul.f32 %v820, %v1033
  %v1039 = vmul.f32 %v821, %v1031
  %1043 = vrot.lane.b32.xlu0 %v1037, 15
  %v1044 = vpop.permute.xlu0 %1043
  %1045 = vrot.lane.b32.xlu0 %v1038, 15
  %v1046 = vpop.permute.xlu0 %1045
  %1047 = vrot.lane.b32.xlu0 %v1039, 15
  %v1048 = vpop.permute.xlu0 %1047
  %vm1049 = vcmask 121856
  %v1050 = vsel %vm1049, %v1044, %v1046
  %v1051 = vsel %vm1049, %v1046, %v1048
  %v1055 = vsel %vm627, %v810, 0
  %1057 = vmatprep.subr.mxu0 %v1051
  %1058 = vmatpush1.msra.mxu0 %v1050
  %1059 = vmatprep.subr.mxu0 0.0
  %1060 = vmatpush1.msra.mxu0 0.0
  %1061 = vmatprep.subr.mxu0 0.0
  %1062 = vmatpush1.msra.mxu0 0.0
  %1063 = vmatprep.subr.mxu0 0.0
  %1064 = vmatpush1.msra.mxu0 0.0
  %1065 = vmatprep.subr.mxu0 0.0
  %1066 = vmatpush1.msra.mxu0 0.0
  %1067 = vmatprep.subr.mxu0 0.0
  %1068 = vmatpush1.msra.mxu0 0.0
  %1069 = vmatprep.subr.mxu0 0.0
  %1070 = vmatpush1.msra.mxu0 0.0
  %1071 = vmatprep.subr.mxu0 0.0
  %1072 = vmatpush1.msra.mxu0 0.0
  %1073 = vmatprep.subr.mxu0 0.0
  %1074 = vmatpush1.msra.mxu0 0.0
  %1075 = vmatprep.subr.mxu0 0.0
  %1076 = vmatpush1.msra.mxu0 0.0
  %1077 = vmatprep.subr.mxu0 0.0
  %1078 = vmatpush1.msra.mxu0 0.0
  %1079 = vmatprep.subr.mxu0 0.0
  %1080 = vmatpush1.msra.mxu0 0.0
  %1081 = vmatprep.subr.mxu0 0.0
  %1082 = vmatpush1.msra.mxu0 0.0
  %1083 = vmatprep.subr.mxu0 0.0
  %1084 = vmatpush1.msra.mxu0 0.0
  %1085 = vmatprep.subr.mxu0 0.0
  %1086 = vmatpush1.msra.mxu0 0.0
  %1087 = vmatprep.subr.mxu0 0.0
  %1088 = vmatpush1.msra.mxu0 0.0
  %1089 = vmatprep.subr.mxu0 0.0
  %1090 = vmatpush1.msra.mxu0 0.0
  %1091 = vmatprep.subr.mxu0 0.0
  %1092 = vmatpush1.msra.mxu0 0.0
  %1093 = vmatprep.subr.mxu0 0.0
  %1094 = vmatpush1.msra.mxu0 0.0
  %1095 = vmatprep.subr.mxu0 0.0
  %1096 = vmatpush1.msra.mxu0 0.0
  %1097 = vmatprep.subr.mxu0 0.0
  %1098 = vmatpush1.msra.mxu0 0.0
  %1099 = vmatprep.subr.mxu0 0.0
  %1100 = vmatpush1.msra.mxu0 0.0
  %1101 = vmatprep.subr.mxu0 0.0
  %1102 = vmatpush1.msra.mxu0 0.0
  %1103 = vmatprep.subr.mxu0 0.0
  %1104 = vmatpush1.msra.mxu0 0.0
  %1105 = vmatprep.subr.mxu0 0.0
  %1106 = vmatpush1.msra.mxu0 0.0
  %1107 = vmatprep.subr.mxu0 0.0
  %1108 = vmatpush1.msra.mxu0 0.0
  %1109 = vmatprep.subr.mxu0 0.0
  %1110 = vmatpush1.msra.mxu0 0.0
  %1111 = vmatprep.subr.mxu0 0.0
  %1112 = vmatpush1.msra.mxu0 0.0
  %1113 = vmatprep.subr.mxu0 0.0
  %1114 = vmatpush1.msra.mxu0 0.0
  %1115 = vmatprep.subr.mxu0 0.0
  %1116 = vmatpush1.msra.mxu0 0.0
  %1117 = vmatprep.subr.mxu0 0.0
  %1118 = vmatpush1.msra.mxu0 0.0
  %1119 = vmatprep.subr.mxu0 0.0
  %1120 = vmatpush1.msra.mxu0 0.0
  %1121 = vmatprep.mubr.f32.mxu0 0.0
  %1122 = vmatmul.mubr.f32.gmra.mrb[0].mxu0 %v1055
  %v1123 = vpop.f32.mrb[0].mxu0
  %v1124 = vadd.f32 0.0, %v1123
  %v1125 = vpop.f32.mrb[0].mxu0
  %v1126 = vadd.f32 0.0, %v1125
  %1127 = vdwg.mxu0
  %v1128 = vadd.f32 %v1015, %v1124
  %v1129 = vadd.f32 %v1017, %v1126
  %1130 = vrot.lane.b32.xlu0 %v826, 127
  %v1131 = vpop.permute.xlu0 %1130
  %1132 = vrot.lane.b32.xlu0 %v830, 127
  %v1133 = vpop.permute.xlu0 %1132
  %vm1134 = vcmask 1039360
  %v1135 = vsel %vm1134, %v1131, %v1133
  %v1139 = vmul.f32 %v819, %v1131
  %v1140 = vmul.f32 %v820, %v1135
  %v1141 = vmul.f32 %v821, %v1133
  %1145 = vrot.lane.b32.xlu0 %v1139, 1
  %v1146 = vpop.permute.xlu0 %1145
  %1147 = vrot.lane.b32.xlu0 %v1140, 1
  %v1148 = vpop.permute.xlu0 %1147
  %1149 = vrot.lane.b32.xlu0 %v1141, 1
  %v1150 = vpop.permute.xlu0 %1149
  %vm1151 = vcmask 7168
  %v1152 = vsel %vm1151, %v1146, %v1148
  %v1153 = vsel %vm1151, %v1148, %v1150
  %v1157 = vsel %vm627, %v811, 0
  %1159 = vmatprep.subr.mxu0 %v1153
  %1160 = vmatpush1.msra.mxu0 %v1152
  %1161 = vmatprep.subr.mxu0 0.0
  %1162 = vmatpush1.msra.mxu0 0.0
  %1163 = vmatprep.subr.mxu0 0.0
  %1164 = vmatpush1.msra.mxu0 0.0
  %1165 = vmatprep.subr.mxu0 0.0
  %1166 = vmatpush1.msra.mxu0 0.0
  %1167 = vmatprep.subr.mxu0 0.0
  %1168 = vmatpush1.msra.mxu0 0.0
  %1169 = vmatprep.subr.mxu0 0.0
  %1170 = vmatpush1.msra.mxu0 0.0
  %1171 = vmatprep.subr.mxu0 0.0
  %1172 = vmatpush1.msra.mxu0 0.0
  %1173 = vmatprep.subr.mxu0 0.0
  %1174 = vmatpush1.msra.mxu0 0.0
  %1175 = vmatprep.subr.mxu0 0.0
  %1176 = vmatpush1.msra.mxu0 0.0
  %1177 = vmatprep.subr.mxu0 0.0
  %1178 = vmatpush1.msra.mxu0 0.0
  %1179 = vmatprep.subr.mxu0 0.0
  %1180 = vmatpush1.msra.mxu0 0.0
  %1181 = vmatprep.subr.mxu0 0.0
  %1182 = vmatpush1.msra.mxu0 0.0
  %1183 = vmatprep.subr.mxu0 0.0
  %1184 = vmatpush1.msra.mxu0 0.0
  %1185 = vmatprep.subr.mxu0 0.0
  %1186 = vmatpush1.msra.mxu0 0.0
  %1187 = vmatprep.subr.mxu0 0.0
  %1188 = vmatpush1.msra.mxu0 0.0
  %1189 = vmatprep.subr.mxu0 0.0
  %1190 = vmatpush1.msra.mxu0 0.0
  %1191 = vmatprep.subr.mxu0 0.0
  %1192 = vmatpush1.msra.mxu0 0.0
  %1193 = vmatprep.subr.mxu0 0.0
  %1194 = vmatpush1.msra.mxu0 0.0
  %1195 = vmatprep.subr.mxu0 0.0
  %1196 = vmatpush1.msra.mxu0 0.0
  %1197 = vmatprep.subr.mxu0 0.0
  %1198 = vmatpush1.msra.mxu0 0.0
  %1199 = vmatprep.subr.mxu0 0.0
  %1200 = vmatpush1.msra.mxu0 0.0
  %1201 = vmatprep.subr.mxu0 0.0
  %1202 = vmatpush1.msra.mxu0 0.0
  %1203 = vmatprep.subr.mxu0 0.0
  %1204 = vmatpush1.msra.mxu0 0.0
  %1205 = vmatprep.subr.mxu0 0.0
  %1206 = vmatpush1.msra.mxu0 0.0
  %1207 = vmatprep.subr.mxu0 0.0
  %1208 = vmatpush1.msra.mxu0 0.0
  %1209 = vmatprep.subr.mxu0 0.0
  %1210 = vmatpush1.msra.mxu0 0.0
  %1211 = vmatprep.subr.mxu0 0.0
  %1212 = vmatpush1.msra.mxu0 0.0
  %1213 = vmatprep.subr.mxu0 0.0
  %1214 = vmatpush1.msra.mxu0 0.0
  %1215 = vmatprep.subr.mxu0 0.0
  %1216 = vmatpush1.msra.mxu0 0.0
  %1217 = vmatprep.subr.mxu0 0.0
  %1218 = vmatpush1.msra.mxu0 0.0
  %1219 = vmatprep.subr.mxu0 0.0
  %1220 = vmatpush1.msra.mxu0 0.0
  %1221 = vmatprep.subr.mxu0 0.0
  %1222 = vmatpush1.msra.mxu0 0.0
  %1223 = vmatprep.mubr.f32.mxu0 0.0
  %1224 = vmatmul.mubr.f32.gmra.mrb[0].mxu0 %v1157
  %v1225 = vpop.f32.mrb[0].mxu0
  %v1226 = vadd.f32 0.0, %v1225
  %v1227 = vpop.f32.mrb[0].mxu0
  %v1228 = vadd.f32 0.0, %v1227
  %1229 = vdwg.mxu0
  %v1230 = vadd.f32 %v1128, %v1226
  %v1231 = vadd.f32 %v1129, %v1228
  %v1233 = vsel %vm627, %v812, 0
  %1235 = vmatprep.subr.mxu0 %v821
  %1236 = vmatpush1.msra.mxu0 %v820
  %1237 = vmatprep.subr.mxu0 0.0
  %1238 = vmatpush1.msra.mxu0 0.0
  %1239 = vmatprep.subr.mxu0 0.0
  %1240 = vmatpush1.msra.mxu0 0.0
  %1241 = vmatprep.subr.mxu0 0.0
  %1242 = vmatpush1.msra.mxu0 0.0
  %1243 = vmatprep.subr.mxu0 0.0
  %1244 = vmatpush1.msra.mxu0 0.0
  %1245 = vmatprep.subr.mxu0 0.0
  %1246 = vmatpush1.msra.mxu0 0.0
  %1247 = vmatprep.subr.mxu0 0.0
  %1248 = vmatpush1.msra.mxu0 0.0
  %1249 = vmatprep.subr.mxu0 0.0
  %1250 = vmatpush1.msra.mxu0 0.0
  %1251 = vmatprep.subr.mxu0 0.0
  %1252 = vmatpush1.msra.mxu0 0.0
  %1253 = vmatprep.subr.mxu0 0.0
  %1254 = vmatpush1.msra.mxu0 0.0
  %1255 = vmatprep.subr.mxu0 0.0
  %1256 = vmatpush1.msra.mxu0 0.0
  %1257 = vmatprep.subr.mxu0 0.0
  %1258 = vmatpush1.msra.mxu0 0.0
  %1259 = vmatprep.subr.mxu0 0.0
  %1260 = vmatpush1.msra.mxu0 0.0
  %1261 = vmatprep.subr.mxu0 0.0
  %1262 = vmatpush1.msra.mxu0 0.0
  %1263 = vmatprep.subr.mxu0 0.0
  %1264 = vmatpush1.msra.mxu0 0.0
  %1265 = vmatprep.subr.mxu0 0.0
  %1266 = vmatpush1.msra.mxu0 0.0
  %1267 = vmatprep.subr.mxu0 0.0
  %1268 = vmatpush1.msra.mxu0 0.0
  %1269 = vmatprep.subr.mxu0 0.0
  %1270 = vmatpush1.msra.mxu0 0.0
  %1271 = vmatprep.subr.mxu0 0.0
  %1272 = vmatpush1.msra.mxu0 0.0
  %1273 = vmatprep.subr.mxu0 0.0
  %1274 = vmatpush1.msra.mxu0 0.0
  %1275 = vmatprep.subr.mxu0 0.0
  %1276 = vmatpush1.msra.mxu0 0.0
  %1277 = vmatprep.subr.mxu0 0.0
  %1278 = vmatpush1.msra.mxu0 0.0
  %1279 = vmatprep.subr.mxu0 0.0
  %1280 = vmatpush1.msra.mxu0 0.0
  %1281 = vmatprep.subr.mxu0 0.0
  %1282 = vmatpush1.msra.mxu0 0.0
  %1283 = vmatprep.subr.mxu0 0.0
  %1284 = vmatpush1.msra.mxu0 0.0
  %1285 = vmatprep.subr.mxu0 0.0
  %1286 = vmatpush1.msra.mxu0 0.0
  %1287 = vmatprep.subr.mxu0 0.0
  %1288 = vmatpush1.msra.mxu0 0.0
  %1289 = vmatprep.subr.mxu0 0.0
  %1290 = vmatpush1.msra.mxu0 0.0
  %1291 = vmatprep.subr.mxu0 0.0
  %1292 = vmatpush1.msra.mxu0 0.0
  %1293 = vmatprep.subr.mxu0 0.0
  %1294 = vmatpush1.msra.mxu0 0.0
  %1295 = vmatprep.subr.mxu0 0.0
  %1296 = vmatpush1.msra.mxu0 0.0
  %1297 = vmatprep.subr.mxu0 0.0
  %1298 = vmatpush1.msra.mxu0 0.0
  %1299 = vmatprep.mubr.f32.mxu0 0.0
  %1300 = vmatmul.mubr.f32.gmra.mrb[0].mxu0 %v1233
  %v1301 = vpop.f32.mrb[0].mxu0
  %v1302 = vadd.f32 0.0, %v1301
  %v1303 = vpop.f32.mrb[0].mxu0
  %v1304 = vadd.f32 0.0, %v1303
  %1305 = vdwg.mxu0
  %v1306 = vadd.f32 %v1230, %v1302
  %v1307 = vadd.f32 %v1231, %v1304
  %v1308 = vld [vmem:[#allocation2 + $0x8] sm:$0xff]
  %v1309 = vld [vmem:[#allocation2 + $0x10] sm:$0xff]
  %v1310 = vld [vmem:[#allocation2 + $0x18] sm:$0xff]
  %1311 = vrot.lane.b32.xlu0 %v1023, 1
  %v1312 = vpop.permute.xlu0 %1311
  %1313 = vrot.lane.b32.xlu0 %v1027, 1
  %v1314 = vpop.permute.xlu0 %1313
  %v1315 = vsel %vm1151, %v1312, %v1314
  %v1319 = vmul.f32 %v1308, %v1312
  %v1320 = vmul.f32 %v1309, %v1315
  %v1321 = vmul.f32 %v1310, %v1314
  %1325 = vrot.lane.b32.xlu0 %v1319, 127
  %v1326 = vpop.permute.xlu0 %1325
  %1327 = vrot.lane.b32.xlu0 %v1320, 127
  %v1328 = vpop.permute.xlu0 %1327
  %1329 = vrot.lane.b32.xlu0 %v1321, 127
  %v1330 = vpop.permute.xlu0 %1329
  %v1331 = vsel %vm1134, %v1326, %v1328
  %v1332 = vsel %vm1134, %v1328, %v1330
  %v1336 = vsel %vm627, %v813, 0
  %1338 = vmatprep.subr.mxu0 %v1332
  %1339 = vmatpush1.msra.mxu0 %v1331
  %1340 = vmatprep.subr.mxu0 0.0
  %1341 = vmatpush1.msra.mxu0 0.0
  %1342 = vmatprep.subr.mxu0 0.0
  %1343 = vmatpush1.msra.mxu0 0.0
  %1344 = vmatprep.subr.mxu0 0.0
  %1345 = vmatpush1.msra.mxu0 0.0
  %1346 = vmatprep.subr.mxu0 0.0
  %1347 = vmatpush1.msra.mxu0 0.0
  %1348 = vmatprep.subr.mxu0 0.0
  %1349 = vmatpush1.msra.mxu0 0.0
  %1350 = vmatprep.subr.mxu0 0.0
  %1351 = vmatpush1.msra.mxu0 0.0
  %1352 = vmatprep.subr.mxu0 0.0
  %1353 = vmatpush1.msra.mxu0 0.0
  %1354 = vmatprep.subr.mxu0 0.0
  %1355 = vmatpush1.msra.mxu0 0.0
  %1356 = vmatprep.subr.mxu0 0.0
  %1357 = vmatpush1.msra.mxu0 0.0
  %1358 = vmatprep.subr.mxu0 0.0
  %1359 = vmatpush1.msra.mxu0 0.0
  %1360 = vmatprep.subr.mxu0 0.0
  %1361 = vmatpush1.msra.mxu0 0.0
  %1362 = vmatprep.subr.mxu0 0.0
  %1363 = vmatpush1.msra.mxu0 0.0
  %1364 = vmatprep.subr.mxu0 0.0
  %1365 = vmatpush1.msra.mxu0 0.0
  %1366 = vmatprep.subr.mxu0 0.0
  %1367 = vmatpush1.msra.mxu0 0.0
  %1368 = vmatprep.subr.mxu0 0.0
  %1369 = vmatpush1.msra.mxu0 0.0
  %1370 = vmatprep.subr.mxu0 0.0
  %1371 = vmatpush1.msra.mxu0 0.0
  %1372 = vmatprep.subr.mxu0 0.0
  %1373 = vmatpush1.msra.mxu0 0.0
  %1374 = vmatprep.subr.mxu0 0.0
  %1375 = vmatpush1.msra.mxu0 0.0
  %1376 = vmatprep.subr.mxu0 0.0
  %1377 = vmatpush1.msra.mxu0 0.0
  %1378 = vmatprep.subr.mxu0 0.0
  %1379 = vmatpush1.msra.mxu0 0.0
  %1380 = vmatprep.subr.mxu0 0.0
  %1381 = vmatpush1.msra.mxu0 0.0
  %1382 = vmatprep.subr.mxu0 0.0
  %1383 = vmatpush1.msra.mxu0 0.0
  %1384 = vmatprep.subr.mxu0 0.0
  %1385 = vmatpush1.msra.mxu0 0.0
  %1386 = vmatprep.subr.mxu0 0.0
  %1387 = vmatpush1.msra.mxu0 0.0
  %1388 = vmatprep.subr.mxu0 0.0
  %1389 = vmatpush1.msra.mxu0 0.0
  %1390 = vmatprep.subr.mxu0 0.0
  %1391 = vmatpush1.msra.mxu0 0.0
  %1392 = vmatprep.subr.mxu0 0.0
  %1393 = vmatpush1.msra.mxu0 0.0
  %1394 = vmatprep.subr.mxu0 0.0
  %1395 = vmatpush1.msra.mxu0 0.0
  %1396 = vmatprep.subr.mxu0 0.0
  %1397 = vmatpush1.msra.mxu0 0.0
  %1398 = vmatprep.subr.mxu0 0.0
  %1399 = vmatpush1.msra.mxu0 0.0
  %1400 = vmatprep.subr.mxu0 0.0
  %1401 = vmatpush1.msra.mxu0 0.0
  %1402 = vmatprep.mubr.f32.mxu0 0.0
  %1403 = vmatmul.mubr.f32.gmra.mrb[0].mxu0 %v1336
  %v1404 = vpop.f32.mrb[0].mxu0
  %v1405 = vadd.f32 0.0, %v1404
  %v1406 = vpop.f32.mrb[0].mxu0
  %v1407 = vadd.f32 0.0, %v1406
  %1408 = vdwg.mxu0
  %v1409 = vadd.f32 %v1306, %v1405
  %v1410 = vadd.f32 %v1307, %v1407
  %1411 = vrot.lane.b32.xlu0 %v826, 15
  %v1412 = vpop.permute.xlu0 %1411
  %1413 = vrot.lane.b32.xlu0 %v830, 15
  %v1414 = vpop.permute.xlu0 %1413
  %v1415 = vsel %vm1049, %v1412, %v1414
  %v1419 = vmul.f32 %v1308, %v1412
  %v1420 = vmul.f32 %v1309, %v1415
  %v1421 = vmul.f32 %v1310, %v1414
  %1425 = vrot.lane.b32.xlu0 %v1419, 113
  %v1426 = vpop.permute.xlu0 %1425
  %1427 = vrot.lane.b32.xlu0 %v1420, 113
  %v1428 = vpop.permute.xlu0 %1427
  %1429 = vrot.lane.b32.xlu0 %v1421, 113
  %v1430 = vpop.permute.xlu0 %1429
  %v1431 = vsel %vm1032, %v1426, %v1428
  %v1432 = vsel %vm1032, %v1428, %v1430
  %v1436 = vsel %vm627, %v814, 0
  %1438 = vmatprep.subr.mxu0 %v1432
  %1439 = vmatpush1.msra.mxu0 %v1431
  %1440 = vmatprep.subr.mxu0 0.0
  %1441 = vmatpush1.msra.mxu0 0.0
  %1442 = vmatprep.subr.mxu0 0.0
  %1443 = vmatpush1.msra.mxu0 0.0
  %1444 = vmatprep.subr.mxu0 0.0
  %1445 = vmatpush1.msra.mxu0 0.0
  %1446 = vmatprep.subr.mxu0 0.0
  %1447 = vmatpush1.msra.mxu0 0.0
  %1448 = vmatprep.subr.mxu0 0.0
  %1449 = vmatpush1.msra.mxu0 0.0
  %1450 = vmatprep.subr.mxu0 0.0
  %1451 = vmatpush1.msra.mxu0 0.0
  %1452 = vmatprep.subr.mxu0 0.0
  %1453 = vmatpush1.msra.mxu0 0.0
  %1454 = vmatprep.subr.mxu0 0.0
  %1455 = vmatpush1.msra.mxu0 0.0
  %1456 = vmatprep.subr.mxu0 0.0
  %1457 = vmatpush1.msra.mxu0 0.0
  %1458 = vmatprep.subr.mxu0 0.0
  %1459 = vmatpush1.msra.mxu0 0.0
  %1460 = vmatprep.subr.mxu0 0.0
  %1461 = vmatpush1.msra.mxu0 0.0
  %1462 = vmatprep.subr.mxu0 0.0
  %1463 = vmatpush1.msra.mxu0 0.0
  %1464 = vmatprep.subr.mxu0 0.0
  %1465 = vmatpush1.msra.mxu0 0.0
  %1466 = vmatprep.subr.mxu0 0.0
  %1467 = vmatpush1.msra.mxu0 0.0
  %1468 = vmatprep.subr.mxu0 0.0
  %1469 = vmatpush1.msra.mxu0 0.0
  %1470 = vmatprep.subr.mxu0 0.0
  %1471 = vmatpush1.msra.mxu0 0.0
  %1472 = vmatprep.subr.mxu0 0.0
  %1473 = vmatpush1.msra.mxu0 0.0
  %1474 = vmatprep.subr.mxu0 0.0
  %1475 = vmatpush1.msra.mxu0 0.0
  %1476 = vmatprep.subr.mxu0 0.0
  %1477 = vmatpush1.msra.mxu0 0.0
  %1478 = vmatprep.subr.mxu0 0.0
  %1479 = vmatpush1.msra.mxu0 0.0
  %1480 = vmatprep.subr.mxu0 0.0
  %1481 = vmatpush1.msra.mxu0 0.0
  %1482 = vmatprep.subr.mxu0 0.0
  %1483 = vmatpush1.msra.mxu0 0.0
  %1484 = vmatprep.subr.mxu0 0.0
  %1485 = vmatpush1.msra.mxu0 0.0
  %1486 = vmatprep.subr.mxu0 0.0
  %1487 = vmatpush1.msra.mxu0 0.0
  %1488 = vmatprep.subr.mxu0 0.0
  %1489 = vmatpush1.msra.mxu0 0.0
  %1490 = vmatprep.subr.mxu0 0.0
  %1491 = vmatpush1.msra.mxu0 0.0
  %1492 = vmatprep.subr.mxu0 0.0
  %1493 = vmatpush1.msra.mxu0 0.0
  %1494 = vmatprep.subr.mxu0 0.0
  %1495 = vmatpush1.msra.mxu0 0.0
  %1496 = vmatprep.subr.mxu0 0.0
  %1497 = vmatpush1.msra.mxu0 0.0
  %1498 = vmatprep.subr.mxu0 0.0
  %1499 = vmatpush1.msra.mxu0 0.0
  %1500 = vmatprep.subr.mxu0 0.0
  %1501 = vmatpush1.msra.mxu0 0.0
  %1502 = vmatprep.mubr.f32.mxu0 0.0
  %1503 = vmatmul.mubr.f32.gmra.mrb[0].mxu0 %v1436
  %v1504 = vpop.f32.mrb[0].mxu0
  %v1505 = vadd.f32 0.0, %v1504
  %v1506 = vpop.f32.mrb[0].mxu0
  %v1507 = vadd.f32 0.0, %v1506
  %1508 = vdwg.mxu0
  %v1509 = vadd.f32 %v1409, %v1505
  %v1510 = vadd.f32 %v1410, %v1507
  %1514 = vrot.lane.b32.xlu0 %v1308, 112
  %v1515 = vpop.permute.xlu0 %1514
  %1516 = vrot.lane.b32.xlu0 %v1309, 112
  %v1517 = vpop.permute.xlu0 %1516
  %1518 = vrot.lane.b32.xlu0 %v1310, 112
  %v1519 = vpop.permute.xlu0 %1518
  %vm1520 = vcmask 916480
  %v1521 = vsel %vm1520, %v1515, %v1517
  %v1522 = vsel %vm1520, %v1517, %v1519
  %v1526 = vsel %vm627, %v815, 0
  %1528 = vmatprep.subr.mxu0 %v1522
  %1529 = vmatpush1.msra.mxu0 %v1521
  %1530 = vmatprep.subr.mxu0 0.0
  %1531 = vmatpush1.msra.mxu0 0.0
  %1532 = vmatprep.subr.mxu0 0.0
  %1533 = vmatpush1.msra.mxu0 0.0
  %1534 = vmatprep.subr.mxu0 0.0
  %1535 = vmatpush1.msra.mxu0 0.0
  %1536 = vmatprep.subr.mxu0 0.0
  %1537 = vmatpush1.msra.mxu0 0.0
  %1538 = vmatprep.subr.mxu0 0.0
  %1539 = vmatpush1.msra.mxu0 0.0
  %1540 = vmatprep.subr.mxu0 0.0
  %1541 = vmatpush1.msra.mxu0 0.0
  %1542 = vmatprep.subr.mxu0 0.0
  %1543 = vmatpush1.msra.mxu0 0.0
  %1544 = vmatprep.subr.mxu0 0.0
  %1545 = vmatpush1.msra.mxu0 0.0
  %1546 = vmatprep.subr.mxu0 0.0
  %1547 = vmatpush1.msra.mxu0 0.0
  %1548 = vmatprep.subr.mxu0 0.0
  %1549 = vmatpush1.msra.mxu0 0.0
  %1550 = vmatprep.subr.mxu0 0.0
  %1551 = vmatpush1.msra.mxu0 0.0
  %1552 = vmatprep.subr.mxu0 0.0
  %1553 = vmatpush1.msra.mxu0 0.0
  %1554 = vmatprep.subr.mxu0 0.0
  %1555 = vmatpush1.msra.mxu0 0.0
  %1556 = vmatprep.subr.mxu0 0.0
  %1557 = vmatpush1.msra.mxu0 0.0
  %1558 = vmatprep.subr.mxu0 0.0
  %1559 = vmatpush1.msra.mxu0 0.0
  %1560 = vmatprep.subr.mxu0 0.0
  %1561 = vmatpush1.msra.mxu0 0.0
  %1562 = vmatprep.subr.mxu0 0.0
  %1563 = vmatpush1.msra.mxu0 0.0
  %1564 = vmatprep.subr.mxu0 0.0
  %1565 = vmatpush1.msra.mxu0 0.0
  %1566 = vmatprep.subr.mxu0 0.0
  %1567 = vmatpush1.msra.mxu0 0.0
  %1568 = vmatprep.subr.mxu0 0.0
  %1569 = vmatpush1.msra.mxu0 0.0
  %1570 = vmatprep.subr.mxu0 0.0
  %1571 = vmatpush1.msra.mxu0 0.0
  %1572 = vmatprep.subr.mxu0 0.0
  %1573 = vmatpush1.msra.mxu0 0.0
  %1574 = vmatprep.subr.mxu0 0.0
  %1575 = vmatpush1.msra.mxu0 0.0
  %1576 = vmatprep.subr.mxu0 0.0
  %1577 = vmatpush1.msra.mxu0 0.0
  %1578 = vmatprep.subr.mxu0 0.0
  %1579 = vmatpush1.msra.mxu0 0.0
  %1580 = vmatprep.subr.mxu0 0.0
  %1581 = vmatpush1.msra.mxu0 0.0
  %1582 = vmatprep.subr.mxu0 0.0
  %1583 = vmatpush1.msra.mxu0 0.0
  %1584 = vmatprep.subr.mxu0 0.0
  %1585 = vmatpush1.msra.mxu0 0.0
  %1586 = vmatprep.subr.mxu0 0.0
  %1587 = vmatpush1.msra.mxu0 0.0
  %1588 = vmatprep.subr.mxu0 0.0
  %1589 = vmatpush1.msra.mxu0 0.0
  %1590 = vmatprep.subr.mxu0 0.0
  %1591 = vmatpush1.msra.mxu0 0.0
  %1592 = vmatprep.mubr.f32.mxu0 0.0
  %1593 = vmatmul.mubr.f32.gmra.mrb[0].mxu0 %v1526
  %v1594 = vpop.f32.mrb[0].mxu0
  %v1595 = vadd.f32 0.0, %v1594
  %v1596 = vpop.f32.mrb[0].mxu0
  %v1597 = vadd.f32 0.0, %v1596
  %1598 = vdwg.mxu0
  %v1599 = vadd.f32 %v1509, %v1595
  %v1600 = vadd.f32 %v1510, %v1597
  %1601 = vrot.lane.b32.xlu0 %v1023, 17
  %v1602 = vpop.permute.xlu0 %1601
  %1603 = vrot.lane.b32.xlu0 %v1027, 17
  %v1604 = vpop.permute.xlu0 %1603
  %v1605 = vsel %vm940, %v1602, %v1604
  %v1609 = vmul.f32 %v1308, %v1602
  %v1610 = vmul.f32 %v1309, %v1605
  %v1611 = vmul.f32 %v1310, %v1604
  %1615 = vrot.lane.b32.xlu0 %v1609, 111
  %v1616 = vpop.permute.xlu0 %1615
  %1617 = vrot.lane.b32.xlu0 %v1610, 111
  %v1618 = vpop.permute.xlu0 %1617
  %1619 = vrot.lane.b32.xlu0 %v1611, 111
  %v1620 = vpop.permute.xlu0 %1619
  %v1621 = vsel %vm835, %v1616, %v1618
  %v1622 = vsel %vm835, %v1618, %v1620
  %v1626 = vsel %vm627, %v816, 0
  %1628 = vmatprep.subr.mxu0 %v1622
  %1629 = vmatpush1.msra.mxu0 %v1621
  %1630 = vmatprep.subr.mxu0 0.0
  %1631 = vmatpush1.msra.mxu0 0.0
  %1632 = vmatprep.subr.mxu0 0.0
  %1633 = vmatpush1.msra.mxu0 0.0
  %1634 = vmatprep.subr.mxu0 0.0
  %1635 = vmatpush1.msra.mxu0 0.0
  %1636 = vmatprep.subr.mxu0 0.0
  %1637 = vmatpush1.msra.mxu0 0.0
  %1638 = vmatprep.subr.mxu0 0.0
  %1639 = vmatpush1.msra.mxu0 0.0
  %1640 = vmatprep.subr.mxu0 0.0
  %1641 = vmatpush1.msra.mxu0 0.0
  %1642 = vmatprep.subr.mxu0 0.0
  %1643 = vmatpush1.msra.mxu0 0.0
  %1644 = vmatprep.subr.mxu0 0.0
  %1645 = vmatpush1.msra.mxu0 0.0
  %1646 = vmatprep.subr.mxu0 0.0
  %1647 = vmatpush1.msra.mxu0 0.0
  %1648 = vmatprep.subr.mxu0 0.0
  %1649 = vmatpush1.msra.mxu0 0.0
  %1650 = vmatprep.subr.mxu0 0.0
  %1651 = vmatpush1.msra.mxu0 0.0
  %1652 = vmatprep.subr.mxu0 0.0
  %1653 = vmatpush1.msra.mxu0 0.0
  %1654 = vmatprep.subr.mxu0 0.0
  %1655 = vmatpush1.msra.mxu0 0.0
  %1656 = vmatprep.subr.mxu0 0.0
  %1657 = vmatpush1.msra.mxu0 0.0
  %1658 = vmatprep.subr.mxu0 0.0
  %1659 = vmatpush1.msra.mxu0 0.0
  %1660 = vmatprep.subr.mxu0 0.0
  %1661 = vmatpush1.msra.mxu0 0.0
  %1662 = vmatprep.subr.mxu0 0.0
  %1663 = vmatpush1.msra.mxu0 0.0
  %1664 = vmatprep.subr.mxu0 0.0
  %1665 = vmatpush1.msra.mxu0 0.0
  %1666 = vmatprep.subr.mxu0 0.0
  %1667 = vmatpush1.msra.mxu0 0.0
  %1668 = vmatprep.subr.mxu0 0.0
  %1669 = vmatpush1.msra.mxu0 0.0
  %1670 = vmatprep.subr.mxu0 0.0
  %1671 = vmatpush1.msra.mxu0 0.0
  %1672 = vmatprep.subr.mxu0 0.0
  %1673 = vmatpush1.msra.mxu0 0.0
  %1674 = vmatprep.subr.mxu0 0.0
  %1675 = vmatpush1.msra.mxu0 0.0
  %1676 = vmatprep.subr.mxu0 0.0
  %1677 = vmatpush1.msra.mxu0 0.0
  %1678 = vmatprep.subr.mxu0 0.0
  %1679 = vmatpush1.msra.mxu0 0.0
  %1680 = vmatprep.subr.mxu0 0.0
  %1681 = vmatpush1.msra.mxu0 0.0
  %1682 = vmatprep.subr.mxu0 0.0
  %1683 = vmatpush1.msra.mxu0 0.0
  %1684 = vmatprep.subr.mxu0 0.0
  %1685 = vmatpush1.msra.mxu0 0.0
  %1686 = vmatprep.subr.mxu0 0.0
  %1687 = vmatpush1.msra.mxu0 0.0
  %1688 = vmatprep.subr.mxu0 0.0
  %1689 = vmatpush1.msra.mxu0 0.0
  %1690 = vmatprep.subr.mxu0 0.0
  %1691 = vmatpush1.msra.mxu0 0.0
  %1692 = vmatprep.mubr.f32.mxu0 0.0
  %1693 = vmatmul.mubr.f32.gmra.mrb[0].mxu0 %v1626
  %v1694 = vpop.f32.mrb[0].mxu0
  %v1695 = vadd.f32 0.0, %v1694
  %v1696 = vpop.f32.mrb[0].mxu0
  %v1697 = vadd.f32 0.0, %v1696
  %1698 = vdwg.mxu0
  %v1699 = vadd.f32 %v1599, %v1695
  %v1700 = vadd.f32 %v1600, %v1697
  %v1701 = vld [vmem:[%s9] sm:$0xff]
  %v1702 = vadd.f32 %v1701, %v349
  %v1703 = vadd.f32 %v1702, %v609
  %1705 = vset.pattern.permute.xlu0 0
  %1706 = vperm.xlu0 %1705, %v1703
  %v1707 = vpop.permute.xlu0 %1706
  %v1709 = vadd.f32 %v1699, %v1707
  %v1710 = vadd.f32 %v1700, %v1707
  %s1711 = scalar_lea.vmem %s6, 8
  %v1712 = vld [vmem:[%s1711] sm:$0xff]
  %s1713 = scalar_lea.vmem %s7, 8
  %v1714 = vld [vmem:[%s1713] sm:$0xff]
  %v1715 = vmul.f32 %v1709, 0.5
  %v1716 = vmul.f32 %v1710, 0.5
  %v1717 = vtanh.pop %v1715
  %v1718 = vtanh.pop %v1716
  %v1719 = vadd.f32 %v1717, 1.0
  %v1720 = vadd.f32 %v1718, 1.0
  %v1721 = vmul.f32 %v1719, 0.5
  %v1722 = vmul.f32 %v1720, 0.5
  %v1723 = vmul.f32 %v1709, %v1721
  %v1724 = vmul.f32 %v1710, %v1722
  %v1725 = vadd.f32 %v1723, %v1724
  %1726 = vadd.xlane.f32.xlu0 %v1725
  %v1727 = vpop.xlane.xlu0 %1726
  %1728 = vmatprep.subr.mxu0 0.0
  %1729 = vmatpush1.msra.mxu0 %v1727
  %1730 = vmatprep.subr.mxu0 0.0
  %1731 = vmatpush1.msra.mxu0 0.0
  %1732 = vmatprep.subr.mxu0 0.0
  %1733 = vmatpush1.msra.mxu0 0.0
  %1734 = vmatprep.subr.mxu0 0.0
  %1735 = vmatpush1.msra.mxu0 0.0
  %1736 = vmatprep.subr.mxu0 0.0
  %1737 = vmatpush1.msra.mxu0 0.0
  %1738 = vmatprep.subr.mxu0 0.0
  %1739 = vmatpush1.msra.mxu0 0.0
  %1740 = vmatprep.subr.mxu0 0.0
  %1741 = vmatpush1.msra.mxu0 0.0
  %1742 = vmatprep.subr.mxu0 0.0
  %1743 = vmatpush1.msra.mxu0 0.0
  %1744 = vmatprep.subr.mxu0 0.0
  %1745 = vmatpush1.msra.mxu0 0.0
  %1746 = vmatprep.subr.mxu0 0.0
  %1747 = vmatpush1.msra.mxu0 0.0
  %1748 = vmatprep.subr.mxu0 0.0
  %1749 = vmatpush1.msra.mxu0 0.0
  %1750 = vmatprep.subr.mxu0 0.0
  %1751 = vmatpush1.msra.mxu0 0.0
  %1752 = vmatprep.subr.mxu0 0.0
  %1753 = vmatpush1.msra.mxu0 0.0
  %1754 = vmatprep.subr.mxu0 0.0
  %1755 = vmatpush1.msra.mxu0 0.0
  %1756 = vmatprep.subr.mxu0 0.0
  %1757 = vmatpush1.msra.mxu0 0.0
  %1758 = vmatprep.subr.mxu0 0.0
  %1759 = vmatpush1.msra.mxu0 0.0
  %1760 = vmatprep.subr.mxu0 0.0
  %1761 = vmatpush1.msra.mxu0 0.0
  %1762 = vmatprep.subr.mxu0 0.0
  %1763 = vmatpush1.msra.mxu0 0.0
  %1764 = vmatprep.subr.mxu0 0.0
  %1765 = vmatpush1.msra.mxu0 0.0
  %1766 = vmatprep.subr.mxu0 0.0
  %1767 = vmatpush1.msra.mxu0 0.0
  %1768 = vmatprep.subr.mxu0 0.0
  %1769 = vmatpush1.msra.mxu0 0.0
  %1770 = vmatprep.subr.mxu0 0.0
  %1771 = vmatpush1.msra.mxu0 0.0
  %1772 = vmatprep.subr.mxu0 0.0
  %1773 = vmatpush1.msra.mxu0 0.0
  %1774 = vmatprep.subr.mxu0 0.0
  %1775 = vmatpush1.msra.mxu0 0.0
  %1776 = vmatprep.subr.mxu0 0.0
  %1777 = vmatpush1.msra.mxu0 0.0
  %1778 = vmatprep.subr.mxu0 0.0
  %1779 = vmatpush1.msra.mxu0 0.0
  %1780 = vmatprep.subr.mxu0 0.0
  %1781 = vmatpush1.msra.mxu0 0.0
  %1782 = vmatprep.subr.mxu0 0.0
  %1783 = vmatpush1.msra.mxu0 0.0
  %1784 = vmatprep.subr.mxu0 0.0
  %1785 = vmatpush1.msra.mxu0 0.0
  %1786 = vmatprep.subr.mxu0 0.0
  %1787 = vmatpush1.msra.mxu0 0.0
  %1788 = vmatprep.subr.mxu0 0.0
  %1789 = vmatpush1.msra.mxu0 0.0
  %1790 = vmatprep.subr.mxu0 0.0
  %1791 = vmatpush1.msra.mxu0 0.0
  %1792 = vmatprep.mubr.f32.mxu0 0.0
  %1793 = vmatmul.mubr.f32.gmra.mrb[0].mxu0 %v629
  %v1794 = vpop.f32.mrb[0].mxu0
  %v1795 = vadd.f32 0.0, %v1794
  %v1796 = vpop.f32.mrb[0].mxu0
  %1797 = vdwg.mxu0
  %v1798 = vmul.f32 %v1795, 0.001953125
  %1800 = vset.pattern.permute.xlu0 0
  %1801 = vperm.xlu0 %1800, %v1798
  %v1802 = vpop.permute.xlu0 %1801
  %v1804 = vsub.f32 %v1723, %v1802
  %v1805 = vsub.f32 %v1724, %v1802
  %v1806 = vmul.f32 %v1804, %v1804
  %v1807 = vmul.f32 %v1805, %v1805
  %v1808 = vadd.f32 %v1806, %v1807
  %1809 = vadd.xlane.f32.xlu0 %v1808
  %v1810 = vpop.xlane.xlu0 %1809
  %1811 = vmatprep.subr.mxu0 0.0
  %1812 = vmatpush1.msra.mxu0 %v1810
  %1813 = vmatprep.subr.mxu0 0.0
  %1814 = vmatpush1.msra.mxu0 0.0
  %1815 = vmatprep.subr.mxu0 0.0
  %1816 = vmatpush1.msra.mxu0 0.0
  %1817 = vmatprep.subr.mxu0 0.0
  %1818 = vmatpush1.msra.mxu0 0.0
  %1819 = vmatprep.subr.mxu0 0.0
  %1820 = vmatpush1.msra.mxu0 0.0
  %1821 = vmatprep.subr.mxu0 0.0
  %1822 = vmatpush1.msra.mxu0 0.0
  %1823 = vmatprep.subr.mxu0 0.0
  %1824 = vmatpush1.msra.mxu0 0.0
  %1825 = vmatprep.subr.mxu0 0.0
  %1826 = vmatpush1.msra.mxu0 0.0
  %1827 = vmatprep.subr.mxu0 0.0
  %1828 = vmatpush1.msra.mxu0 0.0
  %1829 = vmatprep.subr.mxu0 0.0
  %1830 = vmatpush1.msra.mxu0 0.0
  %1831 = vmatprep.subr.mxu0 0.0
  %1832 = vmatpush1.msra.mxu0 0.0
  %1833 = vmatprep.subr.mxu0 0.0
  %1834 = vmatpush1.msra.mxu0 0.0
  %1835 = vmatprep.subr.mxu0 0.0
  %1836 = vmatpush1.msra.mxu0 0.0
  %1837 = vmatprep.subr.mxu0 0.0
  %1838 = vmatpush1.msra.mxu0 0.0
  %1839 = vmatprep.subr.mxu0 0.0
  %1840 = vmatpush1.msra.mxu0 0.0
  %1841 = vmatprep.subr.mxu0 0.0
  %1842 = vmatpush1.msra.mxu0 0.0
  %1843 = vmatprep.subr.mxu0 0.0
  %1844 = vmatpush1.msra.mxu0 0.0
  %1845 = vmatprep.subr.mxu0 0.0
  %1846 = vmatpush1.msra.mxu0 0.0
  %1847 = vmatprep.subr.mxu0 0.0
  %1848 = vmatpush1.msra.mxu0 0.0
  %1849 = vmatprep.subr.mxu0 0.0
  %1850 = vmatpush1.msra.mxu0 0.0
  %1851 = vmatprep.subr.mxu0 0.0
  %1852 = vmatpush1.msra.mxu0 0.0
  %1853 = vmatprep.subr.mxu0 0.0
  %1854 = vmatpush1.msra.mxu0 0.0
  %1855 = vmatprep.subr.mxu0 0.0
  %1856 = vmatpush1.msra.mxu0 0.0
  %1857 = vmatprep.subr.mxu0 0.0
  %1858 = vmatpush1.msra.mxu0 0.0
  %1859 = vmatprep.subr.mxu0 0.0
  %1860 = vmatpush1.msra.mxu0 0.0
  %1861 = vmatprep.subr.mxu0 0.0
  %1862 = vmatpush1.msra.mxu0 0.0
  %1863 = vmatprep.subr.mxu0 0.0
  %1864 = vmatpush1.msra.mxu0 0.0
  %1865 = vmatprep.subr.mxu0 0.0
  %1866 = vmatpush1.msra.mxu0 0.0
  %1867 = vmatprep.subr.mxu0 0.0
  %1868 = vmatpush1.msra.mxu0 0.0
  %1869 = vmatprep.subr.mxu0 0.0
  %1870 = vmatpush1.msra.mxu0 0.0
  %1871 = vmatprep.subr.mxu0 0.0
  %1872 = vmatpush1.msra.mxu0 0.0
  %1873 = vmatprep.subr.mxu0 0.0
  %1874 = vmatpush1.msra.mxu0 0.0
  %1875 = vmatprep.mubr.f32.mxu0 0.0
  %1876 = vmatmul.mubr.f32.gmra.mrb[0].mxu0 %v629
  %v1877 = vpop.f32.mrb[0].mxu0
  %v1878 = vadd.f32 0.0, %v1877
  %v1879 = vpop.f32.mrb[0].mxu0
  %1880 = vdwg.mxu0
  %v1881 = vmul.f32 %v1878, 0.001953125
  %1883 = vset.pattern.permute.xlu0 0
  %1884 = vperm.xlu0 %1883, %v1712
  %v1885 = vpop.permute.xlu0 %1884
  %v1887 = vmul.f32 %v1885, %v1804
  %v1888 = vmul.f32 %v1885, %v1805
  %v1889 = vadd.f32 %v1881, 1e-05
  %v1890 = vrsqrt.pop %v1889
  %1892 = vset.pattern.permute.xlu0 0
  %1893 = vperm.xlu0 %1892, %v1890
  %v1894 = vpop.permute.xlu0 %1893
  %v1896 = vmul.f32 %v1887, %v1894
  %v1897 = vmul.f32 %v1888, %v1894
  %1899 = vset.pattern.permute.xlu0 0
  %1900 = vperm.xlu0 %1899, %v1714
  %v1901 = vpop.permute.xlu0 %1900
  %v1903 = vadd.f32 %v1896, %v1901
  %v1904 = vadd.f32 %v1897, %v1901
  %s1905 = scalar_lea.vmem %s8, 72
  %v1906 = vld [vmem:[%s1905] sm:$0xff]
  %v1907 = vld [vmem:[%s1905 + $0x8] sm:$0xff]
  %v1908 = vld [vmem:[%s1905 + $0x10] sm:$0xff]
  %v1909 = vld [vmem:[%s1905 + $0x18] sm:$0xff]
  %v1910 = vld [vmem:[%s1905 + $0x20] sm:$0xff]
  %v1911 = vld [vmem:[%s1905 + $0x28] sm:$0xff]
  %v1912 = vld [vmem:[%s1905 + $0x30] sm:$0xff]
  %v1913 = vld [vmem:[%s1905 + $0x38] sm:$0xff]
  %v1914 = vld [vmem:[%s1905 + $0x40] sm:$0xff]
  %1915 = vst [vmem:[#allocation2 + $0x8] sm:$0xff] %v1903
  %1916 = vst [vmem:[#allocation2 + $0x10] sm:$0xff] %v1904
  %v1917 = vld [vmem:[#allocation2] sm:$0xff]
  %v1918 = vld [vmem:[#allocation2 + $0x8] sm:$0xff]
  %v1919 = vld [vmem:[#allocation2 + $0x10] sm:$0xff]
  %v1920 = vmul.f32 %v1917, %v832
  %v1921 = vmul.f32 %v1918, %v836
  %v1922 = vmul.f32 %v1919, %v834
  %1926 = vrot.lane.b32.xlu0 %v1917, 16
  %v1927 = vpop.permute.xlu0 %1926
  %1928 = vrot.lane.b32.xlu0 %v1918, 16
  %v1929 = vpop.permute.xlu0 %1928
  %1930 = vrot.lane.b32.xlu0 %v1919, 16
  %v1931 = vpop.permute.xlu0 %1930
  %v1932 = vsel %vm852, %v1927, %v1929
  %v1933 = vsel %vm852, %v1929, %v1931
  %v1937 = vsel %vm627, %v1907, 0
  %1939 = vmatprep.subr.mxu0 %v1933
  %1940 = vmatpush1.msra.mxu0 %v1932
  %1941 = vmatprep.subr.mxu0 0.0
  %1942 = vmatpush1.msra.mxu0 0.0
  %1943 = vmatprep.subr.mxu0 0.0
  %1944 = vmatpush1.msra.mxu0 0.0
  %1945 = vmatprep.subr.mxu0 0.0
  %1946 = vmatpush1.msra.mxu0 0.0
  %1947 = vmatprep.subr.mxu0 0.0
  %1948 = vmatpush1.msra.mxu0 0.0
  %1949 = vmatprep.subr.mxu0 0.0
  %1950 = vmatpush1.msra.mxu0 0.0
  %1951 = vmatprep.subr.mxu0 0.0
  %1952 = vmatpush1.msra.mxu0 0.0
  %1953 = vmatprep.subr.mxu0 0.0
  %1954 = vmatpush1.msra.mxu0 0.0
  %1955 = vmatprep.subr.mxu0 0.0
  %1956 = vmatpush1.msra.mxu0 0.0
  %1957 = vmatprep.subr.mxu0 0.0
  %1958 = vmatpush1.msra.mxu0 0.0
  %1959 = vmatprep.subr.mxu0 0.0
  %1960 = vmatpush1.msra.mxu0 0.0
  %1961 = vmatprep.subr.mxu0 0.0
  %1962 = vmatpush1.msra.mxu0 0.0
  %1963 = vmatprep.subr.mxu0 0.0
  %1964 = vmatpush1.msra.mxu0 0.0
  %1965 = vmatprep.subr.mxu0 0.0
  %1966 = vmatpush1.msra.mxu0 0.0
  %1967 = vmatprep.subr.mxu0 0.0
  %1968 = vmatpush1.msra.mxu0 0.0
  %1969 = vmatprep.subr.mxu0 0.0
  %1970 = vmatpush1.msra.mxu0 0.0
  %1971 = vmatprep.subr.mxu0 0.0
  %1972 = vmatpush1.msra.mxu0 0.0
  %1973 = vmatprep.subr.mxu0 0.0
  %1974 = vmatpush1.msra.mxu0 0.0
  %1975 = vmatprep.subr.mxu0 0.0
  %1976 = vmatpush1.msra.mxu0 0.0
  %1977 = vmatprep.subr.mxu0 0.0
  %1978 = vmatpush1.msra.mxu0 0.0
  %1979 = vmatprep.subr.mxu0 0.0
  %1980 = vmatpush1.msra.mxu0 0.0
  %1981 = vmatprep.subr.mxu0 0.0
  %1982 = vmatpush1.msra.mxu0 0.0
  %1983 = vmatprep.subr.mxu0 0.0
  %1984 = vmatpush1.msra.mxu0 0.0
  %1985 = vmatprep.subr.mxu0 0.0
  %1986 = vmatpush1.msra.mxu0 0.0
  %1987 = vmatprep.subr.mxu0 0.0
  %1988 = vmatpush1.msra.mxu0 0.0
  %1989 = vmatprep.subr.mxu0 0.0
  %1990 = vmatpush1.msra.mxu0 0.0
  %1991 = vmatprep.subr.mxu0 0.0
  %1992 = vmatpush1.msra.mxu0 0.0
  %1993 = vmatprep.subr.mxu0 0.0
  %1994 = vmatpush1.msra.mxu0 0.0
  %1995 = vmatprep.subr.mxu0 0.0
  %1996 = vmatpush1.msra.mxu0 0.0
  %1997 = vmatprep.subr.mxu0 0.0
  %1998 = vmatpush1.msra.mxu0 0.0
  %1999 = vmatprep.subr.mxu0 0.0
  %2000 = vmatpush1.msra.mxu0 0.0
  %2001 = vmatprep.subr.mxu0 0.0
  %2002 = vmatpush1.msra.mxu0 0.0
  %2003 = vmatprep.mubr.f32.mxu0 0.0
  %2004 = vmatmul.mubr.f32.gmra.mrb[0].mxu0 %v1937
  %v2005 = vpop.f32.mrb[0].mxu0
  %v2006 = vadd.f32 0.0, %v2005
  %v2007 = vpop.f32.mrb[0].mxu0
  %v2008 = vadd.f32 0.0, %v2007
  %2009 = vdwg.mxu0
  %2013 = vrot.lane.b32.xlu0 %v1920, 17
  %v2014 = vpop.permute.xlu0 %2013
  %2015 = vrot.lane.b32.xlu0 %v1921, 17
  %v2016 = vpop.permute.xlu0 %2015
  %2017 = vrot.lane.b32.xlu0 %v1922, 17
  %v2018 = vpop.permute.xlu0 %2017
  %v2019 = vsel %vm940, %v2014, %v2016
  %v2020 = vsel %vm940, %v2016, %v2018
  %v2024 = vsel %vm627, %v1906, 0
  %2026 = vmatprep.subr.mxu0 %v2020
  %2027 = vmatpush1.msra.mxu0 %v2019
  %2028 = vmatprep.subr.mxu0 0.0
  %2029 = vmatpush1.msra.mxu0 0.0
  %2030 = vmatprep.subr.mxu0 0.0
  %2031 = vmatpush1.msra.mxu0 0.0
  %2032 = vmatprep.subr.mxu0 0.0
  %2033 = vmatpush1.msra.mxu0 0.0
  %2034 = vmatprep.subr.mxu0 0.0
  %2035 = vmatpush1.msra.mxu0 0.0
  %2036 = vmatprep.subr.mxu0 0.0
  %2037 = vmatpush1.msra.mxu0 0.0
  %2038 = vmatprep.subr.mxu0 0.0
  %2039 = vmatpush1.msra.mxu0 0.0
  %2040 = vmatprep.subr.mxu0 0.0
  %2041 = vmatpush1.msra.mxu0 0.0
  %2042 = vmatprep.subr.mxu0 0.0
  %2043 = vmatpush1.msra.mxu0 0.0
  %2044 = vmatprep.subr.mxu0 0.0
  %2045 = vmatpush1.msra.mxu0 0.0
  %2046 = vmatprep.subr.mxu0 0.0
  %2047 = vmatpush1.msra.mxu0 0.0
  %2048 = vmatprep.subr.mxu0 0.0
  %2049 = vmatpush1.msra.mxu0 0.0
  %2050 = vmatprep.subr.mxu0 0.0
  %2051 = vmatpush1.msra.mxu0 0.0
  %2052 = vmatprep.subr.mxu0 0.0
  %2053 = vmatpush1.msra.mxu0 0.0
  %2054 = vmatprep.subr.mxu0 0.0
  %2055 = vmatpush1.msra.mxu0 0.0
  %2056 = vmatprep.subr.mxu0 0.0
  %2057 = vmatpush1.msra.mxu0 0.0
  %2058 = vmatprep.subr.mxu0 0.0
  %2059 = vmatpush1.msra.mxu0 0.0
  %2060 = vmatprep.subr.mxu0 0.0
  %2061 = vmatpush1.msra.mxu0 0.0
  %2062 = vmatprep.subr.mxu0 0.0
  %2063 = vmatpush1.msra.mxu0 0.0
  %2064 = vmatprep.subr.mxu0 0.0
  %2065 = vmatpush1.msra.mxu0 0.0
  %2066 = vmatprep.subr.mxu0 0.0
  %2067 = vmatpush1.msra.mxu0 0.0
  %2068 = vmatprep.subr.mxu0 0.0
  %2069 = vmatpush1.msra.mxu0 0.0
  %2070 = vmatprep.subr.mxu0 0.0
  %2071 = vmatpush1.msra.mxu0 0.0
  %2072 = vmatprep.subr.mxu0 0.0
  %2073 = vmatpush1.msra.mxu0 0.0
  %2074 = vmatprep.subr.mxu0 0.0
  %2075 = vmatpush1.msra.mxu0 0.0
  %2076 = vmatprep.subr.mxu0 0.0
  %2077 = vmatpush1.msra.mxu0 0.0
  %2078 = vmatprep.subr.mxu0 0.0
  %2079 = vmatpush1.msra.mxu0 0.0
  %2080 = vmatprep.subr.mxu0 0.0
  %2081 = vmatpush1.msra.mxu0 0.0
  %2082 = vmatprep.subr.mxu0 0.0
  %2083 = vmatpush1.msra.mxu0 0.0
  %2084 = vmatprep.subr.mxu0 0.0
  %2085 = vmatpush1.msra.mxu0 0.0
  %2086 = vmatprep.subr.mxu0 0.0
  %2087 = vmatpush1.msra.mxu0 0.0
  %2088 = vmatprep.subr.mxu0 0.0
  %2089 = vmatpush1.msra.mxu0 0.0
  %2090 = vmatprep.mubr.f32.mxu0 0.0
  %2091 = vmatmul.mubr.f32.gmra.mrb[0].mxu0 %v2024
  %v2092 = vpop.f32.mrb[0].mxu0
  %v2093 = vadd.f32 %v2006, %v2092
  %v2094 = vpop.f32.mrb[0].mxu0
  %v2095 = vadd.f32 %v2008, %v2094
  %2096 = vdwg.mxu0
  %v2097 = vmul.f32 %v1917, %v1029
  %v2098 = vmul.f32 %v1918, %v1033
  %v2099 = vmul.f32 %v1919, %v1031
  %2103 = vrot.lane.b32.xlu0 %v2097, 15
  %v2104 = vpop.permute.xlu0 %2103
  %2105 = vrot.lane.b32.xlu0 %v2098, 15
  %v2106 = vpop.permute.xlu0 %2105
  %2107 = vrot.lane.b32.xlu0 %v2099, 15
  %v2108 = vpop.permute.xlu0 %2107
  %v2109 = vsel %vm1049, %v2104, %v2106
  %v2110 = vsel %vm1049, %v2106, %v2108
  %v2114 = vsel %vm627, %v1908, 0
  %2116 = vmatprep.subr.mxu0 %v2110
  %2117 = vmatpush1.msra.mxu0 %v2109
  %2118 = vmatprep.subr.mxu0 0.0
  %2119 = vmatpush1.msra.mxu0 0.0
  %2120 = vmatprep.subr.mxu0 0.0
  %2121 = vmatpush1.msra.mxu0 0.0
  %2122 = vmatprep.subr.mxu0 0.0
  %2123 = vmatpush1.msra.mxu0 0.0
  %2124 = vmatprep.subr.mxu0 0.0
  %2125 = vmatpush1.msra.mxu0 0.0
  %2126 = vmatprep.subr.mxu0 0.0
  %2127 = vmatpush1.msra.mxu0 0.0
  %2128 = vmatprep.subr.mxu0 0.0
  %2129 = vmatpush1.msra.mxu0 0.0
  %2130 = vmatprep.subr.mxu0 0.0
  %2131 = vmatpush1.msra.mxu0 0.0
  %2132 = vmatprep.subr.mxu0 0.0
  %2133 = vmatpush1.msra.mxu0 0.0
  %2134 = vmatprep.subr.mxu0 0.0
  %2135 = vmatpush1.msra.mxu0 0.0
  %2136 = vmatprep.subr.mxu0 0.0
  %2137 = vmatpush1.msra.mxu0 0.0
  %2138 = vmatprep.subr.mxu0 0.0
  %2139 = vmatpush1.msra.mxu0 0.0
  %2140 = vmatprep.subr.mxu0 0.0
  %2141 = vmatpush1.msra.mxu0 0.0
  %2142 = vmatprep.subr.mxu0 0.0
  %2143 = vmatpush1.msra.mxu0 0.0
  %2144 = vmatprep.subr.mxu0 0.0
  %2145 = vmatpush1.msra.mxu0 0.0
  %2146 = vmatprep.subr.mxu0 0.0
  %2147 = vmatpush1.msra.mxu0 0.0
  %2148 = vmatprep.subr.mxu0 0.0
  %2149 = vmatpush1.msra.mxu0 0.0
  %2150 = vmatprep.subr.mxu0 0.0
  %2151 = vmatpush1.msra.mxu0 0.0
  %2152 = vmatprep.subr.mxu0 0.0
  %2153 = vmatpush1.msra.mxu0 0.0
  %2154 = vmatprep.subr.mxu0 0.0
  %2155 = vmatpush1.msra.mxu0 0.0
  %2156 = vmatprep.subr.mxu0 0.0
  %2157 = vmatpush1.msra.mxu0 0.0
  %2158 = vmatprep.subr.mxu0 0.0
  %2159 = vmatpush1.msra.mxu0 0.0
  %2160 = vmatprep.subr.mxu0 0.0
  %2161 = vmatpush1.msra.mxu0 0.0
  %2162 = vmatprep.subr.mxu0 0.0
  %2163 = vmatpush1.msra.mxu0 0.0
  %2164 = vmatprep.subr.mxu0 0.0
  %2165 = vmatpush1.msra.mxu0 0.0
  %2166 = vmatprep.subr.mxu0 0.0
  %2167 = vmatpush1.msra.mxu0 0.0
  %2168 = vmatprep.subr.mxu0 0.0
  %2169 = vmatpush1.msra.mxu0 0.0
  %2170 = vmatprep.subr.mxu0 0.0
  %2171 = vmatpush1.msra.mxu0 0.0
  %2172 = vmatprep.subr.mxu0 0.0
  %2173 = vmatpush1.msra.mxu0 0.0
  %2174 = vmatprep.subr.mxu0 0.0
  %2175 = vmatpush1.msra.mxu0 0.0
  %2176 = vmatprep.subr.mxu0 0.0
  %2177 = vmatpush1.msra.mxu0 0.0
  %2178 = vmatprep.subr.mxu0 0.0
  %2179 = vmatpush1.msra.mxu0 0.0
  %2180 = vmatprep.mubr.f32.mxu0 0.0
  %2181 = vmatmul.mubr.f32.gmra.mrb[0].mxu0 %v2114
  %v2182 = vpop.f32.mrb[0].mxu0
  %v2183 = vadd.f32 0.0, %v2182
  %v2184 = vpop.f32.mrb[0].mxu0
  %v2185 = vadd.f32 0.0, %v2184
  %2186 = vdwg.mxu0
  %v2187 = vadd.f32 %v2093, %v2183
  %v2188 = vadd.f32 %v2095, %v2185
  %v2189 = vmul.f32 %v1917, %v1131
  %v2190 = vmul.f32 %v1918, %v1135
  %v2191 = vmul.f32 %v1919, %v1133
  %2195 = vrot.lane.b32.xlu0 %v2189, 1
  %v2196 = vpop.permute.xlu0 %2195
  %2197 = vrot.lane.b32.xlu0 %v2190, 1
  %v2198 = vpop.permute.xlu0 %2197
  %2199 = vrot.lane.b32.xlu0 %v2191, 1
  %v2200 = vpop.permute.xlu0 %2199
  %v2201 = vsel %vm1151, %v2196, %v2198
  %v2202 = vsel %vm1151, %v2198, %v2200
  %v2206 = vsel %vm627, %v1909, 0
  %2208 = vmatprep.subr.mxu0 %v2202
  %2209 = vmatpush1.msra.mxu0 %v2201
  %2210 = vmatprep.subr.mxu0 0.0
  %2211 = vmatpush1.msra.mxu0 0.0
  %2212 = vmatprep.subr.mxu0 0.0
  %2213 = vmatpush1.msra.mxu0 0.0
  %2214 = vmatprep.subr.mxu0 0.0
  %2215 = vmatpush1.msra.mxu0 0.0
  %2216 = vmatprep.subr.mxu0 0.0
  %2217 = vmatpush1.msra.mxu0 0.0
  %2218 = vmatprep.subr.mxu0 0.0
  %2219 = vmatpush1.msra.mxu0 0.0
  %2220 = vmatprep.subr.mxu0 0.0
  %2221 = vmatpush1.msra.mxu0 0.0
  %2222 = vmatprep.subr.mxu0 0.0
  %2223 = vmatpush1.msra.mxu0 0.0
  %2224 = vmatprep.subr.mxu0 0.0
  %2225 = vmatpush1.msra.mxu0 0.0
  %2226 = vmatprep.subr.mxu0 0.0
  %2227 = vmatpush1.msra.mxu0 0.0
  %2228 = vmatprep.subr.mxu0 0.0
  %2229 = vmatpush1.msra.mxu0 0.0
  %2230 = vmatprep.subr.mxu0 0.0
  %2231 = vmatpush1.msra.mxu0 0.0
  %2232 = vmatprep.subr.mxu0 0.0
  %2233 = vmatpush1.msra.mxu0 0.0
  %2234 = vmatprep.subr.mxu0 0.0
  %2235 = vmatpush1.msra.mxu0 0.0
  %2236 = vmatprep.subr.mxu0 0.0
  %2237 = vmatpush1.msra.mxu0 0.0
  %2238 = vmatprep.subr.mxu0 0.0
  %2239 = vmatpush1.msra.mxu0 0.0
  %2240 = vmatprep.subr.mxu0 0.0
  %2241 = vmatpush1.msra.mxu0 0.0
  %2242 = vmatprep.subr.mxu0 0.0
  %2243 = vmatpush1.msra.mxu0 0.0
  %2244 = vmatprep.subr.mxu0 0.0
  %2245 = vmatpush1.msra.mxu0 0.0
  %2246 = vmatprep.subr.mxu0 0.0
  %2247 = vmatpush1.msra.mxu0 0.0
  %2248 = vmatprep.subr.mxu0 0.0
  %2249 = vmatpush1.msra.mxu0 0.0
  %2250 = vmatprep.subr.mxu0 0.0
  %2251 = vmatpush1.msra.mxu0 0.0
  %2252 = vmatprep.subr.mxu0 0.0
  %2253 = vmatpush1.msra.mxu0 0.0
  %2254 = vmatprep.subr.mxu0 0.0
  %2255 = vmatpush1.msra.mxu0 0.0
  %2256 = vmatprep.subr.mxu0 0.0
  %2257 = vmatpush1.msra.mxu0 0.0
  %2258 = vmatprep.subr.mxu0 0.0
  %2259 = vmatpush1.msra.mxu0 0.0
  %2260 = vmatprep.subr.mxu0 0.0
  %2261 = vmatpush1.msra.mxu0 0.0
  %2262 = vmatprep.subr.mxu0 0.0
  %2263 = vmatpush1.msra.mxu0 0.0
  %2264 = vmatprep.subr.mxu0 0.0
  %2265 = vmatpush1.msra.mxu0 0.0
  %2266 = vmatprep.subr.mxu0 0.0
  %2267 = vmatpush1.msra.mxu0 0.0
  %2268 = vmatprep.subr.mxu0 0.0
  %2269 = vmatpush1.msra.mxu0 0.0
  %2270 = vmatprep.subr.mxu0 0.0
  %2271 = vmatpush1.msra.mxu0 0.0
  %2272 = vmatprep.mubr.f32.mxu0 0.0
  %2273 = vmatmul.mubr.f32.gmra.mrb[0].mxu0 %v2206
  %v2274 = vpop.f32.mrb[0].mxu0
  %v2275 = vadd.f32 0.0, %v2274
  %v2276 = vpop.f32.mrb[0].mxu0
  %v2277 = vadd.f32 0.0, %v2276
  %2278 = vdwg.mxu0
  %v2279 = vadd.f32 %v2187, %v2275
  %v2280 = vadd.f32 %v2188, %v2277
  %v2282 = vsel %vm627, %v1910, 0
  %2284 = vmatprep.subr.mxu0 %v1919
  %2285 = vmatpush1.msra.mxu0 %v1918
  %2286 = vmatprep.subr.mxu0 0.0
  %2287 = vmatpush1.msra.mxu0 0.0
  %2288 = vmatprep.subr.mxu0 0.0
  %2289 = vmatpush1.msra.mxu0 0.0
  %2290 = vmatprep.subr.mxu0 0.0
  %2291 = vmatpush1.msra.mxu0 0.0
  %2292 = vmatprep.subr.mxu0 0.0
  %2293 = vmatpush1.msra.mxu0 0.0
  %2294 = vmatprep.subr.mxu0 0.0
  %2295 = vmatpush1.msra.mxu0 0.0
  %2296 = vmatprep.subr.mxu0 0.0
  %2297 = vmatpush1.msra.mxu0 0.0
  %2298 = vmatprep.subr.mxu0 0.0
  %2299 = vmatpush1.msra.mxu0 0.0
  %2300 = vmatprep.subr.mxu0 0.0
  %2301 = vmatpush1.msra.mxu0 0.0
  %2302 = vmatprep.subr.mxu0 0.0
  %2303 = vmatpush1.msra.mxu0 0.0
  %2304 = vmatprep.subr.mxu0 0.0
  %2305 = vmatpush1.msra.mxu0 0.0
  %2306 = vmatprep.subr.mxu0 0.0
  %2307 = vmatpush1.msra.mxu0 0.0
  %2308 = vmatprep.subr.mxu0 0.0
  %2309 = vmatpush1.msra.mxu0 0.0
  %2310 = vmatprep.subr.mxu0 0.0
  %2311 = vmatpush1.msra.mxu0 0.0
  %2312 = vmatprep.subr.mxu0 0.0
  %2313 = vmatpush1.msra.mxu0 0.0
  %2314 = vmatprep.subr.mxu0 0.0
  %2315 = vmatpush1.msra.mxu0 0.0
  %2316 = vmatprep.subr.mxu0 0.0
  %2317 = vmatpush1.msra.mxu0 0.0
  %2318 = vmatprep.subr.mxu0 0.0
  %2319 = vmatpush1.msra.mxu0 0.0
  %2320 = vmatprep.subr.mxu0 0.0
  %2321 = vmatpush1.msra.mxu0 0.0
  %2322 = vmatprep.subr.mxu0 0.0
  %2323 = vmatpush1.msra.mxu0 0.0
  %2324 = vmatprep.subr.mxu0 0.0
  %2325 = vmatpush1.msra.mxu0 0.0
  %2326 = vmatprep.subr.mxu0 0.0
  %2327 = vmatpush1.msra.mxu0 0.0
  %2328 = vmatprep.subr.mxu0 0.0
  %2329 = vmatpush1.msra.mxu0 0.0
  %2330 = vmatprep.subr.mxu0 0.0
  %2331 = vmatpush1.msra.mxu0 0.0
  %2332 = vmatprep.subr.mxu0 0.0
  %2333 = vmatpush1.msra.mxu0 0.0
  %2334 = vmatprep.subr.mxu0 0.0
  %2335 = vmatpush1.msra.mxu0 0.0
  %2336 = vmatprep.subr.mxu0 0.0
  %2337 = vmatpush1.msra.mxu0 0.0
  %2338 = vmatprep.subr.mxu0 0.0
  %2339 = vmatpush1.msra.mxu0 0.0
  %2340 = vmatprep.subr.mxu0 0.0
  %2341 = vmatpush1.msra.mxu0 0.0
  %2342 = vmatprep.subr.mxu0 0.0
  %2343 = vmatpush1.msra.mxu0 0.0
  %2344 = vmatprep.subr.mxu0 0.0
  %2345 = vmatpush1.msra.mxu0 0.0
  %2346 = vmatprep.subr.mxu0 0.0
  %2347 = vmatpush1.msra.mxu0 0.0
  %2348 = vmatprep.mubr.f32.mxu0 0.0
  %2349 = vmatmul.mubr.f32.gmra.mrb[0].mxu0 %v2282
  %v2350 = vpop.f32.mrb[0].mxu0
  %v2351 = vadd.f32 0.0, %v2350
  %v2352 = vpop.f32.mrb[0].mxu0
  %v2353 = vadd.f32 0.0, %v2352
  %2354 = vdwg.mxu0
  %v2355 = vadd.f32 %v2279, %v2351
  %v2356 = vadd.f32 %v2280, %v2353
  %v2357 = vld [vmem:[#allocation2 + $0x8] sm:$0xff]
  %v2358 = vld [vmem:[#allocation2 + $0x10] sm:$0xff]
  %v2359 = vld [vmem:[#allocation2 + $0x18] sm:$0xff]
  %v2360 = vmul.f32 %v2357, %v1312
  %v2361 = vmul.f32 %v2358, %v1315
  %v2362 = vmul.f32 %v2359, %v1314
  %2366 = vrot.lane.b32.xlu0 %v2360, 127
  %v2367 = vpop.permute.xlu0 %2366
  %2368 = vrot.lane.b32.xlu0 %v2361, 127
  %v2369 = vpop.permute.xlu0 %2368
  %2370 = vrot.lane.b32.xlu0 %v2362, 127
  %v2371 = vpop.permute.xlu0 %2370
  %v2372 = vsel %vm1134, %v2367, %v2369
  %v2373 = vsel %vm1134, %v2369, %v2371
  %v2377 = vsel %vm627, %v1911, 0
  %2379 = vmatprep.subr.mxu0 %v2373
  %2380 = vmatpush1.msra.mxu0 %v2372
  %2381 = vmatprep.subr.mxu0 0.0
  %2382 = vmatpush1.msra.mxu0 0.0
  %2383 = vmatprep.subr.mxu0 0.0
  %2384 = vmatpush1.msra.mxu0 0.0
  %2385 = vmatprep.subr.mxu0 0.0
  %2386 = vmatpush1.msra.mxu0 0.0
  %2387 = vmatprep.subr.mxu0 0.0
  %2388 = vmatpush1.msra.mxu0 0.0
  %2389 = vmatprep.subr.mxu0 0.0
  %2390 = vmatpush1.msra.mxu0 0.0
  %2391 = vmatprep.subr.mxu0 0.0
  %2392 = vmatpush1.msra.mxu0 0.0
  %2393 = vmatprep.subr.mxu0 0.0
  %2394 = vmatpush1.msra.mxu0 0.0
  %2395 = vmatprep.subr.mxu0 0.0
  %2396 = vmatpush1.msra.mxu0 0.0
  %2397 = vmatprep.subr.mxu0 0.0
  %2398 = vmatpush1.msra.mxu0 0.0
  %2399 = vmatprep.subr.mxu0 0.0
  %2400 = vmatpush1.msra.mxu0 0.0
  %2401 = vmatprep.subr.mxu0 0.0
  %2402 = vmatpush1.msra.mxu0 0.0
  %2403 = vmatprep.subr.mxu0 0.0
  %2404 = vmatpush1.msra.mxu0 0.0
  %2405 = vmatprep.subr.mxu0 0.0
  %2406 = vmatpush1.msra.mxu0 0.0
  %2407 = vmatprep.subr.mxu0 0.0
  %2408 = vmatpush1.msra.mxu0 0.0
  %2409 = vmatprep.subr.mxu0 0.0
  %2410 = vmatpush1.msra.mxu0 0.0
  %2411 = vmatprep.subr.mxu0 0.0
  %2412 = vmatpush1.msra.mxu0 0.0
  %2413 = vmatprep.subr.mxu0 0.0
  %2414 = vmatpush1.msra.mxu0 0.0
  %2415 = vmatprep.subr.mxu0 0.0
  %2416 = vmatpush1.msra.mxu0 0.0
  %2417 = vmatprep.subr.mxu0 0.0
  %2418 = vmatpush1.msra.mxu0 0.0
  %2419 = vmatprep.subr.mxu0 0.0
  %2420 = vmatpush1.msra.mxu0 0.0
  %2421 = vmatprep.subr.mxu0 0.0
  %2422 = vmatpush1.msra.mxu0 0.0
  %2423 = vmatprep.subr.mxu0 0.0
  %2424 = vmatpush1.msra.mxu0 0.0
  %2425 = vmatprep.subr.mxu0 0.0
  %2426 = vmatpush1.msra.mxu0 0.0
  %2427 = vmatprep.subr.mxu0 0.0
  %2428 = vmatpush1.msra.mxu0 0.0
  %2429 = vmatprep.subr.mxu0 0.0
  %2430 = vmatpush1.msra.mxu0 0.0
  %2431 = vmatprep.subr.mxu0 0.0
  %2432 = vmatpush1.msra.mxu0 0.0
  %2433 = vmatprep.subr.mxu0 0.0
  %2434 = vmatpush1.msra.mxu0 0.0
  %2435 = vmatprep.subr.mxu0 0.0
  %2436 = vmatpush1.msra.mxu0 0.0
  %2437 = vmatprep.subr.mxu0 0.0
  %2438 = vmatpush1.msra.mxu0 0.0
  %2439 = vmatprep.subr.mxu0 0.0
  %2440 = vmatpush1.msra.mxu0 0.0
  %2441 = vmatprep.subr.mxu0 0.0
  %2442 = vmatpush1.msra.mxu0 0.0
  %2443 = vmatprep.mubr.f32.mxu0 0.0
  %2444 = vmatmul.mubr.f32.gmra.mrb[0].mxu0 %v2377
  %v2445 = vpop.f32.mrb[0].mxu0
  %v2446 = vadd.f32 0.0, %v2445
  %v2447 = vpop.f32.mrb[0].mxu0
  %v2448 = vadd.f32 0.0, %v2447
  %2449 = vdwg.mxu0
  %v2450 = vadd.f32 %v2355, %v2446
  %v2451 = vadd.f32 %v2356, %v2448
  %v2452 = vmul.f32 %v2357, %v1412
  %v2453 = vmul.f32 %v2358, %v1415
  %v2454 = vmul.f32 %v2359, %v1414
  %2458 = vrot.lane.b32.xlu0 %v2452, 113
  %v2459 = vpop.permute.xlu0 %2458
  %2460 = vrot.lane.b32.xlu0 %v2453, 113
  %v2461 = vpop.permute.xlu0 %2460
  %2462 = vrot.lane.b32.xlu0 %v2454, 113
  %v2463 = vpop.permute.xlu0 %2462
  %v2464 = vsel %vm1032, %v2459, %v2461
  %v2465 = vsel %vm1032, %v2461, %v2463
  %v2469 = vsel %vm627, %v1912, 0
  %2471 = vmatprep.subr.mxu0 %v2465
  %2472 = vmatpush1.msra.mxu0 %v2464
  %2473 = vmatprep.subr.mxu0 0.0
  %2474 = vmatpush1.msra.mxu0 0.0
  %2475 = vmatprep.subr.mxu0 0.0
  %2476 = vmatpush1.msra.mxu0 0.0
  %2477 = vmatprep.subr.mxu0 0.0
  %2478 = vmatpush1.msra.mxu0 0.0
  %2479 = vmatprep.subr.mxu0 0.0
  %2480 = vmatpush1.msra.mxu0 0.0
  %2481 = vmatprep.subr.mxu0 0.0
  %2482 = vmatpush1.msra.mxu0 0.0
  %2483 = vmatprep.subr.mxu0 0.0
  %2484 = vmatpush1.msra.mxu0 0.0
  %2485 = vmatprep.subr.mxu0 0.0
  %2486 = vmatpush1.msra.mxu0 0.0
  %2487 = vmatprep.subr.mxu0 0.0
  %2488 = vmatpush1.msra.mxu0 0.0
  %2489 = vmatprep.subr.mxu0 0.0
  %2490 = vmatpush1.msra.mxu0 0.0
  %2491 = vmatprep.subr.mxu0 0.0
  %2492 = vmatpush1.msra.mxu0 0.0
  %2493 = vmatprep.subr.mxu0 0.0
  %2494 = vmatpush1.msra.mxu0 0.0
  %2495 = vmatprep.subr.mxu0 0.0
  %2496 = vmatpush1.msra.mxu0 0.0
  %2497 = vmatprep.subr.mxu0 0.0
  %2498 = vmatpush1.msra.mxu0 0.0
  %2499 = vmatprep.subr.mxu0 0.0
  %2500 = vmatpush1.msra.mxu0 0.0
  %2501 = vmatprep.subr.mxu0 0.0
  %2502 = vmatpush1.msra.mxu0 0.0
  %2503 = vmatprep.subr.mxu0 0.0
  %2504 = vmatpush1.msra.mxu0 0.0
  %2505 = vmatprep.subr.mxu0 0.0
  %2506 = vmatpush1.msra.mxu0 0.0
  %2507 = vmatprep.subr.mxu0 0.0
  %2508 = vmatpush1.msra.mxu0 0.0
  %2509 = vmatprep.subr.mxu0 0.0
  %2510 = vmatpush1.msra.mxu0 0.0
  %2511 = vmatprep.subr.mxu0 0.0
  %2512 = vmatpush1.msra.mxu0 0.0
  %2513 = vmatprep.subr.mxu0 0.0
  %2514 = vmatpush1.msra.mxu0 0.0
  %2515 = vmatprep.subr.mxu0 0.0
  %2516 = vmatpush1.msra.mxu0 0.0
  %2517 = vmatprep.subr.mxu0 0.0
  %2518 = vmatpush1.msra.mxu0 0.0
  %2519 = vmatprep.subr.mxu0 0.0
  %2520 = vmatpush1.msra.mxu0 0.0
  %2521 = vmatprep.subr.mxu0 0.0
  %2522 = vmatpush1.msra.mxu0 0.0
  %2523 = vmatprep.subr.mxu0 0.0
  %2524 = vmatpush1.msra.mxu0 0.0
  %2525 = vmatprep.subr.mxu0 0.0
  %2526 = vmatpush1.msra.mxu0 0.0
  %2527 = vmatprep.subr.mxu0 0.0
  %2528 = vmatpush1.msra.mxu0 0.0
  %2529 = vmatprep.subr.mxu0 0.0
  %2530 = vmatpush1.msra.mxu0 0.0
  %2531 = vmatprep.subr.mxu0 0.0
  %2532 = vmatpush1.msra.mxu0 0.0
  %2533 = vmatprep.subr.mxu0 0.0
  %2534 = vmatpush1.msra.mxu0 0.0
  %2535 = vmatprep.mubr.f32.mxu0 0.0
  %2536 = vmatmul.mubr.f32.gmra.mrb[0].mxu0 %v2469
  %v2537 = vpop.f32.mrb[0].mxu0
  %v2538 = vadd.f32 0.0, %v2537
  %v2539 = vpop.f32.mrb[0].mxu0
  %v2540 = vadd.f32 0.0, %v2539
  %2541 = vdwg.mxu0
  %v2542 = vadd.f32 %v2450, %v2538
  %v2543 = vadd.f32 %v2451, %v2540
  %2547 = vrot.lane.b32.xlu0 %v2357, 112
  %v2548 = vpop.permute.xlu0 %2547
  %2549 = vrot.lane.b32.xlu0 %v2358, 112
  %v2550 = vpop.permute.xlu0 %2549
  %2551 = vrot.lane.b32.xlu0 %v2359, 112
  %v2552 = vpop.permute.xlu0 %2551
  %v2553 = vsel %vm1520, %v2548, %v2550
  %v2554 = vsel %vm1520, %v2550, %v2552
  %v2558 = vsel %vm627, %v1913, 0
  %2560 = vmatprep.subr.mxu0 %v2554
  %2561 = vmatpush1.msra.mxu0 %v2553
  %2562 = vmatprep.subr.mxu0 0.0
  %2563 = vmatpush1.msra.mxu0 0.0
  %2564 = vmatprep.subr.mxu0 0.0
  %2565 = vmatpush1.msra.mxu0 0.0
  %2566 = vmatprep.subr.mxu0 0.0
  %2567 = vmatpush1.msra.mxu0 0.0
  %2568 = vmatprep.subr.mxu0 0.0
  %2569 = vmatpush1.msra.mxu0 0.0
  %2570 = vmatprep.subr.mxu0 0.0
  %2571 = vmatpush1.msra.mxu0 0.0
  %2572 = vmatprep.subr.mxu0 0.0
  %2573 = vmatpush1.msra.mxu0 0.0
  %2574 = vmatprep.subr.mxu0 0.0
  %2575 = vmatpush1.msra.mxu0 0.0
  %2576 = vmatprep.subr.mxu0 0.0
  %2577 = vmatpush1.msra.mxu0 0.0
  %2578 = vmatprep.subr.mxu0 0.0
  %2579 = vmatpush1.msra.mxu0 0.0
  %2580 = vmatprep.subr.mxu0 0.0
  %2581 = vmatpush1.msra.mxu0 0.0
  %2582 = vmatprep.subr.mxu0 0.0
  %2583 = vmatpush1.msra.mxu0 0.0
  %2584 = vmatprep.subr.mxu0 0.0
  %2585 = vmatpush1.msra.mxu0 0.0
  %2586 = vmatprep.subr.mxu0 0.0
  %2587 = vmatpush1.msra.mxu0 0.0
  %2588 = vmatprep.subr.mxu0 0.0
  %2589 = vmatpush1.msra.mxu0 0.0
  %2590 = vmatprep.subr.mxu0 0.0
  %2591 = vmatpush1.msra.mxu0 0.0
  %2592 = vmatprep.subr.mxu0 0.0
  %2593 = vmatpush1.msra.mxu0 0.0
  %2594 = vmatprep.subr.mxu0 0.0
  %2595 = vmatpush1.msra.mxu0 0.0
  %2596 = vmatprep.subr.mxu0 0.0
  %2597 = vmatpush1.msra.mxu0 0.0
  %2598 = vmatprep.subr.mxu0 0.0
  %2599 = vmatpush1.msra.mxu0 0.0
  %2600 = vmatprep.subr.mxu0 0.0
  %2601 = vmatpush1.msra.mxu0 0.0
  %2602 = vmatprep.subr.mxu0 0.0
  %2603 = vmatpush1.msra.mxu0 0.0
  %2604 = vmatprep.subr.mxu0 0.0
  %2605 = vmatpush1.msra.mxu0 0.0
  %2606 = vmatprep.subr.mxu0 0.0
  %2607 = vmatpush1.msra.mxu0 0.0
  %2608 = vmatprep.subr.mxu0 0.0
  %2609 = vmatpush1.msra.mxu0 0.0
  %2610 = vmatprep.subr.mxu0 0.0
  %2611 = vmatpush1.msra.mxu0 0.0
  %2612 = vmatprep.subr.mxu0 0.0
  %2613 = vmatpush1.msra.mxu0 0.0
  %2614 = vmatprep.subr.mxu0 0.0
  %2615 = vmatpush1.msra.mxu0 0.0
  %2616 = vmatprep.subr.mxu0 0.0
  %2617 = vmatpush1.msra.mxu0 0.0
  %2618 = vmatprep.subr.mxu0 0.0
  %2619 = vmatpush1.msra.mxu0 0.0
  %2620 = vmatprep.subr.mxu0 0.0
  %2621 = vmatpush1.msra.mxu0 0.0
  %2622 = vmatprep.subr.mxu0 0.0
  %2623 = vmatpush1.msra.mxu0 0.0
  %2624 = vmatprep.mubr.f32.mxu0 0.0
  %2625 = vmatmul.mubr.f32.gmra.mrb[0].mxu0 %v2558
  %v2626 = vpop.f32.mrb[0].mxu0
  %v2627 = vadd.f32 0.0, %v2626
  %v2628 = vpop.f32.mrb[0].mxu0
  %v2629 = vadd.f32 0.0, %v2628
  %2630 = vdwg.mxu0
  %v2631 = vadd.f32 %v2542, %v2627
  %v2632 = vadd.f32 %v2543, %v2629
  %v2633 = vmul.f32 %v2357, %v1602
  %v2634 = vmul.f32 %v2358, %v1605
  %v2635 = vmul.f32 %v2359, %v1604
  %2639 = vrot.lane.b32.xlu0 %v2633, 111
  %v2640 = vpop.permute.xlu0 %2639
  %2641 = vrot.lane.b32.xlu0 %v2634, 111
  %v2642 = vpop.permute.xlu0 %2641
  %2643 = vrot.lane.b32.xlu0 %v2635, 111
  %v2644 = vpop.permute.xlu0 %2643
  %v2645 = vsel %vm835, %v2640, %v2642
  %v2646 = vsel %vm835, %v2642, %v2644
  %v2650 = vsel %vm627, %v1914, 0
  %2652 = vmatprep.subr.mxu0 %v2646
  %2653 = vmatpush1.msra.mxu0 %v2645
  %2654 = vmatprep.subr.mxu0 0.0
  %2655 = vmatpush1.msra.mxu0 0.0
  %2656 = vmatprep.subr.mxu0 0.0
  %2657 = vmatpush1.msra.mxu0 0.0
  %2658 = vmatprep.subr.mxu0 0.0
  %2659 = vmatpush1.msra.mxu0 0.0
  %2660 = vmatprep.subr.mxu0 0.0
  %2661 = vmatpush1.msra.mxu0 0.0
  %2662 = vmatprep.subr.mxu0 0.0
  %2663 = vmatpush1.msra.mxu0 0.0
  %2664 = vmatprep.subr.mxu0 0.0
  %2665 = vmatpush1.msra.mxu0 0.0
  %2666 = vmatprep.subr.mxu0 0.0
  %2667 = vmatpush1.msra.mxu0 0.0
  %2668 = vmatprep.subr.mxu0 0.0
  %2669 = vmatpush1.msra.mxu0 0.0
  %2670 = vmatprep.subr.mxu0 0.0
  %2671 = vmatpush1.msra.mxu0 0.0
  %2672 = vmatprep.subr.mxu0 0.0
  %2673 = vmatpush1.msra.mxu0 0.0
  %2674 = vmatprep.subr.mxu0 0.0
  %2675 = vmatpush1.msra.mxu0 0.0
  %2676 = vmatprep.subr.mxu0 0.0
  %2677 = vmatpush1.msra.mxu0 0.0
  %2678 = vmatprep.subr.mxu0 0.0
  %2679 = vmatpush1.msra.mxu0 0.0
  %2680 = vmatprep.subr.mxu0 0.0
  %2681 = vmatpush1.msra.mxu0 0.0
  %2682 = vmatprep.subr.mxu0 0.0
  %2683 = vmatpush1.msra.mxu0 0.0
  %2684 = vmatprep.subr.mxu0 0.0
  %2685 = vmatpush1.msra.mxu0 0.0
  %2686 = vmatprep.subr.mxu0 0.0
  %2687 = vmatpush1.msra.mxu0 0.0
  %2688 = vmatprep.subr.mxu0 0.0
  %2689 = vmatpush1.msra.mxu0 0.0
  %2690 = vmatprep.subr.mxu0 0.0
  %2691 = vmatpush1.msra.mxu0 0.0
  %2692 = vmatprep.subr.mxu0 0.0
  %2693 = vmatpush1.msra.mxu0 0.0
  %2694 = vmatprep.subr.mxu0 0.0
  %2695 = vmatpush1.msra.mxu0 0.0
  %2696 = vmatprep.subr.mxu0 0.0
  %2697 = vmatpush1.msra.mxu0 0.0
  %2698 = vmatprep.subr.mxu0 0.0
  %2699 = vmatpush1.msra.mxu0 0.0
  %2700 = vmatprep.subr.mxu0 0.0
  %2701 = vmatpush1.msra.mxu0 0.0
  %2702 = vmatprep.subr.mxu0 0.0
  %2703 = vmatpush1.msra.mxu0 0.0
  %2704 = vmatprep.subr.mxu0 0.0
  %2705 = vmatpush1.msra.mxu0 0.0
  %2706 = vmatprep.subr.mxu0 0.0
  %2707 = vmatpush1.msra.mxu0 0.0
  %2708 = vmatprep.subr.mxu0 0.0
  %2709 = vmatpush1.msra.mxu0 0.0
  %2710 = vmatprep.subr.mxu0 0.0
  %2711 = vmatpush1.msra.mxu0 0.0
  %2712 = vmatprep.subr.mxu0 0.0
  %2713 = vmatpush1.msra.mxu0 0.0
  %2714 = vmatprep.subr.mxu0 0.0
  %2715 = vmatpush1.msra.mxu0 0.0
  %2716 = vmatprep.mubr.f32.mxu0 0.0
  %2717 = vmatmul.mubr.f32.gmra.mrb[0].mxu0 %v2650
  %v2718 = vpop.f32.mrb[0].mxu0
  %v2719 = vadd.f32 0.0, %v2718
  %v2720 = vpop.f32.mrb[0].mxu0
  %v2721 = vadd.f32 0.0, %v2720
  %2722 = vdwg.mxu0
  %v2723 = vadd.f32 %v2631, %v2719
  %v2724 = vadd.f32 %v2632, %v2721
  %s2725 = scalar_lea.vmem %s9, 8
  %v2726 = vld [vmem:[%s2725] sm:$0xff]
  %2728 = vset.pattern.permute.xlu0 0
  %2729 = vperm.xlu0 %2728, %v2726
  %v2730 = vpop.permute.xlu0 %2729
  %v2732 = vadd.f32 %v2723, %v2730
  %v2733 = vadd.f32 %v2724, %v2730
  %v2734 = vadd.f32 %v2732, %v73
  %v2735 = vadd.f32 %v2733, %v74
  %s2736 = scalar_lea.vmem %s10, 64
  %v2737 = vld [vmem:[%s2736] sm:$0xff]
  %v2738 = vld [vmem:[%s2736 + $0x8] sm:$0xff]
  %v2739 = vld [vmem:[%s2736 + $0x10] sm:$0xff]
  %v2740 = vld [vmem:[%s2736 + $0x18] sm:$0xff]
  %v2741 = vld [vmem:[%s2736 + $0x20] sm:$0xff]
  %v2742 = vld [vmem:[%s2736 + $0x28] sm:$0xff]
  %v2743 = vld [vmem:[%s2736 + $0x30] sm:$0xff]
  %v2744 = vld [vmem:[%s2736 + $0x38] sm:$0xff]
  %s2745 = scalar_lea.vmem %s11, 64
  %v2746 = vld [vmem:[%s2745] sm:$0xff]
  %v2747 = vld [vmem:[%s2745 + $0x8] sm:$0xff]
  %v2748 = vld [vmem:[%s2745 + $0x10] sm:$0xff]
  %v2749 = vld [vmem:[%s2745 + $0x18] sm:$0xff]
  %v2750 = vld [vmem:[%s2745 + $0x20] sm:$0xff]
  %v2751 = vld [vmem:[%s2745 + $0x28] sm:$0xff]
  %v2752 = vld [vmem:[%s2745 + $0x30] sm:$0xff]
  %v2753 = vld [vmem:[%s2745 + $0x38] sm:$0xff]
  %v2755 = vsel %vm107, %v2737, 0
  %v2758 = vsel %vm107, %v2738, 0
  %v2761 = vsel %vm107, %v2739, 0
  %v2764 = vsel %vm107, %v2740, 0
  %v2767 = vsel %vm107, %v2741, 0
  %v2770 = vsel %vm107, %v2742, 0
  %v2773 = vsel %vm107, %v2743, 0
  %v2776 = vsel %vm107, %v2744, 0
  %2778 = vmatprep.subr.mxu0 0.0
  %2779 = vmatpush1.msra.mxu0 %v75
  %2780 = vmatprep.subr.mxu0 0.0
  %2781 = vmatpush1.msra.mxu0 %v76
  %2782 = vmatprep.subr.mxu0 0.0
  %2783 = vmatpush1.msra.mxu0 %v77
  %2784 = vmatprep.subr.mxu0 0.0
  %2785 = vmatpush1.msra.mxu0 %v78
  %2786 = vmatprep.subr.mxu0 0.0
  %2787 = vmatpush1.msra.mxu0 %v79
  %2788 = vmatprep.subr.mxu0 0.0
  %2789 = vmatpush1.msra.mxu0 %v80
  %2790 = vmatprep.subr.mxu0 0.0
  %2791 = vmatpush1.msra.mxu0 %v81
  %2792 = vmatprep.subr.mxu0 0.0
  %2793 = vmatpush1.msra.mxu0 %v82
  %2794 = vmatprep.subr.mxu0 0.0
  %2795 = vmatpush1.msra.mxu0 0.0
  %2796 = vmatprep.subr.mxu0 0.0
  %2797 = vmatpush1.msra.mxu0 0.0
  %2798 = vmatprep.subr.mxu0 0.0
  %2799 = vmatpush1.msra.mxu0 0.0
  %2800 = vmatprep.subr.mxu0 0.0
  %2801 = vmatpush1.msra.mxu0 0.0
  %2802 = vmatprep.subr.mxu0 0.0
  %2803 = vmatpush1.msra.mxu0 0.0
  %2804 = vmatprep.subr.mxu0 0.0
  %2805 = vmatpush1.msra.mxu0 0.0
  %2806 = vmatprep.subr.mxu0 0.0
  %2807 = vmatpush1.msra.mxu0 0.0
  %2808 = vmatprep.subr.mxu0 0.0
  %2809 = vmatpush1.msra.mxu0 0.0
  %2810 = vmatprep.subr.mxu0 0.0
  %2811 = vmatpush1.msra.mxu0 0.0
  %2812 = vmatprep.subr.mxu0 0.0
  %2813 = vmatpush1.msra.mxu0 0.0
  %2814 = vmatprep.subr.mxu0 0.0
  %2815 = vmatpush1.msra.mxu0 0.0
  %2816 = vmatprep.subr.mxu0 0.0
  %2817 = vmatpush1.msra.mxu0 0.0
  %2818 = vmatprep.subr.mxu0 0.0
  %2819 = vmatpush1.msra.mxu0 0.0
  %2820 = vmatprep.subr.mxu0 0.0
  %2821 = vmatpush1.msra.mxu0 0.0
  %2822 = vmatprep.subr.mxu0 0.0
  %2823 = vmatpush1.msra.mxu0 0.0
  %2824 = vmatprep.subr.mxu0 0.0
  %2825 = vmatpush1.msra.mxu0 0.0
  %2826 = vmatprep.subr.mxu0 0.0
  %2827 = vmatpush1.msra.mxu0 0.0
  %2828 = vmatprep.subr.mxu0 0.0
  %2829 = vmatpush1.msra.mxu0 0.0
  %2830 = vmatprep.subr.mxu0 0.0
  %2831 = vmatpush1.msra.mxu0 0.0
  %2832 = vmatprep.subr.mxu0 0.0
  %2833 = vmatpush1.msra.mxu0 0.0
  %2834 = vmatprep.subr.mxu0 0.0
  %2835 = vmatpush1.msra.mxu0 0.0
  %2836 = vmatprep.subr.mxu0 0.0
  %2837 = vmatpush1.msra.mxu0 0.0
  %2838 = vmatprep.subr.mxu0 0.0
  %2839 = vmatpush1.msra.mxu0 0.0
  %2840 = vmatprep.subr.mxu0 0.0
  %2841 = vmatpush1.msra.mxu0 0.0
  %2842 = vmatprep.mubr.f32.mxu0 0.0
  %2843 = vmatmul.mubr.f32.gmra.mrb[0].mxu0 %v2755
  %v2844 = vpop.f32.mrb[0].mxu0
  %v2845 = vadd.f32 %v2746, %v2844
  %v2846 = vpop.f32.mrb[0].mxu0
  %2847 = vmatprep.mubr.f32.mxu0 0.0
  %2848 = vmatmul.mubr.f32.gmra.mrb[0].mxu0 %v2758
  %v2849 = vpop.f32.mrb[0].mxu0
  %v2850 = vadd.f32 %v2747, %v2849
  %v2851 = vpop.f32.mrb[0].mxu0
  %2852 = vmatprep.mubr.f32.mxu0 0.0
  %2853 = vmatmul.mubr.f32.gmra.mrb[0].mxu0 %v2761
  %v2854 = vpop.f32.mrb[0].mxu0
  %v2855 = vadd.f32 %v2748, %v2854
  %v2856 = vpop.f32.mrb[0].mxu0
  %2857 = vmatprep.mubr.f32.mxu0 0.0
  %2858 = vmatmul.mubr.f32.gmra.mrb[0].mxu0 %v2764
  %v2859 = vpop.f32.mrb[0].mxu0
  %v2860 = vadd.f32 %v2749, %v2859
  %v2861 = vpop.f32.mrb[0].mxu0
  %2862 = vmatprep.mubr.f32.mxu0 0.0
  %2863 = vmatmul.mubr.f32.gmra.mrb[0].mxu0 %v2767
  %v2864 = vpop.f32.mrb[0].mxu0
  %v2865 = vadd.f32 %v2750, %v2864
  %v2866 = vpop.f32.mrb[0].mxu0
  %2867 = vmatprep.mubr.f32.mxu0 0.0
  %2868 = vmatmul.mubr.f32.gmra.mrb[0].mxu0 %v2770
  %v2869 = vpop.f32.mrb[0].mxu0
  %v2870 = vadd.f32 %v2751, %v2869
  %v2871 = vpop.f32.mrb[0].mxu0
  %2872 = vmatprep.mubr.f32.mxu0 0.0
  %2873 = vmatmul.mubr.f32.gmra.mrb[0].mxu0 %v2773
  %v2874 = vpop.f32.mrb[0].mxu0
  %v2875 = vadd.f32 %v2752, %v2874
  %v2876 = vpop.f32.mrb[0].mxu0
  %2877 = vmatprep.mubr.f32.mxu0 0.0
  %2878 = vmatmul.mubr.f32.gmra.mrb[0].mxu0 %v2776
  %v2879 = vpop.f32.mrb[0].mxu0
  %v2880 = vadd.f32 %v2753, %v2879
  %v2881 = vpop.f32.mrb[0].mxu0
  %2882 = vdwg.mxu0
  %v2883 = vmul.f32 %v2845, 0.5
  %v2884 = vmul.f32 %v2850, 0.5
  %v2885 = vmul.f32 %v2855, 0.5
  %v2886 = vmul.f32 %v2860, 0.5
  %v2887 = vmul.f32 %v2865, 0.5
  %v2888 = vmul.f32 %v2870, 0.5
  %v2889 = vmul.f32 %v2875, 0.5
  %v2890 = vmul.f32 %v2880, 0.5
  %v2891 = vtanh.pop %v2883
  %v2892 = vtanh.pop %v2884
  %v2893 = vtanh.pop %v2885
  %v2894 = vtanh.pop %v2886
  %v2895 = vtanh.pop %v2887
  %v2896 = vtanh.pop %v2888
  %v2897 = vtanh.pop %v2889
  %v2898 = vtanh.pop %v2890
  %v2899 = vadd.f32 %v2891, 1.0
  %v2900 = vadd.f32 %v2892, 1.0
  %v2901 = vadd.f32 %v2893, 1.0
  %v2902 = vadd.f32 %v2894, 1.0
  %v2903 = vadd.f32 %v2895, 1.0
  %v2904 = vadd.f32 %v2896, 1.0
  %v2905 = vadd.f32 %v2897, 1.0
  %v2906 = vadd.f32 %v2898, 1.0
  %v2907 = vmul.f32 %v2899, 0.5
  %v2908 = vmul.f32 %v2900, 0.5
  %v2909 = vmul.f32 %v2901, 0.5
  %v2910 = vmul.f32 %v2902, 0.5
  %v2911 = vmul.f32 %v2903, 0.5
  %v2912 = vmul.f32 %v2904, 0.5
  %v2913 = vmul.f32 %v2905, 0.5
  %v2914 = vmul.f32 %v2906, 0.5
  %v2915 = vmul.f32 %v2845, %v2907
  %v2916 = vmul.f32 %v2850, %v2908
  %v2917 = vmul.f32 %v2855, %v2909
  %v2918 = vmul.f32 %v2860, %v2910
  %v2919 = vmul.f32 %v2865, %v2911
  %v2920 = vmul.f32 %v2870, %v2912
  %v2921 = vmul.f32 %v2875, %v2913
  %v2922 = vmul.f32 %v2880, %v2914
  %s2923 = scalar_lea.vmem %s12, 8
  %v2924 = vld [vmem:[%s2923] sm:$0xff]
  %s2925 = scalar_lea.vmem %s13, 8
  %v2926 = vld [vmem:[%s2925] sm:$0xff]
  %v2928 = vsel %vm107, %v2924, 0
  %2930 = vmatprep.subr.mxu0 0.0
  %2931 = vmatpush1.msra.mxu0 %v2915
  %2932 = vmatprep.subr.mxu0 0.0
  %2933 = vmatpush1.msra.mxu0 %v2916
  %2934 = vmatprep.subr.mxu0 0.0
  %2935 = vmatpush1.msra.mxu0 %v2917
  %2936 = vmatprep.subr.mxu0 0.0
  %2937 = vmatpush1.msra.mxu0 %v2918
  %2938 = vmatprep.subr.mxu0 0.0
  %2939 = vmatpush1.msra.mxu0 %v2919
  %2940 = vmatprep.subr.mxu0 0.0
  %2941 = vmatpush1.msra.mxu0 %v2920
  %2942 = vmatprep.subr.mxu0 0.0
  %2943 = vmatpush1.msra.mxu0 %v2921
  %2944 = vmatprep.subr.mxu0 0.0
  %2945 = vmatpush1.msra.mxu0 %v2922
  %2946 = vmatprep.subr.mxu0 0.0
  %2947 = vmatpush1.msra.mxu0 0.0
  %2948 = vmatprep.subr.mxu0 0.0
  %2949 = vmatpush1.msra.mxu0 0.0
  %2950 = vmatprep.subr.mxu0 0.0
  %2951 = vmatpush1.msra.mxu0 0.0
  %2952 = vmatprep.subr.mxu0 0.0
  %2953 = vmatpush1.msra.mxu0 0.0
  %2954 = vmatprep.subr.mxu0 0.0
  %2955 = vmatpush1.msra.mxu0 0.0
  %2956 = vmatprep.subr.mxu0 0.0
  %2957 = vmatpush1.msra.mxu0 0.0
  %2958 = vmatprep.subr.mxu0 0.0
  %2959 = vmatpush1.msra.mxu0 0.0
  %2960 = vmatprep.subr.mxu0 0.0
  %2961 = vmatpush1.msra.mxu0 0.0
  %2962 = vmatprep.subr.mxu0 0.0
  %2963 = vmatpush1.msra.mxu0 0.0
  %2964 = vmatprep.subr.mxu0 0.0
  %2965 = vmatpush1.msra.mxu0 0.0
  %2966 = vmatprep.subr.mxu0 0.0
  %2967 = vmatpush1.msra.mxu0 0.0
  %2968 = vmatprep.subr.mxu0 0.0
  %2969 = vmatpush1.msra.mxu0 0.0
  %2970 = vmatprep.subr.mxu0 0.0
  %2971 = vmatpush1.msra.mxu0 0.0
  %2972 = vmatprep.subr.mxu0 0.0
  %2973 = vmatpush1.msra.mxu0 0.0
  %2974 = vmatprep.subr.mxu0 0.0
  %2975 = vmatpush1.msra.mxu0 0.0
  %2976 = vmatprep.subr.mxu0 0.0
  %2977 = vmatpush1.msra.mxu0 0.0
  %2978 = vmatprep.subr.mxu0 0.0
  %2979 = vmatpush1.msra.mxu0 0.0
  %2980 = vmatprep.subr.mxu0 0.0
  %2981 = vmatpush1.msra.mxu0 0.0
  %2982 = vmatprep.subr.mxu0 0.0
  %2983 = vmatpush1.msra.mxu0 0.0
  %2984 = vmatprep.subr.mxu0 0.0
  %2985 = vmatpush1.msra.mxu0 0.0
  %2986 = vmatprep.subr.mxu0 0.0
  %2987 = vmatpush1.msra.mxu0 0.0
  %2988 = vmatprep.subr.mxu0 0.0
  %2989 = vmatpush1.msra.mxu0 0.0
  %2990 = vmatprep.subr.mxu0 0.0
  %2991 = vmatpush1.msra.mxu0 0.0
  %2992 = vmatprep.subr.mxu0 0.0
  %2993 = vmatpush1.msra.mxu0 0.0
  %2994 = vmatprep.mubr.f32.mxu0 0.0
  %2995 = vmatmul.mubr.f32.gmra.mrb[0].mxu0 %v2928
  %v2996 = vpop.f32.mrb[0].mxu0
  %v2997 = vadd.f32 %v2926, %v2996
  %v2998 = vpop.f32.mrb[0].mxu0
  %2999 = vdwg.mxu0
  %s3000 = scalar_lea.vmem %s14, 64
  %v3001 = vld [vmem:[%s3000] sm:$0xff]
  %v3002 = vld [vmem:[%s3000 + $0x8] sm:$0xff]
  %v3003 = vld [vmem:[%s3000 + $0x10] sm:$0xff]
  %v3004 = vld [vmem:[%s3000 + $0x18] sm:$0xff]
  %v3005 = vld [vmem:[%s3000 + $0x20] sm:$0xff]
  %v3006 = vld [vmem:[%s3000 + $0x28] sm:$0xff]
  %v3007 = vld [vmem:[%s3000 + $0x30] sm:$0xff]
  %v3008 = vld [vmem:[%s3000 + $0x38] sm:$0xff]
  %s3009 = scalar_lea.vmem %s15, 64
  %v3010 = vld [vmem:[%s3009] sm:$0xff]
  %v3011 = vld [vmem:[%s3009 + $0x8] sm:$0xff]
  %v3012 = vld [vmem:[%s3009 + $0x10] sm:$0xff]
  %v3013 = vld [vmem:[%s3009 + $0x18] sm:$0xff]
  %v3014 = vld [vmem:[%s3009 + $0x20] sm:$0xff]
  %v3015 = vld [vmem:[%s3009 + $0x28] sm:$0xff]
  %v3016 = vld [vmem:[%s3009 + $0x30] sm:$0xff]
  %v3017 = vld [vmem:[%s3009 + $0x38] sm:$0xff]
  %v3019 = vsel %vm107, %v3001, 0
  %v3022 = vsel %vm107, %v3002, 0
  %v3025 = vsel %vm107, %v3003, 0
  %v3028 = vsel %vm107, %v3004, 0
  %v3031 = vsel %vm107, %v3005, 0
  %v3034 = vsel %vm107, %v3006, 0
  %v3037 = vsel %vm107, %v3007, 0
  %v3040 = vsel %vm107, %v3008, 0
  %3042 = vmatprep.subr.mxu0 0.0
  %3043 = vmatpush1.msra.mxu0 %v83
  %3044 = vmatprep.subr.mxu0 0.0
  %3045 = vmatpush1.msra.mxu0 %v84
  %3046 = vmatprep.subr.mxu0 0.0
  %3047 = vmatpush1.msra.mxu0 %v85
  %3048 = vmatprep.subr.mxu0 0.0
  %3049 = vmatpush1.msra.mxu0 %v86
  %3050 = vmatprep.subr.mxu0 0.0
  %3051 = vmatpush1.msra.mxu0 %v87
  %3052 = vmatprep.subr.mxu0 0.0
  %3053 = vmatpush1.msra.mxu0 %v88
  %3054 = vmatprep.subr.mxu0 0.0
  %3055 = vmatpush1.msra.mxu0 %v89
  %3056 = vmatprep.subr.mxu0 0.0
  %3057 = vmatpush1.msra.mxu0 %v90
  %3058 = vmatprep.subr.mxu0 0.0
  %3059 = vmatpush1.msra.mxu0 0.0
  %3060 = vmatprep.subr.mxu0 0.0
  %3061 = vmatpush1.msra.mxu0 0.0
  %3062 = vmatprep.subr.mxu0 0.0
  %3063 = vmatpush1.msra.mxu0 0.0
  %3064 = vmatprep.subr.mxu0 0.0
  %3065 = vmatpush1.msra.mxu0 0.0
  %3066 = vmatprep.subr.mxu0 0.0
  %3067 = vmatpush1.msra.mxu0 0.0
  %3068 = vmatprep.subr.mxu0 0.0
  %3069 = vmatpush1.msra.mxu0 0.0
  %3070 = vmatprep.subr.mxu0 0.0
  %3071 = vmatpush1.msra.mxu0 0.0
  %3072 = vmatprep.subr.mxu0 0.0
  %3073 = vmatpush1.msra.mxu0 0.0
  %3074 = vmatprep.subr.mxu0 0.0
  %3075 = vmatpush1.msra.mxu0 0.0
  %3076 = vmatprep.subr.mxu0 0.0
  %3077 = vmatpush1.msra.mxu0 0.0
  %3078 = vmatprep.subr.mxu0 0.0
  %3079 = vmatpush1.msra.mxu0 0.0
  %3080 = vmatprep.subr.mxu0 0.0
  %3081 = vmatpush1.msra.mxu0 0.0
  %3082 = vmatprep.subr.mxu0 0.0
  %3083 = vmatpush1.msra.mxu0 0.0
  %3084 = vmatprep.subr.mxu0 0.0
  %3085 = vmatpush1.msra.mxu0 0.0
  %3086 = vmatprep.subr.mxu0 0.0
  %3087 = vmatpush1.msra.mxu0 0.0
  %3088 = vmatprep.subr.mxu0 0.0
  %3089 = vmatpush1.msra.mxu0 0.0
  %3090 = vmatprep.subr.mxu0 0.0
  %3091 = vmatpush1.msra.mxu0 0.0
  %3092 = vmatprep.subr.mxu0 0.0
  %3093 = vmatpush1.msra.mxu0 0.0
  %3094 = vmatprep.subr.mxu0 0.0
  %3095 = vmatpush1.msra.mxu0 0.0
  %3096 = vmatprep.subr.mxu0 0.0
  %3097 = vmatpush1.msra.mxu0 0.0
  %3098 = vmatprep.subr.mxu0 0.0
  %3099 = vmatpush1.msra.mxu0 0.0
  %3100 = vmatprep.subr.mxu0 0.0
  %3101 = vmatpush1.msra.mxu0 0.0
  %3102 = vmatprep.subr.mxu0 0.0
  %3103 = vmatpush1.msra.mxu0 0.0
  %3104 = vmatprep.subr.mxu0 0.0
  %3105 = vmatpush1.msra.mxu0 0.0
  %3106 = vmatprep.mubr.f32.mxu0 0.0
  %3107 = vmatmul.mubr.f32.gmra.mrb[0].mxu0 %v3019
  %v3108 = vpop.f32.mrb[0].mxu0
  %v3109 = vadd.f32 %v3010, %v3108
  %v3110 = vpop.f32.mrb[0].mxu0
  %3111 = vmatprep.mubr.f32.mxu0 0.0
  %3112 = vmatmul.mubr.f32.gmra.mrb[0].mxu0 %v3022
  %v3113 = vpop.f32.mrb[0].mxu0
  %v3114 = vadd.f32 %v3011, %v3113
  %v3115 = vpop.f32.mrb[0].mxu0
  %3116 = vmatprep.mubr.f32.mxu0 0.0
  %3117 = vmatmul.mubr.f32.gmra.mrb[0].mxu0 %v3025
  %v3118 = vpop.f32.mrb[0].mxu0
  %v3119 = vadd.f32 %v3012, %v3118
  %v3120 = vpop.f32.mrb[0].mxu0
  %3121 = vmatprep.mubr.f32.mxu0 0.0
  %3122 = vmatmul.mubr.f32.gmra.mrb[0].mxu0 %v3028
  %v3123 = vpop.f32.mrb[0].mxu0
  %v3124 = vadd.f32 %v3013, %v3123
  %v3125 = vpop.f32.mrb[0].mxu0
  %3126 = vmatprep.mubr.f32.mxu0 0.0
  %3127 = vmatmul.mubr.f32.gmra.mrb[0].mxu0 %v3031
  %v3128 = vpop.f32.mrb[0].mxu0
  %v3129 = vadd.f32 %v3014, %v3128
  %v3130 = vpop.f32.mrb[0].mxu0
  %3131 = vmatprep.mubr.f32.mxu0 0.0
  %3132 = vmatmul.mubr.f32.gmra.mrb[0].mxu0 %v3034
  %v3133 = vpop.f32.mrb[0].mxu0
  %v3134 = vadd.f32 %v3015, %v3133
  %v3135 = vpop.f32.mrb[0].mxu0
  %3136 = vmatprep.mubr.f32.mxu0 0.0
  %3137 = vmatmul.mubr.f32.gmra.mrb[0].mxu0 %v3037
  %v3138 = vpop.f32.mrb[0].mxu0
  %v3139 = vadd.f32 %v3016, %v3138
  %v3140 = vpop.f32.mrb[0].mxu0
  %3141 = vmatprep.mubr.f32.mxu0 0.0
  %3142 = vmatmul.mubr.f32.gmra.mrb[0].mxu0 %v3040
  %v3143 = vpop.f32.mrb[0].mxu0
  %v3144 = vadd.f32 %v3017, %v3143
  %v3145 = vpop.f32.mrb[0].mxu0
  %3146 = vdwg.mxu0
  %v3147 = vmul.f32 %v3109, 0.5
  %v3148 = vmul.f32 %v3114, 0.5
  %v3149 = vmul.f32 %v3119, 0.5
  %v3150 = vmul.f32 %v3124, 0.5
  %v3151 = vmul.f32 %v3129, 0.5
  %v3152 = vmul.f32 %v3134, 0.5
  %v3153 = vmul.f32 %v3139, 0.5
  %v3154 = vmul.f32 %v3144, 0.5
  %v3155 = vtanh.pop %v3147
  %v3156 = vtanh.pop %v3148
  %v3157 = vtanh.pop %v3149
  %v3158 = vtanh.pop %v3150
  %v3159 = vtanh.pop %v3151
  %v3160 = vtanh.pop %v3152
  %v3161 = vtanh.pop %v3153
  %v3162 = vtanh.pop %v3154
  %v3163 = vadd.f32 %v3155, 1.0
  %v3164 = vadd.f32 %v3156, 1.0
  %v3165 = vadd.f32 %v3157, 1.0
  %v3166 = vadd.f32 %v3158, 1.0
  %v3167 = vadd.f32 %v3159, 1.0
  %v3168 = vadd.f32 %v3160, 1.0
  %v3169 = vadd.f32 %v3161, 1.0
  %v3170 = vadd.f32 %v3162, 1.0
  %v3171 = vmul.f32 %v3163, 0.5
  %v3172 = vmul.f32 %v3164, 0.5
  %v3173 = vmul.f32 %v3165, 0.5
  %v3174 = vmul.f32 %v3166, 0.5
  %v3175 = vmul.f32 %v3167, 0.5
  %v3176 = vmul.f32 %v3168, 0.5
  %v3177 = vmul.f32 %v3169, 0.5
  %v3178 = vmul.f32 %v3170, 0.5
  %v3179 = vmul.f32 %v3109, %v3171
  %v3180 = vmul.f32 %v3114, %v3172
  %v3181 = vmul.f32 %v3119, %v3173
  %v3182 = vmul.f32 %v3124, %v3174
  %v3183 = vmul.f32 %v3129, %v3175
  %v3184 = vmul.f32 %v3134, %v3176
  %v3185 = vmul.f32 %v3139, %v3177
  %v3186 = vmul.f32 %v3144, %v3178
  %s3187 = scalar_lea.vmem %s16, 8
  %v3188 = vld [vmem:[%s3187] sm:$0xff]
  %s3189 = scalar_lea.vmem %s17, 8
  %v3190 = vld [vmem:[%s3189] sm:$0xff]
  %v3192 = vsel %vm107, %v3188, 0
  %3194 = vmatprep.subr.mxu0 0.0
  %3195 = vmatpush1.msra.mxu0 %v3179
  %3196 = vmatprep.subr.mxu0 0.0
  %3197 = vmatpush1.msra.mxu0 %v3180
  %3198 = vmatprep.subr.mxu0 0.0
  %3199 = vmatpush1.msra.mxu0 %v3181
  %3200 = vmatprep.subr.mxu0 0.0
  %3201 = vmatpush1.msra.mxu0 %v3182
  %3202 = vmatprep.subr.mxu0 0.0
  %3203 = vmatpush1.msra.mxu0 %v3183
  %3204 = vmatprep.subr.mxu0 0.0
  %3205 = vmatpush1.msra.mxu0 %v3184
  %3206 = vmatprep.subr.mxu0 0.0
  %3207 = vmatpush1.msra.mxu0 %v3185
  %3208 = vmatprep.subr.mxu0 0.0
  %3209 = vmatpush1.msra.mxu0 %v3186
  %3210 = vmatprep.subr.mxu0 0.0
  %3211 = vmatpush1.msra.mxu0 0.0
  %3212 = vmatprep.subr.mxu0 0.0
  %3213 = vmatpush1.msra.mxu0 0.0
  %3214 = vmatprep.subr.mxu0 0.0
  %3215 = vmatpush1.msra.mxu0 0.0
  %3216 = vmatprep.subr.mxu0 0.0
  %3217 = vmatpush1.msra.mxu0 0.0
  %3218 = vmatprep.subr.mxu0 0.0
  %3219 = vmatpush1.msra.mxu0 0.0
  %3220 = vmatprep.subr.mxu0 0.0
  %3221 = vmatpush1.msra.mxu0 0.0
  %3222 = vmatprep.subr.mxu0 0.0
  %3223 = vmatpush1.msra.mxu0 0.0
  %3224 = vmatprep.subr.mxu0 0.0
  %3225 = vmatpush1.msra.mxu0 0.0
  %3226 = vmatprep.subr.mxu0 0.0
  %3227 = vmatpush1.msra.mxu0 0.0
  %3228 = vmatprep.subr.mxu0 0.0
  %3229 = vmatpush1.msra.mxu0 0.0
  %3230 = vmatprep.subr.mxu0 0.0
  %3231 = vmatpush1.msra.mxu0 0.0
  %3232 = vmatprep.subr.mxu0 0.0
  %3233 = vmatpush1.msra.mxu0 0.0
  %3234 = vmatprep.subr.mxu0 0.0
  %3235 = vmatpush1.msra.mxu0 0.0
  %3236 = vmatprep.subr.mxu0 0.0
  %3237 = vmatpush1.msra.mxu0 0.0
  %3238 = vmatprep.subr.mxu0 0.0
  %3239 = vmatpush1.msra.mxu0 0.0
  %3240 = vmatprep.subr.mxu0 0.0
  %3241 = vmatpush1.msra.mxu0 0.0
  %3242 = vmatprep.subr.mxu0 0.0
  %3243 = vmatpush1.msra.mxu0 0.0
  %3244 = vmatprep.subr.mxu0 0.0
  %3245 = vmatpush1.msra.mxu0 0.0
  %3246 = vmatprep.subr.mxu0 0.0
  %3247 = vmatpush1.msra.mxu0 0.0
  %3248 = vmatprep.subr.mxu0 0.0
  %3249 = vmatpush1.msra.mxu0 0.0
  %3250 = vmatprep.subr.mxu0 0.0
  %3251 = vmatpush1.msra.mxu0 0.0
  %3252 = vmatprep.subr.mxu0 0.0
  %3253 = vmatpush1.msra.mxu0 0.0
  %3254 = vmatprep.subr.mxu0 0.0
  %3255 = vmatpush1.msra.mxu0 0.0
  %3256 = vmatprep.subr.mxu0 0.0
  %3257 = vmatpush1.msra.mxu0 0.0
  %3258 = vmatprep.mubr.f32.mxu0 0.0
  %3259 = vmatmul.mubr.f32.gmra.mrb[0].mxu0 %v3192
  %v3260 = vpop.f32.mrb[0].mxu0
  %v3261 = vadd.f32 %v3190, %v3260
  %v3262 = vpop.f32.mrb[0].mxu0
  %3263 = vdwg.mxu0
  %s3264 = scalar_lea.vmem %s6, 16
  %v3265 = vld [vmem:[%s3264] sm:$0xff]
  %s3266 = scalar_lea.vmem %s7, 16
  %v3267 = vld [vmem:[%s3266] sm:$0xff]
  %v3268 = vmul.f32 %v2734, 0.5
  %v3269 = vmul.f32 %v2735, 0.5
  %v3270 = vtanh.pop %v3268
  %v3271 = vtanh.pop %v3269
  %v3272 = vadd.f32 %v3270, 1.0
  %v3273 = vadd.f32 %v3271, 1.0
  %v3274 = vmul.f32 %v3272, 0.5
  %v3275 = vmul.f32 %v3273, 0.5
  %v3276 = vmul.f32 %v2734, %v3274
  %v3277 = vmul.f32 %v2735, %v3275
  %v3278 = vadd.f32 %v3276, %v3277
  %3279 = vadd.xlane.f32.xlu0 %v3278
  %v3280 = vpop.xlane.xlu0 %3279
  %3281 = vmatprep.subr.mxu0 0.0
  %3282 = vmatpush1.msra.mxu0 %v3280
  %3283 = vmatprep.subr.mxu0 0.0
  %3284 = vmatpush1.msra.mxu0 0.0
  %3285 = vmatprep.subr.mxu0 0.0
  %3286 = vmatpush1.msra.mxu0 0.0
  %3287 = vmatprep.subr.mxu0 0.0
  %3288 = vmatpush1.msra.mxu0 0.0
  %3289 = vmatprep.subr.mxu0 0.0
  %3290 = vmatpush1.msra.mxu0 0.0
  %3291 = vmatprep.subr.mxu0 0.0
  %3292 = vmatpush1.msra.mxu0 0.0
  %3293 = vmatprep.subr.mxu0 0.0
  %3294 = vmatpush1.msra.mxu0 0.0
  %3295 = vmatprep.subr.mxu0 0.0
  %3296 = vmatpush1.msra.mxu0 0.0
  %3297 = vmatprep.subr.mxu0 0.0
  %3298 = vmatpush1.msra.mxu0 0.0
  %3299 = vmatprep.subr.mxu0 0.0
  %3300 = vmatpush1.msra.mxu0 0.0
  %3301 = vmatprep.subr.mxu0 0.0
  %3302 = vmatpush1.msra.mxu0 0.0
  %3303 = vmatprep.subr.mxu0 0.0
  %3304 = vmatpush1.msra.mxu0 0.0
  %3305 = vmatprep.subr.mxu0 0.0
  %3306 = vmatpush1.msra.mxu0 0.0
  %3307 = vmatprep.subr.mxu0 0.0
  %3308 = vmatpush1.msra.mxu0 0.0
  %3309 = vmatprep.subr.mxu0 0.0
  %3310 = vmatpush1.msra.mxu0 0.0
  %3311 = vmatprep.subr.mxu0 0.0
  %3312 = vmatpush1.msra.mxu0 0.0
  %3313 = vmatprep.subr.mxu0 0.0
  %3314 = vmatpush1.msra.mxu0 0.0
  %3315 = vmatprep.subr.mxu0 0.0
  %3316 = vmatpush1.msra.mxu0 0.0
  %3317 = vmatprep.subr.mxu0 0.0
  %3318 = vmatpush1.msra.mxu0 0.0
  %3319 = vmatprep.subr.mxu0 0.0
  %3320 = vmatpush1.msra.mxu0 0.0
  %3321 = vmatprep.subr.mxu0 0.0
  %3322 = vmatpush1.msra.mxu0 0.0
  %3323 = vmatprep.subr.mxu0 0.0
  %3324 = vmatpush1.msra.mxu0 0.0
  %3325 = vmatprep.subr.mxu0 0.0
  %3326 = vmatpush1.msra.mxu0 0.0
  %3327 = vmatprep.subr.mxu0 0.0
  %3328 = vmatpush1.msra.mxu0 0.0
  %3329 = vmatprep.subr.mxu0 0.0
  %3330 = vmatpush1.msra.mxu0 0.0
  %3331 = vmatprep.subr.mxu0 0.0
  %3332 = vmatpush1.msra.mxu0 0.0
  %3333 = vmatprep.subr.mxu0 0.0
  %3334 = vmatpush1.msra.mxu0 0.0
  %3335 = vmatprep.subr.mxu0 0.0
  %3336 = vmatpush1.msra.mxu0 0.0
  %3337 = vmatprep.subr.mxu0 0.0
  %3338 = vmatpush1.msra.mxu0 0.0
  %3339 = vmatprep.subr.mxu0 0.0
  %3340 = vmatpush1.msra.mxu0 0.0
  %3341 = vmatprep.subr.mxu0 0.0
  %3342 = vmatpush1.msra.mxu0 0.0
  %3343 = vmatprep.subr.mxu0 0.0
  %3344 = vmatpush1.msra.mxu0 0.0
  %3345 = vmatprep.mubr.f32.mxu0 0.0
  %3346 = vmatmul.mubr.f32.gmra.mrb[0].mxu0 %v629
  %v3347 = vpop.f32.mrb[0].mxu0
  %v3348 = vadd.f32 0.0, %v3347
  %v3349 = vpop.f32.mrb[0].mxu0
  %3350 = vdwg.mxu0
  %v3351 = vmul.f32 %v3348, 0.001953125
  %3353 = vset.pattern.permute.xlu0 0
  %3354 = vperm.xlu0 %3353, %v3351
  %v3355 = vpop.permute.xlu0 %3354
  %v3357 = vsub.f32 %v3276, %v3355
  %v3358 = vsub.f32 %v3277, %v3355
  %v3359 = vmul.f32 %v3357, %v3357
  %v3360 = vmul.f32 %v3358, %v3358
  %v3361 = vadd.f32 %v3359, %v3360
  %3362 = vadd.xlane.f32.xlu0 %v3361
  %v3363 = vpop.xlane.xlu0 %3362
  %3364 = vmatprep.subr.mxu0 0.0
  %3365 = vmatpush1.msra.mxu0 %v3363
  %3366 = vmatprep.subr.mxu0 0.0
  %3367 = vmatpush1.msra.mxu0 0.0
  %3368 = vmatprep.subr.mxu0 0.0
  %3369 = vmatpush1.msra.mxu0 0.0
  %3370 = vmatprep.subr.mxu0 0.0
  %3371 = vmatpush1.msra.mxu0 0.0
  %3372 = vmatprep.subr.mxu0 0.0
  %3373 = vmatpush1.msra.mxu0 0.0
  %3374 = vmatprep.subr.mxu0 0.0
  %3375 = vmatpush1.msra.mxu0 0.0
  %3376 = vmatprep.subr.mxu0 0.0
  %3377 = vmatpush1.msra.mxu0 0.0
  %3378 = vmatprep.subr.mxu0 0.0
  %3379 = vmatpush1.msra.mxu0 0.0
  %3380 = vmatprep.subr.mxu0 0.0
  %3381 = vmatpush1.msra.mxu0 0.0
  %3382 = vmatprep.subr.mxu0 0.0
  %3383 = vmatpush1.msra.mxu0 0.0
  %3384 = vmatprep.subr.mxu0 0.0
  %3385 = vmatpush1.msra.mxu0 0.0
  %3386 = vmatprep.subr.mxu0 0.0
  %3387 = vmatpush1.msra.mxu0 0.0
  %3388 = vmatprep.subr.mxu0 0.0
  %3389 = vmatpush1.msra.mxu0 0.0
  %3390 = vmatprep.subr.mxu0 0.0
  %3391 = vmatpush1.msra.mxu0 0.0
  %3392 = vmatprep.subr.mxu0 0.0
  %3393 = vmatpush1.msra.mxu0 0.0
  %3394 = vmatprep.subr.mxu0 0.0
  %3395 = vmatpush1.msra.mxu0 0.0
  %3396 = vmatprep.subr.mxu0 0.0
  %3397 = vmatpush1.msra.mxu0 0.0
  %3398 = vmatprep.subr.mxu0 0.0
  %3399 = vmatpush1.msra.mxu0 0.0
  %3400 = vmatprep.subr.mxu0 0.0
  %3401 = vmatpush1.msra.mxu0 0.0
  %3402 = vmatprep.subr.mxu0 0.0
  %3403 = vmatpush1.msra.mxu0 0.0
  %3404 = vmatprep.subr.mxu0 0.0
  %3405 = vmatpush1.msra.mxu0 0.0
  %3406 = vmatprep.subr.mxu0 0.0
  %3407 = vmatpush1.msra.mxu0 0.0
  %3408 = vmatprep.subr.mxu0 0.0
  %3409 = vmatpush1.msra.mxu0 0.0
  %3410 = vmatprep.subr.mxu0 0.0
  %3411 = vmatpush1.msra.mxu0 0.0
  %3412 = vmatprep.subr.mxu0 0.0
  %3413 = vmatpush1.msra.mxu0 0.0
  %3414 = vmatprep.subr.mxu0 0.0
  %3415 = vmatpush1.msra.mxu0 0.0
  %3416 = vmatprep.subr.mxu0 0.0
  %3417 = vmatpush1.msra.mxu0 0.0
  %3418 = vmatprep.subr.mxu0 0.0
  %3419 = vmatpush1.msra.mxu0 0.0
  %3420 = vmatprep.subr.mxu0 0.0
  %3421 = vmatpush1.msra.mxu0 0.0
  %3422 = vmatprep.subr.mxu0 0.0
  %3423 = vmatpush1.msra.mxu0 0.0
  %3424 = vmatprep.subr.mxu0 0.0
  %3425 = vmatpush1.msra.mxu0 0.0
  %3426 = vmatprep.subr.mxu0 0.0
  %3427 = vmatpush1.msra.mxu0 0.0
  %3428 = vmatprep.mubr.f32.mxu0 0.0
  %3429 = vmatmul.mubr.f32.gmra.mrb[0].mxu0 %v629
  %v3430 = vpop.f32.mrb[0].mxu0
  %v3431 = vadd.f32 0.0, %v3430
  %v3432 = vpop.f32.mrb[0].mxu0
  %3433 = vdwg.mxu0
  %v3434 = vmul.f32 %v3431, 0.001953125
  %3436 = vset.pattern.permute.xlu0 0
  %3437 = vperm.xlu0 %3436, %v3265
  %v3438 = vpop.permute.xlu0 %3437
  %v3440 = vmul.f32 %v3438, %v3357
  %v3441 = vmul.f32 %v3438, %v3358
  %v3442 = vadd.f32 %v3434, 1e-05
  %v3443 = vrsqrt.pop %v3442
  %3445 = vset.pattern.permute.xlu0 0
  %3446 = vperm.xlu0 %3445, %v3443
  %v3447 = vpop.permute.xlu0 %3446
  %v3449 = vmul.f32 %v3440, %v3447
  %v3450 = vmul.f32 %v3441, %v3447
  %3452 = vset.pattern.permute.xlu0 0
  %3453 = vperm.xlu0 %3452, %v3267
  %v3454 = vpop.permute.xlu0 %3453
  %v3456 = vadd.f32 %v3449, %v3454
  %v3457 = vadd.f32 %v3450, %v3454
  %s3458 = scalar_lea.vmem %s8, 144
  %v3459 = vld [vmem:[%s3458] sm:$0xff]
  %v3460 = vld [vmem:[%s3458 + $0x8] sm:$0xff]
  %v3461 = vld [vmem:[%s3458 + $0x10] sm:$0xff]
  %v3462 = vld [vmem:[%s3458 + $0x18] sm:$0xff]
  %v3463 = vld [vmem:[%s3458 + $0x20] sm:$0xff]
  %v3464 = vld [vmem:[%s3458 + $0x28] sm:$0xff]
  %v3465 = vld [vmem:[%s3458 + $0x30] sm:$0xff]
  %v3466 = vld [vmem:[%s3458 + $0x38] sm:$0xff]
  %v3467 = vld [vmem:[%s3458 + $0x40] sm:$0xff]
  %3468 = vst [vmem:[#allocation2 + $0x8] sm:$0xff] %v3456
  %3469 = vst [vmem:[#allocation2 + $0x10] sm:$0xff] %v3457
  %v3470 = vld [vmem:[#allocation2] sm:$0xff]
  %v3471 = vld [vmem:[#allocation2 + $0x8] sm:$0xff]
  %v3472 = vld [vmem:[#allocation2 + $0x10] sm:$0xff]
  %v3473 = vmul.f32 %v3470, %v832
  %v3474 = vmul.f32 %v3471, %v836
  %v3475 = vmul.f32 %v3472, %v834
  %3479 = vrot.lane.b32.xlu0 %v3470, 16
  %v3480 = vpop.permute.xlu0 %3479
  %3481 = vrot.lane.b32.xlu0 %v3471, 16
  %v3482 = vpop.permute.xlu0 %3481
  %3483 = vrot.lane.b32.xlu0 %v3472, 16
  %v3484 = vpop.permute.xlu0 %3483
  %v3485 = vsel %vm852, %v3480, %v3482
  %v3486 = vsel %vm852, %v3482, %v3484
  %v3490 = vsel %vm627, %v3460, 0
  %3492 = vmatprep.subr.mxu0 %v3486
  %3493 = vmatpush1.msra.mxu0 %v3485
  %3494 = vmatprep.subr.mxu0 0.0
  %3495 = vmatpush1.msra.mxu0 0.0
  %3496 = vmatprep.subr.mxu0 0.0
  %3497 = vmatpush1.msra.mxu0 0.0
  %3498 = vmatprep.subr.mxu0 0.0
  %3499 = vmatpush1.msra.mxu0 0.0
  %3500 = vmatprep.subr.mxu0 0.0
  %3501 = vmatpush1.msra.mxu0 0.0
  %3502 = vmatprep.subr.mxu0 0.0
  %3503 = vmatpush1.msra.mxu0 0.0
  %3504 = vmatprep.subr.mxu0 0.0
  %3505 = vmatpush1.msra.mxu0 0.0
  %3506 = vmatprep.subr.mxu0 0.0
  %3507 = vmatpush1.msra.mxu0 0.0
  %3508 = vmatprep.subr.mxu0 0.0
  %3509 = vmatpush1.msra.mxu0 0.0
  %3510 = vmatprep.subr.mxu0 0.0
  %3511 = vmatpush1.msra.mxu0 0.0
  %3512 = vmatprep.subr.mxu0 0.0
  %3513 = vmatpush1.msra.mxu0 0.0
  %3514 = vmatprep.subr.mxu0 0.0
  %3515 = vmatpush1.msra.mxu0 0.0
  %3516 = vmatprep.subr.mxu0 0.0
  %3517 = vmatpush1.msra.mxu0 0.0
  %3518 = vmatprep.subr.mxu0 0.0
  %3519 = vmatpush1.msra.mxu0 0.0
  %3520 = vmatprep.subr.mxu0 0.0
  %3521 = vmatpush1.msra.mxu0 0.0
  %3522 = vmatprep.subr.mxu0 0.0
  %3523 = vmatpush1.msra.mxu0 0.0
  %3524 = vmatprep.subr.mxu0 0.0
  %3525 = vmatpush1.msra.mxu0 0.0
  %3526 = vmatprep.subr.mxu0 0.0
  %3527 = vmatpush1.msra.mxu0 0.0
  %3528 = vmatprep.subr.mxu0 0.0
  %3529 = vmatpush1.msra.mxu0 0.0
  %3530 = vmatprep.subr.mxu0 0.0
  %3531 = vmatpush1.msra.mxu0 0.0
  %3532 = vmatprep.subr.mxu0 0.0
  %3533 = vmatpush1.msra.mxu0 0.0
  %3534 = vmatprep.subr.mxu0 0.0
  %3535 = vmatpush1.msra.mxu0 0.0
  %3536 = vmatprep.subr.mxu0 0.0
  %3537 = vmatpush1.msra.mxu0 0.0
  %3538 = vmatprep.subr.mxu0 0.0
  %3539 = vmatpush1.msra.mxu0 0.0
  %3540 = vmatprep.subr.mxu0 0.0
  %3541 = vmatpush1.msra.mxu0 0.0
  %3542 = vmatprep.subr.mxu0 0.0
  %3543 = vmatpush1.msra.mxu0 0.0
  %3544 = vmatprep.subr.mxu0 0.0
  %3545 = vmatpush1.msra.mxu0 0.0
  %3546 = vmatprep.subr.mxu0 0.0
  %3547 = vmatpush1.msra.mxu0 0.0
  %3548 = vmatprep.subr.mxu0 0.0
  %3549 = vmatpush1.msra.mxu0 0.0
  %3550 = vmatprep.subr.mxu0 0.0
  %3551 = vmatpush1.msra.mxu0 0.0
  %3552 = vmatprep.subr.mxu0 0.0
  %3553 = vmatpush1.msra.mxu0 0.0
  %3554 = vmatprep.subr.mxu0 0.0
  %3555 = vmatpush1.msra.mxu0 0.0
  %3556 = vmatprep.mubr.f32.mxu0 0.0
  %3557 = vmatmul.mubr.f32.gmra.mrb[0].mxu0 %v3490
  %v3558 = vpop.f32.mrb[0].mxu0
  %v3559 = vadd.f32 0.0, %v3558
  %v3560 = vpop.f32.mrb[0].mxu0
  %v3561 = vadd.f32 0.0, %v3560
  %3562 = vdwg.mxu0
  %3566 = vrot.lane.b32.xlu0 %v3473, 17
  %v3567 = vpop.permute.xlu0 %3566
  %3568 = vrot.lane.b32.xlu0 %v3474, 17
  %v3569 = vpop.permute.xlu0 %3568
  %3570 = vrot.lane.b32.xlu0 %v3475, 17
  %v3571 = vpop.permute.xlu0 %3570
  %v3572 = vsel %vm940, %v3567, %v3569
  %v3573 = vsel %vm940, %v3569, %v3571
  %v3577 = vsel %vm627, %v3459, 0
  %3579 = vmatprep.subr.mxu0 %v3573
  %3580 = vmatpush1.msra.mxu0 %v3572
  %3581 = vmatprep.subr.mxu0 0.0
  %3582 = vmatpush1.msra.mxu0 0.0
  %3583 = vmatprep.subr.mxu0 0.0
  %3584 = vmatpush1.msra.mxu0 0.0
  %3585 = vmatprep.subr.mxu0 0.0
  %3586 = vmatpush1.msra.mxu0 0.0
  %3587 = vmatprep.subr.mxu0 0.0
  %3588 = vmatpush1.msra.mxu0 0.0
  %3589 = vmatprep.subr.mxu0 0.0
  %3590 = vmatpush1.msra.mxu0 0.0
  %3591 = vmatprep.subr.mxu0 0.0
  %3592 = vmatpush1.msra.mxu0 0.0
  %3593 = vmatprep.subr.mxu0 0.0
  %3594 = vmatpush1.msra.mxu0 0.0
  %3595 = vmatprep.subr.mxu0 0.0
  %3596 = vmatpush1.msra.mxu0 0.0
  %3597 = vmatprep.subr.mxu0 0.0
  %3598 = vmatpush1.msra.mxu0 0.0
  %3599 = vmatprep.subr.mxu0 0.0
  %3600 = vmatpush1.msra.mxu0 0.0
  %3601 = vmatprep.subr.mxu0 0.0
  %3602 = vmatpush1.msra.mxu0 0.0
  %3603 = vmatprep.subr.mxu0 0.0
  %3604 = vmatpush1.msra.mxu0 0.0
  %3605 = vmatprep.subr.mxu0 0.0
  %3606 = vmatpush1.msra.mxu0 0.0
  %3607 = vmatprep.subr.mxu0 0.0
  %3608 = vmatpush1.msra.mxu0 0.0
  %3609 = vmatprep.subr.mxu0 0.0
  %3610 = vmatpush1.msra.mxu0 0.0
  %3611 = vmatprep.subr.mxu0 0.0
  %3612 = vmatpush1.msra.mxu0 0.0
  %3613 = vmatprep.subr.mxu0 0.0
  %3614 = vmatpush1.msra.mxu0 0.0
  %3615 = vmatprep.subr.mxu0 0.0
  %3616 = vmatpush1.msra.mxu0 0.0
  %3617 = vmatprep.subr.mxu0 0.0
  %3618 = vmatpush1.msra.mxu0 0.0
  %3619 = vmatprep.subr.mxu0 0.0
  %3620 = vmatpush1.msra.mxu0 0.0
  %3621 = vmatprep.subr.mxu0 0.0
  %3622 = vmatpush1.msra.mxu0 0.0
  %3623 = vmatprep.subr.mxu0 0.0
  %3624 = vmatpush1.msra.mxu0 0.0
  %3625 = vmatprep.subr.mxu0 0.0
  %3626 = vmatpush1.msra.mxu0 0.0
  %3627 = vmatprep.subr.mxu0 0.0
  %3628 = vmatpush1.msra.mxu0 0.0
  %3629 = vmatprep.subr.mxu0 0.0
  %3630 = vmatpush1.msra.mxu0 0.0
  %3631 = vmatprep.subr.mxu0 0.0
  %3632 = vmatpush1.msra.mxu0 0.0
  %3633 = vmatprep.subr.mxu0 0.0
  %3634 = vmatpush1.msra.mxu0 0.0
  %3635 = vmatprep.subr.mxu0 0.0
  %3636 = vmatpush1.msra.mxu0 0.0
  %3637 = vmatprep.subr.mxu0 0.0
  %3638 = vmatpush1.msra.mxu0 0.0
  %3639 = vmatprep.subr.mxu0 0.0
  %3640 = vmatpush1.msra.mxu0 0.0
  %3641 = vmatprep.subr.mxu0 0.0
  %3642 = vmatpush1.msra.mxu0 0.0
  %3643 = vmatprep.mubr.f32.mxu0 0.0
  %3644 = vmatmul.mubr.f32.gmra.mrb[0].mxu0 %v3577
  %v3645 = vpop.f32.mrb[0].mxu0
  %v3646 = vadd.f32 %v3559, %v3645
  %v3647 = vpop.f32.mrb[0].mxu0
  %v3648 = vadd.f32 %v3561, %v3647
  %3649 = vdwg.mxu0
  %v3650 = vmul.f32 %v3470, %v1029
  %v3651 = vmul.f32 %v3471, %v1033
  %v3652 = vmul.f32 %v3472, %v1031
  %3656 = vrot.lane.b32.xlu0 %v3650, 15
  %v3657 = vpop.permute.xlu0 %3656
  %3658 = vrot.lane.b32.xlu0 %v3651, 15
  %v3659 = vpop.permute.xlu0 %3658
  %3660 = vrot.lane.b32.xlu0 %v3652, 15
  %v3661 = vpop.permute.xlu0 %3660
  %v3662 = vsel %vm1049, %v3657, %v3659
  %v3663 = vsel %vm1049, %v3659, %v3661
  %v3667 = vsel %vm627, %v3461, 0
  %3669 = vmatprep.subr.mxu0 %v3663
  %3670 = vmatpush1.msra.mxu0 %v3662
  %3671 = vmatprep.subr.mxu0 0.0
  %3672 = vmatpush1.msra.mxu0 0.0
  %3673 = vmatprep.subr.mxu0 0.0
  %3674 = vmatpush1.msra.mxu0 0.0
  %3675 = vmatprep.subr.mxu0 0.0
  %3676 = vmatpush1.msra.mxu0 0.0
  %3677 = vmatprep.subr.mxu0 0.0
  %3678 = vmatpush1.msra.mxu0 0.0
  %3679 = vmatprep.subr.mxu0 0.0
  %3680 = vmatpush1.msra.mxu0 0.0
  %3681 = vmatprep.subr.mxu0 0.0
  %3682 = vmatpush1.msra.mxu0 0.0
  %3683 = vmatprep.subr.mxu0 0.0
  %3684 = vmatpush1.msra.mxu0 0.0
  %3685 = vmatprep.subr.mxu0 0.0
  %3686 = vmatpush1.msra.mxu0 0.0
  %3687 = vmatprep.subr.mxu0 0.0
  %3688 = vmatpush1.msra.mxu0 0.0
  %3689 = vmatprep.subr.mxu0 0.0
  %3690 = vmatpush1.msra.mxu0 0.0
  %3691 = vmatprep.subr.mxu0 0.0
  %3692 = vmatpush1.msra.mxu0 0.0
  %3693 = vmatprep.subr.mxu0 0.0
  %3694 = vmatpush1.msra.mxu0 0.0
  %3695 = vmatprep.subr.mxu0 0.0
  %3696 = vmatpush1.msra.mxu0 0.0
  %3697 = vmatprep.subr.mxu0 0.0
  %3698 = vmatpush1.msra.mxu0 0.0
  %3699 = vmatprep.subr.mxu0 0.0
  %3700 = vmatpush1.msra.mxu0 0.0
  %3701 = vmatprep.subr.mxu0 0.0
  %3702 = vmatpush1.msra.mxu0 0.0
  %3703 = vmatprep.subr.mxu0 0.0
  %3704 = vmatpush1.msra.mxu0 0.0
  %3705 = vmatprep.subr.mxu0 0.0
  %3706 = vmatpush1.msra.mxu0 0.0
  %3707 = vmatprep.subr.mxu0 0.0
  %3708 = vmatpush1.msra.mxu0 0.0
  %3709 = vmatprep.subr.mxu0 0.0
  %3710 = vmatpush1.msra.mxu0 0.0
  %3711 = vmatprep.subr.mxu0 0.0
  %3712 = vmatpush1.msra.mxu0 0.0
  %3713 = vmatprep.subr.mxu0 0.0
  %3714 = vmatpush1.msra.mxu0 0.0
  %3715 = vmatprep.subr.mxu0 0.0
  %3716 = vmatpush1.msra.mxu0 0.0
  %3717 = vmatprep.subr.mxu0 0.0
  %3718 = vmatpush1.msra.mxu0 0.0
  %3719 = vmatprep.subr.mxu0 0.0
  %3720 = vmatpush1.msra.mxu0 0.0
  %3721 = vmatprep.subr.mxu0 0.0
  %3722 = vmatpush1.msra.mxu0 0.0
  %3723 = vmatprep.subr.mxu0 0.0
  %3724 = vmatpush1.msra.mxu0 0.0
  %3725 = vmatprep.subr.mxu0 0.0
  %3726 = vmatpush1.msra.mxu0 0.0
  %3727 = vmatprep.subr.mxu0 0.0
  %3728 = vmatpush1.msra.mxu0 0.0
  %3729 = vmatprep.subr.mxu0 0.0
  %3730 = vmatpush1.msra.mxu0 0.0
  %3731 = vmatprep.subr.mxu0 0.0
  %3732 = vmatpush1.msra.mxu0 0.0
  %3733 = vmatprep.mubr.f32.mxu0 0.0
  %3734 = vmatmul.mubr.f32.gmra.mrb[0].mxu0 %v3667
  %v3735 = vpop.f32.mrb[0].mxu0
  %v3736 = vadd.f32 0.0, %v3735
  %v3737 = vpop.f32.mrb[0].mxu0
  %v3738 = vadd.f32 0.0, %v3737
  %3739 = vdwg.mxu0
  %v3740 = vadd.f32 %v3646, %v3736
  %v3741 = vadd.f32 %v3648, %v3738
  %v3742 = vmul.f32 %v3470, %v1131
  %v3743 = vmul.f32 %v3471, %v1135
  %v3744 = vmul.f32 %v3472, %v1133
  %3748 = vrot.lane.b32.xlu0 %v3742, 1
  %v3749 = vpop.permute.xlu0 %3748
  %3750 = vrot.lane.b32.xlu0 %v3743, 1
  %v3751 = vpop.permute.xlu0 %3750
  %3752 = vrot.lane.b32.xlu0 %v3744, 1
  %v3753 = vpop.permute.xlu0 %3752
  %v3754 = vsel %vm1151, %v3749, %v3751
  %v3755 = vsel %vm1151, %v3751, %v3753
  %v3759 = vsel %vm627, %v3462, 0
  %3761 = vmatprep.subr.mxu0 %v3755
  %3762 = vmatpush1.msra.mxu0 %v3754
  %3763 = vmatprep.subr.mxu0 0.0
  %3764 = vmatpush1.msra.mxu0 0.0
  %3765 = vmatprep.subr.mxu0 0.0
  %3766 = vmatpush1.msra.mxu0 0.0
  %3767 = vmatprep.subr.mxu0 0.0
  %3768 = vmatpush1.msra.mxu0 0.0
  %3769 = vmatprep.subr.mxu0 0.0
  %3770 = vmatpush1.msra.mxu0 0.0
  %3771 = vmatprep.subr.mxu0 0.0
  %3772 = vmatpush1.msra.mxu0 0.0
  %3773 = vmatprep.subr.mxu0 0.0
  %3774 = vmatpush1.msra.mxu0 0.0
  %3775 = vmatprep.subr.mxu0 0.0
  %3776 = vmatpush1.msra.mxu0 0.0
  %3777 = vmatprep.subr.mxu0 0.0
  %3778 = vmatpush1.msra.mxu0 0.0
  %3779 = vmatprep.subr.mxu0 0.0
  %3780 = vmatpush1.msra.mxu0 0.0
  %3781 = vmatprep.subr.mxu0 0.0
  %3782 = vmatpush1.msra.mxu0 0.0
  %3783 = vmatprep.subr.mxu0 0.0
  %3784 = vmatpush1.msra.mxu0 0.0
  %3785 = vmatprep.subr.mxu0 0.0
  %3786 = vmatpush1.msra.mxu0 0.0
  %3787 = vmatprep.subr.mxu0 0.0
  %3788 = vmatpush1.msra.mxu0 0.0
  %3789 = vmatprep.subr.mxu0 0.0
  %3790 = vmatpush1.msra.mxu0 0.0
  %3791 = vmatprep.subr.mxu0 0.0
  %3792 = vmatpush1.msra.mxu0 0.0
  %3793 = vmatprep.subr.mxu0 0.0
  %3794 = vmatpush1.msra.mxu0 0.0
  %3795 = vmatprep.subr.mxu0 0.0
  %3796 = vmatpush1.msra.mxu0 0.0
  %3797 = vmatprep.subr.mxu0 0.0
  %3798 = vmatpush1.msra.mxu0 0.0
  %3799 = vmatprep.subr.mxu0 0.0
  %3800 = vmatpush1.msra.mxu0 0.0
  %3801 = vmatprep.subr.mxu0 0.0
  %3802 = vmatpush1.msra.mxu0 0.0
  %3803 = vmatprep.subr.mxu0 0.0
  %3804 = vmatpush1.msra.mxu0 0.0
  %3805 = vmatprep.subr.mxu0 0.0
  %3806 = vmatpush1.msra.mxu0 0.0
  %3807 = vmatprep.subr.mxu0 0.0
  %3808 = vmatpush1.msra.mxu0 0.0
  %3809 = vmatprep.subr.mxu0 0.0
  %3810 = vmatpush1.msra.mxu0 0.0
  %3811 = vmatprep.subr.mxu0 0.0
  %3812 = vmatpush1.msra.mxu0 0.0
  %3813 = vmatprep.subr.mxu0 0.0
  %3814 = vmatpush1.msra.mxu0 0.0
  %3815 = vmatprep.subr.mxu0 0.0
  %3816 = vmatpush1.msra.mxu0 0.0
  %3817 = vmatprep.subr.mxu0 0.0
  %3818 = vmatpush1.msra.mxu0 0.0
  %3819 = vmatprep.subr.mxu0 0.0
  %3820 = vmatpush1.msra.mxu0 0.0
  %3821 = vmatprep.subr.mxu0 0.0
  %3822 = vmatpush1.msra.mxu0 0.0
  %3823 = vmatprep.subr.mxu0 0.0
  %3824 = vmatpush1.msra.mxu0 0.0
  %3825 = vmatprep.mubr.f32.mxu0 0.0
  %3826 = vmatmul.mubr.f32.gmra.mrb[0].mxu0 %v3759
  %v3827 = vpop.f32.mrb[0].mxu0
  %v3828 = vadd.f32 0.0, %v3827
  %v3829 = vpop.f32.mrb[0].mxu0
  %v3830 = vadd.f32 0.0, %v3829
  %3831 = vdwg.mxu0
  %v3832 = vadd.f32 %v3740, %v3828
  %v3833 = vadd.f32 %v3741, %v3830
  %v3835 = vsel %vm627, %v3463, 0
  %3837 = vmatprep.subr.mxu0 %v3472
  %3838 = vmatpush1.msra.mxu0 %v3471
  %3839 = vmatprep.subr.mxu0 0.0
  %3840 = vmatpush1.msra.mxu0 0.0
  %3841 = vmatprep.subr.mxu0 0.0
  %3842 = vmatpush1.msra.mxu0 0.0
  %3843 = vmatprep.subr.mxu0 0.0
  %3844 = vmatpush1.msra.mxu0 0.0
  %3845 = vmatprep.subr.mxu0 0.0
  %3846 = vmatpush1.msra.mxu0 0.0
  %3847 = vmatprep.subr.mxu0 0.0
  %3848 = vmatpush1.msra.mxu0 0.0
  %3849 = vmatprep.subr.mxu0 0.0
  %3850 = vmatpush1.msra.mxu0 0.0
  %3851 = vmatprep.subr.mxu0 0.0
  %3852 = vmatpush1.msra.mxu0 0.0
  %3853 = vmatprep.subr.mxu0 0.0
  %3854 = vmatpush1.msra.mxu0 0.0
  %3855 = vmatprep.subr.mxu0 0.0
  %3856 = vmatpush1.msra.mxu0 0.0
  %3857 = vmatprep.subr.mxu0 0.0
  %3858 = vmatpush1.msra.mxu0 0.0
  %3859 = vmatprep.subr.mxu0 0.0
  %3860 = vmatpush1.msra.mxu0 0.0
  %3861 = vmatprep.subr.mxu0 0.0
  %3862 = vmatpush1.msra.mxu0 0.0
  %3863 = vmatprep.subr.mxu0 0.0
  %3864 = vmatpush1.msra.mxu0 0.0
  %3865 = vmatprep.subr.mxu0 0.0
  %3866 = vmatpush1.msra.mxu0 0.0
  %3867 = vmatprep.subr.mxu0 0.0
  %3868 = vmatpush1.msra.mxu0 0.0
  %3869 = vmatprep.subr.mxu0 0.0
  %3870 = vmatpush1.msra.mxu0 0.0
  %3871 = vmatprep.subr.mxu0 0.0
  %3872 = vmatpush1.msra.mxu0 0.0
  %3873 = vmatprep.subr.mxu0 0.0
  %3874 = vmatpush1.msra.mxu0 0.0
  %3875 = vmatprep.subr.mxu0 0.0
  %3876 = vmatpush1.msra.mxu0 0.0
  %3877 = vmatprep.subr.mxu0 0.0
  %3878 = vmatpush1.msra.mxu0 0.0
  %3879 = vmatprep.subr.mxu0 0.0
  %3880 = vmatpush1.msra.mxu0 0.0
  %3881 = vmatprep.subr.mxu0 0.0
  %3882 = vmatpush1.msra.mxu0 0.0
  %3883 = vmatprep.subr.mxu0 0.0
  %3884 = vmatpush1.msra.mxu0 0.0
  %3885 = vmatprep.subr.mxu0 0.0
  %3886 = vmatpush1.msra.mxu0 0.0
  %3887 = vmatprep.subr.mxu0 0.0
  %3888 = vmatpush1.msra.mxu0 0.0
  %3889 = vmatprep.subr.mxu0 0.0
  %3890 = vmatpush1.msra.mxu0 0.0
  %3891 = vmatprep.subr.mxu0 0.0
  %3892 = vmatpush1.msra.mxu0 0.0
  %3893 = vmatprep.subr.mxu0 0.0
  %3894 = vmatpush1.msra.mxu0 0.0
  %3895 = vmatprep.subr.mxu0 0.0
  %3896 = vmatpush1.msra.mxu0 0.0
  %3897 = vmatprep.subr.mxu0 0.0
  %3898 = vmatpush1.msra.mxu0 0.0
  %3899 = vmatprep.subr.mxu0 0.0
  %3900 = vmatpush1.msra.mxu0 0.0
  %3901 = vmatprep.mubr.f32.mxu0 0.0
  %3902 = vmatmul.mubr.f32.gmra.mrb[0].mxu0 %v3835
  %v3903 = vpop.f32.mrb[0].mxu0
  %v3904 = vadd.f32 0.0, %v3903
  %v3905 = vpop.f32.mrb[0].mxu0
  %v3906 = vadd.f32 0.0, %v3905
  %3907 = vdwg.mxu0
  %v3908 = vadd.f32 %v3832, %v3904
  %v3909 = vadd.f32 %v3833, %v3906
  %v3910 = vld [vmem:[#allocation2 + $0x8] sm:$0xff]
  %v3911 = vld [vmem:[#allocation2 + $0x10] sm:$0xff]
  %v3912 = vld [vmem:[#allocation2 + $0x18] sm:$0xff]
  %v3913 = vmul.f32 %v3910, %v1312
  %v3914 = vmul.f32 %v3911, %v1315
  %v3915 = vmul.f32 %v3912, %v1314
  %3919 = vrot.lane.b32.xlu0 %v3913, 127
  %v3920 = vpop.permute.xlu0 %3919
  %3921 = vrot.lane.b32.xlu0 %v3914, 127
  %v3922 = vpop.permute.xlu0 %3921
  %3923 = vrot.lane.b32.xlu0 %v3915, 127
  %v3924 = vpop.permute.xlu0 %3923
  %v3925 = vsel %vm1134, %v3920, %v3922
  %v3926 = vsel %vm1134, %v3922, %v3924
  %v3930 = vsel %vm627, %v3464, 0
  %3932 = vmatprep.subr.mxu0 %v3926
  %3933 = vmatpush1.msra.mxu0 %v3925
  %3934 = vmatprep.subr.mxu0 0.0
  %3935 = vmatpush1.msra.mxu0 0.0
  %3936 = vmatprep.subr.mxu0 0.0
  %3937 = vmatpush1.msra.mxu0 0.0
  %3938 = vmatprep.subr.mxu0 0.0
  %3939 = vmatpush1.msra.mxu0 0.0
  %3940 = vmatprep.subr.mxu0 0.0
  %3941 = vmatpush1.msra.mxu0 0.0
  %3942 = vmatprep.subr.mxu0 0.0
  %3943 = vmatpush1.msra.mxu0 0.0
  %3944 = vmatprep.subr.mxu0 0.0
  %3945 = vmatpush1.msra.mxu0 0.0
  %3946 = vmatprep.subr.mxu0 0.0
  %3947 = vmatpush1.msra.mxu0 0.0
  %3948 = vmatprep.subr.mxu0 0.0
  %3949 = vmatpush1.msra.mxu0 0.0
  %3950 = vmatprep.subr.mxu0 0.0
  %3951 = vmatpush1.msra.mxu0 0.0
  %3952 = vmatprep.subr.mxu0 0.0
  %3953 = vmatpush1.msra.mxu0 0.0
  %3954 = vmatprep.subr.mxu0 0.0
  %3955 = vmatpush1.msra.mxu0 0.0
  %3956 = vmatprep.subr.mxu0 0.0
  %3957 = vmatpush1.msra.mxu0 0.0
  %3958 = vmatprep.subr.mxu0 0.0
  %3959 = vmatpush1.msra.mxu0 0.0
  %3960 = vmatprep.subr.mxu0 0.0
  %3961 = vmatpush1.msra.mxu0 0.0
  %3962 = vmatprep.subr.mxu0 0.0
  %3963 = vmatpush1.msra.mxu0 0.0
  %3964 = vmatprep.subr.mxu0 0.0
  %3965 = vmatpush1.msra.mxu0 0.0
  %3966 = vmatprep.subr.mxu0 0.0
  %3967 = vmatpush1.msra.mxu0 0.0
  %3968 = vmatprep.subr.mxu0 0.0
  %3969 = vmatpush1.msra.mxu0 0.0
  %3970 = vmatprep.subr.mxu0 0.0
  %3971 = vmatpush1.msra.mxu0 0.0
  %3972 = vmatprep.subr.mxu0 0.0
  %3973 = vmatpush1.msra.mxu0 0.0
  %3974 = vmatprep.subr.mxu0 0.0
  %3975 = vmatpush1.msra.mxu0 0.0
  %3976 = vmatprep.subr.mxu0 0.0
  %3977 = vmatpush1.msra.mxu0 0.0
  %3978 = vmatprep.subr.mxu0 0.0
  %3979 = vmatpush1.msra.mxu0 0.0
  %3980 = vmatprep.subr.mxu0 0.0
  %3981 = vmatpush1.msra.mxu0 0.0
  %3982 = vmatprep.subr.mxu0 0.0
  %3983 = vmatpush1.msra.mxu0 0.0
  %3984 = vmatprep.subr.mxu0 0.0
  %3985 = vmatpush1.msra.mxu0 0.0
  %3986 = vmatprep.subr.mxu0 0.0
  %3987 = vmatpush1.msra.mxu0 0.0
  %3988 = vmatprep.subr.mxu0 0.0
  %3989 = vmatpush1.msra.mxu0 0.0
  %3990 = vmatprep.subr.mxu0 0.0
  %3991 = vmatpush1.msra.mxu0 0.0
  %3992 = vmatprep.subr.mxu0 0.0
  %3993 = vmatpush1.msra.mxu0 0.0
  %3994 = vmatprep.subr.mxu0 0.0
  %3995 = vmatpush1.msra.mxu0 0.0
  %3996 = vmatprep.mubr.f32.mxu0 0.0
  %3997 = vmatmul.mubr.f32.gmra.mrb[0].mxu0 %v3930
  %v3998 = vpop.f32.mrb[0].mxu0
  %v3999 = vadd.f32 0.0, %v3998
  %v4000 = vpop.f32.mrb[0].mxu0
  %v4001 = vadd.f32 0.0, %v4000
  %4002 = vdwg.mxu0
  %v4003 = vadd.f32 %v3908, %v3999
  %v4004 = vadd.f32 %v3909, %v4001
  %v4005 = vmul.f32 %v3910, %v1412
  %v4006 = vmul.f32 %v3911, %v1415
  %v4007 = vmul.f32 %v3912, %v1414
  %4011 = vrot.lane.b32.xlu0 %v4005, 113
  %v4012 = vpop.permute.xlu0 %4011
  %4013 = vrot.lane.b32.xlu0 %v4006, 113
  %v4014 = vpop.permute.xlu0 %4013
  %4015 = vrot.lane.b32.xlu0 %v4007, 113
  %v4016 = vpop.permute.xlu0 %4015
  %v4017 = vsel %vm1032, %v4012, %v4014
  %v4018 = vsel %vm1032, %v4014, %v4016
  %v4022 = vsel %vm627, %v3465, 0
  %4024 = vmatprep.subr.mxu0 %v4018
  %4025 = vmatpush1.msra.mxu0 %v4017
  %4026 = vmatprep.subr.mxu0 0.0
  %4027 = vmatpush1.msra.mxu0 0.0
  %4028 = vmatprep.subr.mxu0 0.0
  %4029 = vmatpush1.msra.mxu0 0.0
  %4030 = vmatprep.subr.mxu0 0.0
  %4031 = vmatpush1.msra.mxu0 0.0
  %4032 = vmatprep.subr.mxu0 0.0
  %4033 = vmatpush1.msra.mxu0 0.0
  %4034 = vmatprep.subr.mxu0 0.0
  %4035 = vmatpush1.msra.mxu0 0.0
  %4036 = vmatprep.subr.mxu0 0.0
  %4037 = vmatpush1.msra.mxu0 0.0
  %4038 = vmatprep.subr.mxu0 0.0
  %4039 = vmatpush1.msra.mxu0 0.0
  %4040 = vmatprep.subr.mxu0 0.0
  %4041 = vmatpush1.msra.mxu0 0.0
  %4042 = vmatprep.subr.mxu0 0.0
  %4043 = vmatpush1.msra.mxu0 0.0
  %4044 = vmatprep.subr.mxu0 0.0
  %4045 = vmatpush1.msra.mxu0 0.0
  %4046 = vmatprep.subr.mxu0 0.0
  %4047 = vmatpush1.msra.mxu0 0.0
  %4048 = vmatprep.subr.mxu0 0.0
  %4049 = vmatpush1.msra.mxu0 0.0
  %4050 = vmatprep.subr.mxu0 0.0
  %4051 = vmatpush1.msra.mxu0 0.0
  %4052 = vmatprep.subr.mxu0 0.0
  %4053 = vmatpush1.msra.mxu0 0.0
  %4054 = vmatprep.subr.mxu0 0.0
  %4055 = vmatpush1.msra.mxu0 0.0
  %4056 = vmatprep.subr.mxu0 0.0
  %4057 = vmatpush1.msra.mxu0 0.0
  %4058 = vmatprep.subr.mxu0 0.0
  %4059 = vmatpush1.msra.mxu0 0.0
  %4060 = vmatprep.subr.mxu0 0.0
  %4061 = vmatpush1.msra.mxu0 0.0
  %4062 = vmatprep.subr.mxu0 0.0
  %4063 = vmatpush1.msra.mxu0 0.0
  %4064 = vmatprep.subr.mxu0 0.0
  %4065 = vmatpush1.msra.mxu0 0.0
  %4066 = vmatprep.subr.mxu0 0.0
  %4067 = vmatpush1.msra.mxu0 0.0
  %4068 = vmatprep.subr.mxu0 0.0
  %4069 = vmatpush1.msra.mxu0 0.0
  %4070 = vmatprep.subr.mxu0 0.0
  %4071 = vmatpush1.msra.mxu0 0.0
  %4072 = vmatprep.subr.mxu0 0.0
  %4073 = vmatpush1.msra.mxu0 0.0
  %4074 = vmatprep.subr.mxu0 0.0
  %4075 = vmatpush1.msra.mxu0 0.0
  %4076 = vmatprep.subr.mxu0 0.0
  %4077 = vmatpush1.msra.mxu0 0.0
  %4078 = vmatprep.subr.mxu0 0.0
  %4079 = vmatpush1.msra.mxu0 0.0
  %4080 = vmatprep.subr.mxu0 0.0
  %4081 = vmatpush1.msra.mxu0 0.0
  %4082 = vmatprep.subr.mxu0 0.0
  %4083 = vmatpush1.msra.mxu0 0.0
  %4084 = vmatprep.subr.mxu0 0.0
  %4085 = vmatpush1.msra.mxu0 0.0
  %4086 = vmatprep.subr.mxu0 0.0
  %4087 = vmatpush1.msra.mxu0 0.0
  %4088 = vmatprep.mubr.f32.mxu0 0.0
  %4089 = vmatmul.mubr.f32.gmra.mrb[0].mxu0 %v4022
  %v4090 = vpop.f32.mrb[0].mxu0
  %v4091 = vadd.f32 0.0, %v4090
  %v4092 = vpop.f32.mrb[0].mxu0
  %v4093 = vadd.f32 0.0, %v4092
  %4094 = vdwg.mxu0
  %v4095 = vadd.f32 %v4003, %v4091
  %v4096 = vadd.f32 %v4004, %v4093
  %4100 = vrot.lane.b32.xlu0 %v3910, 112
  %v4101 = vpop.permute.xlu0 %4100
  %4102 = vrot.lane.b32.xlu0 %v3911, 112
  %v4103 = vpop.permute.xlu0 %4102
  %4104 = vrot.lane.b32.xlu0 %v3912, 112
  %v4105 = vpop.permute.xlu0 %4104
  %v4106 = vsel %vm1520, %v4101, %v4103
  %v4107 = vsel %vm1520, %v4103, %v4105
  %v4111 = vsel %vm627, %v3466, 0
  %4113 = vmatprep.subr.mxu0 %v4107
  %4114 = vmatpush1.msra.mxu0 %v4106
  %4115 = vmatprep.subr.mxu0 0.0
  %4116 = vmatpush1.msra.mxu0 0.0
  %4117 = vmatprep.subr.mxu0 0.0
  %4118 = vmatpush1.msra.mxu0 0.0
  %4119 = vmatprep.subr.mxu0 0.0
  %4120 = vmatpush1.msra.mxu0 0.0
  %4121 = vmatprep.subr.mxu0 0.0
  %4122 = vmatpush1.msra.mxu0 0.0
  %4123 = vmatprep.subr.mxu0 0.0
  %4124 = vmatpush1.msra.mxu0 0.0
  %4125 = vmatprep.subr.mxu0 0.0
  %4126 = vmatpush1.msra.mxu0 0.0
  %4127 = vmatprep.subr.mxu0 0.0
  %4128 = vmatpush1.msra.mxu0 0.0
  %4129 = vmatprep.subr.mxu0 0.0
  %4130 = vmatpush1.msra.mxu0 0.0
  %4131 = vmatprep.subr.mxu0 0.0
  %4132 = vmatpush1.msra.mxu0 0.0
  %4133 = vmatprep.subr.mxu0 0.0
  %4134 = vmatpush1.msra.mxu0 0.0
  %4135 = vmatprep.subr.mxu0 0.0
  %4136 = vmatpush1.msra.mxu0 0.0
  %4137 = vmatprep.subr.mxu0 0.0
  %4138 = vmatpush1.msra.mxu0 0.0
  %4139 = vmatprep.subr.mxu0 0.0
  %4140 = vmatpush1.msra.mxu0 0.0
  %4141 = vmatprep.subr.mxu0 0.0
  %4142 = vmatpush1.msra.mxu0 0.0
  %4143 = vmatprep.subr.mxu0 0.0
  %4144 = vmatpush1.msra.mxu0 0.0
  %4145 = vmatprep.subr.mxu0 0.0
  %4146 = vmatpush1.msra.mxu0 0.0
  %4147 = vmatprep.subr.mxu0 0.0
  %4148 = vmatpush1.msra.mxu0 0.0
  %4149 = vmatprep.subr.mxu0 0.0
  %4150 = vmatpush1.msra.mxu0 0.0
  %4151 = vmatprep.subr.mxu0 0.0
  %4152 = vmatpush1.msra.mxu0 0.0
  %4153 = vmatprep.subr.mxu0 0.0
  %4154 = vmatpush1.msra.mxu0 0.0
  %4155 = vmatprep.subr.mxu0 0.0
  %4156 = vmatpush1.msra.mxu0 0.0
  %4157 = vmatprep.subr.mxu0 0.0
  %4158 = vmatpush1.msra.mxu0 0.0
  %4159 = vmatprep.subr.mxu0 0.0
  %4160 = vmatpush1.msra.mxu0 0.0
  %4161 = vmatprep.subr.mxu0 0.0
  %4162 = vmatpush1.msra.mxu0 0.0
  %4163 = vmatprep.subr.mxu0 0.0
  %4164 = vmatpush1.msra.mxu0 0.0
  %4165 = vmatprep.subr.mxu0 0.0
  %4166 = vmatpush1.msra.mxu0 0.0
  %4167 = vmatprep.subr.mxu0 0.0
  %4168 = vmatpush1.msra.mxu0 0.0
  %4169 = vmatprep.subr.mxu0 0.0
  %4170 = vmatpush1.msra.mxu0 0.0
  %4171 = vmatprep.subr.mxu0 0.0
  %4172 = vmatpush1.msra.mxu0 0.0
  %4173 = vmatprep.subr.mxu0 0.0
  %4174 = vmatpush1.msra.mxu0 0.0
  %4175 = vmatprep.subr.mxu0 0.0
  %4176 = vmatpush1.msra.mxu0 0.0
  %4177 = vmatprep.mubr.f32.mxu0 0.0
  %4178 = vmatmul.mubr.f32.gmra.mrb[0].mxu0 %v4111
  %v4179 = vpop.f32.mrb[0].mxu0
  %v4180 = vadd.f32 0.0, %v4179
  %v4181 = vpop.f32.mrb[0].mxu0
  %v4182 = vadd.f32 0.0, %v4181
  %4183 = vdwg.mxu0
  %v4184 = vadd.f32 %v4095, %v4180
  %v4185 = vadd.f32 %v4096, %v4182
  %v4186 = vmul.f32 %v3910, %v1602
  %v4187 = vmul.f32 %v3911, %v1605
  %v4188 = vmul.f32 %v3912, %v1604
  %4192 = vrot.lane.b32.xlu0 %v4186, 111
  %v4193 = vpop.permute.xlu0 %4192
  %4194 = vrot.lane.b32.xlu0 %v4187, 111
  %v4195 = vpop.permute.xlu0 %4194
  %4196 = vrot.lane.b32.xlu0 %v4188, 111
  %v4197 = vpop.permute.xlu0 %4196
  %v4198 = vsel %vm835, %v4193, %v4195
  %v4199 = vsel %vm835, %v4195, %v4197
  %v4203 = vsel %vm627, %v3467, 0
  %4205 = vmatprep.subr.mxu0 %v4199
  %4206 = vmatpush1.msra.mxu0 %v4198
  %4207 = vmatprep.subr.mxu0 0.0
  %4208 = vmatpush1.msra.mxu0 0.0
  %4209 = vmatprep.subr.mxu0 0.0
  %4210 = vmatpush1.msra.mxu0 0.0
  %4211 = vmatprep.subr.mxu0 0.0
  %4212 = vmatpush1.msra.mxu0 0.0
  %4213 = vmatprep.subr.mxu0 0.0
  %4214 = vmatpush1.msra.mxu0 0.0
  %4215 = vmatprep.subr.mxu0 0.0
  %4216 = vmatpush1.msra.mxu0 0.0
  %4217 = vmatprep.subr.mxu0 0.0
  %4218 = vmatpush1.msra.mxu0 0.0
  %4219 = vmatprep.subr.mxu0 0.0
  %4220 = vmatpush1.msra.mxu0 0.0
  %4221 = vmatprep.subr.mxu0 0.0
  %4222 = vmatpush1.msra.mxu0 0.0
  %4223 = vmatprep.subr.mxu0 0.0
  %4224 = vmatpush1.msra.mxu0 0.0
  %4225 = vmatprep.subr.mxu0 0.0
  %4226 = vmatpush1.msra.mxu0 0.0
  %4227 = vmatprep.subr.mxu0 0.0
  %4228 = vmatpush1.msra.mxu0 0.0
  %4229 = vmatprep.subr.mxu0 0.0
  %4230 = vmatpush1.msra.mxu0 0.0
  %4231 = vmatprep.subr.mxu0 0.0
  %4232 = vmatpush1.msra.mxu0 0.0
  %4233 = vmatprep.subr.mxu0 0.0
  %4234 = vmatpush1.msra.mxu0 0.0
  %4235 = vmatprep.subr.mxu0 0.0
  %4236 = vmatpush1.msra.mxu0 0.0
  %4237 = vmatprep.subr.mxu0 0.0
  %4238 = vmatpush1.msra.mxu0 0.0
  %4239 = vmatprep.subr.mxu0 0.0
  %4240 = vmatpush1.msra.mxu0 0.0
  %4241 = vmatprep.subr.mxu0 0.0
  %4242 = vmatpush1.msra.mxu0 0.0
  %4243 = vmatprep.subr.mxu0 0.0
  %4244 = vmatpush1.msra.mxu0 0.0
  %4245 = vmatprep.subr.mxu0 0.0
  %4246 = vmatpush1.msra.mxu0 0.0
  %4247 = vmatprep.subr.mxu0 0.0
  %4248 = vmatpush1.msra.mxu0 0.0
  %4249 = vmatprep.subr.mxu0 0.0
  %4250 = vmatpush1.msra.mxu0 0.0
  %4251 = vmatprep.subr.mxu0 0.0
  %4252 = vmatpush1.msra.mxu0 0.0
  %4253 = vmatprep.subr.mxu0 0.0
  %4254 = vmatpush1.msra.mxu0 0.0
  %4255 = vmatprep.subr.mxu0 0.0
  %4256 = vmatpush1.msra.mxu0 0.0
  %4257 = vmatprep.subr.mxu0 0.0
  %4258 = vmatpush1.msra.mxu0 0.0
  %4259 = vmatprep.subr.mxu0 0.0
  %4260 = vmatpush1.msra.mxu0 0.0
  %4261 = vmatprep.subr.mxu0 0.0
  %4262 = vmatpush1.msra.mxu0 0.0
  %4263 = vmatprep.subr.mxu0 0.0
  %4264 = vmatpush1.msra.mxu0 0.0
  %4265 = vmatprep.subr.mxu0 0.0
  %4266 = vmatpush1.msra.mxu0 0.0
  %4267 = vmatprep.subr.mxu0 0.0
  %4268 = vmatpush1.msra.mxu0 0.0
  %4269 = vmatprep.mubr.f32.mxu0 0.0
  %4270 = vmatmul.mubr.f32.gmra.mrb[0].mxu0 %v4203
  %v4271 = vpop.f32.mrb[0].mxu0
  %v4272 = vadd.f32 0.0, %v4271
  %v4273 = vpop.f32.mrb[0].mxu0
  %v4274 = vadd.f32 0.0, %v4273
  %4275 = vdwg.mxu0
  %v4276 = vadd.f32 %v4184, %v4272
  %v4277 = vadd.f32 %v4185, %v4274
  %s4278 = scalar_lea.vmem %s9, 16
  %v4279 = vld [vmem:[%s4278] sm:$0xff]
  %v4280 = vadd.f32 %v4279, %v2997
  %v4281 = vadd.f32 %v4280, %v3261
  %4283 = vset.pattern.permute.xlu0 0
  %4284 = vperm.xlu0 %4283, %v4281
  %v4285 = vpop.permute.xlu0 %4284
  %v4287 = vadd.f32 %v4276, %v4285
  %v4288 = vadd.f32 %v4277, %v4285
  %s4289 = scalar_lea.vmem %s6, 24
  %v4290 = vld [vmem:[%s4289] sm:$0xff]
  %s4291 = scalar_lea.vmem %s7, 24
  %v4292 = vld [vmem:[%s4291] sm:$0xff]
  %v4293 = vmul.f32 %v4287, 0.5
  %v4294 = vmul.f32 %v4288, 0.5
  %v4295 = vtanh.pop %v4293
  %v4296 = vtanh.pop %v4294
  %v4297 = vadd.f32 %v4295, 1.0
  %v4298 = vadd.f32 %v4296, 1.0
  %v4299 = vmul.f32 %v4297, 0.5
  %v4300 = vmul.f32 %v4298, 0.5
  %v4301 = vmul.f32 %v4287, %v4299
  %v4302 = vmul.f32 %v4288, %v4300
  %v4303 = vadd.f32 %v4301, %v4302
  %4304 = vadd.xlane.f32.xlu0 %v4303
  %v4305 = vpop.xlane.xlu0 %4304
  %4306 = vmatprep.subr.mxu0 0.0
  %4307 = vmatpush1.msra.mxu0 %v4305
  %4308 = vmatprep.subr.mxu0 0.0
  %4309 = vmatpush1.msra.mxu0 0.0
  %4310 = vmatprep.subr.mxu0 0.0
  %4311 = vmatpush1.msra.mxu0 0.0
  %4312 = vmatprep.subr.mxu0 0.0
  %4313 = vmatpush1.msra.mxu0 0.0
  %4314 = vmatprep.subr.mxu0 0.0
  %4315 = vmatpush1.msra.mxu0 0.0
  %4316 = vmatprep.subr.mxu0 0.0
  %4317 = vmatpush1.msra.mxu0 0.0
  %4318 = vmatprep.subr.mxu0 0.0
  %4319 = vmatpush1.msra.mxu0 0.0
  %4320 = vmatprep.subr.mxu0 0.0
  %4321 = vmatpush1.msra.mxu0 0.0
  %4322 = vmatprep.subr.mxu0 0.0
  %4323 = vmatpush1.msra.mxu0 0.0
  %4324 = vmatprep.subr.mxu0 0.0
  %4325 = vmatpush1.msra.mxu0 0.0
  %4326 = vmatprep.subr.mxu0 0.0
  %4327 = vmatpush1.msra.mxu0 0.0
  %4328 = vmatprep.subr.mxu0 0.0
  %4329 = vmatpush1.msra.mxu0 0.0
  %4330 = vmatprep.subr.mxu0 0.0
  %4331 = vmatpush1.msra.mxu0 0.0
  %4332 = vmatprep.subr.mxu0 0.0
  %4333 = vmatpush1.msra.mxu0 0.0
  %4334 = vmatprep.subr.mxu0 0.0
  %4335 = vmatpush1.msra.mxu0 0.0
  %4336 = vmatprep.subr.mxu0 0.0
  %4337 = vmatpush1.msra.mxu0 0.0
  %4338 = vmatprep.subr.mxu0 0.0
  %4339 = vmatpush1.msra.mxu0 0.0
  %4340 = vmatprep.subr.mxu0 0.0
  %4341 = vmatpush1.msra.mxu0 0.0
  %4342 = vmatprep.subr.mxu0 0.0
  %4343 = vmatpush1.msra.mxu0 0.0
  %4344 = vmatprep.subr.mxu0 0.0
  %4345 = vmatpush1.msra.mxu0 0.0
  %4346 = vmatprep.subr.mxu0 0.0
  %4347 = vmatpush1.msra.mxu0 0.0
  %4348 = vmatprep.subr.mxu0 0.0
  %4349 = vmatpush1.msra.mxu0 0.0
  %4350 = vmatprep.subr.mxu0 0.0
  %4351 = vmatpush1.msra.mxu0 0.0
  %4352 = vmatprep.subr.mxu0 0.0
  %4353 = vmatpush1.msra.mxu0 0.0
  %4354 = vmatprep.subr.mxu0 0.0
  %4355 = vmatpush1.msra.mxu0 0.0
  %4356 = vmatprep.subr.mxu0 0.0
  %4357 = vmatpush1.msra.mxu0 0.0
  %4358 = vmatprep.subr.mxu0 0.0
  %4359 = vmatpush1.msra.mxu0 0.0
  %4360 = vmatprep.subr.mxu0 0.0
  %4361 = vmatpush1.msra.mxu0 0.0
  %4362 = vmatprep.subr.mxu0 0.0
  %4363 = vmatpush1.msra.mxu0 0.0
  %4364 = vmatprep.subr.mxu0 0.0
  %4365 = vmatpush1.msra.mxu0 0.0
  %4366 = vmatprep.subr.mxu0 0.0
  %4367 = vmatpush1.msra.mxu0 0.0
  %4368 = vmatprep.subr.mxu0 0.0
  %4369 = vmatpush1.msra.mxu0 0.0
  %4370 = vmatprep.mubr.f32.mxu0 0.0
  %4371 = vmatmul.mubr.f32.gmra.mrb[0].mxu0 %v629
  %v4372 = vpop.f32.mrb[0].mxu0
  %v4373 = vadd.f32 0.0, %v4372
  %v4374 = vpop.f32.mrb[0].mxu0
  %4375 = vdwg.mxu0
  %v4376 = vmul.f32 %v4373, 0.001953125
  %4378 = vset.pattern.permute.xlu0 0
  %4379 = vperm.xlu0 %4378, %v4376
  %v4380 = vpop.permute.xlu0 %4379
  %v4382 = vsub.f32 %v4301, %v4380
  %v4383 = vsub.f32 %v4302, %v4380
  %v4384 = vmul.f32 %v4382, %v4382
  %v4385 = vmul.f32 %v4383, %v4383
  %v4386 = vadd.f32 %v4384, %v4385
  %4387 = vadd.xlane.f32.xlu0 %v4386
  %v4388 = vpop.xlane.xlu0 %4387
  %4389 = vmatprep.subr.mxu0 0.0
  %4390 = vmatpush1.msra.mxu0 %v4388
  %4391 = vmatprep.subr.mxu0 0.0
  %4392 = vmatpush1.msra.mxu0 0.0
  %4393 = vmatprep.subr.mxu0 0.0
  %4394 = vmatpush1.msra.mxu0 0.0
  %4395 = vmatprep.subr.mxu0 0.0
  %4396 = vmatpush1.msra.mxu0 0.0
  %4397 = vmatprep.subr.mxu0 0.0
  %4398 = vmatpush1.msra.mxu0 0.0
  %4399 = vmatprep.subr.mxu0 0.0
  %4400 = vmatpush1.msra.mxu0 0.0
  %4401 = vmatprep.subr.mxu0 0.0
  %4402 = vmatpush1.msra.mxu0 0.0
  %4403 = vmatprep.subr.mxu0 0.0
  %4404 = vmatpush1.msra.mxu0 0.0
  %4405 = vmatprep.subr.mxu0 0.0
  %4406 = vmatpush1.msra.mxu0 0.0
  %4407 = vmatprep.subr.mxu0 0.0
  %4408 = vmatpush1.msra.mxu0 0.0
  %4409 = vmatprep.subr.mxu0 0.0
  %4410 = vmatpush1.msra.mxu0 0.0
  %4411 = vmatprep.subr.mxu0 0.0
  %4412 = vmatpush1.msra.mxu0 0.0
  %4413 = vmatprep.subr.mxu0 0.0
  %4414 = vmatpush1.msra.mxu0 0.0
  %4415 = vmatprep.subr.mxu0 0.0
  %4416 = vmatpush1.msra.mxu0 0.0
  %4417 = vmatprep.subr.mxu0 0.0
  %4418 = vmatpush1.msra.mxu0 0.0
  %4419 = vmatprep.subr.mxu0 0.0
  %4420 = vmatpush1.msra.mxu0 0.0
  %4421 = vmatprep.subr.mxu0 0.0
  %4422 = vmatpush1.msra.mxu0 0.0
  %4423 = vmatprep.subr.mxu0 0.0
  %4424 = vmatpush1.msra.mxu0 0.0
  %4425 = vmatprep.subr.mxu0 0.0
  %4426 = vmatpush1.msra.mxu0 0.0
  %4427 = vmatprep.subr.mxu0 0.0
  %4428 = vmatpush1.msra.mxu0 0.0
  %4429 = vmatprep.subr.mxu0 0.0
  %4430 = vmatpush1.msra.mxu0 0.0
  %4431 = vmatprep.subr.mxu0 0.0
  %4432 = vmatpush1.msra.mxu0 0.0
  %4433 = vmatprep.subr.mxu0 0.0
  %4434 = vmatpush1.msra.mxu0 0.0
  %4435 = vmatprep.subr.mxu0 0.0
  %4436 = vmatpush1.msra.mxu0 0.0
  %4437 = vmatprep.subr.mxu0 0.0
  %4438 = vmatpush1.msra.mxu0 0.0
  %4439 = vmatprep.subr.mxu0 0.0
  %4440 = vmatpush1.msra.mxu0 0.0
  %4441 = vmatprep.subr.mxu0 0.0
  %4442 = vmatpush1.msra.mxu0 0.0
  %4443 = vmatprep.subr.mxu0 0.0
  %4444 = vmatpush1.msra.mxu0 0.0
  %4445 = vmatprep.subr.mxu0 0.0
  %4446 = vmatpush1.msra.mxu0 0.0
  %4447 = vmatprep.subr.mxu0 0.0
  %4448 = vmatpush1.msra.mxu0 0.0
  %4449 = vmatprep.subr.mxu0 0.0
  %4450 = vmatpush1.msra.mxu0 0.0
  %4451 = vmatprep.subr.mxu0 0.0
  %4452 = vmatpush1.msra.mxu0 0.0
  %4453 = vmatprep.mubr.f32.mxu0 0.0
  %4454 = vmatmul.mubr.f32.gmra.mrb[0].mxu0 %v629
  %v4455 = vpop.f32.mrb[0].mxu0
  %v4456 = vadd.f32 0.0, %v4455
  %v4457 = vpop.f32.mrb[0].mxu0
  %4458 = vdwg.mxu0
  %v4459 = vmul.f32 %v4456, 0.001953125
  %4461 = vset.pattern.permute.xlu0 0
  %4462 = vperm.xlu0 %4461, %v4290
  %v4463 = vpop.permute.xlu0 %4462
  %v4465 = vmul.f32 %v4463, %v4382
  %v4466 = vmul.f32 %v4463, %v4383
  %v4467 = vadd.f32 %v4459, 1e-05
  %v4468 = vrsqrt.pop %v4467
  %4470 = vset.pattern.permute.xlu0 0
  %4471 = vperm.xlu0 %4470, %v4468
  %v4472 = vpop.permute.xlu0 %4471
  %v4474 = vmul.f32 %v4465, %v4472
  %v4475 = vmul.f32 %v4466, %v4472
  %4477 = vset.pattern.permute.xlu0 0
  %4478 = vperm.xlu0 %4477, %v4292
  %v4479 = vpop.permute.xlu0 %4478
  %v4481 = vadd.f32 %v4474, %v4479
  %v4482 = vadd.f32 %v4475, %v4479
  %s4483 = scalar_lea.vmem %s8, 216
  %v4484 = vld [vmem:[%s4483] sm:$0xff]
  %v4485 = vld [vmem:[%s4483 + $0x8] sm:$0xff]
  %v4486 = vld [vmem:[%s4483 + $0x10] sm:$0xff]
  %v4487 = vld [vmem:[%s4483 + $0x18] sm:$0xff]
  %v4488 = vld [vmem:[%s4483 + $0x20] sm:$0xff]
  %v4489 = vld [vmem:[%s4483 + $0x28] sm:$0xff]
  %v4490 = vld [vmem:[%s4483 + $0x30] sm:$0xff]
  %v4491 = vld [vmem:[%s4483 + $0x38] sm:$0xff]
  %v4492 = vld [vmem:[%s4483 + $0x40] sm:$0xff]
  %4493 = vst [vmem:[#allocation2 + $0x8] sm:$0xff] %v4481
  %4494 = vst [vmem:[#allocation2 + $0x10] sm:$0xff] %v4482
  %v4495 = vld [vmem:[#allocation2] sm:$0xff]
  %v4496 = vld [vmem:[#allocation2 + $0x8] sm:$0xff]
  %v4497 = vld [vmem:[#allocation2 + $0x10] sm:$0xff]
  %v4498 = vmul.f32 %v4495, %v832
  %v4499 = vmul.f32 %v4496, %v836
  %v4500 = vmul.f32 %v4497, %v834
  %4504 = vrot.lane.b32.xlu0 %v4495, 16
  %v4505 = vpop.permute.xlu0 %4504
  %4506 = vrot.lane.b32.xlu0 %v4496, 16
  %v4507 = vpop.permute.xlu0 %4506
  %4508 = vrot.lane.b32.xlu0 %v4497, 16
  %v4509 = vpop.permute.xlu0 %4508
  %v4510 = vsel %vm852, %v4505, %v4507
  %v4511 = vsel %vm852, %v4507, %v4509
  %v4515 = vsel %vm627, %v4485, 0
  %4517 = vmatprep.subr.mxu0 %v4511
  %4518 = vmatpush1.msra.mxu0 %v4510
  %4519 = vmatprep.subr.mxu0 0.0
  %4520 = vmatpush1.msra.mxu0 0.0
  %4521 = vmatprep.subr.mxu0 0.0
  %4522 = vmatpush1.msra.mxu0 0.0
  %4523 = vmatprep.subr.mxu0 0.0
  %4524 = vmatpush1.msra.mxu0 0.0
  %4525 = vmatprep.subr.mxu0 0.0
  %4526 = vmatpush1.msra.mxu0 0.0
  %4527 = vmatprep.subr.mxu0 0.0
  %4528 = vmatpush1.msra.mxu0 0.0
  %4529 = vmatprep.subr.mxu0 0.0
  %4530 = vmatpush1.msra.mxu0 0.0
  %4531 = vmatprep.subr.mxu0 0.0
  %4532 = vmatpush1.msra.mxu0 0.0
  %4533 = vmatprep.subr.mxu0 0.0
  %4534 = vmatpush1.msra.mxu0 0.0
  %4535 = vmatprep.subr.mxu0 0.0
  %4536 = vmatpush1.msra.mxu0 0.0
  %4537 = vmatprep.subr.mxu0 0.0
  %4538 = vmatpush1.msra.mxu0 0.0
  %4539 = vmatprep.subr.mxu0 0.0
  %4540 = vmatpush1.msra.mxu0 0.0
  %4541 = vmatprep.subr.mxu0 0.0
  %4542 = vmatpush1.msra.mxu0 0.0
  %4543 = vmatprep.subr.mxu0 0.0
  %4544 = vmatpush1.msra.mxu0 0.0
  %4545 = vmatprep.subr.mxu0 0.0
  %4546 = vmatpush1.msra.mxu0 0.0
  %4547 = vmatprep.subr.mxu0 0.0
  %4548 = vmatpush1.msra.mxu0 0.0
  %4549 = vmatprep.subr.mxu0 0.0
  %4550 = vmatpush1.msra.mxu0 0.0
  %4551 = vmatprep.subr.mxu0 0.0
  %4552 = vmatpush1.msra.mxu0 0.0
  %4553 = vmatprep.subr.mxu0 0.0
  %4554 = vmatpush1.msra.mxu0 0.0
  %4555 = vmatprep.subr.mxu0 0.0
  %4556 = vmatpush1.msra.mxu0 0.0
  %4557 = vmatprep.subr.mxu0 0.0
  %4558 = vmatpush1.msra.mxu0 0.0
  %4559 = vmatprep.subr.mxu0 0.0
  %4560 = vmatpush1.msra.mxu0 0.0
  %4561 = vmatprep.subr.mxu0 0.0
  %4562 = vmatpush1.msra.mxu0 0.0
  %4563 = vmatprep.subr.mxu0 0.0
  %4564 = vmatpush1.msra.mxu0 0.0
  %4565 = vmatprep.subr.mxu0 0.0
  %4566 = vmatpush1.msra.mxu0 0.0
  %4567 = vmatprep.subr.mxu0 0.0
  %4568 = vmatpush1.msra.mxu0 0.0
  %4569 = vmatprep.subr.mxu0 0.0
  %4570 = vmatpush1.msra.mxu0 0.0
  %4571 = vmatprep.subr.mxu0 0.0
  %4572 = vmatpush1.msra.mxu0 0.0
  %4573 = vmatprep.subr.mxu0 0.0
  %4574 = vmatpush1.msra.mxu0 0.0
  %4575 = vmatprep.subr.mxu0 0.0
  %4576 = vmatpush1.msra.mxu0 0.0
  %4577 = vmatprep.subr.mxu0 0.0
  %4578 = vmatpush1.msra.mxu0 0.0
  %4579 = vmatprep.subr.mxu0 0.0
  %4580 = vmatpush1.msra.mxu0 0.0
  %4581 = vmatprep.mubr.f32.mxu0 0.0
  %4582 = vmatmul.mubr.f32.gmra.mrb[0].mxu0 %v4515
  %v4583 = vpop.f32.mrb[0].mxu0
  %v4584 = vadd.f32 0.0, %v4583
  %v4585 = vpop.f32.mrb[0].mxu0
  %v4586 = vadd.f32 0.0, %v4585
  %4587 = vdwg.mxu0
  %4591 = vrot.lane.b32.xlu0 %v4498, 17
  %v4592 = vpop.permute.xlu0 %4591
  %4593 = vrot.lane.b32.xlu0 %v4499, 17
  %v4594 = vpop.permute.xlu0 %4593
  %4595 = vrot.lane.b32.xlu0 %v4500, 17
  %v4596 = vpop.permute.xlu0 %4595
  %v4597 = vsel %vm940, %v4592, %v4594
  %v4598 = vsel %vm940, %v4594, %v4596
  %v4602 = vsel %vm627, %v4484, 0
  %4604 = vmatprep.subr.mxu0 %v4598
  %4605 = vmatpush1.msra.mxu0 %v4597
  %4606 = vmatprep.subr.mxu0 0.0
  %4607 = vmatpush1.msra.mxu0 0.0
  %4608 = vmatprep.subr.mxu0 0.0
  %4609 = vmatpush1.msra.mxu0 0.0
  %4610 = vmatprep.subr.mxu0 0.0
  %4611 = vmatpush1.msra.mxu0 0.0
  %4612 = vmatprep.subr.mxu0 0.0
  %4613 = vmatpush1.msra.mxu0 0.0
  %4614 = vmatprep.subr.mxu0 0.0
  %4615 = vmatpush1.msra.mxu0 0.0
  %4616 = vmatprep.subr.mxu0 0.0
  %4617 = vmatpush1.msra.mxu0 0.0
  %4618 = vmatprep.subr.mxu0 0.0
  %4619 = vmatpush1.msra.mxu0 0.0
  %4620 = vmatprep.subr.mxu0 0.0
  %4621 = vmatpush1.msra.mxu0 0.0
  %4622 = vmatprep.subr.mxu0 0.0
  %4623 = vmatpush1.msra.mxu0 0.0
  %4624 = vmatprep.subr.mxu0 0.0
  %4625 = vmatpush1.msra.mxu0 0.0
  %4626 = vmatprep.subr.mxu0 0.0
  %4627 = vmatpush1.msra.mxu0 0.0
  %4628 = vmatprep.subr.mxu0 0.0
  %4629 = vmatpush1.msra.mxu0 0.0
  %4630 = vmatprep.subr.mxu0 0.0
  %4631 = vmatpush1.msra.mxu0 0.0
  %4632 = vmatprep.subr.mxu0 0.0
  %4633 = vmatpush1.msra.mxu0 0.0
  %4634 = vmatprep.subr.mxu0 0.0
  %4635 = vmatpush1.msra.mxu0 0.0
  %4636 = vmatprep.subr.mxu0 0.0
  %4637 = vmatpush1.msra.mxu0 0.0
  %4638 = vmatprep.subr.mxu0 0.0
  %4639 = vmatpush1.msra.mxu0 0.0
  %4640 = vmatprep.subr.mxu0 0.0
  %4641 = vmatpush1.msra.mxu0 0.0
  %4642 = vmatprep.subr.mxu0 0.0
  %4643 = vmatpush1.msra.mxu0 0.0
  %4644 = vmatprep.subr.mxu0 0.0
  %4645 = vmatpush1.msra.mxu0 0.0
  %4646 = vmatprep.subr.mxu0 0.0
  %4647 = vmatpush1.msra.mxu0 0.0
  %4648 = vmatprep.subr.mxu0 0.0
  %4649 = vmatpush1.msra.mxu0 0.0
  %4650 = vmatprep.subr.mxu0 0.0
  %4651 = vmatpush1.msra.mxu0 0.0
  %4652 = vmatprep.subr.mxu0 0.0
  %4653 = vmatpush1.msra.mxu0 0.0
  %4654 = vmatprep.subr.mxu0 0.0
  %4655 = vmatpush1.msra.mxu0 0.0
  %4656 = vmatprep.subr.mxu0 0.0
  %4657 = vmatpush1.msra.mxu0 0.0
  %4658 = vmatprep.subr.mxu0 0.0
  %4659 = vmatpush1.msra.mxu0 0.0
  %4660 = vmatprep.subr.mxu0 0.0
  %4661 = vmatpush1.msra.mxu0 0.0
  %4662 = vmatprep.subr.mxu0 0.0
  %4663 = vmatpush1.msra.mxu0 0.0
  %4664 = vmatprep.subr.mxu0 0.0
  %4665 = vmatpush1.msra.mxu0 0.0
  %4666 = vmatprep.subr.mxu0 0.0
  %4667 = vmatpush1.msra.mxu0 0.0
  %4668 = vmatprep.mubr.f32.mxu0 0.0
  %4669 = vmatmul.mubr.f32.gmra.mrb[0].mxu0 %v4602
  %v4670 = vpop.f32.mrb[0].mxu0
  %v4671 = vadd.f32 %v4584, %v4670
  %v4672 = vpop.f32.mrb[0].mxu0
  %v4673 = vadd.f32 %v4586, %v4672
  %4674 = vdwg.mxu0
  %v4675 = vmul.f32 %v4495, %v1029
  %v4676 = vmul.f32 %v4496, %v1033
  %v4677 = vmul.f32 %v4497, %v1031
  %4681 = vrot.lane.b32.xlu0 %v4675, 15
  %v4682 = vpop.permute.xlu0 %4681
  %4683 = vrot.lane.b32.xlu0 %v4676, 15
  %v4684 = vpop.permute.xlu0 %4683
  %4685 = vrot.lane.b32.xlu0 %v4677, 15
  %v4686 = vpop.permute.xlu0 %4685
  %v4687 = vsel %vm1049, %v4682, %v4684
  %v4688 = vsel %vm1049, %v4684, %v4686
  %v4692 = vsel %vm627, %v4486, 0
  %4694 = vmatprep.subr.mxu0 %v4688
  %4695 = vmatpush1.msra.mxu0 %v4687
  %4696 = vmatprep.subr.mxu0 0.0
  %4697 = vmatpush1.msra.mxu0 0.0
  %4698 = vmatprep.subr.mxu0 0.0
  %4699 = vmatpush1.msra.mxu0 0.0
  %4700 = vmatprep.subr.mxu0 0.0
  %4701 = vmatpush1.msra.mxu0 0.0
  %4702 = vmatprep.subr.mxu0 0.0
  %4703 = vmatpush1.msra.mxu0 0.0
  %4704 = vmatprep.subr.mxu0 0.0
  %4705 = vmatpush1.msra.mxu0 0.0
  %4706 = vmatprep.subr.mxu0 0.0
  %4707 = vmatpush1.msra.mxu0 0.0
  %4708 = vmatprep.subr.mxu0 0.0
  %4709 = vmatpush1.msra.mxu0 0.0
  %4710 = vmatprep.subr.mxu0 0.0
  %4711 = vmatpush1.msra.mxu0 0.0
  %4712 = vmatprep.subr.mxu0 0.0
  %4713 = vmatpush1.msra.mxu0 0.0
  %4714 = vmatprep.subr.mxu0 0.0
  %4715 = vmatpush1.msra.mxu0 0.0
  %4716 = vmatprep.subr.mxu0 0.0
  %4717 = vmatpush1.msra.mxu0 0.0
  %4718 = vmatprep.subr.mxu0 0.0
  %4719 = vmatpush1.msra.mxu0 0.0
  %4720 = vmatprep.subr.mxu0 0.0
  %4721 = vmatpush1.msra.mxu0 0.0
  %4722 = vmatprep.subr.mxu0 0.0
  %4723 = vmatpush1.msra.mxu0 0.0
  %4724 = vmatprep.subr.mxu0 0.0
  %4725 = vmatpush1.msra.mxu0 0.0
  %4726 = vmatprep.subr.mxu0 0.0
  %4727 = vmatpush1.msra.mxu0 0.0
  %4728 = vmatprep.subr.mxu0 0.0
  %4729 = vmatpush1.msra.mxu0 0.0
  %4730 = vmatprep.subr.mxu0 0.0
  %4731 = vmatpush1.msra.mxu0 0.0
  %4732 = vmatprep.subr.mxu0 0.0
  %4733 = vmatpush1.msra.mxu0 0.0
  %4734 = vmatprep.subr.mxu0 0.0
  %4735 = vmatpush1.msra.mxu0 0.0
  %4736 = vmatprep.subr.mxu0 0.0
  %4737 = vmatpush1.msra.mxu0 0.0
  %4738 = vmatprep.subr.mxu0 0.0
  %4739 = vmatpush1.msra.mxu0 0.0
  %4740 = vmatprep.subr.mxu0 0.0
  %4741 = vmatpush1.msra.mxu0 0.0
  %4742 = vmatprep.subr.mxu0 0.0
  %4743 = vmatpush1.msra.mxu0 0.0
  %4744 = vmatprep.subr.mxu0 0.0
  %4745 = vmatpush1.msra.mxu0 0.0
  %4746 = vmatprep.subr.mxu0 0.0
  %4747 = vmatpush1.msra.mxu0 0.0
  %4748 = vmatprep.subr.mxu0 0.0
  %4749 = vmatpush1.msra.mxu0 0.0
  %4750 = vmatprep.subr.mxu0 0.0
  %4751 = vmatpush1.msra.mxu0 0.0
  %4752 = vmatprep.subr.mxu0 0.0
  %4753 = vmatpush1.msra.mxu0 0.0
  %4754 = vmatprep.subr.mxu0 0.0
  %4755 = vmatpush1.msra.mxu0 0.0
  %4756 = vmatprep.subr.mxu0 0.0
  %4757 = vmatpush1.msra.mxu0 0.0
  %4758 = vmatprep.mubr.f32.mxu0 0.0
  %4759 = vmatmul.mubr.f32.gmra.mrb[0].mxu0 %v4692
  %v4760 = vpop.f32.mrb[0].mxu0
  %v4761 = vadd.f32 0.0, %v4760
  %v4762 = vpop.f32.mrb[0].mxu0
  %v4763 = vadd.f32 0.0, %v4762
  %4764 = vdwg.mxu0
  %v4765 = vadd.f32 %v4671, %v4761
  %v4766 = vadd.f32 %v4673, %v4763
  %v4767 = vmul.f32 %v4495, %v1131
  %v4768 = vmul.f32 %v4496, %v1135
  %v4769 = vmul.f32 %v4497, %v1133
  %4773 = vrot.lane.b32.xlu0 %v4767, 1
  %v4774 = vpop.permute.xlu0 %4773
  %4775 = vrot.lane.b32.xlu0 %v4768, 1
  %v4776 = vpop.permute.xlu0 %4775
  %4777 = vrot.lane.b32.xlu0 %v4769, 1
  %v4778 = vpop.permute.xlu0 %4777
  %v4779 = vsel %vm1151, %v4774, %v4776
  %v4780 = vsel %vm1151, %v4776, %v4778
  %v4784 = vsel %vm627, %v4487, 0
  %4786 = vmatprep.subr.mxu0 %v4780
  %4787 = vmatpush1.msra.mxu0 %v4779
  %4788 = vmatprep.subr.mxu0 0.0
  %4789 = vmatpush1.msra.mxu0 0.0
  %4790 = vmatprep.subr.mxu0 0.0
  %4791 = vmatpush1.msra.mxu0 0.0
  %4792 = vmatprep.subr.mxu0 0.0
  %4793 = vmatpush1.msra.mxu0 0.0
  %4794 = vmatprep.subr.mxu0 0.0
  %4795 = vmatpush1.msra.mxu0 0.0
  %4796 = vmatprep.subr.mxu0 0.0
  %4797 = vmatpush1.msra.mxu0 0.0
  %4798 = vmatprep.subr.mxu0 0.0
  %4799 = vmatpush1.msra.mxu0 0.0
  %4800 = vmatprep.subr.mxu0 0.0
  %4801 = vmatpush1.msra.mxu0 0.0
  %4802 = vmatprep.subr.mxu0 0.0
  %4803 = vmatpush1.msra.mxu0 0.0
  %4804 = vmatprep.subr.mxu0 0.0
  %4805 = vmatpush1.msra.mxu0 0.0
  %4806 = vmatprep.subr.mxu0 0.0
  %4807 = vmatpush1.msra.mxu0 0.0
  %4808 = vmatprep.subr.mxu0 0.0
  %4809 = vmatpush1.msra.mxu0 0.0
  %4810 = vmatprep.subr.mxu0 0.0
  %4811 = vmatpush1.msra.mxu0 0.0
  %4812 = vmatprep.subr.mxu0 0.0
  %4813 = vmatpush1.msra.mxu0 0.0
  %4814 = vmatprep.subr.mxu0 0.0
  %4815 = vmatpush1.msra.mxu0 0.0
  %4816 = vmatprep.subr.mxu0 0.0
  %4817 = vmatpush1.msra.mxu0 0.0
  %4818 = vmatprep.subr.mxu0 0.0
  %4819 = vmatpush1.msra.mxu0 0.0
  %4820 = vmatprep.subr.mxu0 0.0
  %4821 = vmatpush1.msra.mxu0 0.0
  %4822 = vmatprep.subr.mxu0 0.0
  %4823 = vmatpush1.msra.mxu0 0.0
  %4824 = vmatprep.subr.mxu0 0.0
  %4825 = vmatpush1.msra.mxu0 0.0
  %4826 = vmatprep.subr.mxu0 0.0
  %4827 = vmatpush1.msra.mxu0 0.0
  %4828 = vmatprep.subr.mxu0 0.0
  %4829 = vmatpush1.msra.mxu0 0.0
  %4830 = vmatprep.subr.mxu0 0.0
  %4831 = vmatpush1.msra.mxu0 0.0
  %4832 = vmatprep.subr.mxu0 0.0
  %4833 = vmatpush1.msra.mxu0 0.0
  %4834 = vmatprep.subr.mxu0 0.0
  %4835 = vmatpush1.msra.mxu0 0.0
  %4836 = vmatprep.subr.mxu0 0.0
  %4837 = vmatpush1.msra.mxu0 0.0
  %4838 = vmatprep.subr.mxu0 0.0
  %4839 = vmatpush1.msra.mxu0 0.0
  %4840 = vmatprep.subr.mxu0 0.0
  %4841 = vmatpush1.msra.mxu0 0.0
  %4842 = vmatprep.subr.mxu0 0.0
  %4843 = vmatpush1.msra.mxu0 0.0
  %4844 = vmatprep.subr.mxu0 0.0
  %4845 = vmatpush1.msra.mxu0 0.0
  %4846 = vmatprep.subr.mxu0 0.0
  %4847 = vmatpush1.msra.mxu0 0.0
  %4848 = vmatprep.subr.mxu0 0.0
  %4849 = vmatpush1.msra.mxu0 0.0
  %4850 = vmatprep.mubr.f32.mxu0 0.0
  %4851 = vmatmul.mubr.f32.gmra.mrb[0].mxu0 %v4784
  %v4852 = vpop.f32.mrb[0].mxu0
  %v4853 = vadd.f32 0.0, %v4852
  %v4854 = vpop.f32.mrb[0].mxu0
  %v4855 = vadd.f32 0.0, %v4854
  %4856 = vdwg.mxu0
  %v4857 = vadd.f32 %v4765, %v4853
  %v4858 = vadd.f32 %v4766, %v4855
  %v4860 = vsel %vm627, %v4488, 0
  %4862 = vmatprep.subr.mxu0 %v4497
  %4863 = vmatpush1.msra.mxu0 %v4496
  %4864 = vmatprep.subr.mxu0 0.0
  %4865 = vmatpush1.msra.mxu0 0.0
  %4866 = vmatprep.subr.mxu0 0.0
  %4867 = vmatpush1.msra.mxu0 0.0
  %4868 = vmatprep.subr.mxu0 0.0
  %4869 = vmatpush1.msra.mxu0 0.0
  %4870 = vmatprep.subr.mxu0 0.0
  %4871 = vmatpush1.msra.mxu0 0.0
  %4872 = vmatprep.subr.mxu0 0.0
  %4873 = vmatpush1.msra.mxu0 0.0
  %4874 = vmatprep.subr.mxu0 0.0
  %4875 = vmatpush1.msra.mxu0 0.0
  %4876 = vmatprep.subr.mxu0 0.0
  %4877 = vmatpush1.msra.mxu0 0.0
  %4878 = vmatprep.subr.mxu0 0.0
  %4879 = vmatpush1.msra.mxu0 0.0
  %4880 = vmatprep.subr.mxu0 0.0
  %4881 = vmatpush1.msra.mxu0 0.0
  %4882 = vmatprep.subr.mxu0 0.0
  %4883 = vmatpush1.msra.mxu0 0.0
  %4884 = vmatprep.subr.mxu0 0.0
  %4885 = vmatpush1.msra.mxu0 0.0
  %4886 = vmatprep.subr.mxu0 0.0
  %4887 = vmatpush1.msra.mxu0 0.0
  %4888 = vmatprep.subr.mxu0 0.0
  %4889 = vmatpush1.msra.mxu0 0.0
  %4890 = vmatprep.subr.mxu0 0.0
  %4891 = vmatpush1.msra.mxu0 0.0
  %4892 = vmatprep.subr.mxu0 0.0
  %4893 = vmatpush1.msra.mxu0 0.0
  %4894 = vmatprep.subr.mxu0 0.0
  %4895 = vmatpush1.msra.mxu0 0.0
  %4896 = vmatprep.subr.mxu0 0.0
  %4897 = vmatpush1.msra.mxu0 0.0
  %4898 = vmatprep.subr.mxu0 0.0
  %4899 = vmatpush1.msra.mxu0 0.0
  %4900 = vmatprep.subr.mxu0 0.0
  %4901 = vmatpush1.msra.mxu0 0.0
  %4902 = vmatprep.subr.mxu0 0.0
  %4903 = vmatpush1.msra.mxu0 0.0
  %4904 = vmatprep.subr.mxu0 0.0
  %4905 = vmatpush1.msra.mxu0 0.0
  %4906 = vmatprep.subr.mxu0 0.0
  %4907 = vmatpush1.msra.mxu0 0.0
  %4908 = vmatprep.subr.mxu0 0.0
  %4909 = vmatpush1.msra.mxu0 0.0
  %4910 = vmatprep.subr.mxu0 0.0
  %4911 = vmatpush1.msra.mxu0 0.0
  %4912 = vmatprep.subr.mxu0 0.0
  %4913 = vmatpush1.msra.mxu0 0.0
  %4914 = vmatprep.subr.mxu0 0.0
  %4915 = vmatpush1.msra.mxu0 0.0
  %4916 = vmatprep.subr.mxu0 0.0
  %4917 = vmatpush1.msra.mxu0 0.0
  %4918 = vmatprep.subr.mxu0 0.0
  %4919 = vmatpush1.msra.mxu0 0.0
  %4920 = vmatprep.subr.mxu0 0.0
  %4921 = vmatpush1.msra.mxu0 0.0
  %4922 = vmatprep.subr.mxu0 0.0
  %4923 = vmatpush1.msra.mxu0 0.0
  %4924 = vmatprep.subr.mxu0 0.0
  %4925 = vmatpush1.msra.mxu0 0.0
  %4926 = vmatprep.mubr.f32.mxu0 0.0
  %4927 = vmatmul.mubr.f32.gmra.mrb[0].mxu0 %v4860
  %v4928 = vpop.f32.mrb[0].mxu0
  %v4929 = vadd.f32 0.0, %v4928
  %v4930 = vpop.f32.mrb[0].mxu0
  %v4931 = vadd.f32 0.0, %v4930
  %4932 = vdwg.mxu0
  %v4933 = vadd.f32 %v4857, %v4929
  %v4934 = vadd.f32 %v4858, %v4931
  %v4935 = vld [vmem:[#allocation2 + $0x8] sm:$0xff]
  %v4936 = vld [vmem:[#allocation2 + $0x10] sm:$0xff]
  %v4937 = vld [vmem:[#allocation2 + $0x18] sm:$0xff]
  %v4938 = vmul.f32 %v4935, %v1312
  %v4939 = vmul.f32 %v4936, %v1315
  %v4940 = vmul.f32 %v4937, %v1314
  %4944 = vrot.lane.b32.xlu0 %v4938, 127
  %v4945 = vpop.permute.xlu0 %4944
  %4946 = vrot.lane.b32.xlu0 %v4939, 127
  %v4947 = vpop.permute.xlu0 %4946
  %4948 = vrot.lane.b32.xlu0 %v4940, 127
  %v4949 = vpop.permute.xlu0 %4948
  %v4950 = vsel %vm1134, %v4945, %v4947
  %v4951 = vsel %vm1134, %v4947, %v4949
  %v4955 = vsel %vm627, %v4489, 0
  %4957 = vmatprep.subr.mxu0 %v4951
  %4958 = vmatpush1.msra.mxu0 %v4950
  %4959 = vmatprep.subr.mxu0 0.0
  %4960 = vmatpush1.msra.mxu0 0.0
  %4961 = vmatprep.subr.mxu0 0.0
  %4962 = vmatpush1.msra.mxu0 0.0
  %4963 = vmatprep.subr.mxu0 0.0
  %4964 = vmatpush1.msra.mxu0 0.0
  %4965 = vmatprep.subr.mxu0 0.0
  %4966 = vmatpush1.msra.mxu0 0.0
  %4967 = vmatprep.subr.mxu0 0.0
  %4968 = vmatpush1.msra.mxu0 0.0
  %4969 = vmatprep.subr.mxu0 0.0
  %4970 = vmatpush1.msra.mxu0 0.0
  %4971 = vmatprep.subr.mxu0 0.0
  %4972 = vmatpush1.msra.mxu0 0.0
  %4973 = vmatprep.subr.mxu0 0.0
  %4974 = vmatpush1.msra.mxu0 0.0
  %4975 = vmatprep.subr.mxu0 0.0
  %4976 = vmatpush1.msra.mxu0 0.0
  %4977 = vmatprep.subr.mxu0 0.0
  %4978 = vmatpush1.msra.mxu0 0.0
  %4979 = vmatprep.subr.mxu0 0.0
  %4980 = vmatpush1.msra.mxu0 0.0
  %4981 = vmatprep.subr.mxu0 0.0
  %4982 = vmatpush1.msra.mxu0 0.0
  %4983 = vmatprep.subr.mxu0 0.0
  %4984 = vmatpush1.msra.mxu0 0.0
  %4985 = vmatprep.subr.mxu0 0.0
  %4986 = vmatpush1.msra.mxu0 0.0
  %4987 = vmatprep.subr.mxu0 0.0
  %4988 = vmatpush1.msra.mxu0 0.0
  %4989 = vmatprep.subr.mxu0 0.0
  %4990 = vmatpush1.msra.mxu0 0.0
  %4991 = vmatprep.subr.mxu0 0.0
  %4992 = vmatpush1.msra.mxu0 0.0
  %4993 = vmatprep.subr.mxu0 0.0
  %4994 = vmatpush1.msra.mxu0 0.0
  %4995 = vmatprep.subr.mxu0 0.0
  %4996 = vmatpush1.msra.mxu0 0.0
  %4997 = vmatprep.subr.mxu0 0.0
  %4998 = vmatpush1.msra.mxu0 0.0
  %4999 = vmatprep.subr.mxu0 0.0
  %5000 = vmatpush1.msra.mxu0 0.0
  %5001 = vmatprep.subr.mxu0 0.0
  %5002 = vmatpush1.msra.mxu0 0.0
  %5003 = vmatprep.subr.mxu0 0.0
  %5004 = vmatpush1.msra.mxu0 0.0
  %5005 = vmatprep.subr.mxu0 0.0
  %5006 = vmatpush1.msra.mxu0 0.0
  %5007 = vmatprep.subr.mxu0 0.0
  %5008 = vmatpush1.msra.mxu0 0.0
  %5009 = vmatprep.subr.mxu0 0.0
  %5010 = vmatpush1.msra.mxu0 0.0
  %5011 = vmatprep.subr.mxu0 0.0
  %5012 = vmatpush1.msra.mxu0 0.0
  %5013 = vmatprep.subr.mxu0 0.0
  %5014 = vmatpush1.msra.mxu0 0.0
  %5015 = vmatprep.subr.mxu0 0.0
  %5016 = vmatpush1.msra.mxu0 0.0
  %5017 = vmatprep.subr.mxu0 0.0
  %5018 = vmatpush1.msra.mxu0 0.0
  %5019 = vmatprep.subr.mxu0 0.0
  %5020 = vmatpush1.msra.mxu0 0.0
  %5021 = vmatprep.mubr.f32.mxu0 0.0
  %5022 = vmatmul.mubr.f32.gmra.mrb[0].mxu0 %v4955
  %v5023 = vpop.f32.mrb[0].mxu0
  %v5024 = vadd.f32 0.0, %v5023
  %v5025 = vpop.f32.mrb[0].mxu0
  %v5026 = vadd.f32 0.0, %v5025
  %5027 = vdwg.mxu0
  %v5028 = vadd.f32 %v4933, %v5024
  %v5029 = vadd.f32 %v4934, %v5026
  %v5030 = vmul.f32 %v4935, %v1412
  %v5031 = vmul.f32 %v4936, %v1415
  %v5032 = vmul.f32 %v4937, %v1414
  %5036 = vrot.lane.b32.xlu0 %v5030, 113
  %v5037 = vpop.permute.xlu0 %5036
  %5038 = vrot.lane.b32.xlu0 %v5031, 113
  %v5039 = vpop.permute.xlu0 %5038
  %5040 = vrot.lane.b32.xlu0 %v5032, 113
  %v5041 = vpop.permute.xlu0 %5040
  %v5042 = vsel %vm1032, %v5037, %v5039
  %v5043 = vsel %vm1032, %v5039, %v5041
  %v5047 = vsel %vm627, %v4490, 0
  %5049 = vmatprep.subr.mxu0 %v5043
  %5050 = vmatpush1.msra.mxu0 %v5042
  %5051 = vmatprep.subr.mxu0 0.0
  %5052 = vmatpush1.msra.mxu0 0.0
  %5053 = vmatprep.subr.mxu0 0.0
  %5054 = vmatpush1.msra.mxu0 0.0
  %5055 = vmatprep.subr.mxu0 0.0
  %5056 = vmatpush1.msra.mxu0 0.0
  %5057 = vmatprep.subr.mxu0 0.0
  %5058 = vmatpush1.msra.mxu0 0.0
  %5059 = vmatprep.subr.mxu0 0.0
  %5060 = vmatpush1.msra.mxu0 0.0
  %5061 = vmatprep.subr.mxu0 0.0
  %5062 = vmatpush1.msra.mxu0 0.0
  %5063 = vmatprep.subr.mxu0 0.0
  %5064 = vmatpush1.msra.mxu0 0.0
  %5065 = vmatprep.subr.mxu0 0.0
  %5066 = vmatpush1.msra.mxu0 0.0
  %5067 = vmatprep.subr.mxu0 0.0
  %5068 = vmatpush1.msra.mxu0 0.0
  %5069 = vmatprep.subr.mxu0 0.0
  %5070 = vmatpush1.msra.mxu0 0.0
  %5071 = vmatprep.subr.mxu0 0.0
  %5072 = vmatpush1.msra.mxu0 0.0
  %5073 = vmatprep.subr.mxu0 0.0
  %5074 = vmatpush1.msra.mxu0 0.0
  %5075 = vmatprep.subr.mxu0 0.0
  %5076 = vmatpush1.msra.mxu0 0.0
  %5077 = vmatprep.subr.mxu0 0.0
  %5078 = vmatpush1.msra.mxu0 0.0
  %5079 = vmatprep.subr.mxu0 0.0
  %5080 = vmatpush1.msra.mxu0 0.0
  %5081 = vmatprep.subr.mxu0 0.0
  %5082 = vmatpush1.msra.mxu0 0.0
  %5083 = vmatprep.subr.mxu0 0.0
  %5084 = vmatpush1.msra.mxu0 0.0
  %5085 = vmatprep.subr.mxu0 0.0
  %5086 = vmatpush1.msra.mxu0 0.0
  %5087 = vmatprep.subr.mxu0 0.0
  %5088 = vmatpush1.msra.mxu0 0.0
  %5089 = vmatprep.subr.mxu0 0.0
  %5090 = vmatpush1.msra.mxu0 0.0
  %5091 = vmatprep.subr.mxu0 0.0
  %5092 = vmatpush1.msra.mxu0 0.0
  %5093 = vmatprep.subr.mxu0 0.0
  %5094 = vmatpush1.msra.mxu0 0.0
  %5095 = vmatprep.subr.mxu0 0.0
  %5096 = vmatpush1.msra.mxu0 0.0
  %5097 = vmatprep.subr.mxu0 0.0
  %5098 = vmatpush1.msra.mxu0 0.0
  %5099 = vmatprep.subr.mxu0 0.0
  %5100 = vmatpush1.msra.mxu0 0.0
  %5101 = vmatprep.subr.mxu0 0.0
  %5102 = vmatpush1.msra.mxu0 0.0
  %5103 = vmatprep.subr.mxu0 0.0
  %5104 = vmatpush1.msra.mxu0 0.0
  %5105 = vmatprep.subr.mxu0 0.0
  %5106 = vmatpush1.msra.mxu0 0.0
  %5107 = vmatprep.subr.mxu0 0.0
  %5108 = vmatpush1.msra.mxu0 0.0
  %5109 = vmatprep.subr.mxu0 0.0
  %5110 = vmatpush1.msra.mxu0 0.0
  %5111 = vmatprep.subr.mxu0 0.0
  %5112 = vmatpush1.msra.mxu0 0.0
  %5113 = vmatprep.mubr.f32.mxu0 0.0
  %5114 = vmatmul.mubr.f32.gmra.mrb[0].mxu0 %v5047
  %v5115 = vpop.f32.mrb[0].mxu0
  %v5116 = vadd.f32 0.0, %v5115
  %v5117 = vpop.f32.mrb[0].mxu0
  %v5118 = vadd.f32 0.0, %v5117
  %5119 = vdwg.mxu0
  %v5120 = vadd.f32 %v5028, %v5116
  %v5121 = vadd.f32 %v5029, %v5118
  %5125 = vrot.lane.b32.xlu0 %v4935, 112
  %v5126 = vpop.permute.xlu0 %5125
  %5127 = vrot.lane.b32.xlu0 %v4936, 112
  %v5128 = vpop.permute.xlu0 %5127
  %5129 = vrot.lane.b32.xlu0 %v4937, 112
  %v5130 = vpop.permute.xlu0 %5129
  %v5131 = vsel %vm1520, %v5126, %v5128
  %v5132 = vsel %vm1520, %v5128, %v5130
  %v5136 = vsel %vm627, %v4491, 0
  %5138 = vmatprep.subr.mxu0 %v5132
  %5139 = vmatpush1.msra.mxu0 %v5131
  %5140 = vmatprep.subr.mxu0 0.0
  %5141 = vmatpush1.msra.mxu0 0.0
  %5142 = vmatprep.subr.mxu0 0.0
  %5143 = vmatpush1.msra.mxu0 0.0
  %5144 = vmatprep.subr.mxu0 0.0
  %5145 = vmatpush1.msra.mxu0 0.0
  %5146 = vmatprep.subr.mxu0 0.0
  %5147 = vmatpush1.msra.mxu0 0.0
  %5148 = vmatprep.subr.mxu0 0.0
  %5149 = vmatpush1.msra.mxu0 0.0
  %5150 = vmatprep.subr.mxu0 0.0
  %5151 = vmatpush1.msra.mxu0 0.0
  %5152 = vmatprep.subr.mxu0 0.0
  %5153 = vmatpush1.msra.mxu0 0.0
  %5154 = vmatprep.subr.mxu0 0.0
  %5155 = vmatpush1.msra.mxu0 0.0
  %5156 = vmatprep.subr.mxu0 0.0
  %5157 = vmatpush1.msra.mxu0 0.0
  %5158 = vmatprep.subr.mxu0 0.0
  %5159 = vmatpush1.msra.mxu0 0.0
  %5160 = vmatprep.subr.mxu0 0.0
  %5161 = vmatpush1.msra.mxu0 0.0
  %5162 = vmatprep.subr.mxu0 0.0
  %5163 = vmatpush1.msra.mxu0 0.0
  %5164 = vmatprep.subr.mxu0 0.0
  %5165 = vmatpush1.msra.mxu0 0.0
  %5166 = vmatprep.subr.mxu0 0.0
  %5167 = vmatpush1.msra.mxu0 0.0
  %5168 = vmatprep.subr.mxu0 0.0
  %5169 = vmatpush1.msra.mxu0 0.0
  %5170 = vmatprep.subr.mxu0 0.0
  %5171 = vmatpush1.msra.mxu0 0.0
  %5172 = vmatprep.subr.mxu0 0.0
  %5173 = vmatpush1.msra.mxu0 0.0
  %5174 = vmatprep.subr.mxu0 0.0
  %5175 = vmatpush1.msra.mxu0 0.0
  %5176 = vmatprep.subr.mxu0 0.0
  %5177 = vmatpush1.msra.mxu0 0.0
  %5178 = vmatprep.subr.mxu0 0.0
  %5179 = vmatpush1.msra.mxu0 0.0
  %5180 = vmatprep.subr.mxu0 0.0
  %5181 = vmatpush1.msra.mxu0 0.0
  %5182 = vmatprep.subr.mxu0 0.0
  %5183 = vmatpush1.msra.mxu0 0.0
  %5184 = vmatprep.subr.mxu0 0.0
  %5185 = vmatpush1.msra.mxu0 0.0
  %5186 = vmatprep.subr.mxu0 0.0
  %5187 = vmatpush1.msra.mxu0 0.0
  %5188 = vmatprep.subr.mxu0 0.0
  %5189 = vmatpush1.msra.mxu0 0.0
  %5190 = vmatprep.subr.mxu0 0.0
  %5191 = vmatpush1.msra.mxu0 0.0
  %5192 = vmatprep.subr.mxu0 0.0
  %5193 = vmatpush1.msra.mxu0 0.0
  %5194 = vmatprep.subr.mxu0 0.0
  %5195 = vmatpush1.msra.mxu0 0.0
  %5196 = vmatprep.subr.mxu0 0.0
  %5197 = vmatpush1.msra.mxu0 0.0
  %5198 = vmatprep.subr.mxu0 0.0
  %5199 = vmatpush1.msra.mxu0 0.0
  %5200 = vmatprep.subr.mxu0 0.0
  %5201 = vmatpush1.msra.mxu0 0.0
  %5202 = vmatprep.mubr.f32.mxu0 0.0
  %5203 = vmatmul.mubr.f32.gmra.mrb[0].mxu0 %v5136
  %v5204 = vpop.f32.mrb[0].mxu0
  %v5205 = vadd.f32 0.0, %v5204
  %v5206 = vpop.f32.mrb[0].mxu0
  %v5207 = vadd.f32 0.0, %v5206
  %5208 = vdwg.mxu0
  %v5209 = vadd.f32 %v5120, %v5205
  %v5210 = vadd.f32 %v5121, %v5207
  %v5211 = vmul.f32 %v4935, %v1602
  %v5212 = vmul.f32 %v4936, %v1605
  %v5213 = vmul.f32 %v4937, %v1604
  %5217 = vrot.lane.b32.xlu0 %v5211, 111
  %v5218 = vpop.permute.xlu0 %5217
  %5219 = vrot.lane.b32.xlu0 %v5212, 111
  %v5220 = vpop.permute.xlu0 %5219
  %5221 = vrot.lane.b32.xlu0 %v5213, 111
  %v5222 = vpop.permute.xlu0 %5221
  %v5223 = vsel %vm835, %v5218, %v5220
  %v5224 = vsel %vm835, %v5220, %v5222
  %v5228 = vsel %vm627, %v4492, 0
  %5230 = vmatprep.subr.mxu0 %v5224
  %5231 = vmatpush1.msra.mxu0 %v5223
  %5232 = vmatprep.subr.mxu0 0.0
  %5233 = vmatpush1.msra.mxu0 0.0
  %5234 = vmatprep.subr.mxu0 0.0
  %5235 = vmatpush1.msra.mxu0 0.0
  %5236 = vmatprep.subr.mxu0 0.0
  %5237 = vmatpush1.msra.mxu0 0.0
  %5238 = vmatprep.subr.mxu0 0.0
  %5239 = vmatpush1.msra.mxu0 0.0
  %5240 = vmatprep.subr.mxu0 0.0
  %5241 = vmatpush1.msra.mxu0 0.0
  %5242 = vmatprep.subr.mxu0 0.0
  %5243 = vmatpush1.msra.mxu0 0.0
  %5244 = vmatprep.subr.mxu0 0.0
  %5245 = vmatpush1.msra.mxu0 0.0
  %5246 = vmatprep.subr.mxu0 0.0
  %5247 = vmatpush1.msra.mxu0 0.0
  %5248 = vmatprep.subr.mxu0 0.0
  %5249 = vmatpush1.msra.mxu0 0.0
  %5250 = vmatprep.subr.mxu0 0.0
  %5251 = vmatpush1.msra.mxu0 0.0
  %5252 = vmatprep.subr.mxu0 0.0
  %5253 = vmatpush1.msra.mxu0 0.0
  %5254 = vmatprep.subr.mxu0 0.0
  %5255 = vmatpush1.msra.mxu0 0.0
  %5256 = vmatprep.subr.mxu0 0.0
  %5257 = vmatpush1.msra.mxu0 0.0
  %5258 = vmatprep.subr.mxu0 0.0
  %5259 = vmatpush1.msra.mxu0 0.0
  %5260 = vmatprep.subr.mxu0 0.0
  %5261 = vmatpush1.msra.mxu0 0.0
  %5262 = vmatprep.subr.mxu0 0.0
  %5263 = vmatpush1.msra.mxu0 0.0
  %5264 = vmatprep.subr.mxu0 0.0
  %5265 = vmatpush1.msra.mxu0 0.0
  %5266 = vmatprep.subr.mxu0 0.0
  %5267 = vmatpush1.msra.mxu0 0.0
  %5268 = vmatprep.subr.mxu0 0.0
  %5269 = vmatpush1.msra.mxu0 0.0
  %5270 = vmatprep.subr.mxu0 0.0
  %5271 = vmatpush1.msra.mxu0 0.0
  %5272 = vmatprep.subr.mxu0 0.0
  %5273 = vmatpush1.msra.mxu0 0.0
  %5274 = vmatprep.subr.mxu0 0.0
  %5275 = vmatpush1.msra.mxu0 0.0
  %5276 = vmatprep.subr.mxu0 0.0
  %5277 = vmatpush1.msra.mxu0 0.0
  %5278 = vmatprep.subr.mxu0 0.0
  %5279 = vmatpush1.msra.mxu0 0.0
  %5280 = vmatprep.subr.mxu0 0.0
  %5281 = vmatpush1.msra.mxu0 0.0
  %5282 = vmatprep.subr.mxu0 0.0
  %5283 = vmatpush1.msra.mxu0 0.0
  %5284 = vmatprep.subr.mxu0 0.0
  %5285 = vmatpush1.msra.mxu0 0.0
  %5286 = vmatprep.subr.mxu0 0.0
  %5287 = vmatpush1.msra.mxu0 0.0
  %5288 = vmatprep.subr.mxu0 0.0
  %5289 = vmatpush1.msra.mxu0 0.0
  %5290 = vmatprep.subr.mxu0 0.0
  %5291 = vmatpush1.msra.mxu0 0.0
  %5292 = vmatprep.subr.mxu0 0.0
  %5293 = vmatpush1.msra.mxu0 0.0
  %5294 = vmatprep.mubr.f32.mxu0 0.0
  %5295 = vmatmul.mubr.f32.gmra.mrb[0].mxu0 %v5228
  %v5296 = vpop.f32.mrb[0].mxu0
  %v5297 = vadd.f32 0.0, %v5296
  %v5298 = vpop.f32.mrb[0].mxu0
  %v5299 = vadd.f32 0.0, %v5298
  %5300 = vdwg.mxu0
  %v5301 = vadd.f32 %v5209, %v5297
  %v5302 = vadd.f32 %v5210, %v5299
  %s5303 = scalar_lea.vmem %s9, 24
  %v5304 = vld [vmem:[%s5303] sm:$0xff]
  %5306 = vset.pattern.permute.xlu0 0
  %5307 = vperm.xlu0 %5306, %v5304
  %v5308 = vpop.permute.xlu0 %5307
  %v5310 = vadd.f32 %v5301, %v5308
  %v5311 = vadd.f32 %v5302, %v5308
  %v5312 = vadd.f32 %v5310, %v2734
  %v5313 = vadd.f32 %v5311, %v2735
  %v5314 = vld [vmem:[%s18] sm:$0xff]
  %v5315 = vld [vmem:[%s18 + $0x8] sm:$0xff]
  %v5316 = vld [vmem:[%s18 + $0x10] sm:$0xff]
  %v5317 = vld [vmem:[%s18 + $0x18] sm:$0xff]
  %v5318 = vld [vmem:[%s18 + $0x20] sm:$0xff]
  %v5319 = vld [vmem:[%s18 + $0x28] sm:$0xff]
  %v5320 = vld [vmem:[%s18 + $0x30] sm:$0xff]
  %v5321 = vld [vmem:[%s18 + $0x38] sm:$0xff]
  %v5322 = vld [vmem:[%s18 + $0x40] sm:$0xff]
  %v5323 = vld [vmem:[%s18 + $0x48] sm:$0xff]
  %v5324 = vld [vmem:[%s18 + $0x50] sm:$0xff]
  %v5325 = vld [vmem:[%s18 + $0x58] sm:$0xff]
  %v5326 = vld [vmem:[%s18 + $0x60] sm:$0xff]
  %v5327 = vld [vmem:[%s18 + $0x68] sm:$0xff]
  %v5328 = vld [vmem:[%s18 + $0x70] sm:$0xff]
  %v5329 = vld [vmem:[%s18 + $0x78] sm:$0xff]
  %v5330 = vld [vmem:[%s18 + $0x80] sm:$0xff]
  %v5331 = vld [vmem:[%s18 + $0x88] sm:$0xff]
  %5332 = vst [vmem:[#allocation2 + $0x8] sm:$0xff] %v5312
  %5333 = vst [vmem:[#allocation2 + $0x10] sm:$0xff] %v5313
  %v5334 = vld [vmem:[#allocation2] sm:$0xff]
  %v5335 = vld [vmem:[#allocation2 + $0x8] sm:$0xff]
  %v5336 = vld [vmem:[#allocation2 + $0x10] sm:$0xff]
  %v5337 = vmul.f32 %v5334, %v832
  %v5338 = vmul.f32 %v5335, %v836
  %v5339 = vmul.f32 %v5336, %v834
  %5343 = vrot.lane.b32.xlu0 %v5334, 16
  %v5344 = vpop.permute.xlu0 %5343
  %5345 = vrot.lane.b32.xlu0 %v5335, 16
  %v5346 = vpop.permute.xlu0 %5345
  %5347 = vrot.lane.b32.xlu0 %v5336, 16
  %v5348 = vpop.permute.xlu0 %5347
  %v5349 = vsel %vm852, %v5344, %v5346
  %v5350 = vsel %vm852, %v5346, %v5348
  %v5354 = vsel %vm627, %v5316, 0
  %v5357 = vsel %vm627, %v5317, 0
  %5359 = vmatprep.subr.mxu0 %v5350
  %5360 = vmatpush1.msra.mxu0 %v5349
  %5361 = vmatprep.subr.mxu0 0.0
  %5362 = vmatpush1.msra.mxu0 0.0
  %5363 = vmatprep.subr.mxu0 0.0
  %5364 = vmatpush1.msra.mxu0 0.0
  %5365 = vmatprep.subr.mxu0 0.0
  %5366 = vmatpush1.msra.mxu0 0.0
  %5367 = vmatprep.subr.mxu0 0.0
  %5368 = vmatpush1.msra.mxu0 0.0
  %5369 = vmatprep.subr.mxu0 0.0
  %5370 = vmatpush1.msra.mxu0 0.0
  %5371 = vmatprep.subr.mxu0 0.0
  %5372 = vmatpush1.msra.mxu0 0.0
  %5373 = vmatprep.subr.mxu0 0.0
  %5374 = vmatpush1.msra.mxu0 0.0
  %5375 = vmatprep.subr.mxu0 0.0
  %5376 = vmatpush1.msra.mxu0 0.0
  %5377 = vmatprep.subr.mxu0 0.0
  %5378 = vmatpush1.msra.mxu0 0.0
  %5379 = vmatprep.subr.mxu0 0.0
  %5380 = vmatpush1.msra.mxu0 0.0
  %5381 = vmatprep.subr.mxu0 0.0
  %5382 = vmatpush1.msra.mxu0 0.0
  %5383 = vmatprep.subr.mxu0 0.0
  %5384 = vmatpush1.msra.mxu0 0.0
  %5385 = vmatprep.subr.mxu0 0.0
  %5386 = vmatpush1.msra.mxu0 0.0
  %5387 = vmatprep.subr.mxu0 0.0
  %5388 = vmatpush1.msra.mxu0 0.0
  %5389 = vmatprep.subr.mxu0 0.0
  %5390 = vmatpush1.msra.mxu0 0.0
  %5391 = vmatprep.subr.mxu0 0.0
  %5392 = vmatpush1.msra.mxu0 0.0
  %5393 = vmatprep.subr.mxu0 0.0
  %5394 = vmatpush1.msra.mxu0 0.0
  %5395 = vmatprep.subr.mxu0 0.0
  %5396 = vmatpush1.msra.mxu0 0.0
  %5397 = vmatprep.subr.mxu0 0.0
  %5398 = vmatpush1.msra.mxu0 0.0
  %5399 = vmatprep.subr.mxu0 0.0
  %5400 = vmatpush1.msra.mxu0 0.0
  %5401 = vmatprep.subr.mxu0 0.0
  %5402 = vmatpush1.msra.mxu0 0.0
  %5403 = vmatprep.subr.mxu0 0.0
  %5404 = vmatpush1.msra.mxu0 0.0
  %5405 = vmatprep.subr.mxu0 0.0
  %5406 = vmatpush1.msra.mxu0 0.0
  %5407 = vmatprep.subr.mxu0 0.0
  %5408 = vmatpush1.msra.mxu0 0.0
  %5409 = vmatprep.subr.mxu0 0.0
  %5410 = vmatpush1.msra.mxu0 0.0
  %5411 = vmatprep.subr.mxu0 0.0
  %5412 = vmatpush1.msra.mxu0 0.0
  %5413 = vmatprep.subr.mxu0 0.0
  %5414 = vmatpush1.msra.mxu0 0.0
  %5415 = vmatprep.subr.mxu0 0.0
  %5416 = vmatpush1.msra.mxu0 0.0
  %5417 = vmatprep.subr.mxu0 0.0
  %5418 = vmatpush1.msra.mxu0 0.0
  %5419 = vmatprep.subr.mxu0 0.0
  %5420 = vmatpush1.msra.mxu0 0.0
  %5421 = vmatprep.subr.mxu0 0.0
  %5422 = vmatpush1.msra.mxu0 0.0
  %5423 = vmatprep.mubr.f32.mxu0 0.0
  %5424 = vmatmul.mubr.f32.gmra.mrb[0].mxu0 %v5354
  %v5425 = vpop.f32.mrb[0].mxu0
  %v5426 = vadd.f32 0.0, %v5425
  %v5427 = vpop.f32.mrb[0].mxu0
  %v5428 = vadd.f32 0.0, %v5427
  %5429 = vmatprep.mubr.f32.mxu0 0.0
  %5430 = vmatmul.mubr.f32.gmra.mrb[0].mxu0 %v5357
  %v5431 = vpop.f32.mrb[0].mxu0
  %v5432 = vadd.f32 0.0, %v5431
  %v5433 = vpop.f32.mrb[0].mxu0
  %v5434 = vadd.f32 0.0, %v5433
  %5435 = vdwg.mxu0
  %5439 = vrot.lane.b32.xlu0 %v5337, 17
  %v5440 = vpop.permute.xlu0 %5439
  %5441 = vrot.lane.b32.xlu0 %v5338, 17
  %v5442 = vpop.permute.xlu0 %5441
  %5443 = vrot.lane.b32.xlu0 %v5339, 17
  %v5444 = vpop.permute.xlu0 %5443
  %v5445 = vsel %vm940, %v5440, %v5442
  %v5446 = vsel %vm940, %v5442, %v5444
  %v5450 = vsel %vm627, %v5314, 0
  %v5453 = vsel %vm627, %v5315, 0
  %5455 = vmatprep.subr.mxu0 %v5446
  %5456 = vmatpush1.msra.mxu0 %v5445
  %5457 = vmatprep.subr.mxu0 0.0
  %5458 = vmatpush1.msra.mxu0 0.0
  %5459 = vmatprep.subr.mxu0 0.0
  %5460 = vmatpush1.msra.mxu0 0.0
  %5461 = vmatprep.subr.mxu0 0.0
  %5462 = vmatpush1.msra.mxu0 0.0
  %5463 = vmatprep.subr.mxu0 0.0
  %5464 = vmatpush1.msra.mxu0 0.0
  %5465 = vmatprep.subr.mxu0 0.0
  %5466 = vmatpush1.msra.mxu0 0.0
  %5467 = vmatprep.subr.mxu0 0.0
  %5468 = vmatpush1.msra.mxu0 0.0
  %5469 = vmatprep.subr.mxu0 0.0
  %5470 = vmatpush1.msra.mxu0 0.0
  %5471 = vmatprep.subr.mxu0 0.0
  %5472 = vmatpush1.msra.mxu0 0.0
  %5473 = vmatprep.subr.mxu0 0.0
  %5474 = vmatpush1.msra.mxu0 0.0
  %5475 = vmatprep.subr.mxu0 0.0
  %5476 = vmatpush1.msra.mxu0 0.0
  %5477 = vmatprep.subr.mxu0 0.0
  %5478 = vmatpush1.msra.mxu0 0.0
  %5479 = vmatprep.subr.mxu0 0.0
  %5480 = vmatpush1.msra.mxu0 0.0
  %5481 = vmatprep.subr.mxu0 0.0
  %5482 = vmatpush1.msra.mxu0 0.0
  %5483 = vmatprep.subr.mxu0 0.0
  %5484 = vmatpush1.msra.mxu0 0.0
  %5485 = vmatprep.subr.mxu0 0.0
  %5486 = vmatpush1.msra.mxu0 0.0
  %5487 = vmatprep.subr.mxu0 0.0
  %5488 = vmatpush1.msra.mxu0 0.0
  %5489 = vmatprep.subr.mxu0 0.0
  %5490 = vmatpush1.msra.mxu0 0.0
  %5491 = vmatprep.subr.mxu0 0.0
  %5492 = vmatpush1.msra.mxu0 0.0
  %5493 = vmatprep.subr.mxu0 0.0
  %5494 = vmatpush1.msra.mxu0 0.0
  %5495 = vmatprep.subr.mxu0 0.0
  %5496 = vmatpush1.msra.mxu0 0.0
  %5497 = vmatprep.subr.mxu0 0.0
  %5498 = vmatpush1.msra.mxu0 0.0
  %5499 = vmatprep.subr.mxu0 0.0
  %5500 = vmatpush1.msra.mxu0 0.0
  %5501 = vmatprep.subr.mxu0 0.0
  %5502 = vmatpush1.msra.mxu0 0.0
  %5503 = vmatprep.subr.mxu0 0.0
  %5504 = vmatpush1.msra.mxu0 0.0
  %5505 = vmatprep.subr.mxu0 0.0
  %5506 = vmatpush1.msra.mxu0 0.0
  %5507 = vmatprep.subr.mxu0 0.0
  %5508 = vmatpush1.msra.mxu0 0.0
  %5509 = vmatprep.subr.mxu0 0.0
  %5510 = vmatpush1.msra.mxu0 0.0
  %5511 = vmatprep.subr.mxu0 0.0
  %5512 = vmatpush1.msra.mxu0 0.0
  %5513 = vmatprep.subr.mxu0 0.0
  %5514 = vmatpush1.msra.mxu0 0.0
  %5515 = vmatprep.subr.mxu0 0.0
  %5516 = vmatpush1.msra.mxu0 0.0
  %5517 = vmatprep.subr.mxu0 0.0
  %5518 = vmatpush1.msra.mxu0 0.0
  %5519 = vmatprep.mubr.f32.mxu0 0.0
  %5520 = vmatmul.mubr.f32.gmra.mrb[0].mxu0 %v5450
  %v5521 = vpop.f32.mrb[0].mxu0
  %v5522 = vadd.f32 %v5426, %v5521
  %v5523 = vpop.f32.mrb[0].mxu0
  %v5524 = vadd.f32 %v5428, %v5523
  %5525 = vmatprep.mubr.f32.mxu0 0.0
  %5526 = vmatmul.mubr.f32.gmra.mrb[0].mxu0 %v5453
  %v5527 = vpop.f32.mrb[0].mxu0
  %v5528 = vadd.f32 %v5432, %v5527
  %v5529 = vpop.f32.mrb[0].mxu0
  %v5530 = vadd.f32 %v5434, %v5529
  %5531 = vdwg.mxu0
  %v5532 = vmul.f32 %v5334, %v1029
  %v5533 = vmul.f32 %v5335, %v1033
  %v5534 = vmul.f32 %v5336, %v1031
  %5538 = vrot.lane.b32.xlu0 %v5532, 15
  %v5539 = vpop.permute.xlu0 %5538
  %5540 = vrot.lane.b32.xlu0 %v5533, 15
  %v5541 = vpop.permute.xlu0 %5540
  %5542 = vrot.lane.b32.xlu0 %v5534, 15
  %v5543 = vpop.permute.xlu0 %5542
  %v5544 = vsel %vm1049, %v5539, %v5541
  %v5545 = vsel %vm1049, %v5541, %v5543
  %v5549 = vsel %vm627, %v5318, 0
  %v5552 = vsel %vm627, %v5319, 0
  %5554 = vmatprep.subr.mxu0 %v5545
  %5555 = vmatpush1.msra.mxu0 %v5544
  %5556 = vmatprep.subr.mxu0 0.0
  %5557 = vmatpush1.msra.mxu0 0.0
  %5558 = vmatprep.subr.mxu0 0.0
  %5559 = vmatpush1.msra.mxu0 0.0
  %5560 = vmatprep.subr.mxu0 0.0
  %5561 = vmatpush1.msra.mxu0 0.0
  %5562 = vmatprep.subr.mxu0 0.0
  %5563 = vmatpush1.msra.mxu0 0.0
  %5564 = vmatprep.subr.mxu0 0.0
  %5565 = vmatpush1.msra.mxu0 0.0
  %5566 = vmatprep.subr.mxu0 0.0
  %5567 = vmatpush1.msra.mxu0 0.0
  %5568 = vmatprep.subr.mxu0 0.0
  %5569 = vmatpush1.msra.mxu0 0.0
  %5570 = vmatprep.subr.mxu0 0.0
  %5571 = vmatpush1.msra.mxu0 0.0
  %5572 = vmatprep.subr.mxu0 0.0
  %5573 = vmatpush1.msra.mxu0 0.0
  %5574 = vmatprep.subr.mxu0 0.0
  %5575 = vmatpush1.msra.mxu0 0.0
  %5576 = vmatprep.subr.mxu0 0.0
  %5577 = vmatpush1.msra.mxu0 0.0
  %5578 = vmatprep.subr.mxu0 0.0
  %5579 = vmatpush1.msra.mxu0 0.0
  %5580 = vmatprep.subr.mxu0 0.0
  %5581 = vmatpush1.msra.mxu0 0.0
  %5582 = vmatprep.subr.mxu0 0.0
  %5583 = vmatpush1.msra.mxu0 0.0
  %5584 = vmatprep.subr.mxu0 0.0
  %5585 = vmatpush1.msra.mxu0 0.0
  %5586 = vmatprep.subr.mxu0 0.0
  %5587 = vmatpush1.msra.mxu0 0.0
  %5588 = vmatprep.subr.mxu0 0.0
  %5589 = vmatpush1.msra.mxu0 0.0
  %5590 = vmatprep.subr.mxu0 0.0
  %5591 = vmatpush1.msra.mxu0 0.0
  %5592 = vmatprep.subr.mxu0 0.0
  %5593 = vmatpush1.msra.mxu0 0.0
  %5594 = vmatprep.subr.mxu0 0.0
  %5595 = vmatpush1.msra.mxu0 0.0
  %5596 = vmatprep.subr.mxu0 0.0
  %5597 = vmatpush1.msra.mxu0 0.0
  %5598 = vmatprep.subr.mxu0 0.0
  %5599 = vmatpush1.msra.mxu0 0.0
  %5600 = vmatprep.subr.mxu0 0.0
  %5601 = vmatpush1.msra.mxu0 0.0
  %5602 = vmatprep.subr.mxu0 0.0
  %5603 = vmatpush1.msra.mxu0 0.0
  %5604 = vmatprep.subr.mxu0 0.0
  %5605 = vmatpush1.msra.mxu0 0.0
  %5606 = vmatprep.subr.mxu0 0.0
  %5607 = vmatpush1.msra.mxu0 0.0
  %5608 = vmatprep.subr.mxu0 0.0
  %5609 = vmatpush1.msra.mxu0 0.0
  %5610 = vmatprep.subr.mxu0 0.0
  %5611 = vmatpush1.msra.mxu0 0.0
  %5612 = vmatprep.subr.mxu0 0.0
  %5613 = vmatpush1.msra.mxu0 0.0
  %5614 = vmatprep.subr.mxu0 0.0
  %5615 = vmatpush1.msra.mxu0 0.0
  %5616 = vmatprep.subr.mxu0 0.0
  %5617 = vmatpush1.msra.mxu0 0.0
  %5618 = vmatprep.mubr.f32.mxu0 0.0
  %5619 = vmatmul.mubr.f32.gmra.mrb[0].mxu0 %v5549
  %v5620 = vpop.f32.mrb[0].mxu0
  %v5621 = vadd.f32 0.0, %v5620
  %v5622 = vpop.f32.mrb[0].mxu0
  %v5623 = vadd.f32 0.0, %v5622
  %5624 = vmatprep.mubr.f32.mxu0 0.0
  %5625 = vmatmul.mubr.f32.gmra.mrb[0].mxu0 %v5552
  %v5626 = vpop.f32.mrb[0].mxu0
  %v5627 = vadd.f32 0.0, %v5626
  %v5628 = vpop.f32.mrb[0].mxu0
  %v5629 = vadd.f32 0.0, %v5628
  %5630 = vdwg.mxu0
  %v5631 = vadd.f32 %v5522, %v5621
  %v5632 = vadd.f32 %v5524, %v5623
  %v5633 = vadd.f32 %v5528, %v5627
  %v5634 = vadd.f32 %v5530, %v5629
  %v5635 = vmul.f32 %v5334, %v1131
  %v5636 = vmul.f32 %v5335, %v1135
  %v5637 = vmul.f32 %v5336, %v1133
  %5641 = vrot.lane.b32.xlu0 %v5635, 1
  %v5642 = vpop.permute.xlu0 %5641
  %5643 = vrot.lane.b32.xlu0 %v5636, 1
  %v5644 = vpop.permute.xlu0 %5643
  %5645 = vrot.lane.b32.xlu0 %v5637, 1
  %v5646 = vpop.permute.xlu0 %5645
  %v5647 = vsel %vm1151, %v5642, %v5644
  %v5648 = vsel %vm1151, %v5644, %v5646
  %v5652 = vsel %vm627, %v5320, 0
  %v5655 = vsel %vm627, %v5321, 0
  %5657 = vmatprep.subr.mxu0 %v5648
  %5658 = vmatpush1.msra.mxu0 %v5647
  %5659 = vmatprep.subr.mxu0 0.0
  %5660 = vmatpush1.msra.mxu0 0.0
  %5661 = vmatprep.subr.mxu0 0.0
  %5662 = vmatpush1.msra.mxu0 0.0
  %5663 = vmatprep.subr.mxu0 0.0
  %5664 = vmatpush1.msra.mxu0 0.0
  %5665 = vmatprep.subr.mxu0 0.0
  %5666 = vmatpush1.msra.mxu0 0.0
  %5667 = vmatprep.subr.mxu0 0.0
  %5668 = vmatpush1.msra.mxu0 0.0
  %5669 = vmatprep.subr.mxu0 0.0
  %5670 = vmatpush1.msra.mxu0 0.0
  %5671 = vmatprep.subr.mxu0 0.0
  %5672 = vmatpush1.msra.mxu0 0.0
  %5673 = vmatprep.subr.mxu0 0.0
  %5674 = vmatpush1.msra.mxu0 0.0
  %5675 = vmatprep.subr.mxu0 0.0
  %5676 = vmatpush1.msra.mxu0 0.0
  %5677 = vmatprep.subr.mxu0 0.0
  %5678 = vmatpush1.msra.mxu0 0.0
  %5679 = vmatprep.subr.mxu0 0.0
  %5680 = vmatpush1.msra.mxu0 0.0
  %5681 = vmatprep.subr.mxu0 0.0
  %5682 = vmatpush1.msra.mxu0 0.0
  %5683 = vmatprep.subr.mxu0 0.0
  %5684 = vmatpush1.msra.mxu0 0.0
  %5685 = vmatprep.subr.mxu0 0.0
  %5686 = vmatpush1.msra.mxu0 0.0
  %5687 = vmatprep.subr.mxu0 0.0
  %5688 = vmatpush1.msra.mxu0 0.0
  %5689 = vmatprep.subr.mxu0 0.0
  %5690 = vmatpush1.msra.mxu0 0.0
  %5691 = vmatprep.subr.mxu0 0.0
  %5692 = vmatpush1.msra.mxu0 0.0
  %5693 = vmatprep.subr.mxu0 0.0
  %5694 = vmatpush1.msra.mxu0 0.0
  %5695 = vmatprep.subr.mxu0 0.0
  %5696 = vmatpush1.msra.mxu0 0.0
  %5697 = vmatprep.subr.mxu0 0.0
  %5698 = vmatpush1.msra.mxu0 0.0
  %5699 = vmatprep.subr.mxu0 0.0
  %5700 = vmatpush1.msra.mxu0 0.0
  %5701 = vmatprep.subr.mxu0 0.0
  %5702 = vmatpush1.msra.mxu0 0.0
  %5703 = vmatprep.subr.mxu0 0.0
  %5704 = vmatpush1.msra.mxu0 0.0
  %5705 = vmatprep.subr.mxu0 0.0
  %5706 = vmatpush1.msra.mxu0 0.0
  %5707 = vmatprep.subr.mxu0 0.0
  %5708 = vmatpush1.msra.mxu0 0.0
  %5709 = vmatprep.subr.mxu0 0.0
  %5710 = vmatpush1.msra.mxu0 0.0
  %5711 = vmatprep.subr.mxu0 0.0
  %5712 = vmatpush1.msra.mxu0 0.0
  %5713 = vmatprep.subr.mxu0 0.0
  %5714 = vmatpush1.msra.mxu0 0.0
  %5715 = vmatprep.subr.mxu0 0.0
  %5716 = vmatpush1.msra.mxu0 0.0
  %5717 = vmatprep.subr.mxu0 0.0
  %5718 = vmatpush1.msra.mxu0 0.0
  %5719 = vmatprep.subr.mxu0 0.0
  %5720 = vmatpush1.msra.mxu0 0.0
  %5721 = vmatprep.mubr.f32.mxu0 0.0
  %5722 = vmatmul.mubr.f32.gmra.mrb[0].mxu0 %v5652
  %v5723 = vpop.f32.mrb[0].mxu0
  %v5724 = vadd.f32 0.0, %v5723
  %v5725 = vpop.f32.mrb[0].mxu0
  %v5726 = vadd.f32 0.0, %v5725
  %5727 = vmatprep.mubr.f32.mxu0 0.0
  %5728 = vmatmul.mubr.f32.gmra.mrb[0].mxu0 %v5655
  %v5729 = vpop.f32.mrb[0].mxu0
  %v5730 = vadd.f32 0.0, %v5729
  %v5731 = vpop.f32.mrb[0].mxu0
  %v5732 = vadd.f32 0.0, %v5731
  %5733 = vdwg.mxu0
  %v5734 = vadd.f32 %v5631, %v5724
  %v5735 = vadd.f32 %v5632, %v5726
  %v5736 = vadd.f32 %v5633, %v5730
  %v5737 = vadd.f32 %v5634, %v5732
  %v5739 = vsel %vm627, %v5322, 0
  %v5742 = vsel %vm627, %v5323, 0
  %5744 = vmatprep.subr.mxu0 %v5336
  %5745 = vmatpush1.msra.mxu0 %v5335
  %5746 = vmatprep.subr.mxu0 0.0
  %5747 = vmatpush1.msra.mxu0 0.0
  %5748 = vmatprep.subr.mxu0 0.0
  %5749 = vmatpush1.msra.mxu0 0.0
  %5750 = vmatprep.subr.mxu0 0.0
  %5751 = vmatpush1.msra.mxu0 0.0
  %5752 = vmatprep.subr.mxu0 0.0
  %5753 = vmatpush1.msra.mxu0 0.0
  %5754 = vmatprep.subr.mxu0 0.0
  %5755 = vmatpush1.msra.mxu0 0.0
  %5756 = vmatprep.subr.mxu0 0.0
  %5757 = vmatpush1.msra.mxu0 0.0
  %5758 = vmatprep.subr.mxu0 0.0
  %5759 = vmatpush1.msra.mxu0 0.0
  %5760 = vmatprep.subr.mxu0 0.0
  %5761 = vmatpush1.msra.mxu0 0.0
  %5762 = vmatprep.subr.mxu0 0.0
  %5763 = vmatpush1.msra.mxu0 0.0
  %5764 = vmatprep.subr.mxu0 0.0
  %5765 = vmatpush1.msra.mxu0 0.0
  %5766 = vmatprep.subr.mxu0 0.0
  %5767 = vmatpush1.msra.mxu0 0.0
  %5768 = vmatprep.subr.mxu0 0.0
  %5769 = vmatpush1.msra.mxu0 0.0
  %5770 = vmatprep.subr.mxu0 0.0
  %5771 = vmatpush1.msra.mxu0 0.0
  %5772 = vmatprep.subr.mxu0 0.0
  %5773 = vmatpush1.msra.mxu0 0.0
  %5774 = vmatprep.subr.mxu0 0.0
  %5775 = vmatpush1.msra.mxu0 0.0
  %5776 = vmatprep.subr.mxu0 0.0
  %5777 = vmatpush1.msra.mxu0 0.0
  %5778 = vmatprep.subr.mxu0 0.0
  %5779 = vmatpush1.msra.mxu0 0.0
  %5780 = vmatprep.subr.mxu0 0.0
  %5781 = vmatpush1.msra.mxu0 0.0
  %5782 = vmatprep.subr.mxu0 0.0
  %5783 = vmatpush1.msra.mxu0 0.0
  %5784 = vmatprep.subr.mxu0 0.0
  %5785 = vmatpush1.msra.mxu0 0.0
  %5786 = vmatprep.subr.mxu0 0.0
  %5787 = vmatpush1.msra.mxu0 0.0
  %5788 = vmatprep.subr.mxu0 0.0
  %5789 = vmatpush1.msra.mxu0 0.0
  %5790 = vmatprep.subr.mxu0 0.0
  %5791 = vmatpush1.msra.mxu0 0.0
  %5792 = vmatprep.subr.mxu0 0.0
  %5793 = vmatpush1.msra.mxu0 0.0
  %5794 = vmatprep.subr.mxu0 0.0
  %5795 = vmatpush1.msra.mxu0 0.0
  %5796 = vmatprep.subr.mxu0 0.0
  %5797 = vmatpush1.msra.mxu0 0.0
  %5798 = vmatprep.subr.mxu0 0.0
  %5799 = vmatpush1.msra.mxu0 0.0
  %5800 = vmatprep.subr.mxu0 0.0
  %5801 = vmatpush1.msra.mxu0 0.0
  %5802 = vmatprep.subr.mxu0 0.0
  %5803 = vmatpush1.msra.mxu0 0.0
  %5804 = vmatprep.subr.mxu0 0.0
  %5805 = vmatpush1.msra.mxu0 0.0
  %5806 = vmatprep.subr.mxu0 0.0
  %5807 = vmatpush1.msra.mxu0 0.0
  %5808 = vmatprep.mubr.f32.mxu0 0.0
  %5809 = vmatmul.mubr.f32.gmra.mrb[0].mxu0 %v5739
  %v5810 = vpop.f32.mrb[0].mxu0
  %v5811 = vadd.f32 0.0, %v5810
  %v5812 = vpop.f32.mrb[0].mxu0
  %v5813 = vadd.f32 0.0, %v5812
  %5814 = vmatprep.mubr.f32.mxu0 0.0
  %5815 = vmatmul.mubr.f32.gmra.mrb[0].mxu0 %v5742
  %v5816 = vpop.f32.mrb[0].mxu0
  %v5817 = vadd.f32 0.0, %v5816
  %v5818 = vpop.f32.mrb[0].mxu0
  %v5819 = vadd.f32 0.0, %v5818
  %5820 = vdwg.mxu0
  %v5821 = vadd.f32 %v5734, %v5811
  %v5822 = vadd.f32 %v5735, %v5813
  %v5823 = vadd.f32 %v5736, %v5817
  %v5824 = vadd.f32 %v5737, %v5819
  %v5825 = vld [vmem:[#allocation2 + $0x8] sm:$0xff]
  %v5826 = vld [vmem:[#allocation2 + $0x10] sm:$0xff]
  %v5827 = vld [vmem:[#allocation2 + $0x18] sm:$0xff]
  %v5828 = vmul.f32 %v5825, %v1312
  %v5829 = vmul.f32 %v5826, %v1315
  %v5830 = vmul.f32 %v5827, %v1314
  %5834 = vrot.lane.b32.xlu0 %v5828, 127
  %v5835 = vpop.permute.xlu0 %5834
  %5836 = vrot.lane.b32.xlu0 %v5829, 127
  %v5837 = vpop.permute.xlu0 %5836
  %5838 = vrot.lane.b32.xlu0 %v5830, 127
  %v5839 = vpop.permute.xlu0 %5838
  %v5840 = vsel %vm1134, %v5835, %v5837
  %v5841 = vsel %vm1134, %v5837, %v5839
  %v5845 = vsel %vm627, %v5324, 0
  %v5848 = vsel %vm627, %v5325, 0
  %5850 = vmatprep.subr.mxu0 %v5841
  %5851 = vmatpush1.msra.mxu0 %v5840
  %5852 = vmatprep.subr.mxu0 0.0
  %5853 = vmatpush1.msra.mxu0 0.0
  %5854 = vmatprep.subr.mxu0 0.0
  %5855 = vmatpush1.msra.mxu0 0.0
  %5856 = vmatprep.subr.mxu0 0.0
  %5857 = vmatpush1.msra.mxu0 0.0
  %5858 = vmatprep.subr.mxu0 0.0
  %5859 = vmatpush1.msra.mxu0 0.0
  %5860 = vmatprep.subr.mxu0 0.0
  %5861 = vmatpush1.msra.mxu0 0.0
  %5862 = vmatprep.subr.mxu0 0.0
  %5863 = vmatpush1.msra.mxu0 0.0
  %5864 = vmatprep.subr.mxu0 0.0
  %5865 = vmatpush1.msra.mxu0 0.0
  %5866 = vmatprep.subr.mxu0 0.0
  %5867 = vmatpush1.msra.mxu0 0.0
  %5868 = vmatprep.subr.mxu0 0.0
  %5869 = vmatpush1.msra.mxu0 0.0
  %5870 = vmatprep.subr.mxu0 0.0
  %5871 = vmatpush1.msra.mxu0 0.0
  %5872 = vmatprep.subr.mxu0 0.0
  %5873 = vmatpush1.msra.mxu0 0.0
  %5874 = vmatprep.subr.mxu0 0.0
  %5875 = vmatpush1.msra.mxu0 0.0
  %5876 = vmatprep.subr.mxu0 0.0
  %5877 = vmatpush1.msra.mxu0 0.0
  %5878 = vmatprep.subr.mxu0 0.0
  %5879 = vmatpush1.msra.mxu0 0.0
  %5880 = vmatprep.subr.mxu0 0.0
  %5881 = vmatpush1.msra.mxu0 0.0
  %5882 = vmatprep.subr.mxu0 0.0
  %5883 = vmatpush1.msra.mxu0 0.0
  %5884 = vmatprep.subr.mxu0 0.0
  %5885 = vmatpush1.msra.mxu0 0.0
  %5886 = vmatprep.subr.mxu0 0.0
  %5887 = vmatpush1.msra.mxu0 0.0
  %5888 = vmatprep.subr.mxu0 0.0
  %5889 = vmatpush1.msra.mxu0 0.0
  %5890 = vmatprep.subr.mxu0 0.0
  %5891 = vmatpush1.msra.mxu0 0.0
  %5892 = vmatprep.subr.mxu0 0.0
  %5893 = vmatpush1.msra.mxu0 0.0
  %5894 = vmatprep.subr.mxu0 0.0
  %5895 = vmatpush1.msra.mxu0 0.0
  %5896 = vmatprep.subr.mxu0 0.0
  %5897 = vmatpush1.msra.mxu0 0.0
  %5898 = vmatprep.subr.mxu0 0.0
  %5899 = vmatpush1.msra.mxu0 0.0
  %5900 = vmatprep.subr.mxu0 0.0
  %5901 = vmatpush1.msra.mxu0 0.0
  %5902 = vmatprep.subr.mxu0 0.0
  %5903 = vmatpush1.msra.mxu0 0.0
  %5904 = vmatprep.subr.mxu0 0.0
  %5905 = vmatpush1.msra.mxu0 0.0
  %5906 = vmatprep.subr.mxu0 0.0
  %5907 = vmatpush1.msra.mxu0 0.0
  %5908 = vmatprep.subr.mxu0 0.0
  %5909 = vmatpush1.msra.mxu0 0.0
  %5910 = vmatprep.subr.mxu0 0.0
  %5911 = vmatpush1.msra.mxu0 0.0
  %5912 = vmatprep.subr.mxu0 0.0
  %5913 = vmatpush1.msra.mxu0 0.0
  %5914 = vmatprep.mubr.f32.mxu0 0.0
  %5915 = vmatmul.mubr.f32.gmra.mrb[0].mxu0 %v5845
  %v5916 = vpop.f32.mrb[0].mxu0
  %v5917 = vadd.f32 0.0, %v5916
  %v5918 = vpop.f32.mrb[0].mxu0
  %v5919 = vadd.f32 0.0, %v5918
  %5920 = vmatprep.mubr.f32.mxu0 0.0
  %5921 = vmatmul.mubr.f32.gmra.mrb[0].mxu0 %v5848
  %v5922 = vpop.f32.mrb[0].mxu0
  %v5923 = vadd.f32 0.0, %v5922
  %v5924 = vpop.f32.mrb[0].mxu0
  %v5925 = vadd.f32 0.0, %v5924
  %5926 = vdwg.mxu0
  %v5927 = vadd.f32 %v5821, %v5917
  %v5928 = vadd.f32 %v5822, %v5919
  %v5929 = vadd.f32 %v5823, %v5923
  %v5930 = vadd.f32 %v5824, %v5925
  %v5931 = vmul.f32 %v5825, %v1412
  %v5932 = vmul.f32 %v5826, %v1415
  %v5933 = vmul.f32 %v5827, %v1414
  %5937 = vrot.lane.b32.xlu0 %v5931, 113
  %v5938 = vpop.permute.xlu0 %5937
  %5939 = vrot.lane.b32.xlu0 %v5932, 113
  %v5940 = vpop.permute.xlu0 %5939
  %5941 = vrot.lane.b32.xlu0 %v5933, 113
  %v5942 = vpop.permute.xlu0 %5941
  %v5943 = vsel %vm1032, %v5938, %v5940
  %v5944 = vsel %vm1032, %v5940, %v5942
  %v5948 = vsel %vm627, %v5326, 0
  %v5951 = vsel %vm627, %v5327, 0
  %5953 = vmatprep.subr.mxu0 %v5944
  %5954 = vmatpush1.msra.mxu0 %v5943
  %5955 = vmatprep.subr.mxu0 0.0
  %5956 = vmatpush1.msra.mxu0 0.0
  %5957 = vmatprep.subr.mxu0 0.0
  %5958 = vmatpush1.msra.mxu0 0.0
  %5959 = vmatprep.subr.mxu0 0.0
  %5960 = vmatpush1.msra.mxu0 0.0
  %5961 = vmatprep.subr.mxu0 0.0
  %5962 = vmatpush1.msra.mxu0 0.0
  %5963 = vmatprep.subr.mxu0 0.0
  %5964 = vmatpush1.msra.mxu0 0.0
  %5965 = vmatprep.subr.mxu0 0.0
  %5966 = vmatpush1.msra.mxu0 0.0
  %5967 = vmatprep.subr.mxu0 0.0
  %5968 = vmatpush1.msra.mxu0 0.0
  %5969 = vmatprep.subr.mxu0 0.0
  %5970 = vmatpush1.msra.mxu0 0.0
  %5971 = vmatprep.subr.mxu0 0.0
  %5972 = vmatpush1.msra.mxu0 0.0
  %5973 = vmatprep.subr.mxu0 0.0
  %5974 = vmatpush1.msra.mxu0 0.0
  %5975 = vmatprep.subr.mxu0 0.0
  %5976 = vmatpush1.msra.mxu0 0.0
  %5977 = vmatprep.subr.mxu0 0.0
  %5978 = vmatpush1.msra.mxu0 0.0
  %5979 = vmatprep.subr.mxu0 0.0
  %5980 = vmatpush1.msra.mxu0 0.0
  %5981 = vmatprep.subr.mxu0 0.0
  %5982 = vmatpush1.msra.mxu0 0.0
  %5983 = vmatprep.subr.mxu0 0.0
  %5984 = vmatpush1.msra.mxu0 0.0
  %5985 = vmatprep.subr.mxu0 0.0
  %5986 = vmatpush1.msra.mxu0 0.0
  %5987 = vmatprep.subr.mxu0 0.0
  %5988 = vmatpush1.msra.mxu0 0.0
  %5989 = vmatprep.subr.mxu0 0.0
  %5990 = vmatpush1.msra.mxu0 0.0
  %5991 = vmatprep.subr.mxu0 0.0
  %5992 = vmatpush1.msra.mxu0 0.0
  %5993 = vmatprep.subr.mxu0 0.0
  %5994 = vmatpush1.msra.mxu0 0.0
  %5995 = vmatprep.subr.mxu0 0.0
  %5996 = vmatpush1.msra.mxu0 0.0
  %5997 = vmatprep.subr.mxu0 0.0
  %5998 = vmatpush1.msra.mxu0 0.0
  %5999 = vmatprep.subr.mxu0 0.0
  %6000 = vmatpush1.msra.mxu0 0.0
  %6001 = vmatprep.subr.mxu0 0.0
  %6002 = vmatpush1.msra.mxu0 0.0
  %6003 = vmatprep.subr.mxu0 0.0
  %6004 = vmatpush1.msra.mxu0 0.0
  %6005 = vmatprep.subr.mxu0 0.0
  %6006 = vmatpush1.msra.mxu0 0.0
  %6007 = vmatprep.subr.mxu0 0.0
  %6008 = vmatpush1.msra.mxu0 0.0
  %6009 = vmatprep.subr.mxu0 0.0
  %6010 = vmatpush1.msra.mxu0 0.0
  %6011 = vmatprep.subr.mxu0 0.0
  %6012 = vmatpush1.msra.mxu0 0.0
  %6013 = vmatprep.subr.mxu0 0.0
  %6014 = vmatpush1.msra.mxu0 0.0
  %6015 = vmatprep.subr.mxu0 0.0
  %6016 = vmatpush1.msra.mxu0 0.0
  %6017 = vmatprep.mubr.f32.mxu0 0.0
  %6018 = vmatmul.mubr.f32.gmra.mrb[0].mxu0 %v5948
  %v6019 = vpop.f32.mrb[0].mxu0
  %v6020 = vadd.f32 0.0, %v6019
  %v6021 = vpop.f32.mrb[0].mxu0
  %v6022 = vadd.f32 0.0, %v6021
  %6023 = vmatprep.mubr.f32.mxu0 0.0
  %6024 = vmatmul.mubr.f32.gmra.mrb[0].mxu0 %v5951
  %v6025 = vpop.f32.mrb[0].mxu0
  %v6026 = vadd.f32 0.0, %v6025
  %v6027 = vpop.f32.mrb[0].mxu0
  %v6028 = vadd.f32 0.0, %v6027
  %6029 = vdwg.mxu0
  %v6030 = vadd.f32 %v5927, %v6020
  %v6031 = vadd.f32 %v5928, %v6022
  %v6032 = vadd.f32 %v5929, %v6026
  %v6033 = vadd.f32 %v5930, %v6028
  %6037 = vrot.lane.b32.xlu0 %v5825, 112
  %v6038 = vpop.permute.xlu0 %6037
  %6039 = vrot.lane.b32.xlu0 %v5826, 112
  %v6040 = vpop.permute.xlu0 %6039
  %6041 = vrot.lane.b32.xlu0 %v5827, 112
  %v6042 = vpop.permute.xlu0 %6041
  %v6043 = vsel %vm1520, %v6038, %v6040
  %v6044 = vsel %vm1520, %v6040, %v6042
  %v6048 = vsel %vm627, %v5328, 0
  %v6051 = vsel %vm627, %v5329, 0
  %6053 = vmatprep.subr.mxu0 %v6044
  %6054 = vmatpush1.msra.mxu0 %v6043
  %6055 = vmatprep.subr.mxu0 0.0
  %6056 = vmatpush1.msra.mxu0 0.0
  %6057 = vmatprep.subr.mxu0 0.0
  %6058 = vmatpush1.msra.mxu0 0.0
  %6059 = vmatprep.subr.mxu0 0.0
  %6060 = vmatpush1.msra.mxu0 0.0
  %6061 = vmatprep.subr.mxu0 0.0
  %6062 = vmatpush1.msra.mxu0 0.0
  %6063 = vmatprep.subr.mxu0 0.0
  %6064 = vmatpush1.msra.mxu0 0.0
  %6065 = vmatprep.subr.mxu0 0.0
  %6066 = vmatpush1.msra.mxu0 0.0
  %6067 = vmatprep.subr.mxu0 0.0
  %6068 = vmatpush1.msra.mxu0 0.0
  %6069 = vmatprep.subr.mxu0 0.0
  %6070 = vmatpush1.msra.mxu0 0.0
  %6071 = vmatprep.subr.mxu0 0.0
  %6072 = vmatpush1.msra.mxu0 0.0
  %6073 = vmatprep.subr.mxu0 0.0
  %6074 = vmatpush1.msra.mxu0 0.0
  %6075 = vmatprep.subr.mxu0 0.0
  %6076 = vmatpush1.msra.mxu0 0.0
  %6077 = vmatprep.subr.mxu0 0.0
  %6078 = vmatpush1.msra.mxu0 0.0
  %6079 = vmatprep.subr.mxu0 0.0
  %6080 = vmatpush1.msra.mxu0 0.0
  %6081 = vmatprep.subr.mxu0 0.0
  %6082 = vmatpush1.msra.mxu0 0.0
  %6083 = vmatprep.subr.mxu0 0.0
  %6084 = vmatpush1.msra.mxu0 0.0
  %6085 = vmatprep.subr.mxu0 0.0
  %6086 = vmatpush1.msra.mxu0 0.0
  %6087 = vmatprep.subr.mxu0 0.0
  %6088 = vmatpush1.msra.mxu0 0.0
  %6089 = vmatprep.subr.mxu0 0.0
  %6090 = vmatpush1.msra.mxu0 0.0
  %6091 = vmatprep.subr.mxu0 0.0
  %6092 = vmatpush1.msra.mxu0 0.0
  %6093 = vmatprep.subr.mxu0 0.0
  %6094 = vmatpush1.msra.mxu0 0.0
  %6095 = vmatprep.subr.mxu0 0.0
  %6096 = vmatpush1.msra.mxu0 0.0
  %6097 = vmatprep.subr.mxu0 0.0
  %6098 = vmatpush1.msra.mxu0 0.0
  %6099 = vmatprep.subr.mxu0 0.0
  %6100 = vmatpush1.msra.mxu0 0.0
  %6101 = vmatprep.subr.mxu0 0.0
  %6102 = vmatpush1.msra.mxu0 0.0
  %6103 = vmatprep.subr.mxu0 0.0
  %6104 = vmatpush1.msra.mxu0 0.0
  %6105 = vmatprep.subr.mxu0 0.0
  %6106 = vmatpush1.msra.mxu0 0.0
  %6107 = vmatprep.subr.mxu0 0.0
  %6108 = vmatpush1.msra.mxu0 0.0
  %6109 = vmatprep.subr.mxu0 0.0
  %6110 = vmatpush1.msra.mxu0 0.0
  %6111 = vmatprep.subr.mxu0 0.0
  %6112 = vmatpush1.msra.mxu0 0.0
  %6113 = vmatprep.subr.mxu0 0.0
  %6114 = vmatpush1.msra.mxu0 0.0
  %6115 = vmatprep.subr.mxu0 0.0
  %6116 = vmatpush1.msra.mxu0 0.0
  %6117 = vmatprep.mubr.f32.mxu0 0.0
  %6118 = vmatmul.mubr.f32.gmra.mrb[0].mxu0 %v6048
  %v6119 = vpop.f32.mrb[0].mxu0
  %v6120 = vadd.f32 0.0, %v6119
  %v6121 = vpop.f32.mrb[0].mxu0
  %v6122 = vadd.f32 0.0, %v6121
  %6123 = vmatprep.mubr.f32.mxu0 0.0
  %6124 = vmatmul.mubr.f32.gmra.mrb[0].mxu0 %v6051
  %v6125 = vpop.f32.mrb[0].mxu0
  %v6126 = vadd.f32 0.0, %v6125
  %v6127 = vpop.f32.mrb[0].mxu0
  %v6128 = vadd.f32 0.0, %v6127
  %6129 = vdwg.mxu0
  %v6130 = vadd.f32 %v6030, %v6120
  %v6131 = vadd.f32 %v6031, %v6122
  %v6132 = vadd.f32 %v6032, %v6126
  %v6133 = vadd.f32 %v6033, %v6128
  %v6134 = vmul.f32 %v5825, %v1602
  %v6135 = vmul.f32 %v5826, %v1605
  %v6136 = vmul.f32 %v5827, %v1604
  %6140 = vrot.lane.b32.xlu0 %v6134, 111
  %v6141 = vpop.permute.xlu0 %6140
  %6142 = vrot.lane.b32.xlu0 %v6135, 111
  %v6143 = vpop.permute.xlu0 %6142
  %6144 = vrot.lane.b32.xlu0 %v6136, 111
  %v6145 = vpop.permute.xlu0 %6144
  %v6146 = vsel %vm835, %v6141, %v6143
  %v6147 = vsel %vm835, %v6143, %v6145
  %v6151 = vsel %vm627, %v5330, 0
  %v6154 = vsel %vm627, %v5331, 0
  %6156 = vmatprep.subr.mxu0 %v6147
  %6157 = vmatpush1.msra.mxu0 %v6146
  %6158 = vmatprep.subr.mxu0 0.0
  %6159 = vmatpush1.msra.mxu0 0.0
  %6160 = vmatprep.subr.mxu0 0.0
  %6161 = vmatpush1.msra.mxu0 0.0
  %6162 = vmatprep.subr.mxu0 0.0
  %6163 = vmatpush1.msra.mxu0 0.0
  %6164 = vmatprep.subr.mxu0 0.0
  %6165 = vmatpush1.msra.mxu0 0.0
  %6166 = vmatprep.subr.mxu0 0.0
  %6167 = vmatpush1.msra.mxu0 0.0
  %6168 = vmatprep.subr.mxu0 0.0
  %6169 = vmatpush1.msra.mxu0 0.0
  %6170 = vmatprep.subr.mxu0 0.0
  %6171 = vmatpush1.msra.mxu0 0.0
  %6172 = vmatprep.subr.mxu0 0.0
  %6173 = vmatpush1.msra.mxu0 0.0
  %6174 = vmatprep.subr.mxu0 0.0
  %6175 = vmatpush1.msra.mxu0 0.0
  %6176 = vmatprep.subr.mxu0 0.0
  %6177 = vmatpush1.msra.mxu0 0.0
  %6178 = vmatprep.subr.mxu0 0.0
  %6179 = vmatpush1.msra.mxu0 0.0
  %6180 = vmatprep.subr.mxu0 0.0
  %6181 = vmatpush1.msra.mxu0 0.0
  %6182 = vmatprep.subr.mxu0 0.0
  %6183 = vmatpush1.msra.mxu0 0.0
  %6184 = vmatprep.subr.mxu0 0.0
  %6185 = vmatpush1.msra.mxu0 0.0
  %6186 = vmatprep.subr.mxu0 0.0
  %6187 = vmatpush1.msra.mxu0 0.0
  %6188 = vmatprep.subr.mxu0 0.0
  %6189 = vmatpush1.msra.mxu0 0.0
  %6190 = vmatprep.subr.mxu0 0.0
  %6191 = vmatpush1.msra.mxu0 0.0
  %6192 = vmatprep.subr.mxu0 0.0
  %6193 = vmatpush1.msra.mxu0 0.0
  %6194 = vmatprep.subr.mxu0 0.0
  %6195 = vmatpush1.msra.mxu0 0.0
  %6196 = vmatprep.subr.mxu0 0.0
  %6197 = vmatpush1.msra.mxu0 0.0
  %6198 = vmatprep.subr.mxu0 0.0
  %6199 = vmatpush1.msra.mxu0 0.0
  %6200 = vmatprep.subr.mxu0 0.0
  %6201 = vmatpush1.msra.mxu0 0.0
  %6202 = vmatprep.subr.mxu0 0.0
  %6203 = vmatpush1.msra.mxu0 0.0
  %6204 = vmatprep.subr.mxu0 0.0
  %6205 = vmatpush1.msra.mxu0 0.0
  %6206 = vmatprep.subr.mxu0 0.0
  %6207 = vmatpush1.msra.mxu0 0.0
  %6208 = vmatprep.subr.mxu0 0.0
  %6209 = vmatpush1.msra.mxu0 0.0
  %6210 = vmatprep.subr.mxu0 0.0
  %6211 = vmatpush1.msra.mxu0 0.0
  %6212 = vmatprep.subr.mxu0 0.0
  %6213 = vmatpush1.msra.mxu0 0.0
  %6214 = vmatprep.subr.mxu0 0.0
  %6215 = vmatpush1.msra.mxu0 0.0
  %6216 = vmatprep.subr.mxu0 0.0
  %6217 = vmatpush1.msra.mxu0 0.0
  %6218 = vmatprep.subr.mxu0 0.0
  %6219 = vmatpush1.msra.mxu0 0.0
  %6220 = vmatprep.mubr.f32.mxu0 0.0
  %6221 = vmatmul.mubr.f32.gmra.mrb[0].mxu0 %v6151
  %v6222 = vpop.f32.mrb[0].mxu0
  %v6223 = vadd.f32 0.0, %v6222
  %v6224 = vpop.f32.mrb[0].mxu0
  %v6225 = vadd.f32 0.0, %v6224
  %6226 = vmatprep.mubr.f32.mxu0 0.0
  %6227 = vmatmul.mubr.f32.gmra.mrb[0].mxu0 %v6154
  %v6228 = vpop.f32.mrb[0].mxu0
  %v6229 = vadd.f32 0.0, %v6228
  %v6230 = vpop.f32.mrb[0].mxu0
  %v6231 = vadd.f32 0.0, %v6230
  %6232 = vdwg.mxu0
  %v6233 = vadd.f32 %v6130, %v6223
  %v6234 = vadd.f32 %v6131, %v6225
  %v6235 = vadd.f32 %v6132, %v6229
  %v6236 = vadd.f32 %v6133, %v6231
  %v6237 = vld [vmem:[%s5] sm:$0xff]
  %v6238 = vld [vmem:[%s5 + $0x8] sm:$0xff]
  %v6239 = vld [vmem:[%s5 + $0x10] sm:$0xff]
  %v6240 = vld [vmem:[%s5 + $0x18] sm:$0xff]
  %v6241 = vld [vmem:[%s5 + $0x20] sm:$0xff]
  %v6242 = vld [vmem:[%s5 + $0x28] sm:$0xff]
  %v6243 = vld [vmem:[%s5 + $0x30] sm:$0xff]
  %v6244 = vld [vmem:[%s5 + $0x38] sm:$0xff]
  %v6245 = vld [vmem:[%s5 + $0x40] sm:$0xff]
  %v6246 = vld [vmem:[%s5 + $0x48] sm:$0xff]
  %v6247 = vld [vmem:[%s5 + $0x50] sm:$0xff]
  %v6248 = vld [vmem:[%s5 + $0x58] sm:$0xff]
  %v6249 = vld [vmem:[%s5 + $0x60] sm:$0xff]
  %v6250 = vld [vmem:[%s5 + $0x68] sm:$0xff]
  %v6251 = vld [vmem:[%s5 + $0x70] sm:$0xff]
  %v6252 = vld [vmem:[%s5 + $0x78] sm:$0xff]
  %v6253 = vld [vmem:[%s5 + $0x80] sm:$0xff]
  %v6254 = vld [vmem:[%s5 + $0x88] sm:$0xff]
  %v6255 = vld [vmem:[%s5 + $0x90] sm:$0xff]
  %v6256 = vld [vmem:[%s5 + $0x98] sm:$0xff]
  %v6257 = vld [vmem:[%s5 + $0xa0] sm:$0xff]
  %v6258 = vld [vmem:[%s5 + $0xa8] sm:$0xff]
  %v6259 = vld [vmem:[%s5 + $0xb0] sm:$0xff]
  %v6260 = vld [vmem:[%s5 + $0xb8] sm:$0xff]
  %v6261 = vld [vmem:[%s5 + $0xc0] sm:$0xff]
  %v6262 = vld [vmem:[%s5 + $0xc8] sm:$0xff]
  %v6263 = vld [vmem:[%s5 + $0xd0] sm:$0xff]
  %v6264 = vld [vmem:[%s5 + $0xd8] sm:$0xff]
  %v6265 = vld [vmem:[%s5 + $0xe0] sm:$0xff]
  %v6266 = vld [vmem:[%s5 + $0xe8] sm:$0xff]
  %v6267 = vld [vmem:[%s5 + $0xf0] sm:$0xff]
  %v6268 = vld [vmem:[%s5 + $0xf8] sm:$0xff]
  %v6269 = vld [vmem:[%s19] sm:$0xff]
  %v6270 = vld [vmem:[%s19 + $0x8] sm:$0xff]
  %6272 = vset.pattern.permute.xlu0 0
  %6273 = vperm.xlu0 %6272, %v6269
  %v6274 = vpop.permute.xlu0 %6273
  %6277 = vset.pattern.permute.xlu0 0
  %6278 = vperm.xlu0 %6277, %v6270
  %v6279 = vpop.permute.xlu0 %6278
  %6281 = vmatprep.subr.mxu0 0.0
  %6282 = vmatpush1.msra.mxu0 %v6237
  %6283 = vmatprep.subr.mxu0 0.0
  %6284 = vmatpush1.msra.mxu0 %v6238
  %6285 = vmatprep.subr.mxu0 0.0
  %6286 = vmatpush1.msra.mxu0 %v6239
  %6287 = vmatprep.subr.mxu0 0.0
  %6288 = vmatpush1.msra.mxu0 %v6240
  %6289 = vmatprep.subr.mxu0 0.0
  %6290 = vmatpush1.msra.mxu0 %v6241
  %6291 = vmatprep.subr.mxu0 0.0
  %6292 = vmatpush1.msra.mxu0 %v6242
  %6293 = vmatprep.subr.mxu0 0.0
  %6294 = vmatpush1.msra.mxu0 %v6243
  %6295 = vmatprep.subr.mxu0 0.0
  %6296 = vmatpush1.msra.mxu0 %v6244
  %6297 = vmatprep.subr.mxu0 0.0
  %6298 = vmatpush1.msra.mxu0 %v6245
  %6299 = vmatprep.subr.mxu0 0.0
  %6300 = vmatpush1.msra.mxu0 %v6246
  %6301 = vmatprep.subr.mxu0 0.0
  %6302 = vmatpush1.msra.mxu0 %v6247
  %6303 = vmatprep.subr.mxu0 0.0
  %6304 = vmatpush1.msra.mxu0 %v6248
  %6305 = vmatprep.subr.mxu0 0.0
  %6306 = vmatpush1.msra.mxu0 %v6249
  %6307 = vmatprep.subr.mxu0 0.0
  %6308 = vmatpush1.msra.mxu0 %v6250
  %6309 = vmatprep.subr.mxu0 0.0
  %6310 = vmatpush1.msra.mxu0 %v6251
  %6311 = vmatprep.subr.mxu0 0.0
  %6312 = vmatpush1.msra.mxu0 %v6252
  %6313 = vmatprep.subr.mxu0 0.0
  %6314 = vmatpush1.msra.mxu0 %v6253
  %6315 = vmatprep.subr.mxu0 0.0
  %6316 = vmatpush1.msra.mxu0 %v6254
  %6317 = vmatprep.subr.mxu0 0.0
  %6318 = vmatpush1.msra.mxu0 %v6255
  %6319 = vmatprep.subr.mxu0 0.0
  %6320 = vmatpush1.msra.mxu0 %v6256
  %6321 = vmatprep.subr.mxu0 0.0
  %6322 = vmatpush1.msra.mxu0 %v6257
  %6323 = vmatprep.subr.mxu0 0.0
  %6324 = vmatpush1.msra.mxu0 %v6258
  %6325 = vmatprep.subr.mxu0 0.0
  %6326 = vmatpush1.msra.mxu0 %v6259
  %6327 = vmatprep.subr.mxu0 0.0
  %6328 = vmatpush1.msra.mxu0 %v6260
  %6329 = vmatprep.subr.mxu0 0.0
  %6330 = vmatpush1.msra.mxu0 %v6261
  %6331 = vmatprep.subr.mxu0 0.0
  %6332 = vmatpush1.msra.mxu0 %v6262
  %6333 = vmatprep.subr.mxu0 0.0
  %6334 = vmatpush1.msra.mxu0 %v6263
  %6335 = vmatprep.subr.mxu0 0.0
  %6336 = vmatpush1.msra.mxu0 %v6264
  %6337 = vmatprep.subr.mxu0 0.0
  %6338 = vmatpush1.msra.mxu0 %v6265
  %6339 = vmatprep.subr.mxu0 0.0
  %6340 = vmatpush1.msra.mxu0 %v6266
  %6341 = vmatprep.subr.mxu0 0.0
  %6342 = vmatpush1.msra.mxu0 %v6267
  %6343 = vmatprep.subr.mxu0 0.0
  %6344 = vmatpush1.msra.mxu0 %v6268
  %6345 = vmatprep.mubr.f32.mxu0 %v6234
  %6346 = vmatmul.mubr.f32.gmra.mrb[0].mxu0 %v6233
  %v6347 = vpop.f32.mrb[0].mxu0
  %v6348 = vadd.f32 %v6274, %v6347
  %v6349 = vpop.f32.mrb[0].mxu0
  %6350 = vmatprep.mubr.f32.mxu0 %v6236
  %6351 = vmatmul.mubr.f32.gmra.mrb[0].mxu0 %v6235
  %v6352 = vpop.f32.mrb[0].mxu0
  %v6353 = vadd.f32 %v6279, %v6352
  %v6354 = vpop.f32.mrb[0].mxu0
  %6355 = vdwg.mxu0
  %6356 = vst.msk [vmem:[%s20] sm:$0xff] %vm107, %v6348
  %6357 = vst.msk [vmem:[%s20 + $0x8] sm:$0xff] %vm107, %v6353
  // Predicated region
  $region82: #{encoder_forward.1} parent=0 // pred_check
    _
  $region83: #{encoder_forward.1} parent=0 // pred_check_branch
    %6359 = sbr.rel (0) target = $region85
  $region84: #{encoder_forward.1} parent=0 // pred_region
    _
  $region85: #{encoder_forward.1} parent=0 // pred_fallthru
    _
  // Predicated region
  $region86: #{encoder_forward.1} parent=0 // pred_check
    _
  $region87: #{encoder_forward.1} parent=0 // pred_check_branch
    %6361 = sbr.rel (0) target = $region89
  $region88: #{encoder_forward.1} parent=0 // pred_region
    _
  $region89: #{encoder_forward.1} parent=0 // pred_fallthru
    _

</llo_original>
